<compile_context>
chip_gen: v6e
topology: v6e:2x2x1
jax: 0.10.0
libtpu: 0.0.40
codegen_flags: <defaults>
</compile_context>

<pallas_src>
import functools

import jax
import jax.numpy as jnp
from jax.experimental import pallas as pl
from jax.experimental.pallas import tpu as pltpu


def _round_up(x, m):
    return (x + m - 1) // m * m


def _cdiv(a, b):
    return -(-a // b)


def _pick_tn(M, cap=2304, min_steps=2):
    """Lane-tile width: as big as possible (<= cap) while keeping >= 2 grid steps."""
    Mp = _round_up(M, 128)
    steps = max(min_steps, _cdiv(Mp, cap))
    return max(128, _round_up(_cdiv(Mp, steps), 128))


# ---------------------------------------------------------------------------
# Pallas kernel 1: channel-major conv matmul   out(Cout, tn) = W @ patches
# ---------------------------------------------------------------------------
def _conv_matmul_kernel(w_ref, x_ref, o_ref):
    o_ref[...] = jnp.dot(w_ref[...], x_ref[...],
                         preferred_element_type=jnp.float32).astype(o_ref.dtype)


def conv_matmul(w_mat, patches, tn):
    """(Cout, K) @ (K, M) -> (Cout, M), tiled over M (spatial on lanes)."""
    Cout, K = w_mat.shape
    K2, M = patches.shape
    assert K == K2
    Mp = _round_up(M, tn)
    xp = jnp.pad(patches, ((0, 0), (0, Mp - M)))

    out = pl.pallas_call(
        _conv_matmul_kernel,
        out_shape=jax.ShapeDtypeStruct((Cout, Mp), jnp.float32),
        grid_spec=pltpu.PrefetchScalarGridSpec(
            num_scalar_prefetch=0,
            grid=(Mp // tn,),
            in_specs=[
                pl.BlockSpec((Cout, K), lambda j: (0, 0)),   # weights stay resident
                pl.BlockSpec((K, tn), lambda j: (0, j)),
            ],
            out_specs=pl.BlockSpec((Cout, tn), lambda j: (0, j)),
        ),
        compiler_params=pltpu.CompilerParams(
            dimension_semantics=("parallel",)),
    )(w_mat, xp)
    return out[:, :M]


# ---------------------------------------------------------------------------
# Pallas kernel 2: fused FC head
#   h = relu(x @ w1' + b1')            (Linear + folded BN1d + ReLU)
#   z = h @ w2a + y @ w2b + b2         (z_enc on cat(h, y), concat folded)
# ---------------------------------------------------------------------------
def _head_kernel(x_ref, y_ref, w1_ref, b1_ref, w2a_ref, w2b_ref, b2_ref, o_ref):
    h = jnp.dot(x_ref[...], w1_ref[...], preferred_element_type=jnp.float32)
    h = jnp.maximum(h + b1_ref[...], 0.0)
    z = jnp.dot(h, w2a_ref[...], preferred_element_type=jnp.float32)
    z = z + jnp.dot(y_ref[...], w2b_ref[...], preferred_element_type=jnp.float32)
    o_ref[...] = (z + b2_ref[...]).astype(o_ref.dtype)


def head_matmul(flat, y, w1, b1, w2a, w2b, b2):
    B, D1 = flat.shape
    _, C = y.shape
    H = w1.shape[1]
    O = w2a.shape[1]
    return pl.pallas_call(
        _head_kernel,
        out_shape=jax.ShapeDtypeStruct((B, O), jnp.float32),
        grid_spec=pltpu.PrefetchScalarGridSpec(
            num_scalar_prefetch=0,
            grid=(1,),
            in_specs=[
                pl.BlockSpec((B, D1), lambda i: (0, 0)),
                pl.BlockSpec((B, C), lambda i: (0, 0)),
                pl.BlockSpec((D1, H), lambda i: (0, 0)),
                pl.BlockSpec((1, H), lambda i: (0, 0)),
                pl.BlockSpec((H, O), lambda i: (0, 0)),
                pl.BlockSpec((C, O), lambda i: (0, 0)),
                pl.BlockSpec((1, O), lambda i: (0, 0)),
            ],
            out_specs=pl.BlockSpec((B, O), lambda i: (0, 0)),
        ),
        compiler_params=pltpu.CompilerParams(
            dimension_semantics=("arbitrary",)),
    )(flat, y, w1, b1.reshape(1, H), w2a, w2b, b2.reshape(1, O))


# ---------------------------------------------------------------------------
# XLA glue (cheap, fused by XLA): channel-major im2col, 2x2 maxpool,
# post-pool BN affine + ReLU.
# ---------------------------------------------------------------------------
# TODO(synk): im2col patch extraction, MaxPool2d(2,2) and the post-pool
#   BN-affine+ReLU are XLA element/window ops, not Pallas kernels; BN cannot be
#   folded into the conv weights here because in Enc it runs *after* the pool
#   and max() does not commute with a possibly-negative BN scale.
def _im2col_cm(a, KH=3, KW=3, pad=1):
    """a: (Cin, B, H, W) channel-major -> (Cin*KH*KW, B*H*W), rows = (ci,ky,kx)."""
    C, B, H, W = a.shape
    ap = jnp.pad(a, ((0, 0), (0, 0), (pad, pad), (pad, pad)))
    taps = [ap[:, :, ky:ky + H, kx:kx + W] for ky in range(KH) for kx in range(KW)]
    pat = jnp.stack(taps, axis=1)                       # (Cin, 9, B, H, W)
    return pat.reshape(C * KH * KW, B * H * W)


def _maxpool2x2_cm(a):
    C, B, H, W = a.shape
    return a.reshape(C, B, H // 2, 2, W // 2, 2).max(axis=(3, 5))


# ---------------------------------------------------------------------------
# Enc forward:  x (B,2,48,144), y (B,ncond)  ->  z (B,16)
# ---------------------------------------------------------------------------
def enc_forward(params, x, y):
    B = x.shape[0]
    a = jnp.transpose(x, (1, 0, 2, 3))                  # channel-major (C, B, H, W)

    for i in range(1, 5):                               # 4x conv_block
        C, Bn, H, W = a.shape
        M = Bn * H * W
        patches = _im2col_cm(a)                         # (Cin*9, M)
        w_mat = params[f"wm{i}"]                        # (Cout, Cin*9)
        conv = conv_matmul(w_mat, patches, _pick_tn(M)) # Pallas matmul
        conv = conv.reshape(w_mat.shape[0], Bn, H, W)
        pooled = _maxpool2x2_cm(conv)                   # MaxPool2d(2, 2)
        # eval-mode BN + conv-bias folded into one per-channel affine, then ReLU
        a = jnp.maximum(pooled * params[f"cs{i}"][:, None, None, None]
                        + params[f"ct{i}"][:, None, None, None], 0.0)

    # Flatten() with PyTorch (c, h, w) ordering: (128, B, 3, 9) -> (B, 3456)
    flat = jnp.transpose(a, (1, 0, 2, 3)).reshape(B, -1)

    # linear_block(3456,128) + z_enc(cat(h, y)) fused into one Pallas call
    return head_matmul(flat, y, params["w1f"], params["b1f"],
                       params["w2a"], params["w2b"], params["b2"])


# ---------------------------------------------------------------------------
# Deterministic parameter init (synthetic, not a checkpoint)
# ---------------------------------------------------------------------------
def init_params(key, ncond=8):
    eps = 1e-5
    ks = jax.random.split(key, 8)

    def nrm(k, shape, s=0.05):
        return s * jax.random.normal(k, shape, jnp.float32)

    def bn(k, n):
        g = 1.0 + 0.1 * jax.random.normal(k, (n,), jnp.float32)
        b = 0.05 * jax.random.normal(jax.random.fold_in(k, 1), (n,), jnp.float32)
        # eval-mode BN with default running stats (mean=0, var=1)
        return g / jnp.sqrt(1.0 + eps), b

    p = {}
    chans = [2, 16, 32, 64, 128]
    for i in range(1, 5):
        ci, co = chans[i - 1], chans[i]
        k = jax.random.fold_in(ks[0], i)
        w = nrm(k, (co, ci, 3, 3))                      # Conv2d weight (Cout,Cin,3,3)
        cb = nrm(jax.random.fold_in(k, 1), (co,))       # Conv2d bias
        s, t = bn(jax.random.fold_in(k, 2), co)         # BN2d after the pool
        p[f"wm{i}"] = w.reshape(co, ci * 9)             # matmul weight, rows=(ci,ky,kx)
        p[f"cs{i}"] = s                                 # post-pool scale
        p[f"ct{i}"] = s * cb + t                        # conv bias folded into shift

    # linear_block(3456, 128): BN1d folded directly into the weights/bias
    w1, b1 = nrm(ks[1], (3456, 128)), nrm(ks[2], (128,))
    s1, t1 = bn(ks[3], 128)
    p["w1f"] = w1 * s1[None, :]
    p["b1f"] = b1 * s1 + t1

    # z_enc: Linear(128 + ncond, 16); concat(h, y) folded into a split matmul
    w2, b2 = nrm(ks[4], (128 + ncond, 16)), nrm(ks[5], (16,))
    p["w2a"], p["w2b"], p["b2"] = w2[:128], w2[128:], b2
    return p


if __name__ == "__main__":
    key = jax.random.PRNGKey(0)
    pkey, xkey, ykey = jax.random.split(key, 3)
    ncond = 8
    params = init_params(pkey, ncond=ncond)

    # Enc input implied by the module: 4x (conv k3 p1 + pool/2) brings
    # (2, 48, 144) down to (128, 3, 9) = 3456 features for linear_block(3456, .)
    x = jax.random.normal(xkey, (2, 2, 48, 144), jnp.float32)
    y = jax.random.normal(ykey, (2, ncond), jnp.float32)

    out = jax.jit(enc_forward)(params, x, y)
    out = jax.block_until_ready(out)

    assert out.shape == (2, 16), out.shape
    assert out.dtype == jnp.float32
    assert bool(jnp.all(jnp.isfinite(out)))
    print("KERNEL_OK")
</pallas_src>

<mosaic_0001>
module attributes {stable_mosaic.version = 11 : i64} {
  func.func @_conv_matmul_kernel(%arg0: i32, %arg1: memref<16x18xf32, #tpu.memory_space<vmem>>, %arg2: memref<18x2304xf32, #tpu.memory_space<vmem>>, %arg3: memref<16x2304xf32, #tpu.memory_space<vmem>>) attributes {dimension_semantics = [#tpu.dimension_semantics<parallel>], iteration_bounds = array<i64: 6>, scalar_prefetch = 0 : i64, scratch_operands = 0 : i64, tpu.core_type = #tpu.core_type<tc>, window_params = [{pipeline_mode = #tpu.pipeline_mode<synchronous>, transform_indices = @transform_0, window_bounds = array<i64: 16, 18>}, {transform_indices = @transform_1, window_bounds = array<i64: 18, 2304>}, {transform_indices = @transform_2, window_bounds = array<i64: 16, 2304>}]} {
    %c0 = arith.constant 0 : index
    %c0_0 = arith.constant 0 : index
    %0 = vector.load %arg1[%c0, %c0_0] : memref<16x18xf32, #tpu.memory_space<vmem>>, vector<16x18xf32>
    %c0_1 = arith.constant 0 : index
    %c0_2 = arith.constant 0 : index
    %1 = vector.load %arg2[%c0_1, %c0_2] : memref<18x2304xf32, #tpu.memory_space<vmem>>, vector<18x2304xf32>
    %cst = arith.constant dense<0.000000e+00> : vector<16x2304xf32>
    %2 = tpu.matmul %0, %1, %cst {dimension_numbers = #tpu.dot_dimension_numbers<[1], [0], [0], [1], [0, 0, 1, 1], [], []>} : vector<16x18xf32>, vector<18x2304xf32>, vector<16x2304xf32> -> vector<16x2304xf32>
    %c0_3 = arith.constant 0 : index
    %c0_4 = arith.constant 0 : index
    %3 = vector.load %arg3[%c0_3, %c0_4] : memref<16x2304xf32, #tpu.memory_space<vmem>>, vector<16x2304xf32>
    tpu.vector_store %arg3[%c0_3, %c0_4], %2 {strides = array<i32>} : memref<16x2304xf32, #tpu.memory_space<vmem>>, vector<16x2304xf32>,
    return
  }
  func.func @transform_0(%arg0: i32) -> (i32, i32) {
    %c0_i32 = arith.constant 0 : i32
    %c0_i32_0 = arith.constant 0 : i32
    %c0_i32_1 = arith.constant 0 : i32
    return %c0_i32, %c0_i32_0 : i32, i32
  }
  func.func @transform_1(%arg0: i32) -> (i32, i32) {
    %c0_i32 = arith.constant 0 : i32
    %c0_i32_0 = arith.constant 0 : i32
    return %c0_i32, %arg0 : i32, i32
  }
  func.func @transform_2(%arg0: i32) -> (i32, i32) {
    %c0_i32 = arith.constant 0 : i32
    %c0_i32_0 = arith.constant 0 : i32
    return %c0_i32, %arg0 : i32, i32
  }
}

module attributes {stable_mosaic.version = 11 : i64} {
  func.func @_conv_matmul_kernel(%arg0: i32, %arg1: memref<32x144xf32, #tpu.memory_space<vmem>>, %arg2: memref<144x1792xf32, #tpu.memory_space<vmem>>, %arg3: memref<32x1792xf32, #tpu.memory_space<vmem>>) attributes {dimension_semantics = [#tpu.dimension_semantics<parallel>], iteration_bounds = array<i64: 2>, scalar_prefetch = 0 : i64, scratch_operands = 0 : i64, tpu.core_type = #tpu.core_type<tc>, window_params = [{pipeline_mode = #tpu.pipeline_mode<synchronous>, transform_indices = @transform_0, window_bounds = array<i64: 32, 144>}, {transform_indices = @transform_1, window_bounds = array<i64: 144, 1792>}, {transform_indices = @transform_2, window_bounds = array<i64: 32, 1792>}]} {
    %c0 = arith.constant 0 : index
    %c0_0 = arith.constant 0 : index
    %0 = vector.load %arg1[%c0, %c0_0] : memref<32x144xf32, #tpu.memory_space<vmem>>, vector<32x144xf32>
    %c0_1 = arith.constant 0 : index
    %c0_2 = arith.constant 0 : index
    %1 = vector.load %arg2[%c0_1, %c0_2] : memref<144x1792xf32, #tpu.memory_space<vmem>>, vector<144x1792xf32>
    %cst = arith.constant dense<0.000000e+00> : vector<32x1792xf32>
    %2 = tpu.matmul %0, %1, %cst {dimension_numbers = #tpu.dot_dimension_numbers<[1], [0], [0], [1], [0, 0, 1, 1], [], []>} : vector<32x144xf32>, vector<144x1792xf32>, vector<32x1792xf32> -> vector<32x1792xf32>
    %c0_3 = arith.constant 0 : index
    %c0_4 = arith.constant 0 : index
    %3 = vector.load %arg3[%c0_3, %c0_4] : memref<32x1792xf32, #tpu.memory_space<vmem>>, vector<32x1792xf32>
    tpu.vector_store %arg3[%c0_3, %c0_4], %2 {strides = array<i32>} : memref<32x1792xf32, #tpu.memory_space<vmem>>, vector<32x1792xf32>,
    return
  }
  func.func @transform_0(%arg0: i32) -> (i32, i32) {
    %c0_i32 = arith.constant 0 : i32
    %c0_i32_0 = arith.constant 0 : i32
    %c0_i32_1 = arith.constant 0 : i32
    return %c0_i32, %c0_i32_0 : i32, i32
  }
  func.func @transform_1(%arg0: i32) -> (i32, i32) {
    %c0_i32 = arith.constant 0 : i32
    %c0_i32_0 = arith.constant 0 : i32
    return %c0_i32, %arg0 : i32, i32
  }
  func.func @transform_2(%arg0: i32) -> (i32, i32) {
    %c0_i32 = arith.constant 0 : i32
    %c0_i32_0 = arith.constant 0 : i32
    return %c0_i32, %arg0 : i32, i32
  }
}

module attributes {stable_mosaic.version = 11 : i64} {
  func.func @_conv_matmul_kernel(%arg0: i32, %arg1: memref<64x288xf32, #tpu.memory_space<vmem>>, %arg2: memref<288x512xf32, #tpu.memory_space<vmem>>, %arg3: memref<64x512xf32, #tpu.memory_space<vmem>>) attributes {dimension_semantics = [#tpu.dimension_semantics<parallel>], iteration_bounds = array<i64: 2>, scalar_prefetch = 0 : i64, scratch_operands = 0 : i64, tpu.core_type = #tpu.core_type<tc>, window_params = [{pipeline_mode = #tpu.pipeline_mode<synchronous>, transform_indices = @transform_0, window_bounds = array<i64: 64, 288>}, {transform_indices = @transform_1, window_bounds = array<i64: 288, 512>}, {transform_indices = @transform_2, window_bounds = array<i64: 64, 512>}]} {
    %c0 = arith.constant 0 : index
    %c0_0 = arith.constant 0 : index
    %0 = vector.load %arg1[%c0, %c0_0] : memref<64x288xf32, #tpu.memory_space<vmem>>, vector<64x288xf32>
    %c0_1 = arith.constant 0 : index
    %c0_2 = arith.constant 0 : index
    %1 = vector.load %arg2[%c0_1, %c0_2] : memref<288x512xf32, #tpu.memory_space<vmem>>, vector<288x512xf32>
    %cst = arith.constant dense<0.000000e+00> : vector<64x512xf32>
    %2 = tpu.matmul %0, %1, %cst {dimension_numbers = #tpu.dot_dimension_numbers<[1], [0], [0], [1], [0, 0, 1, 1], [], []>} : vector<64x288xf32>, vector<288x512xf32>, vector<64x512xf32> -> vector<64x512xf32>
    %c0_3 = arith.constant 0 : index
    %c0_4 = arith.constant 0 : index
    %3 = vector.load %arg3[%c0_3, %c0_4] : memref<64x512xf32, #tpu.memory_space<vmem>>, vector<64x512xf32>
    tpu.vector_store %arg3[%c0_3, %c0_4], %2 {strides = array<i32>} : memref<64x512xf32, #tpu.memory_space<vmem>>, vector<64x512xf32>,
    return
  }
  func.func @transform_0(%arg0: i32) -> (i32, i32) {
    %c0_i32 = arith.constant 0 : i32
    %c0_i32_0 = arith.constant 0 : i32
    %c0_i32_1 = arith.constant 0 : i32
    return %c0_i32, %c0_i32_0 : i32, i32
  }
  func.func @transform_1(%arg0: i32) -> (i32, i32) {
    %c0_i32 = arith.constant 0 : i32
    %c0_i32_0 = arith.constant 0 : i32
    return %c0_i32, %arg0 : i32, i32
  }
  func.func @transform_2(%arg0: i32) -> (i32, i32) {
    %c0_i32 = arith.constant 0 : i32
    %c0_i32_0 = arith.constant 0 : i32
    return %c0_i32, %arg0 : i32, i32
  }
}

module attributes {stable_mosaic.version = 11 : i64} {
  func.func @_conv_matmul_kernel(%arg0: i32, %arg1: memref<128x576xf32, #tpu.memory_space<vmem>>, %arg2: memref<576x128xf32, #tpu.memory_space<vmem>>, %arg3: memref<128x128xf32, #tpu.memory_space<vmem>>) attributes {dimension_semantics = [#tpu.dimension_semantics<parallel>], iteration_bounds = array<i64: 2>, scalar_prefetch = 0 : i64, scratch_operands = 0 : i64, tpu.core_type = #tpu.core_type<tc>, window_params = [{pipeline_mode = #tpu.pipeline_mode<synchronous>, transform_indices = @transform_0, window_bounds = array<i64: 128, 576>}, {transform_indices = @transform_1, window_bounds = array<i64: 576, 128>}, {transform_indices = @transform_2, window_bounds = array<i64: 128, 128>}]} {
    %c0 = arith.constant 0 : index
    %c0_0 = arith.constant 0 : index
    %0 = vector.load %arg1[%c0, %c0_0] : memref<128x576xf32, #tpu.memory_space<vmem>>, vector<128x576xf32>
    %c0_1 = arith.constant 0 : index
    %c0_2 = arith.constant 0 : index
    %1 = vector.load %arg2[%c0_1, %c0_2] : memref<576x128xf32, #tpu.memory_space<vmem>>, vector<576x128xf32>
    %cst = arith.constant dense<0.000000e+00> : vector<128x128xf32>
    %2 = tpu.matmul %0, %1, %cst {dimension_numbers = #tpu.dot_dimension_numbers<[1], [0], [0], [1], [0, 0, 1, 1], [], []>} : vector<128x576xf32>, vector<576x128xf32>, vector<128x128xf32> -> vector<128x128xf32>
    %c0_3 = arith.constant 0 : index
    %c0_4 = arith.constant 0 : index
    %3 = vector.load %arg3[%c0_3, %c0_4] : memref<128x128xf32, #tpu.memory_space<vmem>>, vector<128x128xf32>
    tpu.vector_store %arg3[%c0_3, %c0_4], %2 {strides = array<i32>} : memref<128x128xf32, #tpu.memory_space<vmem>>, vector<128x128xf32>,
    return
  }
  func.func @transform_0(%arg0: i32) -> (i32, i32) {
    %c0_i32 = arith.constant 0 : i32
    %c0_i32_0 = arith.constant 0 : i32
    %c0_i32_1 = arith.constant 0 : i32
    return %c0_i32, %c0_i32_0 : i32, i32
  }
  func.func @transform_1(%arg0: i32) -> (i32, i32) {
    %c0_i32 = arith.constant 0 : i32
    %c0_i32_0 = arith.constant 0 : i32
    return %c0_i32, %arg0 : i32, i32
  }
  func.func @transform_2(%arg0: i32) -> (i32, i32) {
    %c0_i32 = arith.constant 0 : i32
    %c0_i32_0 = arith.constant 0 : i32
    return %c0_i32, %arg0 : i32, i32
  }
}

module attributes {stable_mosaic.version = 11 : i64} {
  func.func @_head_kernel(%arg0: i32, %arg1: memref<2x3456xf32, #tpu.memory_space<vmem>>, %arg2: memref<2x8xf32, #tpu.memory_space<vmem>>, %arg3: memref<3456x128xf32, #tpu.memory_space<vmem>>, %arg4: memref<1x128xf32, #tpu.memory_space<vmem>>, %arg5: memref<128x16xf32, #tpu.memory_space<vmem>>, %arg6: memref<8x16xf32, #tpu.memory_space<vmem>>, %arg7: memref<1x16xf32, #tpu.memory_space<vmem>>, %arg8: memref<2x16xf32, #tpu.memory_space<vmem>>) attributes {dimension_semantics = [#tpu.dimension_semantics<arbitrary>], iteration_bounds = array<i64: 1>, scalar_prefetch = 0 : i64, scratch_operands = 0 : i64, tpu.core_type = #tpu.core_type<tc>, window_params = [{pipeline_mode = #tpu.pipeline_mode<synchronous>, transform_indices = @transform_0, window_bounds = array<i64: 2, 3456>}, {pipeline_mode = #tpu.pipeline_mode<synchronous>, transform_indices = @transform_1, window_bounds = array<i64: 2, 8>}, {pipeline_mode = #tpu.pipeline_mode<synchronous>, transform_indices = @transform_2, window_bounds = array<i64: 3456, 128>}, {pipeline_mode = #tpu.pipeline_mode<synchronous>, transform_indices = @transform_3, window_bounds = array<i64: 1, 128>}, {pipeline_mode = #tpu.pipeline_mode<synchronous>, transform_indices = @transform_4, window_bounds = array<i64: 128, 16>}, {pipeline_mode = #tpu.pipeline_mode<synchronous>, transform_indices = @transform_5, window_bounds = array<i64: 8, 16>}, {pipeline_mode = #tpu.pipeline_mode<synchronous>, transform_indices = @transform_6, window_bounds = array<i64: 1, 16>}, {pipeline_mode = #tpu.pipeline_mode<synchronous>, transform_indices = @transform_7, window_bounds = array<i64: 2, 16>}]} {
    %c0 = arith.constant 0 : index
    %c0_0 = arith.constant 0 : index
    %0 = vector.load %arg1[%c0, %c0_0] : memref<2x3456xf32, #tpu.memory_space<vmem>>, vector<2x3456xf32>
    %c0_1 = arith.constant 0 : index
    %c0_2 = arith.constant 0 : index
    %1 = vector.load %arg3[%c0_1, %c0_2] : memref<3456x128xf32, #tpu.memory_space<vmem>>, vector<3456x128xf32>
    %cst = arith.constant dense<0.000000e+00> : vector<2x128xf32>
    %2 = tpu.matmul %0, %1, %cst {dimension_numbers = #tpu.dot_dimension_numbers<[1], [0], [0], [1], [0, 0, 1, 1], [], []>} : vector<2x3456xf32>, vector<3456x128xf32>, vector<2x128xf32> -> vector<2x128xf32>
    %c0_3 = arith.constant 0 : index
    %c0_4 = arith.constant 0 : index
    %3 = vector.load %arg4[%c0_3, %c0_4] : memref<1x128xf32, #tpu.memory_space<vmem>>, vector<1x128xf32>
    %4 = vector.broadcast %3 : vector<1x128xf32> to vector<2x128xf32>
    %5 = arith.addf %2, %4 : vector<2x128xf32>
    %cst_5 = arith.constant 0.000000e+00 : f32
    %6 = vector.broadcast %cst_5 : f32 to vector<2x128xf32>
    %7 = arith.maximumf %5, %6 : vector<2x128xf32>
    %c0_6 = arith.constant 0 : index
    %c0_7 = arith.constant 0 : index
    %8 = vector.load %arg5[%c0_6, %c0_7] : memref<128x16xf32, #tpu.memory_space<vmem>>, vector<128x16xf32>
    %cst_8 = arith.constant dense<0.000000e+00> : vector<2x16xf32>
    %9 = tpu.matmul %7, %8, %cst_8 {dimension_numbers = #tpu.dot_dimension_numbers<[1], [0], [0], [1], [0, 0, 1, 1], [], []>} : vector<2x128xf32>, vector<128x16xf32>, vector<2x16xf32> -> vector<2x16xf32>
    %c0_9 = arith.constant 0 : index
    %c0_10 = arith.constant 0 : index
    %10 = vector.load %arg2[%c0_9, %c0_10] : memref<2x8xf32, #tpu.memory_space<vmem>>, vector<2x8xf32>
    %c0_11 = arith.constant 0 : index
    %c0_12 = arith.constant 0 : index
    %11 = vector.load %arg6[%c0_11, %c0_12] : memref<8x16xf32, #tpu.memory_space<vmem>>, vector<8x16xf32>
    %cst_13 = arith.constant dense<0.000000e+00> : vector<2x16xf32>
    %12 = tpu.matmul %10, %11, %cst_13 {dimension_numbers = #tpu.dot_dimension_numbers<[1], [0], [0], [1], [0, 0, 1, 1], [], []>} : vector<2x8xf32>, vector<8x16xf32>, vector<2x16xf32> -> vector<2x16xf32>
    %13 = arith.addf %9, %12 : vector<2x16xf32>
    %c0_14 = arith.constant 0 : index
    %c0_15 = arith.constant 0 : index
    %14 = vector.load %arg7[%c0_14, %c0_15] : memref<1x16xf32, #tpu.memory_space<vmem>>, vector<1x16xf32>
    %15 = vector.broadcast %14 : vector<1x16xf32> to vector<2x16xf32>
    %16 = arith.addf %13, %15 : vector<2x16xf32>
    %c0_16 = arith.constant 0 : index
    %c0_17 = arith.constant 0 : index
    %17 = vector.load %arg8[%c0_16, %c0_17] : memref<2x16xf32, #tpu.memory_space<vmem>>, vector<2x16xf32>
    tpu.vector_store %arg8[%c0_16, %c0_17], %16 {strides = array<i32>} : memref<2x16xf32, #tpu.memory_space<vmem>>, vector<2x16xf32>,
    return
  }
  func.func @transform_0(%arg0: i32) -> (i32, i32) {
    %c0_i32 = arith.constant 0 : i32
    %c0_i32_0 = arith.constant 0 : i32
    %c0_i32_1 = arith.constant 0 : i32
    return %c0_i32, %c0_i32_0 : i32, i32
  }
  func.func @transform_1(%arg0: i32) -> (i32, i32) {
    %c0_i32 = arith.constant 0 : i32
    %c0_i32_0 = arith.constant 0 : i32
    %c0_i32_1 = arith.constant 0 : i32
    return %c0_i32, %c0_i32_0 : i32, i32
  }
  func.func @transform_2(%arg0: i32) -> (i32, i32) {
    %c0_i32 = arith.constant 0 : i32
    %c0_i32_0 = arith.constant 0 : i32
    %c0_i32_1 = arith.constant 0 : i32
    return %c0_i32, %c0_i32_0 : i32, i32
  }
  func.func @transform_3(%arg0: i32) -> (i32, i32) {
    %c0_i32 = arith.constant 0 : i32
    %c0_i32_0 = arith.constant 0 : i32
    %c0_i32_1 = arith.constant 0 : i32
    return %c0_i32, %c0_i32_0 : i32, i32
  }
  func.func @transform_4(%arg0: i32) -> (i32, i32) {
    %c0_i32 = arith.constant 0 : i32
    %c0_i32_0 = arith.constant 0 : i32
    %c0_i32_1 = arith.constant 0 : i32
    return %c0_i32, %c0_i32_0 : i32, i32
  }
  func.func @transform_5(%arg0: i32) -> (i32, i32) {
    %c0_i32 = arith.constant 0 : i32
    %c0_i32_0 = arith.constant 0 : i32
    %c0_i32_1 = arith.constant 0 : i32
    return %c0_i32, %c0_i32_0 : i32, i32
  }
  func.func @transform_6(%arg0: i32) -> (i32, i32) {
    %c0_i32 = arith.constant 0 : i32
    %c0_i32_0 = arith.constant 0 : i32
    %c0_i32_1 = arith.constant 0 : i32
    return %c0_i32, %c0_i32_0 : i32, i32
  }
  func.func @transform_7(%arg0: i32) -> (i32, i32) {
    %c0_i32 = arith.constant 0 : i32
    %c0_i32_0 = arith.constant 0 : i32
    %c0_i32_1 = arith.constant 0 : i32
    return %c0_i32, %c0_i32_0 : i32, i32
  }
}

</mosaic_0001>

<llo_original>
// kernel: enc_forward.5
$region0: #{enc_forward.5}
  #allocation0 [shape = 'u32[]', space=smem, size = 0x4, offset = 0x4, fixed_abs, tag = 'smem constant byte address 0x4 - core index']
  #allocation1 [shape = 'u32[144,128]{1,0:T(1,128)}', space=vmem, size = 0x12000, scoped, tag = 'internal scratch']
  %s0 = inlined_call_operand.vmem [shape: f32[16,18], index: 0, kind: input, shape index: {}]
  %s1 = inlined_call_operand.vmem [shape: f32[18,13824], index: 1, kind: input, shape index: {}]
  %s2 = inlined_call_operand.vmem [shape: f32[16,13824], index: 2, kind: output, shape index: {}]
  %s3 = sld [smem:[#allocation0]]
  $region83: #{enc_forward.5} parent=0
    _
  %s5 = ssub.s32 1, %s3
  %s6 = scalar_select 0, %s5, %s3
  $region1: #{enc_forward.5} parent=0
    #allocation2 [shape = 'u8[442368]{0}', space=vmem, size = 0x6c000, scoped, tag = 'input window, operand 1']
    #allocation3 [shape = 'u8[294912]{0}', space=vmem, size = 0x48000, scoped, tag = 'output window, operand 0']
    loop: start=0, step=1, limit=8
    $region2: #{enc_forward.5} parent=1 // loop_pre_header
      _
    $region3: #{enc_forward.5} parent=1 // loop_header
      %s8 = sphi 0, %s12
      %p9 = scmp.ge.s32.totalorder %s8, 8
      %s16 = sphi 0, %s16
      %s18 = sphi 0, %s16
      %s19 = sphi 0, %s18
      %s33 = sphi 0, %s19
      %s39 = sphi 0, %s41
      %s42 = sphi 0, %s39
      %s43 = sphi 0, %s42
      %s59 = sphi 0, %s43
      %s65 = sphi 0, %s67
      %s68 = sphi 0, %s65
      %s69 = sphi 0, %s68
      %s85 = sphi 0, %s69
    $region4: #{enc_forward.5} parent=1 // loop_header_branch
      %11 = sbr.rel (%p9) target = $region8
    $region5: #{enc_forward.5} parent=1 // loop_body
      %s13 = ssub.s32 %s8, 1
      %s14 = ssub.s32 %s8, 2
      %s15 = sadd.s32 %s8, 1
      %s17 = sadd.s32 %s16, 1
      %p20 = scmp.eq.s32.totalorder %s8, 5
      %p21 = scmp.ne.s32.totalorder %s16, %s18
      %p22 = scmp.eq.s32.totalorder %s8, 0
      %p23 = por %p21, %p22
      %p24 = scmp.ne.s32.totalorder %s16, %s18
      %p25 = scmp.eq.s32.totalorder %s13, 5
      %p26 = por %p24, %p25
      %p27 = scmp.ne.s32.totalorder %s18, %s19
      %p28 = scmp.eq.s32.totalorder %s13, 0
      %p29 = por %p27, %p28
      %p30 = scmp.ne.s32.totalorder %s18, %s19
      %p31 = scmp.eq.s32.totalorder %s14, 5
      %p32 = por %p30, %p31
      %p34 = scmp.ne.s32.totalorder %s19, %s33
      %p35 = scmp.eq.s32.totalorder %s14, 0
      %p36 = por %p34, %p35
      %s37 = ssub.s32 %s8, %s15
      %p38 = scmp.eq.s32.totalorder %s37, 0
      %s40 = sadd.s32 %s39, 1
      %s41 = scalar_select %p38, %s39, %s40
      %p44 = pneg %p38
      %p45 = scmp.eq.s32.totalorder %s8, 5
      %p46 = por %p44, %p45
      %p47 = scmp.ne.s32.totalorder %s39, %s42
      %p48 = scmp.eq.s32.totalorder %s8, 0
      %p49 = por %p47, %p48
      %p50 = scmp.ne.s32.totalorder %s39, %s42
      %p51 = scmp.eq.s32.totalorder %s13, 5
      %p52 = por %p50, %p51
      %p53 = scmp.ne.s32.totalorder %s42, %s43
      %p54 = scmp.eq.s32.totalorder %s13, 0
      %p55 = por %p53, %p54
      %p56 = scmp.ne.s32.totalorder %s42, %s43
      %p57 = scmp.eq.s32.totalorder %s14, 5
      %p58 = por %p56, %p57
      %p60 = scmp.ne.s32.totalorder %s43, %s59
      %p61 = scmp.eq.s32.totalorder %s14, 0
      %p62 = por %p60, %p61
      %s63 = ssub.s32 %s8, %s15
      %p64 = scmp.eq.s32.totalorder %s63, 0
      %s66 = sadd.s32 %s65, 1
      %s67 = scalar_select %p64, %s65, %s66
      %p70 = pneg %p64
      %p71 = scmp.eq.s32.totalorder %s8, 5
      %p72 = por %p70, %p71
      %p73 = scmp.ne.s32.totalorder %s65, %s68
      %p74 = scmp.eq.s32.totalorder %s8, 0
      %p75 = por %p73, %p74
      %p76 = scmp.ne.s32.totalorder %s65, %s68
      %p77 = scmp.eq.s32.totalorder %s13, 5
      %p78 = por %p76, %p77
      %p79 = scmp.ne.s32.totalorder %s68, %s69
      %p80 = scmp.eq.s32.totalorder %s13, 0
      %p81 = por %p79, %p80
      %p82 = scmp.ne.s32.totalorder %s68, %s69
      %p83 = scmp.eq.s32.totalorder %s14, 5
      %p84 = por %p82, %p83
      %p86 = scmp.ne.s32.totalorder %s69, %s85
      %p87 = scmp.eq.s32.totalorder %s14, 0
      %p88 = por %p86, %p87
      %p89 = scmp.le.s32.totalorder 1, %s8
      %p90 = scmp.lt.s32.totalorder %s8, 7
      %p91 = pnand %p89, %p90
      %p92 = pneg %p91
      // Predicated region
      $region9: #{enc_forward.5} parent=5 // pred_check
        _
      $region10: #{enc_forward.5} parent=5 // pred_check_branch
        %94 = sbr.rel (%p91) target = $region12
      $region11: #{enc_forward.5} parent=5 // pred_region
        %s95 = ssub.s32 %s8, 1
        // Predicated region
        $region13: #{enc_forward.5} parent=11 // pred_check
          %p96 = pneg %p29
        $region14: #{enc_forward.5} parent=11 // pred_check_branch
          %98 = sbr.rel (%p96) target = $region16
        $region15: #{enc_forward.5} parent=11 // pred_region
          _
        $region16: #{enc_forward.5} parent=11 // pred_fallthru
          _
      $region12: #{enc_forward.5} parent=5 // pred_fallthru
        _
      %p99 = scmp.lt.s32.totalorder %s8, 6
      // Predicated region
      $region17: #{enc_forward.5} parent=5 // pred_check
        %p100 = pneg %p99
      $region18: #{enc_forward.5} parent=5 // pred_check_branch
        %102 = sbr.rel (%p100) target = $region20
      $region19: #{enc_forward.5} parent=5 // pred_region
        // Predicated region
        $region21: #{enc_forward.5} parent=19 // pred_check
          %p103 = pneg %p49
        $region22: #{enc_forward.5} parent=19 // pred_check_branch
          %105 = sbr.rel (%p103) target = $region24
        $region23: #{enc_forward.5} parent=19 // pred_region
          %s106 = sand.u32 %s39, 1
          %s107 = sand.u32 %s39, 1
          %s108 = smul.addr %s107, 432
          %s109 = scalar_lea.vmem [#allocation2], %s108
          %s110 = smul.u32 18, %s8
          %s111 = smul.addr %s110, 8
          %s112 = scalar_lea.vmem %s1, %s111
          // Predicated region
          $region25: #{enc_forward.5} parent=23 // pred_check
            _
          $region26: #{enc_forward.5} parent=23 // pred_check_branch
            %114 = sbr.rel (0) target = $region28
          $region27: #{enc_forward.5} parent=23 // pred_region
            // Predicated region
            $region29: #{enc_forward.5} parent=27 // pred_check
              _
            $region30: #{enc_forward.5} parent=27 // pred_check_branch
              %116 = sbr.rel (0) target = $region32
            $region31: #{enc_forward.5} parent=27 // pred_region
              loop: start=0, step=1, limit=1
              $region33: #{enc_forward.5} parent=31 // loop_pre_header
                _
              $region34: #{enc_forward.5} parent=31 // loop_header
                %s118 = sphi 0, %s122
                %p119 = scmp.ge.s32.totalorder %s118, 1
                %s123 = sphi %s112, %s112
                %s124 = sphi %s109, %s109
              $region35: #{enc_forward.5} parent=31 // loop_header_branch
                %121 = sbr.rel (%p119) target = $region39
              $region36: #{enc_forward.5} parent=31 // loop_body
                %v125 = vld [vmem:[%s123] sm:$0xff]
                %126 = vst [vmem:[%s124] sm:$0xff] %v125
                %v127 = vld [vmem:[%s123 + $0x8] sm:$0xff]
                %128 = vst [vmem:[%s124 + $0x8] sm:$0xff] %v127
                %v129 = vld [vmem:[%s123 + $0x10] sm:$0xff]
                %130 = vst [vmem:[%s124 + $0x10] sm:$0xff] %v129
                %v131 = vld [vmem:[%s123 + $0x18] sm:$0xff]
                %132 = vst [vmem:[%s124 + $0x18] sm:$0xff] %v131
                %v133 = vld [vmem:[%s123 + $0x20] sm:$0xff]
                %134 = vst [vmem:[%s124 + $0x20] sm:$0xff] %v133
                %v135 = vld [vmem:[%s123 + $0x28] sm:$0xff]
                %136 = vst [vmem:[%s124 + $0x28] sm:$0xff] %v135
                %v137 = vld [vmem:[%s123 + $0x30] sm:$0xff]
                %138 = vst [vmem:[%s124 + $0x30] sm:$0xff] %v137
                %v139 = vld [vmem:[%s123 + $0x38] sm:$0xff]
                %140 = vst [vmem:[%s124 + $0x38] sm:$0xff] %v139
                %v141 = vld [vmem:[%s123 + $0x40] sm:$0xff]
                %142 = vst [vmem:[%s124 + $0x40] sm:$0xff] %v141
                %v143 = vld [vmem:[%s123 + $0x48] sm:$0xff]
                %144 = vst [vmem:[%s124 + $0x48] sm:$0xff] %v143
                %v145 = vld [vmem:[%s123 + $0x50] sm:$0xff]
                %146 = vst [vmem:[%s124 + $0x50] sm:$0xff] %v145
                %v147 = vld [vmem:[%s123 + $0x58] sm:$0xff]
                %148 = vst [vmem:[%s124 + $0x58] sm:$0xff] %v147
                %v149 = vld [vmem:[%s123 + $0x60] sm:$0xff]
                %150 = vst [vmem:[%s124 + $0x60] sm:$0xff] %v149
                %v151 = vld [vmem:[%s123 + $0x68] sm:$0xff]
                %152 = vst [vmem:[%s124 + $0x68] sm:$0xff] %v151
                %v153 = vld [vmem:[%s123 + $0x70] sm:$0xff]
                %154 = vst [vmem:[%s124 + $0x70] sm:$0xff] %v153
                %v155 = vld [vmem:[%s123 + $0x78] sm:$0xff]
                %156 = vst [vmem:[%s124 + $0x78] sm:$0xff] %v155
                %v157 = vld [vmem:[%s123 + $0x80] sm:$0xff]
                %158 = vst [vmem:[%s124 + $0x80] sm:$0xff] %v157
                %v159 = vld [vmem:[%s123 + $0x88] sm:$0xff]
                %160 = vst [vmem:[%s124 + $0x88] sm:$0xff] %v159
                %v161 = vld [vmem:[%s123 + $0x360] sm:$0xff]
                %162 = vst [vmem:[%s124 + $0x90] sm:$0xff] %v161
                %v163 = vld [vmem:[%s123 + $0x368] sm:$0xff]
                %164 = vst [vmem:[%s124 + $0x98] sm:$0xff] %v163
                %v165 = vld [vmem:[%s123 + $0x370] sm:$0xff]
                %166 = vst [vmem:[%s124 + $0xa0] sm:$0xff] %v165
                %v167 = vld [vmem:[%s123 + $0x378] sm:$0xff]
                %168 = vst [vmem:[%s124 + $0xa8] sm:$0xff] %v167
                %v169 = vld [vmem:[%s123 + $0x380] sm:$0xff]
                %170 = vst [vmem:[%s124 + $0xb0] sm:$0xff] %v169
                %v171 = vld [vmem:[%s123 + $0x388] sm:$0xff]
                %172 = vst [vmem:[%s124 + $0xb8] sm:$0xff] %v171
                %v173 = vld [vmem:[%s123 + $0x390] sm:$0xff]
                %174 = vst [vmem:[%s124 + $0xc0] sm:$0xff] %v173
                %v175 = vld [vmem:[%s123 + $0x398] sm:$0xff]
                %176 = vst [vmem:[%s124 + $0xc8] sm:$0xff] %v175
                %v177 = vld [vmem:[%s123 + $0x3a0] sm:$0xff]
                %178 = vst [vmem:[%s124 + $0xd0] sm:$0xff] %v177
                %v179 = vld [vmem:[%s123 + $0x3a8] sm:$0xff]
                %180 = vst [vmem:[%s124 + $0xd8] sm:$0xff] %v179
                %v181 = vld [vmem:[%s123 + $0x3b0] sm:$0xff]
                %182 = vst [vmem:[%s124 + $0xe0] sm:$0xff] %v181
                %v183 = vld [vmem:[%s123 + $0x3b8] sm:$0xff]
                %184 = vst [vmem:[%s124 + $0xe8] sm:$0xff] %v183
                %v185 = vld [vmem:[%s123 + $0x3c0] sm:$0xff]
                %186 = vst [vmem:[%s124 + $0xf0] sm:$0xff] %v185
                %v187 = vld [vmem:[%s123 + $0x3c8] sm:$0xff]
                %188 = vst [vmem:[%s124 + $0xf8] sm:$0xff] %v187
                %v189 = vld [vmem:[%s123 + $0x3d0] sm:$0xff]
                %190 = vst [vmem:[%s124 + $0x100] sm:$0xff] %v189
                %v191 = vld [vmem:[%s123 + $0x3d8] sm:$0xff]
                %192 = vst [vmem:[%s124 + $0x108] sm:$0xff] %v191
                %v193 = vld [vmem:[%s123 + $0x3e0] sm:$0xff]
                %194 = vst [vmem:[%s124 + $0x110] sm:$0xff] %v193
                %v195 = vld [vmem:[%s123 + $0x3e8] sm:$0xff]
                %196 = vst [vmem:[%s124 + $0x118] sm:$0xff] %v195
                %v197 = vld [vmem:[%s123 + $0x6c0] sm:$0xff]
                %198 = vst [vmem:[%s124 + $0x120] sm:$0xff] %v197
                %v199 = vld [vmem:[%s123 + $0x6c8] sm:$0xff]
                %200 = vst [vmem:[%s124 + $0x128] sm:$0xff] %v199
                %v201 = vld [vmem:[%s123 + $0x6d0] sm:$0xff]
                %202 = vst [vmem:[%s124 + $0x130] sm:$0xff] %v201
                %v203 = vld [vmem:[%s123 + $0x6d8] sm:$0xff]
                %204 = vst [vmem:[%s124 + $0x138] sm:$0xff] %v203
                %v205 = vld [vmem:[%s123 + $0x6e0] sm:$0xff]
                %206 = vst [vmem:[%s124 + $0x140] sm:$0xff] %v205
                %v207 = vld [vmem:[%s123 + $0x6e8] sm:$0xff]
                %208 = vst [vmem:[%s124 + $0x148] sm:$0xff] %v207
                %v209 = vld [vmem:[%s123 + $0x6f0] sm:$0xff]
                %210 = vst [vmem:[%s124 + $0x150] sm:$0xff] %v209
                %v211 = vld [vmem:[%s123 + $0x6f8] sm:$0xff]
                %212 = vst [vmem:[%s124 + $0x158] sm:$0xff] %v211
                %v213 = vld [vmem:[%s123 + $0x700] sm:$0xff]
                %214 = vst [vmem:[%s124 + $0x160] sm:$0xff] %v213
                %v215 = vld [vmem:[%s123 + $0x708] sm:$0xff]
                %216 = vst [vmem:[%s124 + $0x168] sm:$0xff] %v215
                %v217 = vld [vmem:[%s123 + $0x710] sm:$0xff]
                %218 = vst [vmem:[%s124 + $0x170] sm:$0xff] %v217
                %v219 = vld [vmem:[%s123 + $0x718] sm:$0xff]
                %220 = vst [vmem:[%s124 + $0x178] sm:$0xff] %v219
                %v221 = vld [vmem:[%s123 + $0x720] sm:$0xff]
                %222 = vst [vmem:[%s124 + $0x180] sm:$0xff] %v221
                %v223 = vld [vmem:[%s123 + $0x728] sm:$0xff]
                %224 = vst [vmem:[%s124 + $0x188] sm:$0xff] %v223
                %v225 = vld [vmem:[%s123 + $0x730] sm:$0xff]
                %226 = vst [vmem:[%s124 + $0x190] sm:$0xff] %v225
                %v227 = vld [vmem:[%s123 + $0x738] sm:$0xff]
                %228 = vst [vmem:[%s124 + $0x198] sm:$0xff] %v227
                %v229 = vld [vmem:[%s123 + $0x740] sm:$0xff]
                %230 = vst [vmem:[%s124 + $0x1a0] sm:$0xff] %v229
                %v231 = vld [vmem:[%s123 + $0x748] sm:$0xff]
                %232 = vst [vmem:[%s124 + $0x1a8] sm:$0xff] %v231
              $region37: #{enc_forward.5} parent=31 // loop_footer
                %s122 = sadd.s32 1, %s118
              $region38: #{enc_forward.5} parent=31 // loop_footer_branch
                %117 = sbr.rel target = $region34
              $region39: #{enc_forward.5} parent=31 // loop_exit
                _
            $region32: #{enc_forward.5} parent=27 // pred_fallthru
              _
            // Predicated region
            $region40: #{enc_forward.5} parent=27 // pred_check
              _
            $region41: #{enc_forward.5} parent=27 // pred_check_branch
              %234 = sbr.rel target = $region43
            $region42: #{enc_forward.5} parent=27 // pred_region
              _
            $region43: #{enc_forward.5} parent=27 // pred_fallthru
              _
          $region28: #{enc_forward.5} parent=23 // pred_fallthru
            _
          %235 = vnop
        $region24: #{enc_forward.5} parent=19 // pred_fallthru
          _
      $region20: #{enc_forward.5} parent=5 // pred_fallthru
        _
      %p236 = scmp.le.s32.totalorder 1, %s8
      %p237 = scmp.lt.s32.totalorder %s8, 7
      %p238 = pnand %p236, %p237
      %p239 = pneg %p238
      // Predicated region
      $region44: #{enc_forward.5} parent=5 // pred_check
        _
      $region45: #{enc_forward.5} parent=5 // pred_check_branch
        %241 = sbr.rel (%p238) target = $region47
      $region46: #{enc_forward.5} parent=5 // pred_region
        %s242 = ssub.s32 %s8, 1
        %s243 = sand.u32 %s42, 1
        %s244 = sand.u32 %s42, 1
        %s245 = smul.addr %s244, 432
        %s246 = scalar_lea.vmem [#allocation2], %s245
        // Predicated region
        $region48: #{enc_forward.5} parent=46 // pred_check
          %p247 = pneg %p55
        $region49: #{enc_forward.5} parent=46 // pred_check_branch
          %249 = sbr.rel (%p247) target = $region51
        $region50: #{enc_forward.5} parent=46 // pred_region
          _
        $region51: #{enc_forward.5} parent=46 // pred_fallthru
          _
        %p250 = pneg %p29
        %p251 = pneg %p26
        %s252 = sand.u32 %s42, 1
        %s253 = sand.u32 %s42, 1
        %s254 = smul.addr %s253, 432
        %s255 = scalar_lea.vmem [#allocation2], %s254
        %p256 = pneg %p55
        %p257 = pneg %p52
        %p258 = pneg %p81
        %p259 = pneg %p78
        %s260 = sand.u32 %s68, 1
        %s261 = sand.u32 %s68, 1
        %s262 = smul.addr %s261, 288
        %s263 = scalar_lea.vmem [#allocation3], %s262
        %s264 = smul.u32 18, %s13
        %s265 = smul.u32 18, %s13
        %v266 = vld [vmem:[%s0] sm:$0xff]
        %v267 = vld [vmem:[%s0 + $0x8] sm:$0xff]
        %v268 = vld [vmem:[%s246] sm:$0xff]
        %v269 = vld [vmem:[%s246 + $0x8] sm:$0xff]
        %v270 = vld [vmem:[%s246 + $0x10] sm:$0xff]
        %v271 = vld [vmem:[%s246 + $0x18] sm:$0xff]
        %v272 = vld [vmem:[%s246 + $0x20] sm:$0xff]
        %v273 = vld [vmem:[%s246 + $0x28] sm:$0xff]
        %v274 = vld [vmem:[%s246 + $0x30] sm:$0xff]
        %v275 = vld [vmem:[%s246 + $0x38] sm:$0xff]
        %v276 = vld [vmem:[%s246 + $0x40] sm:$0xff]
        %v277 = vld [vmem:[%s246 + $0x48] sm:$0xff]
        %v278 = vld [vmem:[%s246 + $0x50] sm:$0xff]
        %v279 = vld [vmem:[%s246 + $0x58] sm:$0xff]
        %v280 = vld [vmem:[%s246 + $0x60] sm:$0xff]
        %v281 = vld [vmem:[%s246 + $0x68] sm:$0xff]
        %v282 = vld [vmem:[%s246 + $0x70] sm:$0xff]
        %v283 = vld [vmem:[%s246 + $0x78] sm:$0xff]
        %v284 = vld [vmem:[%s246 + $0x80] sm:$0xff]
        %v285 = vld [vmem:[%s246 + $0x88] sm:$0xff]
        %v286 = vld [vmem:[%s246 + $0x90] sm:$0xff]
        %v287 = vld [vmem:[%s246 + $0x98] sm:$0xff]
        %v288 = vld [vmem:[%s246 + $0xa0] sm:$0xff]
        %v289 = vld [vmem:[%s246 + $0xa8] sm:$0xff]
        %v290 = vld [vmem:[%s246 + $0xb0] sm:$0xff]
        %v291 = vld [vmem:[%s246 + $0xb8] sm:$0xff]
        %v292 = vld [vmem:[%s246 + $0xc0] sm:$0xff]
        %v293 = vld [vmem:[%s246 + $0xc8] sm:$0xff]
        %v294 = vld [vmem:[%s246 + $0xd0] sm:$0xff]
        %v295 = vld [vmem:[%s246 + $0xd8] sm:$0xff]
        %v296 = vld [vmem:[%s246 + $0xe0] sm:$0xff]
        %v297 = vld [vmem:[%s246 + $0xe8] sm:$0xff]
        %v298 = vld [vmem:[%s246 + $0xf0] sm:$0xff]
        %v299 = vld [vmem:[%s246 + $0xf8] sm:$0xff]
        %v300 = vld [vmem:[%s246 + $0x100] sm:$0xff]
        %v301 = vld [vmem:[%s246 + $0x108] sm:$0xff]
        %v302 = vld [vmem:[%s246 + $0x110] sm:$0xff]
        %v303 = vld [vmem:[%s246 + $0x118] sm:$0xff]
        %v304 = vld [vmem:[%s246 + $0x120] sm:$0x3]
        %v305 = vld [vmem:[%s246 + $0x128] sm:$0x3]
        %v306 = vld [vmem:[%s246 + $0x130] sm:$0x3]
        %v307 = vld [vmem:[%s246 + $0x138] sm:$0x3]
        %v308 = vld [vmem:[%s246 + $0x140] sm:$0x3]
        %v309 = vld [vmem:[%s246 + $0x148] sm:$0x3]
        %v310 = vld [vmem:[%s246 + $0x150] sm:$0x3]
        %v311 = vld [vmem:[%s246 + $0x158] sm:$0x3]
        %v312 = vld [vmem:[%s246 + $0x160] sm:$0x3]
        %v313 = vld [vmem:[%s246 + $0x168] sm:$0x3]
        %v314 = vld [vmem:[%s246 + $0x170] sm:$0x3]
        %v315 = vld [vmem:[%s246 + $0x178] sm:$0x3]
        %v316 = vld [vmem:[%s246 + $0x180] sm:$0x3]
        %v317 = vld [vmem:[%s246 + $0x188] sm:$0x3]
        %v318 = vld [vmem:[%s246 + $0x190] sm:$0x3]
        %v319 = vld [vmem:[%s246 + $0x198] sm:$0x3]
        %v320 = vld [vmem:[%s246 + $0x1a0] sm:$0x3]
        %v321 = vld [vmem:[%s246 + $0x1a8] sm:$0x3]
        %vm322 = vcmask 146432
        %v324 = vsel %vm322, %v266, 0
        %v327 = vsel %vm322, %v267, 0
        %vm329 = vcmask 1041408
        %v331 = vsel %vm329, %v304, 0
        %v334 = vsel %vm329, %v305, 0
        %v337 = vsel %vm329, %v306, 0
        %v340 = vsel %vm329, %v307, 0
        %v343 = vsel %vm329, %v308, 0
        %v346 = vsel %vm329, %v309, 0
        %v349 = vsel %vm329, %v310, 0
        %v352 = vsel %vm329, %v311, 0
        %v355 = vsel %vm329, %v312, 0
        %v358 = vsel %vm329, %v313, 0
        %v361 = vsel %vm329, %v314, 0
        %v364 = vsel %vm329, %v315, 0
        %v367 = vsel %vm329, %v316, 0
        %v370 = vsel %vm329, %v317, 0
        %v373 = vsel %vm329, %v318, 0
        %v376 = vsel %vm329, %v319, 0
        %v379 = vsel %vm329, %v320, 0
        %v382 = vsel %vm329, %v321, 0
        %384 = vmatprep.subr.mxu0 0.0
        %385 = vmatpush1.msra.mxu0 0.0
        %386 = vmatprep.subr.mxu0 0.0
        %387 = vmatpush1.msra.mxu0 0.0
        %388 = vmatprep.subr.mxu0 0.0
        %389 = vmatpush1.msra.mxu0 0.0
        %390 = vmatprep.subr.mxu0 0.0
        %391 = vmatpush1.msra.mxu0 0.0
        %392 = vmatprep.subr.mxu0 0.0
        %393 = vmatpush1.msra.mxu0 0.0
        %394 = vmatprep.subr.mxu0 0.0
        %395 = vmatpush1.msra.mxu0 0.0
        %396 = vmatprep.subr.mxu0 0.0
        %397 = vmatpush1.msra.mxu0 0.0
        %398 = vmatprep.subr.mxu0 0.0
        %399 = vmatpush1.msra.mxu0 0.0
        %400 = vmatprep.subr.mxu0 0.0
        %401 = vmatpush1.msra.mxu0 0.0
        %402 = vmatprep.subr.mxu0 0.0
        %403 = vmatpush1.msra.mxu0 0.0
        %404 = vmatprep.subr.mxu0 0.0
        %405 = vmatpush1.msra.mxu0 0.0
        %406 = vmatprep.subr.mxu0 0.0
        %407 = vmatpush1.msra.mxu0 0.0
        %408 = vmatprep.subr.mxu0 0.0
        %409 = vmatpush1.msra.mxu0 0.0
        %410 = vmatprep.subr.mxu0 %v334
        %411 = vmatpush1.msra.mxu0 %v331
        %412 = vmatprep.subr.mxu0 %v287
        %413 = vmatpush1.msra.mxu0 %v286
        %414 = vmatprep.subr.mxu0 %v269
        %415 = vmatpush1.msra.mxu0 %v268
        %416 = vmatprep.subr.mxu0 0.0
        %417 = vmatpush2.msra.mxu0 0.0
        %418 = vmatprep.subr.mxu0 0.0
        %419 = vmatpush2.msra.mxu0 0.0
        %420 = vmatprep.subr.mxu0 0.0
        %421 = vmatpush2.msra.mxu0 0.0
        %422 = vmatprep.subr.mxu0 0.0
        %423 = vmatpush2.msra.mxu0 0.0
        %424 = vmatprep.subr.mxu0 0.0
        %425 = vmatpush2.msra.mxu0 0.0
        %426 = vmatprep.subr.mxu0 0.0
        %427 = vmatpush2.msra.mxu0 0.0
        %428 = vmatprep.subr.mxu0 0.0
        %429 = vmatpush2.msra.mxu0 0.0
        %430 = vmatprep.subr.mxu0 0.0
        %431 = vmatpush2.msra.mxu0 0.0
        %432 = vmatprep.subr.mxu0 0.0
        %433 = vmatpush2.msra.mxu0 0.0
        %434 = vmatprep.subr.mxu0 0.0
        %435 = vmatpush2.msra.mxu0 0.0
        %436 = vmatprep.subr.mxu0 0.0
        %437 = vmatpush2.msra.mxu0 0.0
        %438 = vmatprep.subr.mxu0 0.0
        %439 = vmatpush2.msra.mxu0 0.0
        %440 = vmatprep.subr.mxu0 0.0
        %441 = vmatpush2.msra.mxu0 0.0
        %442 = vmatprep.subr.mxu0 0.0
        %443 = vmatpush2.msra.mxu0 0.0
        %444 = vmatprep.subr.mxu0 0.0
        %445 = vmatpush2.msra.mxu0 0.0
        %446 = vmatprep.subr.mxu0 0.0
        %447 = vmatpush2.msra.mxu0 0.0
        %448 = vmatprep.mubr.f32.mxu0 0.0
        %449 = vmatmul.mubr.f32.gmra.mxu0 %v324
        %v450 = vpop.f32.mrf.mxu0
        %v451 = vadd.f32 0.0, %v450
        %v452 = vpop.f32.mrf.mxu0
        %v453 = vadd.f32 0.0, %v452
        %454 = vmatprep.mubr.f32.mxu0 0.0
        %455 = vmatmul.mubr.f32.gmra.mxu0 %v327
        %v456 = vpop.f32.mrf.mxu0
        %v457 = vadd.f32 0.0, %v456
        %v458 = vpop.f32.mrf.mxu0
        %v459 = vadd.f32 0.0, %v458
        %460 = vdwg.mxu0
        %461 = vmatprep.subr.mxu0 0.0
        %462 = vmatpush1.msra.mxu0 0.0
        %463 = vmatprep.subr.mxu0 0.0
        %464 = vmatpush1.msra.mxu0 0.0
        %465 = vmatprep.subr.mxu0 0.0
        %466 = vmatpush1.msra.mxu0 0.0
        %467 = vmatprep.subr.mxu0 0.0
        %468 = vmatpush1.msra.mxu0 0.0
        %469 = vmatprep.subr.mxu0 0.0
        %470 = vmatpush1.msra.mxu0 0.0
        %471 = vmatprep.subr.mxu0 0.0
        %472 = vmatpush1.msra.mxu0 0.0
        %473 = vmatprep.subr.mxu0 0.0
        %474 = vmatpush1.msra.mxu0 0.0
        %475 = vmatprep.subr.mxu0 0.0
        %476 = vmatpush1.msra.mxu0 0.0
        %477 = vmatprep.subr.mxu0 0.0
        %478 = vmatpush1.msra.mxu0 0.0
        %479 = vmatprep.subr.mxu0 0.0
        %480 = vmatpush1.msra.mxu0 0.0
        %481 = vmatprep.subr.mxu0 0.0
        %482 = vmatpush1.msra.mxu0 0.0
        %483 = vmatprep.subr.mxu0 0.0
        %484 = vmatpush1.msra.mxu0 0.0
        %485 = vmatprep.subr.mxu0 0.0
        %486 = vmatpush1.msra.mxu0 0.0
        %487 = vmatprep.subr.mxu0 %v340
        %488 = vmatpush1.msra.mxu0 %v337
        %489 = vmatprep.subr.mxu0 %v289
        %490 = vmatpush1.msra.mxu0 %v288
        %491 = vmatprep.subr.mxu0 %v271
        %492 = vmatpush1.msra.mxu0 %v270
        %493 = vmatprep.subr.mxu0 0.0
        %494 = vmatpush2.msra.mxu0 0.0
        %495 = vmatprep.subr.mxu0 0.0
        %496 = vmatpush2.msra.mxu0 0.0
        %497 = vmatprep.subr.mxu0 0.0
        %498 = vmatpush2.msra.mxu0 0.0
        %499 = vmatprep.subr.mxu0 0.0
        %500 = vmatpush2.msra.mxu0 0.0
        %501 = vmatprep.subr.mxu0 0.0
        %502 = vmatpush2.msra.mxu0 0.0
        %503 = vmatprep.subr.mxu0 0.0
        %504 = vmatpush2.msra.mxu0 0.0
        %505 = vmatprep.subr.mxu0 0.0
        %506 = vmatpush2.msra.mxu0 0.0
        %507 = vmatprep.subr.mxu0 0.0
        %508 = vmatpush2.msra.mxu0 0.0
        %509 = vmatprep.subr.mxu0 0.0
        %510 = vmatpush2.msra.mxu0 0.0
        %511 = vmatprep.subr.mxu0 0.0
        %512 = vmatpush2.msra.mxu0 0.0
        %513 = vmatprep.subr.mxu0 0.0
        %514 = vmatpush2.msra.mxu0 0.0
        %515 = vmatprep.subr.mxu0 0.0
        %516 = vmatpush2.msra.mxu0 0.0
        %517 = vmatprep.subr.mxu0 0.0
        %518 = vmatpush2.msra.mxu0 0.0
        %519 = vmatprep.subr.mxu0 0.0
        %520 = vmatpush2.msra.mxu0 0.0
        %521 = vmatprep.subr.mxu0 0.0
        %522 = vmatpush2.msra.mxu0 0.0
        %523 = vmatprep.subr.mxu0 0.0
        %524 = vmatpush2.msra.mxu0 0.0
        %525 = vmatprep.mubr.f32.mxu0 0.0
        %526 = vmatmul.mubr.f32.gmra.mxu0 %v324
        %v527 = vpop.f32.mrf.mxu0
        %v528 = vadd.f32 0.0, %v527
        %v529 = vpop.f32.mrf.mxu0
        %v530 = vadd.f32 0.0, %v529
        %531 = vmatprep.mubr.f32.mxu0 0.0
        %532 = vmatmul.mubr.f32.gmra.mxu0 %v327
        %v533 = vpop.f32.mrf.mxu0
        %v534 = vadd.f32 0.0, %v533
        %v535 = vpop.f32.mrf.mxu0
        %v536 = vadd.f32 0.0, %v535
        %537 = vdwg.mxu0
        %538 = vmatprep.subr.mxu0 0.0
        %539 = vmatpush1.msra.mxu0 0.0
        %540 = vmatprep.subr.mxu0 0.0
        %541 = vmatpush1.msra.mxu0 0.0
        %542 = vmatprep.subr.mxu0 0.0
        %543 = vmatpush1.msra.mxu0 0.0
        %544 = vmatprep.subr.mxu0 0.0
        %545 = vmatpush1.msra.mxu0 0.0
        %546 = vmatprep.subr.mxu0 0.0
        %547 = vmatpush1.msra.mxu0 0.0
        %548 = vmatprep.subr.mxu0 0.0
        %549 = vmatpush1.msra.mxu0 0.0
        %550 = vmatprep.subr.mxu0 0.0
        %551 = vmatpush1.msra.mxu0 0.0
        %552 = vmatprep.subr.mxu0 0.0
        %553 = vmatpush1.msra.mxu0 0.0
        %554 = vmatprep.subr.mxu0 0.0
        %555 = vmatpush1.msra.mxu0 0.0
        %556 = vmatprep.subr.mxu0 0.0
        %557 = vmatpush1.msra.mxu0 0.0
        %558 = vmatprep.subr.mxu0 0.0
        %559 = vmatpush1.msra.mxu0 0.0
        %560 = vmatprep.subr.mxu0 0.0
        %561 = vmatpush1.msra.mxu0 0.0
        %562 = vmatprep.subr.mxu0 0.0
        %563 = vmatpush1.msra.mxu0 0.0
        %564 = vmatprep.subr.mxu0 %v346
        %565 = vmatpush1.msra.mxu0 %v343
        %566 = vmatprep.subr.mxu0 %v291
        %567 = vmatpush1.msra.mxu0 %v290
        %568 = vmatprep.subr.mxu0 %v273
        %569 = vmatpush1.msra.mxu0 %v272
        %570 = vmatprep.subr.mxu0 0.0
        %571 = vmatpush2.msra.mxu0 0.0
        %572 = vmatprep.subr.mxu0 0.0
        %573 = vmatpush2.msra.mxu0 0.0
        %574 = vmatprep.subr.mxu0 0.0
        %575 = vmatpush2.msra.mxu0 0.0
        %576 = vmatprep.subr.mxu0 0.0
        %577 = vmatpush2.msra.mxu0 0.0
        %578 = vmatprep.subr.mxu0 0.0
        %579 = vmatpush2.msra.mxu0 0.0
        %580 = vmatprep.subr.mxu0 0.0
        %581 = vmatpush2.msra.mxu0 0.0
        %582 = vmatprep.subr.mxu0 0.0
        %583 = vmatpush2.msra.mxu0 0.0
        %584 = vmatprep.subr.mxu0 0.0
        %585 = vmatpush2.msra.mxu0 0.0
        %586 = vmatprep.subr.mxu0 0.0
        %587 = vmatpush2.msra.mxu0 0.0
        %588 = vmatprep.subr.mxu0 0.0
        %589 = vmatpush2.msra.mxu0 0.0
        %590 = vmatprep.subr.mxu0 0.0
        %591 = vmatpush2.msra.mxu0 0.0
        %592 = vmatprep.subr.mxu0 0.0
        %593 = vmatpush2.msra.mxu0 0.0
        %594 = vmatprep.subr.mxu0 0.0
        %595 = vmatpush2.msra.mxu0 0.0
        %596 = vmatprep.subr.mxu0 0.0
        %597 = vmatpush2.msra.mxu0 0.0
        %598 = vmatprep.subr.mxu0 0.0
        %599 = vmatpush2.msra.mxu0 0.0
        %600 = vmatprep.subr.mxu0 0.0
        %601 = vmatpush2.msra.mxu0 0.0
        %602 = vmatprep.mubr.f32.mxu0 0.0
        %603 = vmatmul.mubr.f32.gmra.mxu0 %v324
        %v604 = vpop.f32.mrf.mxu0
        %v605 = vadd.f32 0.0, %v604
        %v606 = vpop.f32.mrf.mxu0
        %v607 = vadd.f32 0.0, %v606
        %608 = vmatprep.mubr.f32.mxu0 0.0
        %609 = vmatmul.mubr.f32.gmra.mxu0 %v327
        %v610 = vpop.f32.mrf.mxu0
        %v611 = vadd.f32 0.0, %v610
        %v612 = vpop.f32.mrf.mxu0
        %v613 = vadd.f32 0.0, %v612
        %614 = vdwg.mxu0
        %615 = vmatprep.subr.mxu0 0.0
        %616 = vmatpush1.msra.mxu0 0.0
        %617 = vmatprep.subr.mxu0 0.0
        %618 = vmatpush1.msra.mxu0 0.0
        %619 = vmatprep.subr.mxu0 0.0
        %620 = vmatpush1.msra.mxu0 0.0
        %621 = vmatprep.subr.mxu0 0.0
        %622 = vmatpush1.msra.mxu0 0.0
        %623 = vmatprep.subr.mxu0 0.0
        %624 = vmatpush1.msra.mxu0 0.0
        %625 = vmatprep.subr.mxu0 0.0
        %626 = vmatpush1.msra.mxu0 0.0
        %627 = vmatprep.subr.mxu0 0.0
        %628 = vmatpush1.msra.mxu0 0.0
        %629 = vmatprep.subr.mxu0 0.0
        %630 = vmatpush1.msra.mxu0 0.0
        %631 = vmatprep.subr.mxu0 0.0
        %632 = vmatpush1.msra.mxu0 0.0
        %633 = vmatprep.subr.mxu0 0.0
        %634 = vmatpush1.msra.mxu0 0.0
        %635 = vmatprep.subr.mxu0 0.0
        %636 = vmatpush1.msra.mxu0 0.0
        %637 = vmatprep.subr.mxu0 0.0
        %638 = vmatpush1.msra.mxu0 0.0
        %639 = vmatprep.subr.mxu0 0.0
        %640 = vmatpush1.msra.mxu0 0.0
        %641 = vmatprep.subr.mxu0 %v352
        %642 = vmatpush1.msra.mxu0 %v349
        %643 = vmatprep.subr.mxu0 %v293
        %644 = vmatpush1.msra.mxu0 %v292
        %645 = vmatprep.subr.mxu0 %v275
        %646 = vmatpush1.msra.mxu0 %v274
        %647 = vmatprep.subr.mxu0 0.0
        %648 = vmatpush2.msra.mxu0 0.0
        %649 = vmatprep.subr.mxu0 0.0
        %650 = vmatpush2.msra.mxu0 0.0
        %651 = vmatprep.subr.mxu0 0.0
        %652 = vmatpush2.msra.mxu0 0.0
        %653 = vmatprep.subr.mxu0 0.0
        %654 = vmatpush2.msra.mxu0 0.0
        %655 = vmatprep.subr.mxu0 0.0
        %656 = vmatpush2.msra.mxu0 0.0
        %657 = vmatprep.subr.mxu0 0.0
        %658 = vmatpush2.msra.mxu0 0.0
        %659 = vmatprep.subr.mxu0 0.0
        %660 = vmatpush2.msra.mxu0 0.0
        %661 = vmatprep.subr.mxu0 0.0
        %662 = vmatpush2.msra.mxu0 0.0
        %663 = vmatprep.subr.mxu0 0.0
        %664 = vmatpush2.msra.mxu0 0.0
        %665 = vmatprep.subr.mxu0 0.0
        %666 = vmatpush2.msra.mxu0 0.0
        %667 = vmatprep.subr.mxu0 0.0
        %668 = vmatpush2.msra.mxu0 0.0
        %669 = vmatprep.subr.mxu0 0.0
        %670 = vmatpush2.msra.mxu0 0.0
        %671 = vmatprep.subr.mxu0 0.0
        %672 = vmatpush2.msra.mxu0 0.0
        %673 = vmatprep.subr.mxu0 0.0
        %674 = vmatpush2.msra.mxu0 0.0
        %675 = vmatprep.subr.mxu0 0.0
        %676 = vmatpush2.msra.mxu0 0.0
        %677 = vmatprep.subr.mxu0 0.0
        %678 = vmatpush2.msra.mxu0 0.0
        %679 = vmatprep.mubr.f32.mxu0 0.0
        %680 = vmatmul.mubr.f32.gmra.mxu0 %v324
        %v681 = vpop.f32.mrf.mxu0
        %v682 = vadd.f32 0.0, %v681
        %v683 = vpop.f32.mrf.mxu0
        %v684 = vadd.f32 0.0, %v683
        %685 = vmatprep.mubr.f32.mxu0 0.0
        %686 = vmatmul.mubr.f32.gmra.mxu0 %v327
        %v687 = vpop.f32.mrf.mxu0
        %v688 = vadd.f32 0.0, %v687
        %v689 = vpop.f32.mrf.mxu0
        %v690 = vadd.f32 0.0, %v689
        %691 = vdwg.mxu0
        %692 = vmatprep.subr.mxu0 0.0
        %693 = vmatpush1.msra.mxu0 0.0
        %694 = vmatprep.subr.mxu0 0.0
        %695 = vmatpush1.msra.mxu0 0.0
        %696 = vmatprep.subr.mxu0 0.0
        %697 = vmatpush1.msra.mxu0 0.0
        %698 = vmatprep.subr.mxu0 0.0
        %699 = vmatpush1.msra.mxu0 0.0
        %700 = vmatprep.subr.mxu0 0.0
        %701 = vmatpush1.msra.mxu0 0.0
        %702 = vmatprep.subr.mxu0 0.0
        %703 = vmatpush1.msra.mxu0 0.0
        %704 = vmatprep.subr.mxu0 0.0
        %705 = vmatpush1.msra.mxu0 0.0
        %706 = vmatprep.subr.mxu0 0.0
        %707 = vmatpush1.msra.mxu0 0.0
        %708 = vmatprep.subr.mxu0 0.0
        %709 = vmatpush1.msra.mxu0 0.0
        %710 = vmatprep.subr.mxu0 0.0
        %711 = vmatpush1.msra.mxu0 0.0
        %712 = vmatprep.subr.mxu0 0.0
        %713 = vmatpush1.msra.mxu0 0.0
        %714 = vmatprep.subr.mxu0 0.0
        %715 = vmatpush1.msra.mxu0 0.0
        %716 = vmatprep.subr.mxu0 0.0
        %717 = vmatpush1.msra.mxu0 0.0
        %718 = vmatprep.subr.mxu0 %v358
        %719 = vmatpush1.msra.mxu0 %v355
        %720 = vmatprep.subr.mxu0 %v295
        %721 = vmatpush1.msra.mxu0 %v294
        %722 = vmatprep.subr.mxu0 %v277
        %723 = vmatpush1.msra.mxu0 %v276
        %724 = vmatprep.subr.mxu0 0.0
        %725 = vmatpush2.msra.mxu0 0.0
        %726 = vmatprep.subr.mxu0 0.0
        %727 = vmatpush2.msra.mxu0 0.0
        %728 = vmatprep.subr.mxu0 0.0
        %729 = vmatpush2.msra.mxu0 0.0
        %730 = vmatprep.subr.mxu0 0.0
        %731 = vmatpush2.msra.mxu0 0.0
        %732 = vmatprep.subr.mxu0 0.0
        %733 = vmatpush2.msra.mxu0 0.0
        %734 = vmatprep.subr.mxu0 0.0
        %735 = vmatpush2.msra.mxu0 0.0
        %736 = vmatprep.subr.mxu0 0.0
        %737 = vmatpush2.msra.mxu0 0.0
        %738 = vmatprep.subr.mxu0 0.0
        %739 = vmatpush2.msra.mxu0 0.0
        %740 = vmatprep.subr.mxu0 0.0
        %741 = vmatpush2.msra.mxu0 0.0
        %742 = vmatprep.subr.mxu0 0.0
        %743 = vmatpush2.msra.mxu0 0.0
        %744 = vmatprep.subr.mxu0 0.0
        %745 = vmatpush2.msra.mxu0 0.0
        %746 = vmatprep.subr.mxu0 0.0
        %747 = vmatpush2.msra.mxu0 0.0
        %748 = vmatprep.subr.mxu0 0.0
        %749 = vmatpush2.msra.mxu0 0.0
        %750 = vmatprep.subr.mxu0 0.0
        %751 = vmatpush2.msra.mxu0 0.0
        %752 = vmatprep.subr.mxu0 0.0
        %753 = vmatpush2.msra.mxu0 0.0
        %754 = vmatprep.subr.mxu0 0.0
        %755 = vmatpush2.msra.mxu0 0.0
        %756 = vmatprep.mubr.f32.mxu0 0.0
        %757 = vmatmul.mubr.f32.gmra.mxu0 %v324
        %v758 = vpop.f32.mrf.mxu0
        %v759 = vadd.f32 0.0, %v758
        %v760 = vpop.f32.mrf.mxu0
        %v761 = vadd.f32 0.0, %v760
        %762 = vmatprep.mubr.f32.mxu0 0.0
        %763 = vmatmul.mubr.f32.gmra.mxu0 %v327
        %v764 = vpop.f32.mrf.mxu0
        %v765 = vadd.f32 0.0, %v764
        %v766 = vpop.f32.mrf.mxu0
        %v767 = vadd.f32 0.0, %v766
        %768 = vdwg.mxu0
        %769 = vmatprep.subr.mxu0 0.0
        %770 = vmatpush1.msra.mxu0 0.0
        %771 = vmatprep.subr.mxu0 0.0
        %772 = vmatpush1.msra.mxu0 0.0
        %773 = vmatprep.subr.mxu0 0.0
        %774 = vmatpush1.msra.mxu0 0.0
        %775 = vmatprep.subr.mxu0 0.0
        %776 = vmatpush1.msra.mxu0 0.0
        %777 = vmatprep.subr.mxu0 0.0
        %778 = vmatpush1.msra.mxu0 0.0
        %779 = vmatprep.subr.mxu0 0.0
        %780 = vmatpush1.msra.mxu0 0.0
        %781 = vmatprep.subr.mxu0 0.0
        %782 = vmatpush1.msra.mxu0 0.0
        %783 = vmatprep.subr.mxu0 0.0
        %784 = vmatpush1.msra.mxu0 0.0
        %785 = vmatprep.subr.mxu0 0.0
        %786 = vmatpush1.msra.mxu0 0.0
        %787 = vmatprep.subr.mxu0 0.0
        %788 = vmatpush1.msra.mxu0 0.0
        %789 = vmatprep.subr.mxu0 0.0
        %790 = vmatpush1.msra.mxu0 0.0
        %791 = vmatprep.subr.mxu0 0.0
        %792 = vmatpush1.msra.mxu0 0.0
        %793 = vmatprep.subr.mxu0 0.0
        %794 = vmatpush1.msra.mxu0 0.0
        %795 = vmatprep.subr.mxu0 %v364
        %796 = vmatpush1.msra.mxu0 %v361
        %797 = vmatprep.subr.mxu0 %v297
        %798 = vmatpush1.msra.mxu0 %v296
        %799 = vmatprep.subr.mxu0 %v279
        %800 = vmatpush1.msra.mxu0 %v278
        %801 = vmatprep.subr.mxu0 0.0
        %802 = vmatpush2.msra.mxu0 0.0
        %803 = vmatprep.subr.mxu0 0.0
        %804 = vmatpush2.msra.mxu0 0.0
        %805 = vmatprep.subr.mxu0 0.0
        %806 = vmatpush2.msra.mxu0 0.0
        %807 = vmatprep.subr.mxu0 0.0
        %808 = vmatpush2.msra.mxu0 0.0
        %809 = vmatprep.subr.mxu0 0.0
        %810 = vmatpush2.msra.mxu0 0.0
        %811 = vmatprep.subr.mxu0 0.0
        %812 = vmatpush2.msra.mxu0 0.0
        %813 = vmatprep.subr.mxu0 0.0
        %814 = vmatpush2.msra.mxu0 0.0
        %815 = vmatprep.subr.mxu0 0.0
        %816 = vmatpush2.msra.mxu0 0.0
        %817 = vmatprep.subr.mxu0 0.0
        %818 = vmatpush2.msra.mxu0 0.0
        %819 = vmatprep.subr.mxu0 0.0
        %820 = vmatpush2.msra.mxu0 0.0
        %821 = vmatprep.subr.mxu0 0.0
        %822 = vmatpush2.msra.mxu0 0.0
        %823 = vmatprep.subr.mxu0 0.0
        %824 = vmatpush2.msra.mxu0 0.0
        %825 = vmatprep.subr.mxu0 0.0
        %826 = vmatpush2.msra.mxu0 0.0
        %827 = vmatprep.subr.mxu0 0.0
        %828 = vmatpush2.msra.mxu0 0.0
        %829 = vmatprep.subr.mxu0 0.0
        %830 = vmatpush2.msra.mxu0 0.0
        %831 = vmatprep.subr.mxu0 0.0
        %832 = vmatpush2.msra.mxu0 0.0
        %833 = vmatprep.mubr.f32.mxu0 0.0
        %834 = vmatmul.mubr.f32.gmra.mxu0 %v324
        %v835 = vpop.f32.mrf.mxu0
        %v836 = vadd.f32 0.0, %v835
        %v837 = vpop.f32.mrf.mxu0
        %v838 = vadd.f32 0.0, %v837
        %839 = vmatprep.mubr.f32.mxu0 0.0
        %840 = vmatmul.mubr.f32.gmra.mxu0 %v327
        %v841 = vpop.f32.mrf.mxu0
        %v842 = vadd.f32 0.0, %v841
        %v843 = vpop.f32.mrf.mxu0
        %v844 = vadd.f32 0.0, %v843
        %845 = vdwg.mxu0
        %846 = vmatprep.subr.mxu0 0.0
        %847 = vmatpush1.msra.mxu0 0.0
        %848 = vmatprep.subr.mxu0 0.0
        %849 = vmatpush1.msra.mxu0 0.0
        %850 = vmatprep.subr.mxu0 0.0
        %851 = vmatpush1.msra.mxu0 0.0
        %852 = vmatprep.subr.mxu0 0.0
        %853 = vmatpush1.msra.mxu0 0.0
        %854 = vmatprep.subr.mxu0 0.0
        %855 = vmatpush1.msra.mxu0 0.0
        %856 = vmatprep.subr.mxu0 0.0
        %857 = vmatpush1.msra.mxu0 0.0
        %858 = vmatprep.subr.mxu0 0.0
        %859 = vmatpush1.msra.mxu0 0.0
        %860 = vmatprep.subr.mxu0 0.0
        %861 = vmatpush1.msra.mxu0 0.0
        %862 = vmatprep.subr.mxu0 0.0
        %863 = vmatpush1.msra.mxu0 0.0
        %864 = vmatprep.subr.mxu0 0.0
        %865 = vmatpush1.msra.mxu0 0.0
        %866 = vmatprep.subr.mxu0 0.0
        %867 = vmatpush1.msra.mxu0 0.0
        %868 = vmatprep.subr.mxu0 0.0
        %869 = vmatpush1.msra.mxu0 0.0
        %870 = vmatprep.subr.mxu0 0.0
        %871 = vmatpush1.msra.mxu0 0.0
        %872 = vmatprep.subr.mxu0 %v370
        %873 = vmatpush1.msra.mxu0 %v367
        %874 = vmatprep.subr.mxu0 %v299
        %875 = vmatpush1.msra.mxu0 %v298
        %876 = vmatprep.subr.mxu0 %v281
        %877 = vmatpush1.msra.mxu0 %v280
        %878 = vmatprep.subr.mxu0 0.0
        %879 = vmatpush2.msra.mxu0 0.0
        %880 = vmatprep.subr.mxu0 0.0
        %881 = vmatpush2.msra.mxu0 0.0
        %882 = vmatprep.subr.mxu0 0.0
        %883 = vmatpush2.msra.mxu0 0.0
        %884 = vmatprep.subr.mxu0 0.0
        %885 = vmatpush2.msra.mxu0 0.0
        %886 = vmatprep.subr.mxu0 0.0
        %887 = vmatpush2.msra.mxu0 0.0
        %888 = vmatprep.subr.mxu0 0.0
        %889 = vmatpush2.msra.mxu0 0.0
        %890 = vmatprep.subr.mxu0 0.0
        %891 = vmatpush2.msra.mxu0 0.0
        %892 = vmatprep.subr.mxu0 0.0
        %893 = vmatpush2.msra.mxu0 0.0
        %894 = vmatprep.subr.mxu0 0.0
        %895 = vmatpush2.msra.mxu0 0.0
        %896 = vmatprep.subr.mxu0 0.0
        %897 = vmatpush2.msra.mxu0 0.0
        %898 = vmatprep.subr.mxu0 0.0
        %899 = vmatpush2.msra.mxu0 0.0
        %900 = vmatprep.subr.mxu0 0.0
        %901 = vmatpush2.msra.mxu0 0.0
        %902 = vmatprep.subr.mxu0 0.0
        %903 = vmatpush2.msra.mxu0 0.0
        %904 = vmatprep.subr.mxu0 0.0
        %905 = vmatpush2.msra.mxu0 0.0
        %906 = vmatprep.subr.mxu0 0.0
        %907 = vmatpush2.msra.mxu0 0.0
        %908 = vmatprep.subr.mxu0 0.0
        %909 = vmatpush2.msra.mxu0 0.0
        %910 = vmatprep.mubr.f32.mxu0 0.0
        %911 = vmatmul.mubr.f32.gmra.mxu0 %v324
        %v912 = vpop.f32.mrf.mxu0
        %v913 = vadd.f32 0.0, %v912
        %v914 = vpop.f32.mrf.mxu0
        %v915 = vadd.f32 0.0, %v914
        %916 = vmatprep.mubr.f32.mxu0 0.0
        %917 = vmatmul.mubr.f32.gmra.mxu0 %v327
        %v918 = vpop.f32.mrf.mxu0
        %v919 = vadd.f32 0.0, %v918
        %v920 = vpop.f32.mrf.mxu0
        %v921 = vadd.f32 0.0, %v920
        %922 = vdwg.mxu0
        %923 = vmatprep.subr.mxu0 0.0
        %924 = vmatpush1.msra.mxu0 0.0
        %925 = vmatprep.subr.mxu0 0.0
        %926 = vmatpush1.msra.mxu0 0.0
        %927 = vmatprep.subr.mxu0 0.0
        %928 = vmatpush1.msra.mxu0 0.0
        %929 = vmatprep.subr.mxu0 0.0
        %930 = vmatpush1.msra.mxu0 0.0
        %931 = vmatprep.subr.mxu0 0.0
        %932 = vmatpush1.msra.mxu0 0.0
        %933 = vmatprep.subr.mxu0 0.0
        %934 = vmatpush1.msra.mxu0 0.0
        %935 = vmatprep.subr.mxu0 0.0
        %936 = vmatpush1.msra.mxu0 0.0
        %937 = vmatprep.subr.mxu0 0.0
        %938 = vmatpush1.msra.mxu0 0.0
        %939 = vmatprep.subr.mxu0 0.0
        %940 = vmatpush1.msra.mxu0 0.0
        %941 = vmatprep.subr.mxu0 0.0
        %942 = vmatpush1.msra.mxu0 0.0
        %943 = vmatprep.subr.mxu0 0.0
        %944 = vmatpush1.msra.mxu0 0.0
        %945 = vmatprep.subr.mxu0 0.0
        %946 = vmatpush1.msra.mxu0 0.0
        %947 = vmatprep.subr.mxu0 0.0
        %948 = vmatpush1.msra.mxu0 0.0
        %949 = vmatprep.subr.mxu0 %v376
        %950 = vmatpush1.msra.mxu0 %v373
        %951 = vmatprep.subr.mxu0 %v301
        %952 = vmatpush1.msra.mxu0 %v300
        %953 = vmatprep.subr.mxu0 %v283
        %954 = vmatpush1.msra.mxu0 %v282
        %955 = vmatprep.subr.mxu0 0.0
        %956 = vmatpush2.msra.mxu0 0.0
        %957 = vmatprep.subr.mxu0 0.0
        %958 = vmatpush2.msra.mxu0 0.0
        %959 = vmatprep.subr.mxu0 0.0
        %960 = vmatpush2.msra.mxu0 0.0
        %961 = vmatprep.subr.mxu0 0.0
        %962 = vmatpush2.msra.mxu0 0.0
        %963 = vmatprep.subr.mxu0 0.0
        %964 = vmatpush2.msra.mxu0 0.0
        %965 = vmatprep.subr.mxu0 0.0
        %966 = vmatpush2.msra.mxu0 0.0
        %967 = vmatprep.subr.mxu0 0.0
        %968 = vmatpush2.msra.mxu0 0.0
        %969 = vmatprep.subr.mxu0 0.0
        %970 = vmatpush2.msra.mxu0 0.0
        %971 = vmatprep.subr.mxu0 0.0
        %972 = vmatpush2.msra.mxu0 0.0
        %973 = vmatprep.subr.mxu0 0.0
        %974 = vmatpush2.msra.mxu0 0.0
        %975 = vmatprep.subr.mxu0 0.0
        %976 = vmatpush2.msra.mxu0 0.0
        %977 = vmatprep.subr.mxu0 0.0
        %978 = vmatpush2.msra.mxu0 0.0
        %979 = vmatprep.subr.mxu0 0.0
        %980 = vmatpush2.msra.mxu0 0.0
        %981 = vmatprep.subr.mxu0 0.0
        %982 = vmatpush2.msra.mxu0 0.0
        %983 = vmatprep.subr.mxu0 0.0
        %984 = vmatpush2.msra.mxu0 0.0
        %985 = vmatprep.subr.mxu0 0.0
        %986 = vmatpush2.msra.mxu0 0.0
        %987 = vmatprep.mubr.f32.mxu0 0.0
        %988 = vmatmul.mubr.f32.gmra.mxu0 %v324
        %v989 = vpop.f32.mrf.mxu0
        %v990 = vadd.f32 0.0, %v989
        %v991 = vpop.f32.mrf.mxu0
        %v992 = vadd.f32 0.0, %v991
        %993 = vmatprep.mubr.f32.mxu0 0.0
        %994 = vmatmul.mubr.f32.gmra.mxu0 %v327
        %v995 = vpop.f32.mrf.mxu0
        %v996 = vadd.f32 0.0, %v995
        %v997 = vpop.f32.mrf.mxu0
        %v998 = vadd.f32 0.0, %v997
        %999 = vdwg.mxu0
        %1000 = vmatprep.subr.mxu0 0.0
        %1001 = vmatpush1.msra.mxu0 0.0
        %1002 = vmatprep.subr.mxu0 0.0
        %1003 = vmatpush1.msra.mxu0 0.0
        %1004 = vmatprep.subr.mxu0 0.0
        %1005 = vmatpush1.msra.mxu0 0.0
        %1006 = vmatprep.subr.mxu0 0.0
        %1007 = vmatpush1.msra.mxu0 0.0
        %1008 = vmatprep.subr.mxu0 0.0
        %1009 = vmatpush1.msra.mxu0 0.0
        %1010 = vmatprep.subr.mxu0 0.0
        %1011 = vmatpush1.msra.mxu0 0.0
        %1012 = vmatprep.subr.mxu0 0.0
        %1013 = vmatpush1.msra.mxu0 0.0
        %1014 = vmatprep.subr.mxu0 0.0
        %1015 = vmatpush1.msra.mxu0 0.0
        %1016 = vmatprep.subr.mxu0 0.0
        %1017 = vmatpush1.msra.mxu0 0.0
        %1018 = vmatprep.subr.mxu0 0.0
        %1019 = vmatpush1.msra.mxu0 0.0
        %1020 = vmatprep.subr.mxu0 0.0
        %1021 = vmatpush1.msra.mxu0 0.0
        %1022 = vmatprep.subr.mxu0 0.0
        %1023 = vmatpush1.msra.mxu0 0.0
        %1024 = vmatprep.subr.mxu0 0.0
        %1025 = vmatpush1.msra.mxu0 0.0
        %1026 = vmatprep.subr.mxu0 %v382
        %1027 = vmatpush1.msra.mxu0 %v379
        %1028 = vmatprep.subr.mxu0 %v303
        %1029 = vmatpush1.msra.mxu0 %v302
        %1030 = vmatprep.subr.mxu0 %v285
        %1031 = vmatpush1.msra.mxu0 %v284
        %1032 = vmatprep.subr.mxu0 0.0
        %1033 = vmatpush2.msra.mxu0 0.0
        %1034 = vmatprep.subr.mxu0 0.0
        %1035 = vmatpush2.msra.mxu0 0.0
        %1036 = vmatprep.subr.mxu0 0.0
        %1037 = vmatpush2.msra.mxu0 0.0
        %1038 = vmatprep.subr.mxu0 0.0
        %1039 = vmatpush2.msra.mxu0 0.0
        %1040 = vmatprep.subr.mxu0 0.0
        %1041 = vmatpush2.msra.mxu0 0.0
        %1042 = vmatprep.subr.mxu0 0.0
        %1043 = vmatpush2.msra.mxu0 0.0
        %1044 = vmatprep.subr.mxu0 0.0
        %1045 = vmatpush2.msra.mxu0 0.0
        %1046 = vmatprep.subr.mxu0 0.0
        %1047 = vmatpush2.msra.mxu0 0.0
        %1048 = vmatprep.subr.mxu0 0.0
        %1049 = vmatpush2.msra.mxu0 0.0
        %1050 = vmatprep.subr.mxu0 0.0
        %1051 = vmatpush2.msra.mxu0 0.0
        %1052 = vmatprep.subr.mxu0 0.0
        %1053 = vmatpush2.msra.mxu0 0.0
        %1054 = vmatprep.subr.mxu0 0.0
        %1055 = vmatpush2.msra.mxu0 0.0
        %1056 = vmatprep.subr.mxu0 0.0
        %1057 = vmatpush2.msra.mxu0 0.0
        %1058 = vmatprep.subr.mxu0 0.0
        %1059 = vmatpush2.msra.mxu0 0.0
        %1060 = vmatprep.subr.mxu0 0.0
        %1061 = vmatpush2.msra.mxu0 0.0
        %1062 = vmatprep.subr.mxu0 0.0
        %1063 = vmatpush2.msra.mxu0 0.0
        %1064 = vmatprep.mubr.f32.mxu0 0.0
        %1065 = vmatmul.mubr.f32.gmra.mxu0 %v324
        %v1066 = vpop.f32.mrf.mxu0
        %v1067 = vadd.f32 0.0, %v1066
        %v1068 = vpop.f32.mrf.mxu0
        %v1069 = vadd.f32 0.0, %v1068
        %1070 = vmatprep.mubr.f32.mxu0 0.0
        %1071 = vmatmul.mubr.f32.gmra.mxu0 %v327
        %v1072 = vpop.f32.mrf.mxu0
        %v1073 = vadd.f32 0.0, %v1072
        %v1074 = vpop.f32.mrf.mxu0
        %v1075 = vadd.f32 0.0, %v1074
        %1076 = vdwg.mxu0
        %1077 = vst [vmem:[%s263] sm:$0xff] %v451
        %1078 = vst [vmem:[%s263 + $0x8] sm:$0xff] %v453
        %1079 = vst [vmem:[%s263 + $0x10] sm:$0xff] %v528
        %1080 = vst [vmem:[%s263 + $0x18] sm:$0xff] %v530
        %1081 = vst [vmem:[%s263 + $0x20] sm:$0xff] %v605
        %1082 = vst [vmem:[%s263 + $0x28] sm:$0xff] %v607
        %1083 = vst [vmem:[%s263 + $0x30] sm:$0xff] %v682
        %1084 = vst [vmem:[%s263 + $0x38] sm:$0xff] %v684
        %1085 = vst [vmem:[%s263 + $0x40] sm:$0xff] %v759
        %1086 = vst [vmem:[%s263 + $0x48] sm:$0xff] %v761
        %1087 = vst [vmem:[%s263 + $0x50] sm:$0xff] %v836
        %1088 = vst [vmem:[%s263 + $0x58] sm:$0xff] %v838
        %1089 = vst [vmem:[%s263 + $0x60] sm:$0xff] %v913
        %1090 = vst [vmem:[%s263 + $0x68] sm:$0xff] %v915
        %1091 = vst [vmem:[%s263 + $0x70] sm:$0xff] %v990
        %1092 = vst [vmem:[%s263 + $0x78] sm:$0xff] %v992
        %1093 = vst [vmem:[%s263 + $0x80] sm:$0xff] %v1067
        %1094 = vst [vmem:[%s263 + $0x88] sm:$0xff] %v1069
        %1095 = vst [vmem:[%s263 + $0x90] sm:$0xff] %v457
        %1096 = vst [vmem:[%s263 + $0x98] sm:$0xff] %v459
        %1097 = vst [vmem:[%s263 + $0xa0] sm:$0xff] %v534
        %1098 = vst [vmem:[%s263 + $0xa8] sm:$0xff] %v536
        %1099 = vst [vmem:[%s263 + $0xb0] sm:$0xff] %v611
        %1100 = vst [vmem:[%s263 + $0xb8] sm:$0xff] %v613
        %1101 = vst [vmem:[%s263 + $0xc0] sm:$0xff] %v688
        %1102 = vst [vmem:[%s263 + $0xc8] sm:$0xff] %v690
        %1103 = vst [vmem:[%s263 + $0xd0] sm:$0xff] %v765
        %1104 = vst [vmem:[%s263 + $0xd8] sm:$0xff] %v767
        %1105 = vst [vmem:[%s263 + $0xe0] sm:$0xff] %v842
        %1106 = vst [vmem:[%s263 + $0xe8] sm:$0xff] %v844
        %1107 = vst [vmem:[%s263 + $0xf0] sm:$0xff] %v919
        %1108 = vst [vmem:[%s263 + $0xf8] sm:$0xff] %v921
        %1109 = vst [vmem:[%s263 + $0x100] sm:$0xff] %v996
        %1110 = vst [vmem:[%s263 + $0x108] sm:$0xff] %v998
        %1111 = vst [vmem:[%s263 + $0x110] sm:$0xff] %v1073
        %1112 = vst [vmem:[%s263 + $0x118] sm:$0xff] %v1075
        %s1113 = sand.u32 %s68, 1
        %s1114 = sand.u32 %s68, 1
        %s1115 = smul.addr %s1114, 288
        %s1116 = scalar_lea.vmem [#allocation3], %s1115
        // Predicated region
        $region52: #{enc_forward.5} parent=46 // pred_check
          %p1117 = pneg %p78
        $region53: #{enc_forward.5} parent=46 // pred_check_branch
          %1119 = sbr.rel (%p1117) target = $region55
        $region54: #{enc_forward.5} parent=46 // pred_region
          %s1120 = smul.u32 18, %s13
          %s1121 = smul.addr %s1120, 8
          %s1122 = scalar_lea.vmem %s2, %s1121
          // Predicated region
          $region56: #{enc_forward.5} parent=54 // pred_check
            _
          $region57: #{enc_forward.5} parent=54 // pred_check_branch
            %1124 = sbr.rel (0) target = $region59
          $region58: #{enc_forward.5} parent=54 // pred_region
            // Predicated region
            $region60: #{enc_forward.5} parent=58 // pred_check
              _
            $region61: #{enc_forward.5} parent=58 // pred_check_branch
              %1126 = sbr.rel (0) target = $region63
            $region62: #{enc_forward.5} parent=58 // pred_region
              loop: start=0, step=1, limit=1
              $region64: #{enc_forward.5} parent=62 // loop_pre_header
                _
              $region65: #{enc_forward.5} parent=62 // loop_header
                %s1128 = sphi 0, %s1132
                %p1129 = scmp.ge.s32.totalorder %s1128, 1
                %s1133 = sphi %s1116, %s1116
                %s1134 = sphi %s1122, %s1122
              $region66: #{enc_forward.5} parent=62 // loop_header_branch
                %1131 = sbr.rel (%p1129) target = $region70
              $region67: #{enc_forward.5} parent=62 // loop_body
                %v1135 = vld [vmem:[%s1133] sm:$0xff]
                %1136 = vst [vmem:[%s1134] sm:$0xff] %v1135
                %v1137 = vld [vmem:[%s1133 + $0x8] sm:$0xff]
                %1138 = vst [vmem:[%s1134 + $0x8] sm:$0xff] %v1137
                %v1139 = vld [vmem:[%s1133 + $0x10] sm:$0xff]
                %1140 = vst [vmem:[%s1134 + $0x10] sm:$0xff] %v1139
                %v1141 = vld [vmem:[%s1133 + $0x18] sm:$0xff]
                %1142 = vst [vmem:[%s1134 + $0x18] sm:$0xff] %v1141
                %v1143 = vld [vmem:[%s1133 + $0x20] sm:$0xff]
                %1144 = vst [vmem:[%s1134 + $0x20] sm:$0xff] %v1143
                %v1145 = vld [vmem:[%s1133 + $0x28] sm:$0xff]
                %1146 = vst [vmem:[%s1134 + $0x28] sm:$0xff] %v1145
                %v1147 = vld [vmem:[%s1133 + $0x30] sm:$0xff]
                %1148 = vst [vmem:[%s1134 + $0x30] sm:$0xff] %v1147
                %v1149 = vld [vmem:[%s1133 + $0x38] sm:$0xff]
                %1150 = vst [vmem:[%s1134 + $0x38] sm:$0xff] %v1149
                %v1151 = vld [vmem:[%s1133 + $0x40] sm:$0xff]
                %1152 = vst [vmem:[%s1134 + $0x40] sm:$0xff] %v1151
                %v1153 = vld [vmem:[%s1133 + $0x48] sm:$0xff]
                %1154 = vst [vmem:[%s1134 + $0x48] sm:$0xff] %v1153
                %v1155 = vld [vmem:[%s1133 + $0x50] sm:$0xff]
                %1156 = vst [vmem:[%s1134 + $0x50] sm:$0xff] %v1155
                %v1157 = vld [vmem:[%s1133 + $0x58] sm:$0xff]
                %1158 = vst [vmem:[%s1134 + $0x58] sm:$0xff] %v1157
                %v1159 = vld [vmem:[%s1133 + $0x60] sm:$0xff]
                %1160 = vst [vmem:[%s1134 + $0x60] sm:$0xff] %v1159
                %v1161 = vld [vmem:[%s1133 + $0x68] sm:$0xff]
                %1162 = vst [vmem:[%s1134 + $0x68] sm:$0xff] %v1161
                %v1163 = vld [vmem:[%s1133 + $0x70] sm:$0xff]
                %1164 = vst [vmem:[%s1134 + $0x70] sm:$0xff] %v1163
                %v1165 = vld [vmem:[%s1133 + $0x78] sm:$0xff]
                %1166 = vst [vmem:[%s1134 + $0x78] sm:$0xff] %v1165
                %v1167 = vld [vmem:[%s1133 + $0x80] sm:$0xff]
                %1168 = vst [vmem:[%s1134 + $0x80] sm:$0xff] %v1167
                %v1169 = vld [vmem:[%s1133 + $0x88] sm:$0xff]
                %1170 = vst [vmem:[%s1134 + $0x88] sm:$0xff] %v1169
                %v1171 = vld [vmem:[%s1133 + $0x90] sm:$0xff]
                %1172 = vst [vmem:[%s1134 + $0x360] sm:$0xff] %v1171
                %v1173 = vld [vmem:[%s1133 + $0x98] sm:$0xff]
                %1174 = vst [vmem:[%s1134 + $0x368] sm:$0xff] %v1173
                %v1175 = vld [vmem:[%s1133 + $0xa0] sm:$0xff]
                %1176 = vst [vmem:[%s1134 + $0x370] sm:$0xff] %v1175
                %v1177 = vld [vmem:[%s1133 + $0xa8] sm:$0xff]
                %1178 = vst [vmem:[%s1134 + $0x378] sm:$0xff] %v1177
                %v1179 = vld [vmem:[%s1133 + $0xb0] sm:$0xff]
                %1180 = vst [vmem:[%s1134 + $0x380] sm:$0xff] %v1179
                %v1181 = vld [vmem:[%s1133 + $0xb8] sm:$0xff]
                %1182 = vst [vmem:[%s1134 + $0x388] sm:$0xff] %v1181
                %v1183 = vld [vmem:[%s1133 + $0xc0] sm:$0xff]
                %1184 = vst [vmem:[%s1134 + $0x390] sm:$0xff] %v1183
                %v1185 = vld [vmem:[%s1133 + $0xc8] sm:$0xff]
                %1186 = vst [vmem:[%s1134 + $0x398] sm:$0xff] %v1185
                %v1187 = vld [vmem:[%s1133 + $0xd0] sm:$0xff]
                %1188 = vst [vmem:[%s1134 + $0x3a0] sm:$0xff] %v1187
                %v1189 = vld [vmem:[%s1133 + $0xd8] sm:$0xff]
                %1190 = vst [vmem:[%s1134 + $0x3a8] sm:$0xff] %v1189
                %v1191 = vld [vmem:[%s1133 + $0xe0] sm:$0xff]
                %1192 = vst [vmem:[%s1134 + $0x3b0] sm:$0xff] %v1191
                %v1193 = vld [vmem:[%s1133 + $0xe8] sm:$0xff]
                %1194 = vst [vmem:[%s1134 + $0x3b8] sm:$0xff] %v1193
                %v1195 = vld [vmem:[%s1133 + $0xf0] sm:$0xff]
                %1196 = vst [vmem:[%s1134 + $0x3c0] sm:$0xff] %v1195
                %v1197 = vld [vmem:[%s1133 + $0xf8] sm:$0xff]
                %1198 = vst [vmem:[%s1134 + $0x3c8] sm:$0xff] %v1197
                %v1199 = vld [vmem:[%s1133 + $0x100] sm:$0xff]
                %1200 = vst [vmem:[%s1134 + $0x3d0] sm:$0xff] %v1199
                %v1201 = vld [vmem:[%s1133 + $0x108] sm:$0xff]
                %1202 = vst [vmem:[%s1134 + $0x3d8] sm:$0xff] %v1201
                %v1203 = vld [vmem:[%s1133 + $0x110] sm:$0xff]
                %1204 = vst [vmem:[%s1134 + $0x3e0] sm:$0xff] %v1203
                %v1205 = vld [vmem:[%s1133 + $0x118] sm:$0xff]
                %1206 = vst [vmem:[%s1134 + $0x3e8] sm:$0xff] %v1205
              $region68: #{enc_forward.5} parent=62 // loop_footer
                %s1132 = sadd.s32 1, %s1128
              $region69: #{enc_forward.5} parent=62 // loop_footer_branch
                %1127 = sbr.rel target = $region65
              $region70: #{enc_forward.5} parent=62 // loop_exit
                _
            $region63: #{enc_forward.5} parent=58 // pred_fallthru
              _
            // Predicated region
            $region71: #{enc_forward.5} parent=58 // pred_check
              _
            $region72: #{enc_forward.5} parent=58 // pred_check_branch
              %1208 = sbr.rel target = $region74
            $region73: #{enc_forward.5} parent=58 // pred_region
              _
            $region74: #{enc_forward.5} parent=58 // pred_fallthru
              _
          $region59: #{enc_forward.5} parent=54 // pred_fallthru
            _
          %1209 = vnop
        $region55: #{enc_forward.5} parent=46 // pred_fallthru
          _
      $region47: #{enc_forward.5} parent=5 // pred_fallthru
        _
      %p1210 = scmp.le.s32.totalorder 2, %s8
      // Predicated region
      $region75: #{enc_forward.5} parent=5 // pred_check
        %p1211 = pneg %p1210
      $region76: #{enc_forward.5} parent=5 // pred_check_branch
        %1213 = sbr.rel (%p1211) target = $region78
      $region77: #{enc_forward.5} parent=5 // pred_region
        %s1214 = ssub.s32 %s8, 2
        // Predicated region
        $region79: #{enc_forward.5} parent=77 // pred_check
          %p1215 = pneg %p84
        $region80: #{enc_forward.5} parent=77 // pred_check_branch
          %1217 = sbr.rel (%p1215) target = $region82
        $region81: #{enc_forward.5} parent=77 // pred_region
          %s1218 = sand.u32 %s69, 1
          %s1219 = sand.u32 %s69, 1
          %s1220 = smul.addr %s1219, 288
          %s1221 = scalar_lea.vmem [#allocation3], %s1220
        $region82: #{enc_forward.5} parent=77 // pred_fallthru
          _
      $region78: #{enc_forward.5} parent=5 // pred_fallthru
        _
    $region6: #{enc_forward.5} parent=1 // loop_footer
      %s12 = sadd.s32 1, %s8
    $region7: #{enc_forward.5} parent=1 // loop_footer_branch
      %7 = sbr.rel target = $region3
    $region8: #{enc_forward.5} parent=1 // loop_exit
      _

// kernel: enc_forward.6
$region0: #{enc_forward.6}
  #allocation0 [shape = 'u32[]', space=smem, size = 0x4, offset = 0x4, fixed_abs, tag = 'smem constant byte address 0x4 - core index']
  #allocation1 [shape = 'u32[144,128]{1,0:T(1,128)}', space=vmem, size = 0x12000, scoped, tag = 'internal scratch']
  %s0 = inlined_call_operand.vmem [shape: f32[32,144], index: 0, kind: input, shape index: {}]
  %s1 = inlined_call_operand.vmem [shape: f32[144,3584], index: 1, kind: input, shape index: {}]
  %s2 = inlined_call_operand.vmem [shape: f32[32,3584], index: 2, kind: output, shape index: {}]
  %s3 = sld [smem:[#allocation0]]
  $region83: #{enc_forward.6} parent=0
    _
  %s5 = ssub.s32 1, %s3
  %s6 = scalar_select 0, %s5, %s3
  $region1: #{enc_forward.6} parent=0
    #allocation2 [shape = 'u8[2064384]{0}', space=vmem, size = 0x1f8000, scoped, tag = 'input window, operand 1']
    #allocation3 [shape = 'u8[458752]{0}', space=vmem, size = 0x70000, scoped, tag = 'output window, operand 0']
    loop: start=0, step=1, limit=4
    $region2: #{enc_forward.6} parent=1 // loop_pre_header
      _
    $region3: #{enc_forward.6} parent=1 // loop_header
      %s8 = sphi 0, %s12
      %p9 = scmp.ge.s32.totalorder %s8, 4
      %s16 = sphi 0, %s16
      %s18 = sphi 0, %s16
      %s19 = sphi 0, %s18
      %s33 = sphi 0, %s19
      %s39 = sphi 0, %s41
      %s42 = sphi 0, %s39
      %s43 = sphi 0, %s42
      %s59 = sphi 0, %s43
      %s65 = sphi 0, %s67
      %s68 = sphi 0, %s65
      %s69 = sphi 0, %s68
      %s85 = sphi 0, %s69
    $region4: #{enc_forward.6} parent=1 // loop_header_branch
      %11 = sbr.rel (%p9) target = $region8
    $region5: #{enc_forward.6} parent=1 // loop_body
      %s13 = ssub.s32 %s8, 1
      %s14 = ssub.s32 %s8, 2
      %s15 = sadd.s32 %s8, 1
      %s17 = sadd.s32 %s16, 1
      %p20 = scmp.eq.s32.totalorder %s8, 1
      %p21 = scmp.ne.s32.totalorder %s16, %s18
      %p22 = scmp.eq.s32.totalorder %s8, 0
      %p23 = por %p21, %p22
      %p24 = scmp.ne.s32.totalorder %s16, %s18
      %p25 = scmp.eq.s32.totalorder %s13, 1
      %p26 = por %p24, %p25
      %p27 = scmp.ne.s32.totalorder %s18, %s19
      %p28 = scmp.eq.s32.totalorder %s13, 0
      %p29 = por %p27, %p28
      %p30 = scmp.ne.s32.totalorder %s18, %s19
      %p31 = scmp.eq.s32.totalorder %s14, 1
      %p32 = por %p30, %p31
      %p34 = scmp.ne.s32.totalorder %s19, %s33
      %p35 = scmp.eq.s32.totalorder %s14, 0
      %p36 = por %p34, %p35
      %s37 = ssub.s32 %s8, %s15
      %p38 = scmp.eq.s32.totalorder %s37, 0
      %s40 = sadd.s32 %s39, 1
      %s41 = scalar_select %p38, %s39, %s40
      %p44 = pneg %p38
      %p45 = scmp.eq.s32.totalorder %s8, 1
      %p46 = por %p44, %p45
      %p47 = scmp.ne.s32.totalorder %s39, %s42
      %p48 = scmp.eq.s32.totalorder %s8, 0
      %p49 = por %p47, %p48
      %p50 = scmp.ne.s32.totalorder %s39, %s42
      %p51 = scmp.eq.s32.totalorder %s13, 1
      %p52 = por %p50, %p51
      %p53 = scmp.ne.s32.totalorder %s42, %s43
      %p54 = scmp.eq.s32.totalorder %s13, 0
      %p55 = por %p53, %p54
      %p56 = scmp.ne.s32.totalorder %s42, %s43
      %p57 = scmp.eq.s32.totalorder %s14, 1
      %p58 = por %p56, %p57
      %p60 = scmp.ne.s32.totalorder %s43, %s59
      %p61 = scmp.eq.s32.totalorder %s14, 0
      %p62 = por %p60, %p61
      %s63 = ssub.s32 %s8, %s15
      %p64 = scmp.eq.s32.totalorder %s63, 0
      %s66 = sadd.s32 %s65, 1
      %s67 = scalar_select %p64, %s65, %s66
      %p70 = pneg %p64
      %p71 = scmp.eq.s32.totalorder %s8, 1
      %p72 = por %p70, %p71
      %p73 = scmp.ne.s32.totalorder %s65, %s68
      %p74 = scmp.eq.s32.totalorder %s8, 0
      %p75 = por %p73, %p74
      %p76 = scmp.ne.s32.totalorder %s65, %s68
      %p77 = scmp.eq.s32.totalorder %s13, 1
      %p78 = por %p76, %p77
      %p79 = scmp.ne.s32.totalorder %s68, %s69
      %p80 = scmp.eq.s32.totalorder %s13, 0
      %p81 = por %p79, %p80
      %p82 = scmp.ne.s32.totalorder %s68, %s69
      %p83 = scmp.eq.s32.totalorder %s14, 1
      %p84 = por %p82, %p83
      %p86 = scmp.ne.s32.totalorder %s69, %s85
      %p87 = scmp.eq.s32.totalorder %s14, 0
      %p88 = por %p86, %p87
      %p89 = scmp.le.s32.totalorder 1, %s8
      %p90 = scmp.lt.s32.totalorder %s8, 3
      %p91 = pnand %p89, %p90
      %p92 = pneg %p91
      // Predicated region
      $region9: #{enc_forward.6} parent=5 // pred_check
        _
      $region10: #{enc_forward.6} parent=5 // pred_check_branch
        %94 = sbr.rel (%p91) target = $region12
      $region11: #{enc_forward.6} parent=5 // pred_region
        %s95 = ssub.s32 %s8, 1
        // Predicated region
        $region13: #{enc_forward.6} parent=11 // pred_check
          %p96 = pneg %p29
        $region14: #{enc_forward.6} parent=11 // pred_check_branch
          %98 = sbr.rel (%p96) target = $region16
        $region15: #{enc_forward.6} parent=11 // pred_region
          _
        $region16: #{enc_forward.6} parent=11 // pred_fallthru
          _
      $region12: #{enc_forward.6} parent=5 // pred_fallthru
        _
      %p99 = scmp.lt.s32.totalorder %s8, 2
      // Predicated region
      $region17: #{enc_forward.6} parent=5 // pred_check
        %p100 = pneg %p99
      $region18: #{enc_forward.6} parent=5 // pred_check_branch
        %102 = sbr.rel (%p100) target = $region20
      $region19: #{enc_forward.6} parent=5 // pred_region
        // Predicated region
        $region21: #{enc_forward.6} parent=19 // pred_check
          %p103 = pneg %p49
        $region22: #{enc_forward.6} parent=19 // pred_check_branch
          %105 = sbr.rel (%p103) target = $region24
        $region23: #{enc_forward.6} parent=19 // pred_region
          %s106 = sand.u32 %s39, 1
          %s107 = sand.u32 %s39, 1
          %s108 = smul.addr %s107, 2016
          %s109 = scalar_lea.vmem [#allocation2], %s108
          %s110 = smul.u32 14, %s8
          %s111 = smul.addr %s110, 8
          %s112 = scalar_lea.vmem %s1, %s111
          // Predicated region
          $region25: #{enc_forward.6} parent=23 // pred_check
            _
          $region26: #{enc_forward.6} parent=23 // pred_check_branch
            %114 = sbr.rel (0) target = $region28
          $region27: #{enc_forward.6} parent=23 // pred_region
            // Predicated region
            $region29: #{enc_forward.6} parent=27 // pred_check
              _
            $region30: #{enc_forward.6} parent=27 // pred_check_branch
              %116 = sbr.rel (0) target = $region32
            $region31: #{enc_forward.6} parent=27 // pred_region
              loop: start=0, step=1, limit=1
              $region33: #{enc_forward.6} parent=31 // loop_pre_header
                _
              $region34: #{enc_forward.6} parent=31 // loop_header
                %s118 = sphi 0, %s122
                %p119 = scmp.ge.s32.totalorder %s118, 1
                %s123 = sphi %s112, %s112
                %s124 = sphi %s109, %s109
              $region35: #{enc_forward.6} parent=31 // loop_header_branch
                %121 = sbr.rel (%p119) target = $region39
              $region36: #{enc_forward.6} parent=31 // loop_body
                %v125 = vld [vmem:[%s123] sm:$0xff]
                %126 = vst [vmem:[%s124] sm:$0xff] %v125
                %v127 = vld [vmem:[%s123 + $0x8] sm:$0xff]
                %128 = vst [vmem:[%s124 + $0x8] sm:$0xff] %v127
                %v129 = vld [vmem:[%s123 + $0x10] sm:$0xff]
                %130 = vst [vmem:[%s124 + $0x10] sm:$0xff] %v129
                %v131 = vld [vmem:[%s123 + $0x18] sm:$0xff]
                %132 = vst [vmem:[%s124 + $0x18] sm:$0xff] %v131
                %v133 = vld [vmem:[%s123 + $0x20] sm:$0xff]
                %134 = vst [vmem:[%s124 + $0x20] sm:$0xff] %v133
                %v135 = vld [vmem:[%s123 + $0x28] sm:$0xff]
                %136 = vst [vmem:[%s124 + $0x28] sm:$0xff] %v135
                %v137 = vld [vmem:[%s123 + $0x30] sm:$0xff]
                %138 = vst [vmem:[%s124 + $0x30] sm:$0xff] %v137
                %v139 = vld [vmem:[%s123 + $0x38] sm:$0xff]
                %140 = vst [vmem:[%s124 + $0x38] sm:$0xff] %v139
                %v141 = vld [vmem:[%s123 + $0x40] sm:$0xff]
                %142 = vst [vmem:[%s124 + $0x40] sm:$0xff] %v141
                %v143 = vld [vmem:[%s123 + $0x48] sm:$0xff]
                %144 = vst [vmem:[%s124 + $0x48] sm:$0xff] %v143
                %v145 = vld [vmem:[%s123 + $0x50] sm:$0xff]
                %146 = vst [vmem:[%s124 + $0x50] sm:$0xff] %v145
                %v147 = vld [vmem:[%s123 + $0x58] sm:$0xff]
                %148 = vst [vmem:[%s124 + $0x58] sm:$0xff] %v147
                %v149 = vld [vmem:[%s123 + $0x60] sm:$0xff]
                %150 = vst [vmem:[%s124 + $0x60] sm:$0xff] %v149
                %v151 = vld [vmem:[%s123 + $0x68] sm:$0xff]
                %152 = vst [vmem:[%s124 + $0x68] sm:$0xff] %v151
                %v153 = vld [vmem:[%s123 + $0xe0] sm:$0xff]
                %154 = vst [vmem:[%s124 + $0x70] sm:$0xff] %v153
                %v155 = vld [vmem:[%s123 + $0xe8] sm:$0xff]
                %156 = vst [vmem:[%s124 + $0x78] sm:$0xff] %v155
                %v157 = vld [vmem:[%s123 + $0xf0] sm:$0xff]
                %158 = vst [vmem:[%s124 + $0x80] sm:$0xff] %v157
                %v159 = vld [vmem:[%s123 + $0xf8] sm:$0xff]
                %160 = vst [vmem:[%s124 + $0x88] sm:$0xff] %v159
                %v161 = vld [vmem:[%s123 + $0x100] sm:$0xff]
                %162 = vst [vmem:[%s124 + $0x90] sm:$0xff] %v161
                %v163 = vld [vmem:[%s123 + $0x108] sm:$0xff]
                %164 = vst [vmem:[%s124 + $0x98] sm:$0xff] %v163
                %v165 = vld [vmem:[%s123 + $0x110] sm:$0xff]
                %166 = vst [vmem:[%s124 + $0xa0] sm:$0xff] %v165
                %v167 = vld [vmem:[%s123 + $0x118] sm:$0xff]
                %168 = vst [vmem:[%s124 + $0xa8] sm:$0xff] %v167
                %v169 = vld [vmem:[%s123 + $0x120] sm:$0xff]
                %170 = vst [vmem:[%s124 + $0xb0] sm:$0xff] %v169
                %v171 = vld [vmem:[%s123 + $0x128] sm:$0xff]
                %172 = vst [vmem:[%s124 + $0xb8] sm:$0xff] %v171
                %v173 = vld [vmem:[%s123 + $0x130] sm:$0xff]
                %174 = vst [vmem:[%s124 + $0xc0] sm:$0xff] %v173
                %v175 = vld [vmem:[%s123 + $0x138] sm:$0xff]
                %176 = vst [vmem:[%s124 + $0xc8] sm:$0xff] %v175
                %v177 = vld [vmem:[%s123 + $0x140] sm:$0xff]
                %178 = vst [vmem:[%s124 + $0xd0] sm:$0xff] %v177
                %v179 = vld [vmem:[%s123 + $0x148] sm:$0xff]
                %180 = vst [vmem:[%s124 + $0xd8] sm:$0xff] %v179
                %v181 = vld [vmem:[%s123 + $0x1c0] sm:$0xff]
                %182 = vst [vmem:[%s124 + $0xe0] sm:$0xff] %v181
                %v183 = vld [vmem:[%s123 + $0x1c8] sm:$0xff]
                %184 = vst [vmem:[%s124 + $0xe8] sm:$0xff] %v183
                %v185 = vld [vmem:[%s123 + $0x1d0] sm:$0xff]
                %186 = vst [vmem:[%s124 + $0xf0] sm:$0xff] %v185
                %v187 = vld [vmem:[%s123 + $0x1d8] sm:$0xff]
                %188 = vst [vmem:[%s124 + $0xf8] sm:$0xff] %v187
                %v189 = vld [vmem:[%s123 + $0x1e0] sm:$0xff]
                %190 = vst [vmem:[%s124 + $0x100] sm:$0xff] %v189
                %v191 = vld [vmem:[%s123 + $0x1e8] sm:$0xff]
                %192 = vst [vmem:[%s124 + $0x108] sm:$0xff] %v191
                %v193 = vld [vmem:[%s123 + $0x1f0] sm:$0xff]
                %194 = vst [vmem:[%s124 + $0x110] sm:$0xff] %v193
                %v195 = vld [vmem:[%s123 + $0x1f8] sm:$0xff]
                %196 = vst [vmem:[%s124 + $0x118] sm:$0xff] %v195
                %v197 = vld [vmem:[%s123 + $0x200] sm:$0xff]
                %198 = vst [vmem:[%s124 + $0x120] sm:$0xff] %v197
                %v199 = vld [vmem:[%s123 + $0x208] sm:$0xff]
                %200 = vst [vmem:[%s124 + $0x128] sm:$0xff] %v199
                %v201 = vld [vmem:[%s123 + $0x210] sm:$0xff]
                %202 = vst [vmem:[%s124 + $0x130] sm:$0xff] %v201
                %v203 = vld [vmem:[%s123 + $0x218] sm:$0xff]
                %204 = vst [vmem:[%s124 + $0x138] sm:$0xff] %v203
                %v205 = vld [vmem:[%s123 + $0x220] sm:$0xff]
                %206 = vst [vmem:[%s124 + $0x140] sm:$0xff] %v205
                %v207 = vld [vmem:[%s123 + $0x228] sm:$0xff]
                %208 = vst [vmem:[%s124 + $0x148] sm:$0xff] %v207
                %v209 = vld [vmem:[%s123 + $0x2a0] sm:$0xff]
                %210 = vst [vmem:[%s124 + $0x150] sm:$0xff] %v209
                %v211 = vld [vmem:[%s123 + $0x2a8] sm:$0xff]
                %212 = vst [vmem:[%s124 + $0x158] sm:$0xff] %v211
                %v213 = vld [vmem:[%s123 + $0x2b0] sm:$0xff]
                %214 = vst [vmem:[%s124 + $0x160] sm:$0xff] %v213
                %v215 = vld [vmem:[%s123 + $0x2b8] sm:$0xff]
                %216 = vst [vmem:[%s124 + $0x168] sm:$0xff] %v215
                %v217 = vld [vmem:[%s123 + $0x2c0] sm:$0xff]
                %218 = vst [vmem:[%s124 + $0x170] sm:$0xff] %v217
                %v219 = vld [vmem:[%s123 + $0x2c8] sm:$0xff]
                %220 = vst [vmem:[%s124 + $0x178] sm:$0xff] %v219
                %v221 = vld [vmem:[%s123 + $0x2d0] sm:$0xff]
                %222 = vst [vmem:[%s124 + $0x180] sm:$0xff] %v221
                %v223 = vld [vmem:[%s123 + $0x2d8] sm:$0xff]
                %224 = vst [vmem:[%s124 + $0x188] sm:$0xff] %v223
                %v225 = vld [vmem:[%s123 + $0x2e0] sm:$0xff]
                %226 = vst [vmem:[%s124 + $0x190] sm:$0xff] %v225
                %v227 = vld [vmem:[%s123 + $0x2e8] sm:$0xff]
                %228 = vst [vmem:[%s124 + $0x198] sm:$0xff] %v227
                %v229 = vld [vmem:[%s123 + $0x2f0] sm:$0xff]
                %230 = vst [vmem:[%s124 + $0x1a0] sm:$0xff] %v229
                %v231 = vld [vmem:[%s123 + $0x2f8] sm:$0xff]
                %232 = vst [vmem:[%s124 + $0x1a8] sm:$0xff] %v231
                %v233 = vld [vmem:[%s123 + $0x300] sm:$0xff]
                %234 = vst [vmem:[%s124 + $0x1b0] sm:$0xff] %v233
                %v235 = vld [vmem:[%s123 + $0x308] sm:$0xff]
                %236 = vst [vmem:[%s124 + $0x1b8] sm:$0xff] %v235
                %v237 = vld [vmem:[%s123 + $0x380] sm:$0xff]
                %238 = vst [vmem:[%s124 + $0x1c0] sm:$0xff] %v237
                %v239 = vld [vmem:[%s123 + $0x388] sm:$0xff]
                %240 = vst [vmem:[%s124 + $0x1c8] sm:$0xff] %v239
                %v241 = vld [vmem:[%s123 + $0x390] sm:$0xff]
                %242 = vst [vmem:[%s124 + $0x1d0] sm:$0xff] %v241
                %v243 = vld [vmem:[%s123 + $0x398] sm:$0xff]
                %244 = vst [vmem:[%s124 + $0x1d8] sm:$0xff] %v243
                %v245 = vld [vmem:[%s123 + $0x3a0] sm:$0xff]
                %246 = vst [vmem:[%s124 + $0x1e0] sm:$0xff] %v245
                %v247 = vld [vmem:[%s123 + $0x3a8] sm:$0xff]
                %248 = vst [vmem:[%s124 + $0x1e8] sm:$0xff] %v247
                %v249 = vld [vmem:[%s123 + $0x3b0] sm:$0xff]
                %250 = vst [vmem:[%s124 + $0x1f0] sm:$0xff] %v249
                %v251 = vld [vmem:[%s123 + $0x3b8] sm:$0xff]
                %252 = vst [vmem:[%s124 + $0x1f8] sm:$0xff] %v251
                %v253 = vld [vmem:[%s123 + $0x3c0] sm:$0xff]
                %254 = vst [vmem:[%s124 + $0x200] sm:$0xff] %v253
                %v255 = vld [vmem:[%s123 + $0x3c8] sm:$0xff]
                %256 = vst [vmem:[%s124 + $0x208] sm:$0xff] %v255
                %v257 = vld [vmem:[%s123 + $0x3d0] sm:$0xff]
                %258 = vst [vmem:[%s124 + $0x210] sm:$0xff] %v257
                %v259 = vld [vmem:[%s123 + $0x3d8] sm:$0xff]
                %260 = vst [vmem:[%s124 + $0x218] sm:$0xff] %v259
                %v261 = vld [vmem:[%s123 + $0x3e0] sm:$0xff]
                %262 = vst [vmem:[%s124 + $0x220] sm:$0xff] %v261
                %v263 = vld [vmem:[%s123 + $0x3e8] sm:$0xff]
                %264 = vst [vmem:[%s124 + $0x228] sm:$0xff] %v263
                %v265 = vld [vmem:[%s123 + $0x460] sm:$0xff]
                %266 = vst [vmem:[%s124 + $0x230] sm:$0xff] %v265
                %v267 = vld [vmem:[%s123 + $0x468] sm:$0xff]
                %268 = vst [vmem:[%s124 + $0x238] sm:$0xff] %v267
                %v269 = vld [vmem:[%s123 + $0x470] sm:$0xff]
                %270 = vst [vmem:[%s124 + $0x240] sm:$0xff] %v269
                %v271 = vld [vmem:[%s123 + $0x478] sm:$0xff]
                %272 = vst [vmem:[%s124 + $0x248] sm:$0xff] %v271
                %v273 = vld [vmem:[%s123 + $0x480] sm:$0xff]
                %274 = vst [vmem:[%s124 + $0x250] sm:$0xff] %v273
                %v275 = vld [vmem:[%s123 + $0x488] sm:$0xff]
                %276 = vst [vmem:[%s124 + $0x258] sm:$0xff] %v275
                %v277 = vld [vmem:[%s123 + $0x490] sm:$0xff]
                %278 = vst [vmem:[%s124 + $0x260] sm:$0xff] %v277
                %v279 = vld [vmem:[%s123 + $0x498] sm:$0xff]
                %280 = vst [vmem:[%s124 + $0x268] sm:$0xff] %v279
                %v281 = vld [vmem:[%s123 + $0x4a0] sm:$0xff]
                %282 = vst [vmem:[%s124 + $0x270] sm:$0xff] %v281
                %v283 = vld [vmem:[%s123 + $0x4a8] sm:$0xff]
                %284 = vst [vmem:[%s124 + $0x278] sm:$0xff] %v283
                %v285 = vld [vmem:[%s123 + $0x4b0] sm:$0xff]
                %286 = vst [vmem:[%s124 + $0x280] sm:$0xff] %v285
                %v287 = vld [vmem:[%s123 + $0x4b8] sm:$0xff]
                %288 = vst [vmem:[%s124 + $0x288] sm:$0xff] %v287
                %v289 = vld [vmem:[%s123 + $0x4c0] sm:$0xff]
                %290 = vst [vmem:[%s124 + $0x290] sm:$0xff] %v289
                %v291 = vld [vmem:[%s123 + $0x4c8] sm:$0xff]
                %292 = vst [vmem:[%s124 + $0x298] sm:$0xff] %v291
                %v293 = vld [vmem:[%s123 + $0x540] sm:$0xff]
                %294 = vst [vmem:[%s124 + $0x2a0] sm:$0xff] %v293
                %v295 = vld [vmem:[%s123 + $0x548] sm:$0xff]
                %296 = vst [vmem:[%s124 + $0x2a8] sm:$0xff] %v295
                %v297 = vld [vmem:[%s123 + $0x550] sm:$0xff]
                %298 = vst [vmem:[%s124 + $0x2b0] sm:$0xff] %v297
                %v299 = vld [vmem:[%s123 + $0x558] sm:$0xff]
                %300 = vst [vmem:[%s124 + $0x2b8] sm:$0xff] %v299
                %v301 = vld [vmem:[%s123 + $0x560] sm:$0xff]
                %302 = vst [vmem:[%s124 + $0x2c0] sm:$0xff] %v301
                %v303 = vld [vmem:[%s123 + $0x568] sm:$0xff]
                %304 = vst [vmem:[%s124 + $0x2c8] sm:$0xff] %v303
                %v305 = vld [vmem:[%s123 + $0x570] sm:$0xff]
                %306 = vst [vmem:[%s124 + $0x2d0] sm:$0xff] %v305
                %v307 = vld [vmem:[%s123 + $0x578] sm:$0xff]
                %308 = vst [vmem:[%s124 + $0x2d8] sm:$0xff] %v307
                %v309 = vld [vmem:[%s123 + $0x580] sm:$0xff]
                %310 = vst [vmem:[%s124 + $0x2e0] sm:$0xff] %v309
                %v311 = vld [vmem:[%s123 + $0x588] sm:$0xff]
                %312 = vst [vmem:[%s124 + $0x2e8] sm:$0xff] %v311
                %v313 = vld [vmem:[%s123 + $0x590] sm:$0xff]
                %314 = vst [vmem:[%s124 + $0x2f0] sm:$0xff] %v313
                %v315 = vld [vmem:[%s123 + $0x598] sm:$0xff]
                %316 = vst [vmem:[%s124 + $0x2f8] sm:$0xff] %v315
                %v317 = vld [vmem:[%s123 + $0x5a0] sm:$0xff]
                %318 = vst [vmem:[%s124 + $0x300] sm:$0xff] %v317
                %v319 = vld [vmem:[%s123 + $0x5a8] sm:$0xff]
                %320 = vst [vmem:[%s124 + $0x308] sm:$0xff] %v319
                %v321 = vld [vmem:[%s123 + $0x620] sm:$0xff]
                %322 = vst [vmem:[%s124 + $0x310] sm:$0xff] %v321
                %v323 = vld [vmem:[%s123 + $0x628] sm:$0xff]
                %324 = vst [vmem:[%s124 + $0x318] sm:$0xff] %v323
                %v325 = vld [vmem:[%s123 + $0x630] sm:$0xff]
                %326 = vst [vmem:[%s124 + $0x320] sm:$0xff] %v325
                %v327 = vld [vmem:[%s123 + $0x638] sm:$0xff]
                %328 = vst [vmem:[%s124 + $0x328] sm:$0xff] %v327
                %v329 = vld [vmem:[%s123 + $0x640] sm:$0xff]
                %330 = vst [vmem:[%s124 + $0x330] sm:$0xff] %v329
                %v331 = vld [vmem:[%s123 + $0x648] sm:$0xff]
                %332 = vst [vmem:[%s124 + $0x338] sm:$0xff] %v331
                %v333 = vld [vmem:[%s123 + $0x650] sm:$0xff]
                %334 = vst [vmem:[%s124 + $0x340] sm:$0xff] %v333
                %v335 = vld [vmem:[%s123 + $0x658] sm:$0xff]
                %336 = vst [vmem:[%s124 + $0x348] sm:$0xff] %v335
                %v337 = vld [vmem:[%s123 + $0x660] sm:$0xff]
                %338 = vst [vmem:[%s124 + $0x350] sm:$0xff] %v337
                %v339 = vld [vmem:[%s123 + $0x668] sm:$0xff]
                %340 = vst [vmem:[%s124 + $0x358] sm:$0xff] %v339
                %v341 = vld [vmem:[%s123 + $0x670] sm:$0xff]
                %342 = vst [vmem:[%s124 + $0x360] sm:$0xff] %v341
                %v343 = vld [vmem:[%s123 + $0x678] sm:$0xff]
                %344 = vst [vmem:[%s124 + $0x368] sm:$0xff] %v343
                %v345 = vld [vmem:[%s123 + $0x680] sm:$0xff]
                %346 = vst [vmem:[%s124 + $0x370] sm:$0xff] %v345
                %v347 = vld [vmem:[%s123 + $0x688] sm:$0xff]
                %348 = vst [vmem:[%s124 + $0x378] sm:$0xff] %v347
                %v349 = vld [vmem:[%s123 + $0x700] sm:$0xff]
                %350 = vst [vmem:[%s124 + $0x380] sm:$0xff] %v349
                %v351 = vld [vmem:[%s123 + $0x708] sm:$0xff]
                %352 = vst [vmem:[%s124 + $0x388] sm:$0xff] %v351
                %v353 = vld [vmem:[%s123 + $0x710] sm:$0xff]
                %354 = vst [vmem:[%s124 + $0x390] sm:$0xff] %v353
                %v355 = vld [vmem:[%s123 + $0x718] sm:$0xff]
                %356 = vst [vmem:[%s124 + $0x398] sm:$0xff] %v355
                %v357 = vld [vmem:[%s123 + $0x720] sm:$0xff]
                %358 = vst [vmem:[%s124 + $0x3a0] sm:$0xff] %v357
                %v359 = vld [vmem:[%s123 + $0x728] sm:$0xff]
                %360 = vst [vmem:[%s124 + $0x3a8] sm:$0xff] %v359
                %v361 = vld [vmem:[%s123 + $0x730] sm:$0xff]
                %362 = vst [vmem:[%s124 + $0x3b0] sm:$0xff] %v361
                %v363 = vld [vmem:[%s123 + $0x738] sm:$0xff]
                %364 = vst [vmem:[%s124 + $0x3b8] sm:$0xff] %v363
                %v365 = vld [vmem:[%s123 + $0x740] sm:$0xff]
                %366 = vst [vmem:[%s124 + $0x3c0] sm:$0xff] %v365
                %v367 = vld [vmem:[%s123 + $0x748] sm:$0xff]
                %368 = vst [vmem:[%s124 + $0x3c8] sm:$0xff] %v367
                %v369 = vld [vmem:[%s123 + $0x750] sm:$0xff]
                %370 = vst [vmem:[%s124 + $0x3d0] sm:$0xff] %v369
                %v371 = vld [vmem:[%s123 + $0x758] sm:$0xff]
                %372 = vst [vmem:[%s124 + $0x3d8] sm:$0xff] %v371
                %v373 = vld [vmem:[%s123 + $0x760] sm:$0xff]
                %374 = vst [vmem:[%s124 + $0x3e0] sm:$0xff] %v373
                %v375 = vld [vmem:[%s123 + $0x768] sm:$0xff]
                %376 = vst [vmem:[%s124 + $0x3e8] sm:$0xff] %v375
                %v377 = vld [vmem:[%s123 + $0x7e0] sm:$0xff]
                %378 = vst [vmem:[%s124 + $0x3f0] sm:$0xff] %v377
                %v379 = vld [vmem:[%s123 + $0x7e8] sm:$0xff]
                %380 = vst [vmem:[%s124 + $0x3f8] sm:$0xff] %v379
                %v381 = vld [vmem:[%s123 + $0x7f0] sm:$0xff]
                %382 = vst [vmem:[%s124 + $0x400] sm:$0xff] %v381
                %v383 = vld [vmem:[%s123 + $0x7f8] sm:$0xff]
                %384 = vst [vmem:[%s124 + $0x408] sm:$0xff] %v383
                %v385 = vld [vmem:[%s123 + $0x800] sm:$0xff]
                %386 = vst [vmem:[%s124 + $0x410] sm:$0xff] %v385
                %v387 = vld [vmem:[%s123 + $0x808] sm:$0xff]
                %388 = vst [vmem:[%s124 + $0x418] sm:$0xff] %v387
                %v389 = vld [vmem:[%s123 + $0x810] sm:$0xff]
                %390 = vst [vmem:[%s124 + $0x420] sm:$0xff] %v389
                %v391 = vld [vmem:[%s123 + $0x818] sm:$0xff]
                %392 = vst [vmem:[%s124 + $0x428] sm:$0xff] %v391
                %v393 = vld [vmem:[%s123 + $0x820] sm:$0xff]
                %394 = vst [vmem:[%s124 + $0x430] sm:$0xff] %v393
                %v395 = vld [vmem:[%s123 + $0x828] sm:$0xff]
                %396 = vst [vmem:[%s124 + $0x438] sm:$0xff] %v395
                %v397 = vld [vmem:[%s123 + $0x830] sm:$0xff]
                %398 = vst [vmem:[%s124 + $0x440] sm:$0xff] %v397
                %v399 = vld [vmem:[%s123 + $0x838] sm:$0xff]
                %400 = vst [vmem:[%s124 + $0x448] sm:$0xff] %v399
                %v401 = vld [vmem:[%s123 + $0x840] sm:$0xff]
                %402 = vst [vmem:[%s124 + $0x450] sm:$0xff] %v401
                %v403 = vld [vmem:[%s123 + $0x848] sm:$0xff]
                %404 = vst [vmem:[%s124 + $0x458] sm:$0xff] %v403
                %v405 = vld [vmem:[%s123 + $0x8c0] sm:$0xff]
                %406 = vst [vmem:[%s124 + $0x460] sm:$0xff] %v405
                %v407 = vld [vmem:[%s123 + $0x8c8] sm:$0xff]
                %408 = vst [vmem:[%s124 + $0x468] sm:$0xff] %v407
                %v409 = vld [vmem:[%s123 + $0x8d0] sm:$0xff]
                %410 = vst [vmem:[%s124 + $0x470] sm:$0xff] %v409
                %v411 = vld [vmem:[%s123 + $0x8d8] sm:$0xff]
                %412 = vst [vmem:[%s124 + $0x478] sm:$0xff] %v411
                %v413 = vld [vmem:[%s123 + $0x8e0] sm:$0xff]
                %414 = vst [vmem:[%s124 + $0x480] sm:$0xff] %v413
                %v415 = vld [vmem:[%s123 + $0x8e8] sm:$0xff]
                %416 = vst [vmem:[%s124 + $0x488] sm:$0xff] %v415
                %v417 = vld [vmem:[%s123 + $0x8f0] sm:$0xff]
                %418 = vst [vmem:[%s124 + $0x490] sm:$0xff] %v417
                %v419 = vld [vmem:[%s123 + $0x8f8] sm:$0xff]
                %420 = vst [vmem:[%s124 + $0x498] sm:$0xff] %v419
                %v421 = vld [vmem:[%s123 + $0x900] sm:$0xff]
                %422 = vst [vmem:[%s124 + $0x4a0] sm:$0xff] %v421
                %v423 = vld [vmem:[%s123 + $0x908] sm:$0xff]
                %424 = vst [vmem:[%s124 + $0x4a8] sm:$0xff] %v423
                %v425 = vld [vmem:[%s123 + $0x910] sm:$0xff]
                %426 = vst [vmem:[%s124 + $0x4b0] sm:$0xff] %v425
                %v427 = vld [vmem:[%s123 + $0x918] sm:$0xff]
                %428 = vst [vmem:[%s124 + $0x4b8] sm:$0xff] %v427
                %v429 = vld [vmem:[%s123 + $0x920] sm:$0xff]
                %430 = vst [vmem:[%s124 + $0x4c0] sm:$0xff] %v429
                %v431 = vld [vmem:[%s123 + $0x928] sm:$0xff]
                %432 = vst [vmem:[%s124 + $0x4c8] sm:$0xff] %v431
                %v433 = vld [vmem:[%s123 + $0x9a0] sm:$0xff]
                %434 = vst [vmem:[%s124 + $0x4d0] sm:$0xff] %v433
                %v435 = vld [vmem:[%s123 + $0x9a8] sm:$0xff]
                %436 = vst [vmem:[%s124 + $0x4d8] sm:$0xff] %v435
                %v437 = vld [vmem:[%s123 + $0x9b0] sm:$0xff]
                %438 = vst [vmem:[%s124 + $0x4e0] sm:$0xff] %v437
                %v439 = vld [vmem:[%s123 + $0x9b8] sm:$0xff]
                %440 = vst [vmem:[%s124 + $0x4e8] sm:$0xff] %v439
                %v441 = vld [vmem:[%s123 + $0x9c0] sm:$0xff]
                %442 = vst [vmem:[%s124 + $0x4f0] sm:$0xff] %v441
                %v443 = vld [vmem:[%s123 + $0x9c8] sm:$0xff]
                %444 = vst [vmem:[%s124 + $0x4f8] sm:$0xff] %v443
                %v445 = vld [vmem:[%s123 + $0x9d0] sm:$0xff]
                %446 = vst [vmem:[%s124 + $0x500] sm:$0xff] %v445
                %v447 = vld [vmem:[%s123 + $0x9d8] sm:$0xff]
                %448 = vst [vmem:[%s124 + $0x508] sm:$0xff] %v447
                %v449 = vld [vmem:[%s123 + $0x9e0] sm:$0xff]
                %450 = vst [vmem:[%s124 + $0x510] sm:$0xff] %v449
                %v451 = vld [vmem:[%s123 + $0x9e8] sm:$0xff]
                %452 = vst [vmem:[%s124 + $0x518] sm:$0xff] %v451
                %v453 = vld [vmem:[%s123 + $0x9f0] sm:$0xff]
                %454 = vst [vmem:[%s124 + $0x520] sm:$0xff] %v453
                %v455 = vld [vmem:[%s123 + $0x9f8] sm:$0xff]
                %456 = vst [vmem:[%s124 + $0x528] sm:$0xff] %v455
                %v457 = vld [vmem:[%s123 + $0xa00] sm:$0xff]
                %458 = vst [vmem:[%s124 + $0x530] sm:$0xff] %v457
                %v459 = vld [vmem:[%s123 + $0xa08] sm:$0xff]
                %460 = vst [vmem:[%s124 + $0x538] sm:$0xff] %v459
                %v461 = vld [vmem:[%s123 + $0xa80] sm:$0xff]
                %462 = vst [vmem:[%s124 + $0x540] sm:$0xff] %v461
                %v463 = vld [vmem:[%s123 + $0xa88] sm:$0xff]
                %464 = vst [vmem:[%s124 + $0x548] sm:$0xff] %v463
                %v465 = vld [vmem:[%s123 + $0xa90] sm:$0xff]
                %466 = vst [vmem:[%s124 + $0x550] sm:$0xff] %v465
                %v467 = vld [vmem:[%s123 + $0xa98] sm:$0xff]
                %468 = vst [vmem:[%s124 + $0x558] sm:$0xff] %v467
                %v469 = vld [vmem:[%s123 + $0xaa0] sm:$0xff]
                %470 = vst [vmem:[%s124 + $0x560] sm:$0xff] %v469
                %v471 = vld [vmem:[%s123 + $0xaa8] sm:$0xff]
                %472 = vst [vmem:[%s124 + $0x568] sm:$0xff] %v471
                %v473 = vld [vmem:[%s123 + $0xab0] sm:$0xff]
                %474 = vst [vmem:[%s124 + $0x570] sm:$0xff] %v473
                %v475 = vld [vmem:[%s123 + $0xab8] sm:$0xff]
                %476 = vst [vmem:[%s124 + $0x578] sm:$0xff] %v475
                %v477 = vld [vmem:[%s123 + $0xac0] sm:$0xff]
                %478 = vst [vmem:[%s124 + $0x580] sm:$0xff] %v477
                %v479 = vld [vmem:[%s123 + $0xac8] sm:$0xff]
                %480 = vst [vmem:[%s124 + $0x588] sm:$0xff] %v479
                %v481 = vld [vmem:[%s123 + $0xad0] sm:$0xff]
                %482 = vst [vmem:[%s124 + $0x590] sm:$0xff] %v481
                %v483 = vld [vmem:[%s123 + $0xad8] sm:$0xff]
                %484 = vst [vmem:[%s124 + $0x598] sm:$0xff] %v483
                %v485 = vld [vmem:[%s123 + $0xae0] sm:$0xff]
                %486 = vst [vmem:[%s124 + $0x5a0] sm:$0xff] %v485
                %v487 = vld [vmem:[%s123 + $0xae8] sm:$0xff]
                %488 = vst [vmem:[%s124 + $0x5a8] sm:$0xff] %v487
                %v489 = vld [vmem:[%s123 + $0xb60] sm:$0xff]
                %490 = vst [vmem:[%s124 + $0x5b0] sm:$0xff] %v489
                %v491 = vld [vmem:[%s123 + $0xb68] sm:$0xff]
                %492 = vst [vmem:[%s124 + $0x5b8] sm:$0xff] %v491
                %v493 = vld [vmem:[%s123 + $0xb70] sm:$0xff]
                %494 = vst [vmem:[%s124 + $0x5c0] sm:$0xff] %v493
                %v495 = vld [vmem:[%s123 + $0xb78] sm:$0xff]
                %496 = vst [vmem:[%s124 + $0x5c8] sm:$0xff] %v495
                %v497 = vld [vmem:[%s123 + $0xb80] sm:$0xff]
                %498 = vst [vmem:[%s124 + $0x5d0] sm:$0xff] %v497
                %v499 = vld [vmem:[%s123 + $0xb88] sm:$0xff]
                %500 = vst [vmem:[%s124 + $0x5d8] sm:$0xff] %v499
                %v501 = vld [vmem:[%s123 + $0xb90] sm:$0xff]
                %502 = vst [vmem:[%s124 + $0x5e0] sm:$0xff] %v501
                %v503 = vld [vmem:[%s123 + $0xb98] sm:$0xff]
                %504 = vst [vmem:[%s124 + $0x5e8] sm:$0xff] %v503
                %v505 = vld [vmem:[%s123 + $0xba0] sm:$0xff]
                %506 = vst [vmem:[%s124 + $0x5f0] sm:$0xff] %v505
                %v507 = vld [vmem:[%s123 + $0xba8] sm:$0xff]
                %508 = vst [vmem:[%s124 + $0x5f8] sm:$0xff] %v507
                %v509 = vld [vmem:[%s123 + $0xbb0] sm:$0xff]
                %510 = vst [vmem:[%s124 + $0x600] sm:$0xff] %v509
                %v511 = vld [vmem:[%s123 + $0xbb8] sm:$0xff]
                %512 = vst [vmem:[%s124 + $0x608] sm:$0xff] %v511
                %v513 = vld [vmem:[%s123 + $0xbc0] sm:$0xff]
                %514 = vst [vmem:[%s124 + $0x610] sm:$0xff] %v513
                %v515 = vld [vmem:[%s123 + $0xbc8] sm:$0xff]
                %516 = vst [vmem:[%s124 + $0x618] sm:$0xff] %v515
                %v517 = vld [vmem:[%s123 + $0xc40] sm:$0xff]
                %518 = vst [vmem:[%s124 + $0x620] sm:$0xff] %v517
                %v519 = vld [vmem:[%s123 + $0xc48] sm:$0xff]
                %520 = vst [vmem:[%s124 + $0x628] sm:$0xff] %v519
                %v521 = vld [vmem:[%s123 + $0xc50] sm:$0xff]
                %522 = vst [vmem:[%s124 + $0x630] sm:$0xff] %v521
                %v523 = vld [vmem:[%s123 + $0xc58] sm:$0xff]
                %524 = vst [vmem:[%s124 + $0x638] sm:$0xff] %v523
                %v525 = vld [vmem:[%s123 + $0xc60] sm:$0xff]
                %526 = vst [vmem:[%s124 + $0x640] sm:$0xff] %v525
                %v527 = vld [vmem:[%s123 + $0xc68] sm:$0xff]
                %528 = vst [vmem:[%s124 + $0x648] sm:$0xff] %v527
                %v529 = vld [vmem:[%s123 + $0xc70] sm:$0xff]
                %530 = vst [vmem:[%s124 + $0x650] sm:$0xff] %v529
                %v531 = vld [vmem:[%s123 + $0xc78] sm:$0xff]
                %532 = vst [vmem:[%s124 + $0x658] sm:$0xff] %v531
                %v533 = vld [vmem:[%s123 + $0xc80] sm:$0xff]
                %534 = vst [vmem:[%s124 + $0x660] sm:$0xff] %v533
                %v535 = vld [vmem:[%s123 + $0xc88] sm:$0xff]
                %536 = vst [vmem:[%s124 + $0x668] sm:$0xff] %v535
                %v537 = vld [vmem:[%s123 + $0xc90] sm:$0xff]
                %538 = vst [vmem:[%s124 + $0x670] sm:$0xff] %v537
                %v539 = vld [vmem:[%s123 + $0xc98] sm:$0xff]
                %540 = vst [vmem:[%s124 + $0x678] sm:$0xff] %v539
                %v541 = vld [vmem:[%s123 + $0xca0] sm:$0xff]
                %542 = vst [vmem:[%s124 + $0x680] sm:$0xff] %v541
                %v543 = vld [vmem:[%s123 + $0xca8] sm:$0xff]
                %544 = vst [vmem:[%s124 + $0x688] sm:$0xff] %v543
                %v545 = vld [vmem:[%s123 + $0xd20] sm:$0xff]
                %546 = vst [vmem:[%s124 + $0x690] sm:$0xff] %v545
                %v547 = vld [vmem:[%s123 + $0xd28] sm:$0xff]
                %548 = vst [vmem:[%s124 + $0x698] sm:$0xff] %v547
                %v549 = vld [vmem:[%s123 + $0xd30] sm:$0xff]
                %550 = vst [vmem:[%s124 + $0x6a0] sm:$0xff] %v549
                %v551 = vld [vmem:[%s123 + $0xd38] sm:$0xff]
                %552 = vst [vmem:[%s124 + $0x6a8] sm:$0xff] %v551
                %v553 = vld [vmem:[%s123 + $0xd40] sm:$0xff]
                %554 = vst [vmem:[%s124 + $0x6b0] sm:$0xff] %v553
                %v555 = vld [vmem:[%s123 + $0xd48] sm:$0xff]
                %556 = vst [vmem:[%s124 + $0x6b8] sm:$0xff] %v555
                %v557 = vld [vmem:[%s123 + $0xd50] sm:$0xff]
                %558 = vst [vmem:[%s124 + $0x6c0] sm:$0xff] %v557
                %v559 = vld [vmem:[%s123 + $0xd58] sm:$0xff]
                %560 = vst [vmem:[%s124 + $0x6c8] sm:$0xff] %v559
                %v561 = vld [vmem:[%s123 + $0xd60] sm:$0xff]
                %562 = vst [vmem:[%s124 + $0x6d0] sm:$0xff] %v561
                %v563 = vld [vmem:[%s123 + $0xd68] sm:$0xff]
                %564 = vst [vmem:[%s124 + $0x6d8] sm:$0xff] %v563
                %v565 = vld [vmem:[%s123 + $0xd70] sm:$0xff]
                %566 = vst [vmem:[%s124 + $0x6e0] sm:$0xff] %v565
                %v567 = vld [vmem:[%s123 + $0xd78] sm:$0xff]
                %568 = vst [vmem:[%s124 + $0x6e8] sm:$0xff] %v567
                %v569 = vld [vmem:[%s123 + $0xd80] sm:$0xff]
                %570 = vst [vmem:[%s124 + $0x6f0] sm:$0xff] %v569
                %v571 = vld [vmem:[%s123 + $0xd88] sm:$0xff]
                %572 = vst [vmem:[%s124 + $0x6f8] sm:$0xff] %v571
                %v573 = vld [vmem:[%s123 + $0xe00] sm:$0xff]
                %574 = vst [vmem:[%s124 + $0x700] sm:$0xff] %v573
                %v575 = vld [vmem:[%s123 + $0xe08] sm:$0xff]
                %576 = vst [vmem:[%s124 + $0x708] sm:$0xff] %v575
                %v577 = vld [vmem:[%s123 + $0xe10] sm:$0xff]
                %578 = vst [vmem:[%s124 + $0x710] sm:$0xff] %v577
                %v579 = vld [vmem:[%s123 + $0xe18] sm:$0xff]
                %580 = vst [vmem:[%s124 + $0x718] sm:$0xff] %v579
                %v581 = vld [vmem:[%s123 + $0xe20] sm:$0xff]
                %582 = vst [vmem:[%s124 + $0x720] sm:$0xff] %v581
                %v583 = vld [vmem:[%s123 + $0xe28] sm:$0xff]
                %584 = vst [vmem:[%s124 + $0x728] sm:$0xff] %v583
                %v585 = vld [vmem:[%s123 + $0xe30] sm:$0xff]
                %586 = vst [vmem:[%s124 + $0x730] sm:$0xff] %v585
                %v587 = vld [vmem:[%s123 + $0xe38] sm:$0xff]
                %588 = vst [vmem:[%s124 + $0x738] sm:$0xff] %v587
                %v589 = vld [vmem:[%s123 + $0xe40] sm:$0xff]
                %590 = vst [vmem:[%s124 + $0x740] sm:$0xff] %v589
                %v591 = vld [vmem:[%s123 + $0xe48] sm:$0xff]
                %592 = vst [vmem:[%s124 + $0x748] sm:$0xff] %v591
                %v593 = vld [vmem:[%s123 + $0xe50] sm:$0xff]
                %594 = vst [vmem:[%s124 + $0x750] sm:$0xff] %v593
                %v595 = vld [vmem:[%s123 + $0xe58] sm:$0xff]
                %596 = vst [vmem:[%s124 + $0x758] sm:$0xff] %v595
                %v597 = vld [vmem:[%s123 + $0xe60] sm:$0xff]
                %598 = vst [vmem:[%s124 + $0x760] sm:$0xff] %v597
                %v599 = vld [vmem:[%s123 + $0xe68] sm:$0xff]
                %600 = vst [vmem:[%s124 + $0x768] sm:$0xff] %v599
                %v601 = vld [vmem:[%s123 + $0xee0] sm:$0xff]
                %602 = vst [vmem:[%s124 + $0x770] sm:$0xff] %v601
                %v603 = vld [vmem:[%s123 + $0xee8] sm:$0xff]
                %604 = vst [vmem:[%s124 + $0x778] sm:$0xff] %v603
                %v605 = vld [vmem:[%s123 + $0xef0] sm:$0xff]
                %606 = vst [vmem:[%s124 + $0x780] sm:$0xff] %v605
                %v607 = vld [vmem:[%s123 + $0xef8] sm:$0xff]
                %608 = vst [vmem:[%s124 + $0x788] sm:$0xff] %v607
                %v609 = vld [vmem:[%s123 + $0xf00] sm:$0xff]
                %610 = vst [vmem:[%s124 + $0x790] sm:$0xff] %v609
                %v611 = vld [vmem:[%s123 + $0xf08] sm:$0xff]
                %612 = vst [vmem:[%s124 + $0x798] sm:$0xff] %v611
                %v613 = vld [vmem:[%s123 + $0xf10] sm:$0xff]
                %614 = vst [vmem:[%s124 + $0x7a0] sm:$0xff] %v613
                %v615 = vld [vmem:[%s123 + $0xf18] sm:$0xff]
                %616 = vst [vmem:[%s124 + $0x7a8] sm:$0xff] %v615
                %v617 = vld [vmem:[%s123 + $0xf20] sm:$0xff]
                %618 = vst [vmem:[%s124 + $0x7b0] sm:$0xff] %v617
                %v619 = vld [vmem:[%s123 + $0xf28] sm:$0xff]
                %620 = vst [vmem:[%s124 + $0x7b8] sm:$0xff] %v619
                %v621 = vld [vmem:[%s123 + $0xf30] sm:$0xff]
                %622 = vst [vmem:[%s124 + $0x7c0] sm:$0xff] %v621
                %v623 = vld [vmem:[%s123 + $0xf38] sm:$0xff]
                %624 = vst [vmem:[%s124 + $0x7c8] sm:$0xff] %v623
                %v625 = vld [vmem:[%s123 + $0xf40] sm:$0xff]
                %626 = vst [vmem:[%s124 + $0x7d0] sm:$0xff] %v625
                %v627 = vld [vmem:[%s123 + $0xf48] sm:$0xff]
                %628 = vst [vmem:[%s124 + $0x7d8] sm:$0xff] %v627
              $region37: #{enc_forward.6} parent=31 // loop_footer
                %s122 = sadd.s32 1, %s118
              $region38: #{enc_forward.6} parent=31 // loop_footer_branch
                %117 = sbr.rel target = $region34
              $region39: #{enc_forward.6} parent=31 // loop_exit
                _
            $region32: #{enc_forward.6} parent=27 // pred_fallthru
              _
            // Predicated region
            $region40: #{enc_forward.6} parent=27 // pred_check
              _
            $region41: #{enc_forward.6} parent=27 // pred_check_branch
              %630 = sbr.rel target = $region43
            $region42: #{enc_forward.6} parent=27 // pred_region
              _
            $region43: #{enc_forward.6} parent=27 // pred_fallthru
              _
          $region28: #{enc_forward.6} parent=23 // pred_fallthru
            _
          %631 = vnop
        $region24: #{enc_forward.6} parent=19 // pred_fallthru
          _
      $region20: #{enc_forward.6} parent=5 // pred_fallthru
        _
      %p632 = scmp.le.s32.totalorder 1, %s8
      %p633 = scmp.lt.s32.totalorder %s8, 3
      %p634 = pnand %p632, %p633
      %p635 = pneg %p634
      // Predicated region
      $region44: #{enc_forward.6} parent=5 // pred_check
        _
      $region45: #{enc_forward.6} parent=5 // pred_check_branch
        %637 = sbr.rel (%p634) target = $region47
      $region46: #{enc_forward.6} parent=5 // pred_region
        %s638 = ssub.s32 %s8, 1
        %s639 = sand.u32 %s42, 1
        %s640 = sand.u32 %s42, 1
        %s641 = smul.addr %s640, 2016
        %s642 = scalar_lea.vmem [#allocation2], %s641
        // Predicated region
        $region48: #{enc_forward.6} parent=46 // pred_check
          %p643 = pneg %p55
        $region49: #{enc_forward.6} parent=46 // pred_check_branch
          %645 = sbr.rel (%p643) target = $region51
        $region50: #{enc_forward.6} parent=46 // pred_region
          _
        $region51: #{enc_forward.6} parent=46 // pred_fallthru
          _
        %p646 = pneg %p29
        %p647 = pneg %p26
        %s648 = sand.u32 %s42, 1
        %s649 = sand.u32 %s42, 1
        %s650 = smul.addr %s649, 2016
        %s651 = scalar_lea.vmem [#allocation2], %s650
        %p652 = pneg %p55
        %p653 = pneg %p52
        %p654 = pneg %p81
        %p655 = pneg %p78
        %s656 = sand.u32 %s68, 1
        %s657 = sand.u32 %s68, 1
        %s658 = smul.addr %s657, 448
        %s659 = scalar_lea.vmem [#allocation3], %s658
        %s660 = smul.u32 14, %s13
        %s661 = smul.u32 14, %s13
        %v662 = vld [vmem:[%s0] sm:$0xff]
        %v663 = vld [vmem:[%s0 + $0x8] sm:$0xff]
        %v664 = vld [vmem:[%s0 + $0x10] sm:$0xff]
        %v665 = vld [vmem:[%s0 + $0x18] sm:$0xff]
        %v666 = vld [vmem:[%s0 + $0x20] sm:$0xff]
        %v667 = vld [vmem:[%s0 + $0x28] sm:$0xff]
        %v668 = vld [vmem:[%s0 + $0x30] sm:$0xff]
        %v669 = vld [vmem:[%s0 + $0x38] sm:$0xff]
        %v670 = vld [vmem:[%s642] sm:$0xff]
        %v671 = vld [vmem:[%s642 + $0x8] sm:$0xff]
        %v672 = vld [vmem:[%s642 + $0x10] sm:$0xff]
        %v673 = vld [vmem:[%s642 + $0x18] sm:$0xff]
        %v674 = vld [vmem:[%s642 + $0x20] sm:$0xff]
        %v675 = vld [vmem:[%s642 + $0x28] sm:$0xff]
        %v676 = vld [vmem:[%s642 + $0x30] sm:$0xff]
        %v677 = vld [vmem:[%s642 + $0x38] sm:$0xff]
        %v678 = vld [vmem:[%s642 + $0x40] sm:$0xff]
        %v679 = vld [vmem:[%s642 + $0x48] sm:$0xff]
        %v680 = vld [vmem:[%s642 + $0x50] sm:$0xff]
        %v681 = vld [vmem:[%s642 + $0x58] sm:$0xff]
        %v682 = vld [vmem:[%s642 + $0x60] sm:$0xff]
        %v683 = vld [vmem:[%s642 + $0x68] sm:$0xff]
        %v684 = vld [vmem:[%s642 + $0x70] sm:$0xff]
        %v685 = vld [vmem:[%s642 + $0x78] sm:$0xff]
        %v686 = vld [vmem:[%s642 + $0x80] sm:$0xff]
        %v687 = vld [vmem:[%s642 + $0x88] sm:$0xff]
        %v688 = vld [vmem:[%s642 + $0x90] sm:$0xff]
        %v689 = vld [vmem:[%s642 + $0x98] sm:$0xff]
        %v690 = vld [vmem:[%s642 + $0xa0] sm:$0xff]
        %v691 = vld [vmem:[%s642 + $0xa8] sm:$0xff]
        %v692 = vld [vmem:[%s642 + $0xb0] sm:$0xff]
        %v693 = vld [vmem:[%s642 + $0xb8] sm:$0xff]
        %v694 = vld [vmem:[%s642 + $0xc0] sm:$0xff]
        %v695 = vld [vmem:[%s642 + $0xc8] sm:$0xff]
        %v696 = vld [vmem:[%s642 + $0xd0] sm:$0xff]
        %v697 = vld [vmem:[%s642 + $0xd8] sm:$0xff]
        %v698 = vld [vmem:[%s642 + $0xe0] sm:$0xff]
        %v699 = vld [vmem:[%s642 + $0xe8] sm:$0xff]
        %v700 = vld [vmem:[%s642 + $0xf0] sm:$0xff]
        %v701 = vld [vmem:[%s642 + $0xf8] sm:$0xff]
        %v702 = vld [vmem:[%s642 + $0x100] sm:$0xff]
        %v703 = vld [vmem:[%s642 + $0x108] sm:$0xff]
        %v704 = vld [vmem:[%s642 + $0x110] sm:$0xff]
        %v705 = vld [vmem:[%s642 + $0x118] sm:$0xff]
        %v706 = vld [vmem:[%s642 + $0x120] sm:$0xff]
        %v707 = vld [vmem:[%s642 + $0x128] sm:$0xff]
        %v708 = vld [vmem:[%s642 + $0x130] sm:$0xff]
        %v709 = vld [vmem:[%s642 + $0x138] sm:$0xff]
        %v710 = vld [vmem:[%s642 + $0x140] sm:$0xff]
        %v711 = vld [vmem:[%s642 + $0x148] sm:$0xff]
        %v712 = vld [vmem:[%s642 + $0x150] sm:$0xff]
        %v713 = vld [vmem:[%s642 + $0x158] sm:$0xff]
        %v714 = vld [vmem:[%s642 + $0x160] sm:$0xff]
        %v715 = vld [vmem:[%s642 + $0x168] sm:$0xff]
        %v716 = vld [vmem:[%s642 + $0x170] sm:$0xff]
        %v717 = vld [vmem:[%s642 + $0x178] sm:$0xff]
        %v718 = vld [vmem:[%s642 + $0x180] sm:$0xff]
        %v719 = vld [vmem:[%s642 + $0x188] sm:$0xff]
        %v720 = vld [vmem:[%s642 + $0x190] sm:$0xff]
        %v721 = vld [vmem:[%s642 + $0x198] sm:$0xff]
        %v722 = vld [vmem:[%s642 + $0x1a0] sm:$0xff]
        %v723 = vld [vmem:[%s642 + $0x1a8] sm:$0xff]
        %v724 = vld [vmem:[%s642 + $0x1b0] sm:$0xff]
        %v725 = vld [vmem:[%s642 + $0x1b8] sm:$0xff]
        %v726 = vld [vmem:[%s642 + $0x1c0] sm:$0xff]
        %v727 = vld [vmem:[%s642 + $0x1c8] sm:$0xff]
        %v728 = vld [vmem:[%s642 + $0x1d0] sm:$0xff]
        %v729 = vld [vmem:[%s642 + $0x1d8] sm:$0xff]
        %v730 = vld [vmem:[%s642 + $0x1e0] sm:$0xff]
        %v731 = vld [vmem:[%s642 + $0x1e8] sm:$0xff]
        %v732 = vld [vmem:[%s642 + $0x1f0] sm:$0xff]
        %v733 = vld [vmem:[%s642 + $0x1f8] sm:$0xff]
        %v734 = vld [vmem:[%s642 + $0x200] sm:$0xff]
        %v735 = vld [vmem:[%s642 + $0x208] sm:$0xff]
        %v736 = vld [vmem:[%s642 + $0x210] sm:$0xff]
        %v737 = vld [vmem:[%s642 + $0x218] sm:$0xff]
        %v738 = vld [vmem:[%s642 + $0x220] sm:$0xff]
        %v739 = vld [vmem:[%s642 + $0x228] sm:$0xff]
        %v740 = vld [vmem:[%s642 + $0x230] sm:$0xff]
        %v741 = vld [vmem:[%s642 + $0x238] sm:$0xff]
        %v742 = vld [vmem:[%s642 + $0x240] sm:$0xff]
        %v743 = vld [vmem:[%s642 + $0x248] sm:$0xff]
        %v744 = vld [vmem:[%s642 + $0x250] sm:$0xff]
        %v745 = vld [vmem:[%s642 + $0x258] sm:$0xff]
        %v746 = vld [vmem:[%s642 + $0x260] sm:$0xff]
        %v747 = vld [vmem:[%s642 + $0x268] sm:$0xff]
        %v748 = vld [vmem:[%s642 + $0x270] sm:$0xff]
        %v749 = vld [vmem:[%s642 + $0x278] sm:$0xff]
        %v750 = vld [vmem:[%s642 + $0x280] sm:$0xff]
        %v751 = vld [vmem:[%s642 + $0x288] sm:$0xff]
        %v752 = vld [vmem:[%s642 + $0x290] sm:$0xff]
        %v753 = vld [vmem:[%s642 + $0x298] sm:$0xff]
        %v754 = vld [vmem:[%s642 + $0x2a0] sm:$0xff]
        %v755 = vld [vmem:[%s642 + $0x2a8] sm:$0xff]
        %v756 = vld [vmem:[%s642 + $0x2b0] sm:$0xff]
        %v757 = vld [vmem:[%s642 + $0x2b8] sm:$0xff]
        %v758 = vld [vmem:[%s642 + $0x2c0] sm:$0xff]
        %v759 = vld [vmem:[%s642 + $0x2c8] sm:$0xff]
        %v760 = vld [vmem:[%s642 + $0x2d0] sm:$0xff]
        %v761 = vld [vmem:[%s642 + $0x2d8] sm:$0xff]
        %v762 = vld [vmem:[%s642 + $0x2e0] sm:$0xff]
        %v763 = vld [vmem:[%s642 + $0x2e8] sm:$0xff]
        %v764 = vld [vmem:[%s642 + $0x2f0] sm:$0xff]
        %v765 = vld [vmem:[%s642 + $0x2f8] sm:$0xff]
        %v766 = vld [vmem:[%s642 + $0x300] sm:$0xff]
        %v767 = vld [vmem:[%s642 + $0x308] sm:$0xff]
        %v768 = vld [vmem:[%s642 + $0x310] sm:$0xff]
        %v769 = vld [vmem:[%s642 + $0x318] sm:$0xff]
        %v770 = vld [vmem:[%s642 + $0x320] sm:$0xff]
        %v771 = vld [vmem:[%s642 + $0x328] sm:$0xff]
        %v772 = vld [vmem:[%s642 + $0x330] sm:$0xff]
        %v773 = vld [vmem:[%s642 + $0x338] sm:$0xff]
        %v774 = vld [vmem:[%s642 + $0x340] sm:$0xff]
        %v775 = vld [vmem:[%s642 + $0x348] sm:$0xff]
        %v776 = vld [vmem:[%s642 + $0x350] sm:$0xff]
        %v777 = vld [vmem:[%s642 + $0x358] sm:$0xff]
        %v778 = vld [vmem:[%s642 + $0x360] sm:$0xff]
        %v779 = vld [vmem:[%s642 + $0x368] sm:$0xff]
        %v780 = vld [vmem:[%s642 + $0x370] sm:$0xff]
        %v781 = vld [vmem:[%s642 + $0x378] sm:$0xff]
        %v782 = vld [vmem:[%s642 + $0x380] sm:$0xff]
        %v783 = vld [vmem:[%s642 + $0x388] sm:$0xff]
        %v784 = vld [vmem:[%s642 + $0x390] sm:$0xff]
        %v785 = vld [vmem:[%s642 + $0x398] sm:$0xff]
        %v786 = vld [vmem:[%s642 + $0x3a0] sm:$0xff]
        %v787 = vld [vmem:[%s642 + $0x3a8] sm:$0xff]
        %v788 = vld [vmem:[%s642 + $0x3b0] sm:$0xff]
        %v789 = vld [vmem:[%s642 + $0x3b8] sm:$0xff]
        %v790 = vld [vmem:[%s642 + $0x3c0] sm:$0xff]
        %v791 = vld [vmem:[%s642 + $0x3c8] sm:$0xff]
        %v792 = vld [vmem:[%s642 + $0x3d0] sm:$0xff]
        %v793 = vld [vmem:[%s642 + $0x3d8] sm:$0xff]
        %v794 = vld [vmem:[%s642 + $0x3e0] sm:$0xff]
        %v795 = vld [vmem:[%s642 + $0x3e8] sm:$0xff]
        %v796 = vld [vmem:[%s642 + $0x3f0] sm:$0xff]
        %v797 = vld [vmem:[%s642 + $0x3f8] sm:$0xff]
        %v798 = vld [vmem:[%s642 + $0x400] sm:$0xff]
        %v799 = vld [vmem:[%s642 + $0x408] sm:$0xff]
        %v800 = vld [vmem:[%s642 + $0x410] sm:$0xff]
        %v801 = vld [vmem:[%s642 + $0x418] sm:$0xff]
        %v802 = vld [vmem:[%s642 + $0x420] sm:$0xff]
        %v803 = vld [vmem:[%s642 + $0x428] sm:$0xff]
        %v804 = vld [vmem:[%s642 + $0x430] sm:$0xff]
        %v805 = vld [vmem:[%s642 + $0x438] sm:$0xff]
        %v806 = vld [vmem:[%s642 + $0x440] sm:$0xff]
        %v807 = vld [vmem:[%s642 + $0x448] sm:$0xff]
        %v808 = vld [vmem:[%s642 + $0x450] sm:$0xff]
        %v809 = vld [vmem:[%s642 + $0x458] sm:$0xff]
        %v810 = vld [vmem:[%s642 + $0x460] sm:$0xff]
        %v811 = vld [vmem:[%s642 + $0x468] sm:$0xff]
        %v812 = vld [vmem:[%s642 + $0x470] sm:$0xff]
        %v813 = vld [vmem:[%s642 + $0x478] sm:$0xff]
        %v814 = vld [vmem:[%s642 + $0x480] sm:$0xff]
        %v815 = vld [vmem:[%s642 + $0x488] sm:$0xff]
        %v816 = vld [vmem:[%s642 + $0x490] sm:$0xff]
        %v817 = vld [vmem:[%s642 + $0x498] sm:$0xff]
        %v818 = vld [vmem:[%s642 + $0x4a0] sm:$0xff]
        %v819 = vld [vmem:[%s642 + $0x4a8] sm:$0xff]
        %v820 = vld [vmem:[%s642 + $0x4b0] sm:$0xff]
        %v821 = vld [vmem:[%s642 + $0x4b8] sm:$0xff]
        %v822 = vld [vmem:[%s642 + $0x4c0] sm:$0xff]
        %v823 = vld [vmem:[%s642 + $0x4c8] sm:$0xff]
        %v824 = vld [vmem:[%s642 + $0x4d0] sm:$0xff]
        %v825 = vld [vmem:[%s642 + $0x4d8] sm:$0xff]
        %v826 = vld [vmem:[%s642 + $0x4e0] sm:$0xff]
        %v827 = vld [vmem:[%s642 + $0x4e8] sm:$0xff]
        %v828 = vld [vmem:[%s642 + $0x4f0] sm:$0xff]
        %v829 = vld [vmem:[%s642 + $0x4f8] sm:$0xff]
        %v830 = vld [vmem:[%s642 + $0x500] sm:$0xff]
        %v831 = vld [vmem:[%s642 + $0x508] sm:$0xff]
        %v832 = vld [vmem:[%s642 + $0x510] sm:$0xff]
        %v833 = vld [vmem:[%s642 + $0x518] sm:$0xff]
        %v834 = vld [vmem:[%s642 + $0x520] sm:$0xff]
        %v835 = vld [vmem:[%s642 + $0x528] sm:$0xff]
        %v836 = vld [vmem:[%s642 + $0x530] sm:$0xff]
        %v837 = vld [vmem:[%s642 + $0x538] sm:$0xff]
        %v838 = vld [vmem:[%s642 + $0x540] sm:$0xff]
        %v839 = vld [vmem:[%s642 + $0x548] sm:$0xff]
        %v840 = vld [vmem:[%s642 + $0x550] sm:$0xff]
        %v841 = vld [vmem:[%s642 + $0x558] sm:$0xff]
        %v842 = vld [vmem:[%s642 + $0x560] sm:$0xff]
        %v843 = vld [vmem:[%s642 + $0x568] sm:$0xff]
        %v844 = vld [vmem:[%s642 + $0x570] sm:$0xff]
        %v845 = vld [vmem:[%s642 + $0x578] sm:$0xff]
        %v846 = vld [vmem:[%s642 + $0x580] sm:$0xff]
        %v847 = vld [vmem:[%s642 + $0x588] sm:$0xff]
        %v848 = vld [vmem:[%s642 + $0x590] sm:$0xff]
        %v849 = vld [vmem:[%s642 + $0x598] sm:$0xff]
        %v850 = vld [vmem:[%s642 + $0x5a0] sm:$0xff]
        %v851 = vld [vmem:[%s642 + $0x5a8] sm:$0xff]
        %v852 = vld [vmem:[%s642 + $0x5b0] sm:$0xff]
        %v853 = vld [vmem:[%s642 + $0x5b8] sm:$0xff]
        %v854 = vld [vmem:[%s642 + $0x5c0] sm:$0xff]
        %v855 = vld [vmem:[%s642 + $0x5c8] sm:$0xff]
        %v856 = vld [vmem:[%s642 + $0x5d0] sm:$0xff]
        %v857 = vld [vmem:[%s642 + $0x5d8] sm:$0xff]
        %v858 = vld [vmem:[%s642 + $0x5e0] sm:$0xff]
        %v859 = vld [vmem:[%s642 + $0x5e8] sm:$0xff]
        %v860 = vld [vmem:[%s642 + $0x5f0] sm:$0xff]
        %v861 = vld [vmem:[%s642 + $0x5f8] sm:$0xff]
        %v862 = vld [vmem:[%s642 + $0x600] sm:$0xff]
        %v863 = vld [vmem:[%s642 + $0x608] sm:$0xff]
        %v864 = vld [vmem:[%s642 + $0x610] sm:$0xff]
        %v865 = vld [vmem:[%s642 + $0x618] sm:$0xff]
        %v866 = vld [vmem:[%s642 + $0x620] sm:$0xff]
        %v867 = vld [vmem:[%s642 + $0x628] sm:$0xff]
        %v868 = vld [vmem:[%s642 + $0x630] sm:$0xff]
        %v869 = vld [vmem:[%s642 + $0x638] sm:$0xff]
        %v870 = vld [vmem:[%s642 + $0x640] sm:$0xff]
        %v871 = vld [vmem:[%s642 + $0x648] sm:$0xff]
        %v872 = vld [vmem:[%s642 + $0x650] sm:$0xff]
        %v873 = vld [vmem:[%s642 + $0x658] sm:$0xff]
        %v874 = vld [vmem:[%s642 + $0x660] sm:$0xff]
        %v875 = vld [vmem:[%s642 + $0x668] sm:$0xff]
        %v876 = vld [vmem:[%s642 + $0x670] sm:$0xff]
        %v877 = vld [vmem:[%s642 + $0x678] sm:$0xff]
        %v878 = vld [vmem:[%s642 + $0x680] sm:$0xff]
        %v879 = vld [vmem:[%s642 + $0x688] sm:$0xff]
        %v880 = vld [vmem:[%s642 + $0x690] sm:$0xff]
        %v881 = vld [vmem:[%s642 + $0x698] sm:$0xff]
        %v882 = vld [vmem:[%s642 + $0x6a0] sm:$0xff]
        %v883 = vld [vmem:[%s642 + $0x6a8] sm:$0xff]
        %v884 = vld [vmem:[%s642 + $0x6b0] sm:$0xff]
        %v885 = vld [vmem:[%s642 + $0x6b8] sm:$0xff]
        %v886 = vld [vmem:[%s642 + $0x6c0] sm:$0xff]
        %v887 = vld [vmem:[%s642 + $0x6c8] sm:$0xff]
        %v888 = vld [vmem:[%s642 + $0x6d0] sm:$0xff]
        %v889 = vld [vmem:[%s642 + $0x6d8] sm:$0xff]
        %v890 = vld [vmem:[%s642 + $0x6e0] sm:$0xff]
        %v891 = vld [vmem:[%s642 + $0x6e8] sm:$0xff]
        %v892 = vld [vmem:[%s642 + $0x6f0] sm:$0xff]
        %v893 = vld [vmem:[%s642 + $0x6f8] sm:$0xff]
        %v894 = vld [vmem:[%s642 + $0x700] sm:$0xff]
        %v895 = vld [vmem:[%s642 + $0x708] sm:$0xff]
        %v896 = vld [vmem:[%s642 + $0x710] sm:$0xff]
        %v897 = vld [vmem:[%s642 + $0x718] sm:$0xff]
        %v898 = vld [vmem:[%s642 + $0x720] sm:$0xff]
        %v899 = vld [vmem:[%s642 + $0x728] sm:$0xff]
        %v900 = vld [vmem:[%s642 + $0x730] sm:$0xff]
        %v901 = vld [vmem:[%s642 + $0x738] sm:$0xff]
        %v902 = vld [vmem:[%s642 + $0x740] sm:$0xff]
        %v903 = vld [vmem:[%s642 + $0x748] sm:$0xff]
        %v904 = vld [vmem:[%s642 + $0x750] sm:$0xff]
        %v905 = vld [vmem:[%s642 + $0x758] sm:$0xff]
        %v906 = vld [vmem:[%s642 + $0x760] sm:$0xff]
        %v907 = vld [vmem:[%s642 + $0x768] sm:$0xff]
        %v908 = vld [vmem:[%s642 + $0x770] sm:$0xff]
        %v909 = vld [vmem:[%s642 + $0x778] sm:$0xff]
        %v910 = vld [vmem:[%s642 + $0x780] sm:$0xff]
        %v911 = vld [vmem:[%s642 + $0x788] sm:$0xff]
        %v912 = vld [vmem:[%s642 + $0x790] sm:$0xff]
        %v913 = vld [vmem:[%s642 + $0x798] sm:$0xff]
        %v914 = vld [vmem:[%s642 + $0x7a0] sm:$0xff]
        %v915 = vld [vmem:[%s642 + $0x7a8] sm:$0xff]
        %v916 = vld [vmem:[%s642 + $0x7b0] sm:$0xff]
        %v917 = vld [vmem:[%s642 + $0x7b8] sm:$0xff]
        %v918 = vld [vmem:[%s642 + $0x7c0] sm:$0xff]
        %v919 = vld [vmem:[%s642 + $0x7c8] sm:$0xff]
        %v920 = vld [vmem:[%s642 + $0x7d0] sm:$0xff]
        %v921 = vld [vmem:[%s642 + $0x7d8] sm:$0xff]
        %vm922 = vcmask 130048
        %v924 = vsel %vm922, %v663, 0
        %v927 = vsel %vm922, %v665, 0
        %v930 = vsel %vm922, %v667, 0
        %v933 = vsel %vm922, %v669, 0
        %935 = vmatprep.subr.mxu0 %v881
        %936 = vmatpush1.msra.mxu0 %v880
        %937 = vmatprep.subr.mxu0 %v867
        %938 = vmatpush1.msra.mxu0 %v866
        %939 = vmatprep.subr.mxu0 %v853
        %940 = vmatpush1.msra.mxu0 %v852
        %941 = vmatprep.subr.mxu0 %v839
        %942 = vmatpush1.msra.mxu0 %v838
        %943 = vmatprep.subr.mxu0 %v825
        %944 = vmatpush1.msra.mxu0 %v824
        %945 = vmatprep.subr.mxu0 %v811
        %946 = vmatpush1.msra.mxu0 %v810
        %947 = vmatprep.subr.mxu0 %v797
        %948 = vmatpush1.msra.mxu0 %v796
        %949 = vmatprep.subr.mxu0 %v783
        %950 = vmatpush1.msra.mxu0 %v782
        %951 = vmatprep.subr.mxu0 %v769
        %952 = vmatpush1.msra.mxu0 %v768
        %953 = vmatprep.subr.mxu0 %v755
        %954 = vmatpush1.msra.mxu0 %v754
        %955 = vmatprep.subr.mxu0 %v741
        %956 = vmatpush1.msra.mxu0 %v740
        %957 = vmatprep.subr.mxu0 %v727
        %958 = vmatpush1.msra.mxu0 %v726
        %959 = vmatprep.subr.mxu0 %v713
        %960 = vmatpush1.msra.mxu0 %v712
        %961 = vmatprep.subr.mxu0 %v699
        %962 = vmatpush1.msra.mxu0 %v698
        %963 = vmatprep.subr.mxu0 %v685
        %964 = vmatpush1.msra.mxu0 %v684
        %965 = vmatprep.subr.mxu0 %v671
        %966 = vmatpush1.msra.mxu0 %v670
        %967 = vmatprep.subr.mxu0 0.0
        %968 = vmatpush2.msra.mxu0 0.0
        %969 = vmatprep.subr.mxu0 0.0
        %970 = vmatpush2.msra.mxu0 0.0
        %971 = vmatprep.subr.mxu0 0.0
        %972 = vmatpush2.msra.mxu0 0.0
        %973 = vmatprep.subr.mxu0 0.0
        %974 = vmatpush2.msra.mxu0 0.0
        %975 = vmatprep.subr.mxu0 0.0
        %976 = vmatpush2.msra.mxu0 0.0
        %977 = vmatprep.subr.mxu0 0.0
        %978 = vmatpush2.msra.mxu0 0.0
        %979 = vmatprep.subr.mxu0 0.0
        %980 = vmatpush2.msra.mxu0 0.0
        %981 = vmatprep.subr.mxu0 0.0
        %982 = vmatpush2.msra.mxu0 0.0
        %983 = vmatprep.subr.mxu0 0.0
        %984 = vmatpush2.msra.mxu0 0.0
        %985 = vmatprep.subr.mxu0 0.0
        %986 = vmatpush2.msra.mxu0 0.0
        %987 = vmatprep.subr.mxu0 0.0
        %988 = vmatpush2.msra.mxu0 0.0
        %989 = vmatprep.subr.mxu0 0.0
        %990 = vmatpush2.msra.mxu0 0.0
        %991 = vmatprep.subr.mxu0 0.0
        %992 = vmatpush2.msra.mxu0 0.0
        %993 = vmatprep.subr.mxu0 0.0
        %994 = vmatpush2.msra.mxu0 0.0
        %995 = vmatprep.subr.mxu0 %v909
        %996 = vmatpush2.msra.mxu0 %v908
        %997 = vmatprep.subr.mxu0 %v895
        %998 = vmatpush2.msra.mxu0 %v894
        %999 = vmatprep.mubr.f32.mxu0 %v924
        %1000 = vmatmul.mubr.f32.gmra.mxu0 %v662
        %v1001 = vpop.f32.mrf.mxu0
        %v1002 = vadd.f32 0.0, %v1001
        %v1003 = vpop.f32.mrf.mxu0
        %v1004 = vadd.f32 0.0, %v1003
        %1005 = vmatprep.mubr.f32.mxu0 %v927
        %1006 = vmatmul.mubr.f32.gmra.mxu0 %v664
        %v1007 = vpop.f32.mrf.mxu0
        %v1008 = vadd.f32 0.0, %v1007
        %v1009 = vpop.f32.mrf.mxu0
        %v1010 = vadd.f32 0.0, %v1009
        %1011 = vmatprep.mubr.f32.mxu0 %v930
        %1012 = vmatmul.mubr.f32.gmra.mxu0 %v666
        %v1013 = vpop.f32.mrf.mxu0
        %v1014 = vadd.f32 0.0, %v1013
        %v1015 = vpop.f32.mrf.mxu0
        %v1016 = vadd.f32 0.0, %v1015
        %1017 = vmatprep.mubr.f32.mxu0 %v933
        %1018 = vmatmul.mubr.f32.gmra.mxu0 %v668
        %v1019 = vpop.f32.mrf.mxu0
        %v1020 = vadd.f32 0.0, %v1019
        %v1021 = vpop.f32.mrf.mxu0
        %v1022 = vadd.f32 0.0, %v1021
        %1023 = vdwg.mxu0
        %1024 = vmatprep.subr.mxu0 %v883
        %1025 = vmatpush1.msra.mxu0 %v882
        %1026 = vmatprep.subr.mxu0 %v869
        %1027 = vmatpush1.msra.mxu0 %v868
        %1028 = vmatprep.subr.mxu0 %v855
        %1029 = vmatpush1.msra.mxu0 %v854
        %1030 = vmatprep.subr.mxu0 %v841
        %1031 = vmatpush1.msra.mxu0 %v840
        %1032 = vmatprep.subr.mxu0 %v827
        %1033 = vmatpush1.msra.mxu0 %v826
        %1034 = vmatprep.subr.mxu0 %v813
        %1035 = vmatpush1.msra.mxu0 %v812
        %1036 = vmatprep.subr.mxu0 %v799
        %1037 = vmatpush1.msra.mxu0 %v798
        %1038 = vmatprep.subr.mxu0 %v785
        %1039 = vmatpush1.msra.mxu0 %v784
        %1040 = vmatprep.subr.mxu0 %v771
        %1041 = vmatpush1.msra.mxu0 %v770
        %1042 = vmatprep.subr.mxu0 %v757
        %1043 = vmatpush1.msra.mxu0 %v756
        %1044 = vmatprep.subr.mxu0 %v743
        %1045 = vmatpush1.msra.mxu0 %v742
        %1046 = vmatprep.subr.mxu0 %v729
        %1047 = vmatpush1.msra.mxu0 %v728
        %1048 = vmatprep.subr.mxu0 %v715
        %1049 = vmatpush1.msra.mxu0 %v714
        %1050 = vmatprep.subr.mxu0 %v701
        %1051 = vmatpush1.msra.mxu0 %v700
        %1052 = vmatprep.subr.mxu0 %v687
        %1053 = vmatpush1.msra.mxu0 %v686
        %1054 = vmatprep.subr.mxu0 %v673
        %1055 = vmatpush1.msra.mxu0 %v672
        %1056 = vmatprep.subr.mxu0 0.0
        %1057 = vmatpush2.msra.mxu0 0.0
        %1058 = vmatprep.subr.mxu0 0.0
        %1059 = vmatpush2.msra.mxu0 0.0
        %1060 = vmatprep.subr.mxu0 0.0
        %1061 = vmatpush2.msra.mxu0 0.0
        %1062 = vmatprep.subr.mxu0 0.0
        %1063 = vmatpush2.msra.mxu0 0.0
        %1064 = vmatprep.subr.mxu0 0.0
        %1065 = vmatpush2.msra.mxu0 0.0
        %1066 = vmatprep.subr.mxu0 0.0
        %1067 = vmatpush2.msra.mxu0 0.0
        %1068 = vmatprep.subr.mxu0 0.0
        %1069 = vmatpush2.msra.mxu0 0.0
        %1070 = vmatprep.subr.mxu0 0.0
        %1071 = vmatpush2.msra.mxu0 0.0
        %1072 = vmatprep.subr.mxu0 0.0
        %1073 = vmatpush2.msra.mxu0 0.0
        %1074 = vmatprep.subr.mxu0 0.0
        %1075 = vmatpush2.msra.mxu0 0.0
        %1076 = vmatprep.subr.mxu0 0.0
        %1077 = vmatpush2.msra.mxu0 0.0
        %1078 = vmatprep.subr.mxu0 0.0
        %1079 = vmatpush2.msra.mxu0 0.0
        %1080 = vmatprep.subr.mxu0 0.0
        %1081 = vmatpush2.msra.mxu0 0.0
        %1082 = vmatprep.subr.mxu0 0.0
        %1083 = vmatpush2.msra.mxu0 0.0
        %1084 = vmatprep.subr.mxu0 %v911
        %1085 = vmatpush2.msra.mxu0 %v910
        %1086 = vmatprep.subr.mxu0 %v897
        %1087 = vmatpush2.msra.mxu0 %v896
        %1088 = vmatprep.mubr.f32.mxu0 %v924
        %1089 = vmatmul.mubr.f32.gmra.mxu0 %v662
        %v1090 = vpop.f32.mrf.mxu0
        %v1091 = vadd.f32 0.0, %v1090
        %v1092 = vpop.f32.mrf.mxu0
        %v1093 = vadd.f32 0.0, %v1092
        %1094 = vmatprep.mubr.f32.mxu0 %v927
        %1095 = vmatmul.mubr.f32.gmra.mxu0 %v664
        %v1096 = vpop.f32.mrf.mxu0
        %v1097 = vadd.f32 0.0, %v1096
        %v1098 = vpop.f32.mrf.mxu0
        %v1099 = vadd.f32 0.0, %v1098
        %1100 = vmatprep.mubr.f32.mxu0 %v930
        %1101 = vmatmul.mubr.f32.gmra.mxu0 %v666
        %v1102 = vpop.f32.mrf.mxu0
        %v1103 = vadd.f32 0.0, %v1102
        %v1104 = vpop.f32.mrf.mxu0
        %v1105 = vadd.f32 0.0, %v1104
        %1106 = vmatprep.mubr.f32.mxu0 %v933
        %1107 = vmatmul.mubr.f32.gmra.mxu0 %v668
        %v1108 = vpop.f32.mrf.mxu0
        %v1109 = vadd.f32 0.0, %v1108
        %v1110 = vpop.f32.mrf.mxu0
        %v1111 = vadd.f32 0.0, %v1110
        %1112 = vdwg.mxu0
        %1113 = vmatprep.subr.mxu0 %v885
        %1114 = vmatpush1.msra.mxu0 %v884
        %1115 = vmatprep.subr.mxu0 %v871
        %1116 = vmatpush1.msra.mxu0 %v870
        %1117 = vmatprep.subr.mxu0 %v857
        %1118 = vmatpush1.msra.mxu0 %v856
        %1119 = vmatprep.subr.mxu0 %v843
        %1120 = vmatpush1.msra.mxu0 %v842
        %1121 = vmatprep.subr.mxu0 %v829
        %1122 = vmatpush1.msra.mxu0 %v828
        %1123 = vmatprep.subr.mxu0 %v815
        %1124 = vmatpush1.msra.mxu0 %v814
        %1125 = vmatprep.subr.mxu0 %v801
        %1126 = vmatpush1.msra.mxu0 %v800
        %1127 = vmatprep.subr.mxu0 %v787
        %1128 = vmatpush1.msra.mxu0 %v786
        %1129 = vmatprep.subr.mxu0 %v773
        %1130 = vmatpush1.msra.mxu0 %v772
        %1131 = vmatprep.subr.mxu0 %v759
        %1132 = vmatpush1.msra.mxu0 %v758
        %1133 = vmatprep.subr.mxu0 %v745
        %1134 = vmatpush1.msra.mxu0 %v744
        %1135 = vmatprep.subr.mxu0 %v731
        %1136 = vmatpush1.msra.mxu0 %v730
        %1137 = vmatprep.subr.mxu0 %v717
        %1138 = vmatpush1.msra.mxu0 %v716
        %1139 = vmatprep.subr.mxu0 %v703
        %1140 = vmatpush1.msra.mxu0 %v702
        %1141 = vmatprep.subr.mxu0 %v689
        %1142 = vmatpush1.msra.mxu0 %v688
        %1143 = vmatprep.subr.mxu0 %v675
        %1144 = vmatpush1.msra.mxu0 %v674
        %1145 = vmatprep.subr.mxu0 0.0
        %1146 = vmatpush2.msra.mxu0 0.0
        %1147 = vmatprep.subr.mxu0 0.0
        %1148 = vmatpush2.msra.mxu0 0.0
        %1149 = vmatprep.subr.mxu0 0.0
        %1150 = vmatpush2.msra.mxu0 0.0
        %1151 = vmatprep.subr.mxu0 0.0
        %1152 = vmatpush2.msra.mxu0 0.0
        %1153 = vmatprep.subr.mxu0 0.0
        %1154 = vmatpush2.msra.mxu0 0.0
        %1155 = vmatprep.subr.mxu0 0.0
        %1156 = vmatpush2.msra.mxu0 0.0
        %1157 = vmatprep.subr.mxu0 0.0
        %1158 = vmatpush2.msra.mxu0 0.0
        %1159 = vmatprep.subr.mxu0 0.0
        %1160 = vmatpush2.msra.mxu0 0.0
        %1161 = vmatprep.subr.mxu0 0.0
        %1162 = vmatpush2.msra.mxu0 0.0
        %1163 = vmatprep.subr.mxu0 0.0
        %1164 = vmatpush2.msra.mxu0 0.0
        %1165 = vmatprep.subr.mxu0 0.0
        %1166 = vmatpush2.msra.mxu0 0.0
        %1167 = vmatprep.subr.mxu0 0.0
        %1168 = vmatpush2.msra.mxu0 0.0
        %1169 = vmatprep.subr.mxu0 0.0
        %1170 = vmatpush2.msra.mxu0 0.0
        %1171 = vmatprep.subr.mxu0 0.0
        %1172 = vmatpush2.msra.mxu0 0.0
        %1173 = vmatprep.subr.mxu0 %v913
        %1174 = vmatpush2.msra.mxu0 %v912
        %1175 = vmatprep.subr.mxu0 %v899
        %1176 = vmatpush2.msra.mxu0 %v898
        %1177 = vmatprep.mubr.f32.mxu0 %v924
        %1178 = vmatmul.mubr.f32.gmra.mxu0 %v662
        %v1179 = vpop.f32.mrf.mxu0
        %v1180 = vadd.f32 0.0, %v1179
        %v1181 = vpop.f32.mrf.mxu0
        %v1182 = vadd.f32 0.0, %v1181
        %1183 = vmatprep.mubr.f32.mxu0 %v927
        %1184 = vmatmul.mubr.f32.gmra.mxu0 %v664
        %v1185 = vpop.f32.mrf.mxu0
        %v1186 = vadd.f32 0.0, %v1185
        %v1187 = vpop.f32.mrf.mxu0
        %v1188 = vadd.f32 0.0, %v1187
        %1189 = vmatprep.mubr.f32.mxu0 %v930
        %1190 = vmatmul.mubr.f32.gmra.mxu0 %v666
        %v1191 = vpop.f32.mrf.mxu0
        %v1192 = vadd.f32 0.0, %v1191
        %v1193 = vpop.f32.mrf.mxu0
        %v1194 = vadd.f32 0.0, %v1193
        %1195 = vmatprep.mubr.f32.mxu0 %v933
        %1196 = vmatmul.mubr.f32.gmra.mxu0 %v668
        %v1197 = vpop.f32.mrf.mxu0
        %v1198 = vadd.f32 0.0, %v1197
        %v1199 = vpop.f32.mrf.mxu0
        %v1200 = vadd.f32 0.0, %v1199
        %1201 = vdwg.mxu0
        %1202 = vmatprep.subr.mxu0 %v887
        %1203 = vmatpush1.msra.mxu0 %v886
        %1204 = vmatprep.subr.mxu0 %v873
        %1205 = vmatpush1.msra.mxu0 %v872
        %1206 = vmatprep.subr.mxu0 %v859
        %1207 = vmatpush1.msra.mxu0 %v858
        %1208 = vmatprep.subr.mxu0 %v845
        %1209 = vmatpush1.msra.mxu0 %v844
        %1210 = vmatprep.subr.mxu0 %v831
        %1211 = vmatpush1.msra.mxu0 %v830
        %1212 = vmatprep.subr.mxu0 %v817
        %1213 = vmatpush1.msra.mxu0 %v816
        %1214 = vmatprep.subr.mxu0 %v803
        %1215 = vmatpush1.msra.mxu0 %v802
        %1216 = vmatprep.subr.mxu0 %v789
        %1217 = vmatpush1.msra.mxu0 %v788
        %1218 = vmatprep.subr.mxu0 %v775
        %1219 = vmatpush1.msra.mxu0 %v774
        %1220 = vmatprep.subr.mxu0 %v761
        %1221 = vmatpush1.msra.mxu0 %v760
        %1222 = vmatprep.subr.mxu0 %v747
        %1223 = vmatpush1.msra.mxu0 %v746
        %1224 = vmatprep.subr.mxu0 %v733
        %1225 = vmatpush1.msra.mxu0 %v732
        %1226 = vmatprep.subr.mxu0 %v719
        %1227 = vmatpush1.msra.mxu0 %v718
        %1228 = vmatprep.subr.mxu0 %v705
        %1229 = vmatpush1.msra.mxu0 %v704
        %1230 = vmatprep.subr.mxu0 %v691
        %1231 = vmatpush1.msra.mxu0 %v690
        %1232 = vmatprep.subr.mxu0 %v677
        %1233 = vmatpush1.msra.mxu0 %v676
        %1234 = vmatprep.subr.mxu0 0.0
        %1235 = vmatpush2.msra.mxu0 0.0
        %1236 = vmatprep.subr.mxu0 0.0
        %1237 = vmatpush2.msra.mxu0 0.0
        %1238 = vmatprep.subr.mxu0 0.0
        %1239 = vmatpush2.msra.mxu0 0.0
        %1240 = vmatprep.subr.mxu0 0.0
        %1241 = vmatpush2.msra.mxu0 0.0
        %1242 = vmatprep.subr.mxu0 0.0
        %1243 = vmatpush2.msra.mxu0 0.0
        %1244 = vmatprep.subr.mxu0 0.0
        %1245 = vmatpush2.msra.mxu0 0.0
        %1246 = vmatprep.subr.mxu0 0.0
        %1247 = vmatpush2.msra.mxu0 0.0
        %1248 = vmatprep.subr.mxu0 0.0
        %1249 = vmatpush2.msra.mxu0 0.0
        %1250 = vmatprep.subr.mxu0 0.0
        %1251 = vmatpush2.msra.mxu0 0.0
        %1252 = vmatprep.subr.mxu0 0.0
        %1253 = vmatpush2.msra.mxu0 0.0
        %1254 = vmatprep.subr.mxu0 0.0
        %1255 = vmatpush2.msra.mxu0 0.0
        %1256 = vmatprep.subr.mxu0 0.0
        %1257 = vmatpush2.msra.mxu0 0.0
        %1258 = vmatprep.subr.mxu0 0.0
        %1259 = vmatpush2.msra.mxu0 0.0
        %1260 = vmatprep.subr.mxu0 0.0
        %1261 = vmatpush2.msra.mxu0 0.0
        %1262 = vmatprep.subr.mxu0 %v915
        %1263 = vmatpush2.msra.mxu0 %v914
        %1264 = vmatprep.subr.mxu0 %v901
        %1265 = vmatpush2.msra.mxu0 %v900
        %1266 = vmatprep.mubr.f32.mxu0 %v924
        %1267 = vmatmul.mubr.f32.gmra.mxu0 %v662
        %v1268 = vpop.f32.mrf.mxu0
        %v1269 = vadd.f32 0.0, %v1268
        %v1270 = vpop.f32.mrf.mxu0
        %v1271 = vadd.f32 0.0, %v1270
        %1272 = vmatprep.mubr.f32.mxu0 %v927
        %1273 = vmatmul.mubr.f32.gmra.mxu0 %v664
        %v1274 = vpop.f32.mrf.mxu0
        %v1275 = vadd.f32 0.0, %v1274
        %v1276 = vpop.f32.mrf.mxu0
        %v1277 = vadd.f32 0.0, %v1276
        %1278 = vmatprep.mubr.f32.mxu0 %v930
        %1279 = vmatmul.mubr.f32.gmra.mxu0 %v666
        %v1280 = vpop.f32.mrf.mxu0
        %v1281 = vadd.f32 0.0, %v1280
        %v1282 = vpop.f32.mrf.mxu0
        %v1283 = vadd.f32 0.0, %v1282
        %1284 = vmatprep.mubr.f32.mxu0 %v933
        %1285 = vmatmul.mubr.f32.gmra.mxu0 %v668
        %v1286 = vpop.f32.mrf.mxu0
        %v1287 = vadd.f32 0.0, %v1286
        %v1288 = vpop.f32.mrf.mxu0
        %v1289 = vadd.f32 0.0, %v1288
        %1290 = vdwg.mxu0
        %1291 = vmatprep.subr.mxu0 %v889
        %1292 = vmatpush1.msra.mxu0 %v888
        %1293 = vmatprep.subr.mxu0 %v875
        %1294 = vmatpush1.msra.mxu0 %v874
        %1295 = vmatprep.subr.mxu0 %v861
        %1296 = vmatpush1.msra.mxu0 %v860
        %1297 = vmatprep.subr.mxu0 %v847
        %1298 = vmatpush1.msra.mxu0 %v846
        %1299 = vmatprep.subr.mxu0 %v833
        %1300 = vmatpush1.msra.mxu0 %v832
        %1301 = vmatprep.subr.mxu0 %v819
        %1302 = vmatpush1.msra.mxu0 %v818
        %1303 = vmatprep.subr.mxu0 %v805
        %1304 = vmatpush1.msra.mxu0 %v804
        %1305 = vmatprep.subr.mxu0 %v791
        %1306 = vmatpush1.msra.mxu0 %v790
        %1307 = vmatprep.subr.mxu0 %v777
        %1308 = vmatpush1.msra.mxu0 %v776
        %1309 = vmatprep.subr.mxu0 %v763
        %1310 = vmatpush1.msra.mxu0 %v762
        %1311 = vmatprep.subr.mxu0 %v749
        %1312 = vmatpush1.msra.mxu0 %v748
        %1313 = vmatprep.subr.mxu0 %v735
        %1314 = vmatpush1.msra.mxu0 %v734
        %1315 = vmatprep.subr.mxu0 %v721
        %1316 = vmatpush1.msra.mxu0 %v720
        %1317 = vmatprep.subr.mxu0 %v707
        %1318 = vmatpush1.msra.mxu0 %v706
        %1319 = vmatprep.subr.mxu0 %v693
        %1320 = vmatpush1.msra.mxu0 %v692
        %1321 = vmatprep.subr.mxu0 %v679
        %1322 = vmatpush1.msra.mxu0 %v678
        %1323 = vmatprep.subr.mxu0 0.0
        %1324 = vmatpush2.msra.mxu0 0.0
        %1325 = vmatprep.subr.mxu0 0.0
        %1326 = vmatpush2.msra.mxu0 0.0
        %1327 = vmatprep.subr.mxu0 0.0
        %1328 = vmatpush2.msra.mxu0 0.0
        %1329 = vmatprep.subr.mxu0 0.0
        %1330 = vmatpush2.msra.mxu0 0.0
        %1331 = vmatprep.subr.mxu0 0.0
        %1332 = vmatpush2.msra.mxu0 0.0
        %1333 = vmatprep.subr.mxu0 0.0
        %1334 = vmatpush2.msra.mxu0 0.0
        %1335 = vmatprep.subr.mxu0 0.0
        %1336 = vmatpush2.msra.mxu0 0.0
        %1337 = vmatprep.subr.mxu0 0.0
        %1338 = vmatpush2.msra.mxu0 0.0
        %1339 = vmatprep.subr.mxu0 0.0
        %1340 = vmatpush2.msra.mxu0 0.0
        %1341 = vmatprep.subr.mxu0 0.0
        %1342 = vmatpush2.msra.mxu0 0.0
        %1343 = vmatprep.subr.mxu0 0.0
        %1344 = vmatpush2.msra.mxu0 0.0
        %1345 = vmatprep.subr.mxu0 0.0
        %1346 = vmatpush2.msra.mxu0 0.0
        %1347 = vmatprep.subr.mxu0 0.0
        %1348 = vmatpush2.msra.mxu0 0.0
        %1349 = vmatprep.subr.mxu0 0.0
        %1350 = vmatpush2.msra.mxu0 0.0
        %1351 = vmatprep.subr.mxu0 %v917
        %1352 = vmatpush2.msra.mxu0 %v916
        %1353 = vmatprep.subr.mxu0 %v903
        %1354 = vmatpush2.msra.mxu0 %v902
        %1355 = vmatprep.mubr.f32.mxu0 %v924
        %1356 = vmatmul.mubr.f32.gmra.mxu0 %v662
        %v1357 = vpop.f32.mrf.mxu0
        %v1358 = vadd.f32 0.0, %v1357
        %v1359 = vpop.f32.mrf.mxu0
        %v1360 = vadd.f32 0.0, %v1359
        %1361 = vmatprep.mubr.f32.mxu0 %v927
        %1362 = vmatmul.mubr.f32.gmra.mxu0 %v664
        %v1363 = vpop.f32.mrf.mxu0
        %v1364 = vadd.f32 0.0, %v1363
        %v1365 = vpop.f32.mrf.mxu0
        %v1366 = vadd.f32 0.0, %v1365
        %1367 = vmatprep.mubr.f32.mxu0 %v930
        %1368 = vmatmul.mubr.f32.gmra.mxu0 %v666
        %v1369 = vpop.f32.mrf.mxu0
        %v1370 = vadd.f32 0.0, %v1369
        %v1371 = vpop.f32.mrf.mxu0
        %v1372 = vadd.f32 0.0, %v1371
        %1373 = vmatprep.mubr.f32.mxu0 %v933
        %1374 = vmatmul.mubr.f32.gmra.mxu0 %v668
        %v1375 = vpop.f32.mrf.mxu0
        %v1376 = vadd.f32 0.0, %v1375
        %v1377 = vpop.f32.mrf.mxu0
        %v1378 = vadd.f32 0.0, %v1377
        %1379 = vdwg.mxu0
        %1380 = vmatprep.subr.mxu0 %v891
        %1381 = vmatpush1.msra.mxu0 %v890
        %1382 = vmatprep.subr.mxu0 %v877
        %1383 = vmatpush1.msra.mxu0 %v876
        %1384 = vmatprep.subr.mxu0 %v863
        %1385 = vmatpush1.msra.mxu0 %v862
        %1386 = vmatprep.subr.mxu0 %v849
        %1387 = vmatpush1.msra.mxu0 %v848
        %1388 = vmatprep.subr.mxu0 %v835
        %1389 = vmatpush1.msra.mxu0 %v834
        %1390 = vmatprep.subr.mxu0 %v821
        %1391 = vmatpush1.msra.mxu0 %v820
        %1392 = vmatprep.subr.mxu0 %v807
        %1393 = vmatpush1.msra.mxu0 %v806
        %1394 = vmatprep.subr.mxu0 %v793
        %1395 = vmatpush1.msra.mxu0 %v792
        %1396 = vmatprep.subr.mxu0 %v779
        %1397 = vmatpush1.msra.mxu0 %v778
        %1398 = vmatprep.subr.mxu0 %v765
        %1399 = vmatpush1.msra.mxu0 %v764
        %1400 = vmatprep.subr.mxu0 %v751
        %1401 = vmatpush1.msra.mxu0 %v750
        %1402 = vmatprep.subr.mxu0 %v737
        %1403 = vmatpush1.msra.mxu0 %v736
        %1404 = vmatprep.subr.mxu0 %v723
        %1405 = vmatpush1.msra.mxu0 %v722
        %1406 = vmatprep.subr.mxu0 %v709
        %1407 = vmatpush1.msra.mxu0 %v708
        %1408 = vmatprep.subr.mxu0 %v695
        %1409 = vmatpush1.msra.mxu0 %v694
        %1410 = vmatprep.subr.mxu0 %v681
        %1411 = vmatpush1.msra.mxu0 %v680
        %1412 = vmatprep.subr.mxu0 0.0
        %1413 = vmatpush2.msra.mxu0 0.0
        %1414 = vmatprep.subr.mxu0 0.0
        %1415 = vmatpush2.msra.mxu0 0.0
        %1416 = vmatprep.subr.mxu0 0.0
        %1417 = vmatpush2.msra.mxu0 0.0
        %1418 = vmatprep.subr.mxu0 0.0
        %1419 = vmatpush2.msra.mxu0 0.0
        %1420 = vmatprep.subr.mxu0 0.0
        %1421 = vmatpush2.msra.mxu0 0.0
        %1422 = vmatprep.subr.mxu0 0.0
        %1423 = vmatpush2.msra.mxu0 0.0
        %1424 = vmatprep.subr.mxu0 0.0
        %1425 = vmatpush2.msra.mxu0 0.0
        %1426 = vmatprep.subr.mxu0 0.0
        %1427 = vmatpush2.msra.mxu0 0.0
        %1428 = vmatprep.subr.mxu0 0.0
        %1429 = vmatpush2.msra.mxu0 0.0
        %1430 = vmatprep.subr.mxu0 0.0
        %1431 = vmatpush2.msra.mxu0 0.0
        %1432 = vmatprep.subr.mxu0 0.0
        %1433 = vmatpush2.msra.mxu0 0.0
        %1434 = vmatprep.subr.mxu0 0.0
        %1435 = vmatpush2.msra.mxu0 0.0
        %1436 = vmatprep.subr.mxu0 0.0
        %1437 = vmatpush2.msra.mxu0 0.0
        %1438 = vmatprep.subr.mxu0 0.0
        %1439 = vmatpush2.msra.mxu0 0.0
        %1440 = vmatprep.subr.mxu0 %v919
        %1441 = vmatpush2.msra.mxu0 %v918
        %1442 = vmatprep.subr.mxu0 %v905
        %1443 = vmatpush2.msra.mxu0 %v904
        %1444 = vmatprep.mubr.f32.mxu0 %v924
        %1445 = vmatmul.mubr.f32.gmra.mxu0 %v662
        %v1446 = vpop.f32.mrf.mxu0
        %v1447 = vadd.f32 0.0, %v1446
        %v1448 = vpop.f32.mrf.mxu0
        %v1449 = vadd.f32 0.0, %v1448
        %1450 = vmatprep.mubr.f32.mxu0 %v927
        %1451 = vmatmul.mubr.f32.gmra.mxu0 %v664
        %v1452 = vpop.f32.mrf.mxu0
        %v1453 = vadd.f32 0.0, %v1452
        %v1454 = vpop.f32.mrf.mxu0
        %v1455 = vadd.f32 0.0, %v1454
        %1456 = vmatprep.mubr.f32.mxu0 %v930
        %1457 = vmatmul.mubr.f32.gmra.mxu0 %v666
        %v1458 = vpop.f32.mrf.mxu0
        %v1459 = vadd.f32 0.0, %v1458
        %v1460 = vpop.f32.mrf.mxu0
        %v1461 = vadd.f32 0.0, %v1460
        %1462 = vmatprep.mubr.f32.mxu0 %v933
        %1463 = vmatmul.mubr.f32.gmra.mxu0 %v668
        %v1464 = vpop.f32.mrf.mxu0
        %v1465 = vadd.f32 0.0, %v1464
        %v1466 = vpop.f32.mrf.mxu0
        %v1467 = vadd.f32 0.0, %v1466
        %1468 = vdwg.mxu0
        %1469 = vmatprep.subr.mxu0 %v893
        %1470 = vmatpush1.msra.mxu0 %v892
        %1471 = vmatprep.subr.mxu0 %v879
        %1472 = vmatpush1.msra.mxu0 %v878
        %1473 = vmatprep.subr.mxu0 %v865
        %1474 = vmatpush1.msra.mxu0 %v864
        %1475 = vmatprep.subr.mxu0 %v851
        %1476 = vmatpush1.msra.mxu0 %v850
        %1477 = vmatprep.subr.mxu0 %v837
        %1478 = vmatpush1.msra.mxu0 %v836
        %1479 = vmatprep.subr.mxu0 %v823
        %1480 = vmatpush1.msra.mxu0 %v822
        %1481 = vmatprep.subr.mxu0 %v809
        %1482 = vmatpush1.msra.mxu0 %v808
        %1483 = vmatprep.subr.mxu0 %v795
        %1484 = vmatpush1.msra.mxu0 %v794
        %1485 = vmatprep.subr.mxu0 %v781
        %1486 = vmatpush1.msra.mxu0 %v780
        %1487 = vmatprep.subr.mxu0 %v767
        %1488 = vmatpush1.msra.mxu0 %v766
        %1489 = vmatprep.subr.mxu0 %v753
        %1490 = vmatpush1.msra.mxu0 %v752
        %1491 = vmatprep.subr.mxu0 %v739
        %1492 = vmatpush1.msra.mxu0 %v738
        %1493 = vmatprep.subr.mxu0 %v725
        %1494 = vmatpush1.msra.mxu0 %v724
        %1495 = vmatprep.subr.mxu0 %v711
        %1496 = vmatpush1.msra.mxu0 %v710
        %1497 = vmatprep.subr.mxu0 %v697
        %1498 = vmatpush1.msra.mxu0 %v696
        %1499 = vmatprep.subr.mxu0 %v683
        %1500 = vmatpush1.msra.mxu0 %v682
        %1501 = vmatprep.subr.mxu0 0.0
        %1502 = vmatpush2.msra.mxu0 0.0
        %1503 = vmatprep.subr.mxu0 0.0
        %1504 = vmatpush2.msra.mxu0 0.0
        %1505 = vmatprep.subr.mxu0 0.0
        %1506 = vmatpush2.msra.mxu0 0.0
        %1507 = vmatprep.subr.mxu0 0.0
        %1508 = vmatpush2.msra.mxu0 0.0
        %1509 = vmatprep.subr.mxu0 0.0
        %1510 = vmatpush2.msra.mxu0 0.0
        %1511 = vmatprep.subr.mxu0 0.0
        %1512 = vmatpush2.msra.mxu0 0.0
        %1513 = vmatprep.subr.mxu0 0.0
        %1514 = vmatpush2.msra.mxu0 0.0
        %1515 = vmatprep.subr.mxu0 0.0
        %1516 = vmatpush2.msra.mxu0 0.0
        %1517 = vmatprep.subr.mxu0 0.0
        %1518 = vmatpush2.msra.mxu0 0.0
        %1519 = vmatprep.subr.mxu0 0.0
        %1520 = vmatpush2.msra.mxu0 0.0
        %1521 = vmatprep.subr.mxu0 0.0
        %1522 = vmatpush2.msra.mxu0 0.0
        %1523 = vmatprep.subr.mxu0 0.0
        %1524 = vmatpush2.msra.mxu0 0.0
        %1525 = vmatprep.subr.mxu0 0.0
        %1526 = vmatpush2.msra.mxu0 0.0
        %1527 = vmatprep.subr.mxu0 0.0
        %1528 = vmatpush2.msra.mxu0 0.0
        %1529 = vmatprep.subr.mxu0 %v921
        %1530 = vmatpush2.msra.mxu0 %v920
        %1531 = vmatprep.subr.mxu0 %v907
        %1532 = vmatpush2.msra.mxu0 %v906
        %1533 = vmatprep.mubr.f32.mxu0 %v924
        %1534 = vmatmul.mubr.f32.gmra.mxu0 %v662
        %v1535 = vpop.f32.mrf.mxu0
        %v1536 = vadd.f32 0.0, %v1535
        %v1537 = vpop.f32.mrf.mxu0
        %v1538 = vadd.f32 0.0, %v1537
        %1539 = vmatprep.mubr.f32.mxu0 %v927
        %1540 = vmatmul.mubr.f32.gmra.mxu0 %v664
        %v1541 = vpop.f32.mrf.mxu0
        %v1542 = vadd.f32 0.0, %v1541
        %v1543 = vpop.f32.mrf.mxu0
        %v1544 = vadd.f32 0.0, %v1543
        %1545 = vmatprep.mubr.f32.mxu0 %v930
        %1546 = vmatmul.mubr.f32.gmra.mxu0 %v666
        %v1547 = vpop.f32.mrf.mxu0
        %v1548 = vadd.f32 0.0, %v1547
        %v1549 = vpop.f32.mrf.mxu0
        %v1550 = vadd.f32 0.0, %v1549
        %1551 = vmatprep.mubr.f32.mxu0 %v933
        %1552 = vmatmul.mubr.f32.gmra.mxu0 %v668
        %v1553 = vpop.f32.mrf.mxu0
        %v1554 = vadd.f32 0.0, %v1553
        %v1555 = vpop.f32.mrf.mxu0
        %v1556 = vadd.f32 0.0, %v1555
        %1557 = vdwg.mxu0
        %1558 = vst [vmem:[%s659] sm:$0xff] %v1002
        %1559 = vst [vmem:[%s659 + $0x8] sm:$0xff] %v1004
        %1560 = vst [vmem:[%s659 + $0x10] sm:$0xff] %v1091
        %1561 = vst [vmem:[%s659 + $0x18] sm:$0xff] %v1093
        %1562 = vst [vmem:[%s659 + $0x20] sm:$0xff] %v1180
        %1563 = vst [vmem:[%s659 + $0x28] sm:$0xff] %v1182
        %1564 = vst [vmem:[%s659 + $0x30] sm:$0xff] %v1269
        %1565 = vst [vmem:[%s659 + $0x38] sm:$0xff] %v1271
        %1566 = vst [vmem:[%s659 + $0x40] sm:$0xff] %v1358
        %1567 = vst [vmem:[%s659 + $0x48] sm:$0xff] %v1360
        %1568 = vst [vmem:[%s659 + $0x50] sm:$0xff] %v1447
        %1569 = vst [vmem:[%s659 + $0x58] sm:$0xff] %v1449
        %1570 = vst [vmem:[%s659 + $0x60] sm:$0xff] %v1536
        %1571 = vst [vmem:[%s659 + $0x68] sm:$0xff] %v1538
        %1572 = vst [vmem:[%s659 + $0x70] sm:$0xff] %v1008
        %1573 = vst [vmem:[%s659 + $0x78] sm:$0xff] %v1010
        %1574 = vst [vmem:[%s659 + $0x80] sm:$0xff] %v1097
        %1575 = vst [vmem:[%s659 + $0x88] sm:$0xff] %v1099
        %1576 = vst [vmem:[%s659 + $0x90] sm:$0xff] %v1186
        %1577 = vst [vmem:[%s659 + $0x98] sm:$0xff] %v1188
        %1578 = vst [vmem:[%s659 + $0xa0] sm:$0xff] %v1275
        %1579 = vst [vmem:[%s659 + $0xa8] sm:$0xff] %v1277
        %1580 = vst [vmem:[%s659 + $0xb0] sm:$0xff] %v1364
        %1581 = vst [vmem:[%s659 + $0xb8] sm:$0xff] %v1366
        %1582 = vst [vmem:[%s659 + $0xc0] sm:$0xff] %v1453
        %1583 = vst [vmem:[%s659 + $0xc8] sm:$0xff] %v1455
        %1584 = vst [vmem:[%s659 + $0xd0] sm:$0xff] %v1542
        %1585 = vst [vmem:[%s659 + $0xd8] sm:$0xff] %v1544
        %1586 = vst [vmem:[%s659 + $0xe0] sm:$0xff] %v1014
        %1587 = vst [vmem:[%s659 + $0xe8] sm:$0xff] %v1016
        %1588 = vst [vmem:[%s659 + $0xf0] sm:$0xff] %v1103
        %1589 = vst [vmem:[%s659 + $0xf8] sm:$0xff] %v1105
        %1590 = vst [vmem:[%s659 + $0x100] sm:$0xff] %v1192
        %1591 = vst [vmem:[%s659 + $0x108] sm:$0xff] %v1194
        %1592 = vst [vmem:[%s659 + $0x110] sm:$0xff] %v1281
        %1593 = vst [vmem:[%s659 + $0x118] sm:$0xff] %v1283
        %1594 = vst [vmem:[%s659 + $0x120] sm:$0xff] %v1370
        %1595 = vst [vmem:[%s659 + $0x128] sm:$0xff] %v1372
        %1596 = vst [vmem:[%s659 + $0x130] sm:$0xff] %v1459
        %1597 = vst [vmem:[%s659 + $0x138] sm:$0xff] %v1461
        %1598 = vst [vmem:[%s659 + $0x140] sm:$0xff] %v1548
        %1599 = vst [vmem:[%s659 + $0x148] sm:$0xff] %v1550
        %1600 = vst [vmem:[%s659 + $0x150] sm:$0xff] %v1020
        %1601 = vst [vmem:[%s659 + $0x158] sm:$0xff] %v1022
        %1602 = vst [vmem:[%s659 + $0x160] sm:$0xff] %v1109
        %1603 = vst [vmem:[%s659 + $0x168] sm:$0xff] %v1111
        %1604 = vst [vmem:[%s659 + $0x170] sm:$0xff] %v1198
        %1605 = vst [vmem:[%s659 + $0x178] sm:$0xff] %v1200
        %1606 = vst [vmem:[%s659 + $0x180] sm:$0xff] %v1287
        %1607 = vst [vmem:[%s659 + $0x188] sm:$0xff] %v1289
        %1608 = vst [vmem:[%s659 + $0x190] sm:$0xff] %v1376
        %1609 = vst [vmem:[%s659 + $0x198] sm:$0xff] %v1378
        %1610 = vst [vmem:[%s659 + $0x1a0] sm:$0xff] %v1465
        %1611 = vst [vmem:[%s659 + $0x1a8] sm:$0xff] %v1467
        %1612 = vst [vmem:[%s659 + $0x1b0] sm:$0xff] %v1554
        %1613 = vst [vmem:[%s659 + $0x1b8] sm:$0xff] %v1556
        %s1614 = sand.u32 %s68, 1
        %s1615 = sand.u32 %s68, 1
        %s1616 = smul.addr %s1615, 448
        %s1617 = scalar_lea.vmem [#allocation3], %s1616
        // Predicated region
        $region52: #{enc_forward.6} parent=46 // pred_check
          %p1618 = pneg %p78
        $region53: #{enc_forward.6} parent=46 // pred_check_branch
          %1620 = sbr.rel (%p1618) target = $region55
        $region54: #{enc_forward.6} parent=46 // pred_region
          %s1621 = smul.u32 14, %s13
          %s1622 = smul.addr %s1621, 8
          %s1623 = scalar_lea.vmem %s2, %s1622
          // Predicated region
          $region56: #{enc_forward.6} parent=54 // pred_check
            _
          $region57: #{enc_forward.6} parent=54 // pred_check_branch
            %1625 = sbr.rel (0) target = $region59
          $region58: #{enc_forward.6} parent=54 // pred_region
            // Predicated region
            $region60: #{enc_forward.6} parent=58 // pred_check
              _
            $region61: #{enc_forward.6} parent=58 // pred_check_branch
              %1627 = sbr.rel (0) target = $region63
            $region62: #{enc_forward.6} parent=58 // pred_region
              loop: start=0, step=1, limit=1
              $region64: #{enc_forward.6} parent=62 // loop_pre_header
                _
              $region65: #{enc_forward.6} parent=62 // loop_header
                %s1629 = sphi 0, %s1633
                %p1630 = scmp.ge.s32.totalorder %s1629, 1
                %s1634 = sphi %s1617, %s1617
                %s1635 = sphi %s1623, %s1623
              $region66: #{enc_forward.6} parent=62 // loop_header_branch
                %1632 = sbr.rel (%p1630) target = $region70
              $region67: #{enc_forward.6} parent=62 // loop_body
                %v1636 = vld [vmem:[%s1634] sm:$0xff]
                %1637 = vst [vmem:[%s1635] sm:$0xff] %v1636
                %v1638 = vld [vmem:[%s1634 + $0x8] sm:$0xff]
                %1639 = vst [vmem:[%s1635 + $0x8] sm:$0xff] %v1638
                %v1640 = vld [vmem:[%s1634 + $0x10] sm:$0xff]
                %1641 = vst [vmem:[%s1635 + $0x10] sm:$0xff] %v1640
                %v1642 = vld [vmem:[%s1634 + $0x18] sm:$0xff]
                %1643 = vst [vmem:[%s1635 + $0x18] sm:$0xff] %v1642
                %v1644 = vld [vmem:[%s1634 + $0x20] sm:$0xff]
                %1645 = vst [vmem:[%s1635 + $0x20] sm:$0xff] %v1644
                %v1646 = vld [vmem:[%s1634 + $0x28] sm:$0xff]
                %1647 = vst [vmem:[%s1635 + $0x28] sm:$0xff] %v1646
                %v1648 = vld [vmem:[%s1634 + $0x30] sm:$0xff]
                %1649 = vst [vmem:[%s1635 + $0x30] sm:$0xff] %v1648
                %v1650 = vld [vmem:[%s1634 + $0x38] sm:$0xff]
                %1651 = vst [vmem:[%s1635 + $0x38] sm:$0xff] %v1650
                %v1652 = vld [vmem:[%s1634 + $0x40] sm:$0xff]
                %1653 = vst [vmem:[%s1635 + $0x40] sm:$0xff] %v1652
                %v1654 = vld [vmem:[%s1634 + $0x48] sm:$0xff]
                %1655 = vst [vmem:[%s1635 + $0x48] sm:$0xff] %v1654
                %v1656 = vld [vmem:[%s1634 + $0x50] sm:$0xff]
                %1657 = vst [vmem:[%s1635 + $0x50] sm:$0xff] %v1656
                %v1658 = vld [vmem:[%s1634 + $0x58] sm:$0xff]
                %1659 = vst [vmem:[%s1635 + $0x58] sm:$0xff] %v1658
                %v1660 = vld [vmem:[%s1634 + $0x60] sm:$0xff]
                %1661 = vst [vmem:[%s1635 + $0x60] sm:$0xff] %v1660
                %v1662 = vld [vmem:[%s1634 + $0x68] sm:$0xff]
                %1663 = vst [vmem:[%s1635 + $0x68] sm:$0xff] %v1662
                %v1664 = vld [vmem:[%s1634 + $0x70] sm:$0xff]
                %1665 = vst [vmem:[%s1635 + $0xe0] sm:$0xff] %v1664
                %v1666 = vld [vmem:[%s1634 + $0x78] sm:$0xff]
                %1667 = vst [vmem:[%s1635 + $0xe8] sm:$0xff] %v1666
                %v1668 = vld [vmem:[%s1634 + $0x80] sm:$0xff]
                %1669 = vst [vmem:[%s1635 + $0xf0] sm:$0xff] %v1668
                %v1670 = vld [vmem:[%s1634 + $0x88] sm:$0xff]
                %1671 = vst [vmem:[%s1635 + $0xf8] sm:$0xff] %v1670
                %v1672 = vld [vmem:[%s1634 + $0x90] sm:$0xff]
                %1673 = vst [vmem:[%s1635 + $0x100] sm:$0xff] %v1672
                %v1674 = vld [vmem:[%s1634 + $0x98] sm:$0xff]
                %1675 = vst [vmem:[%s1635 + $0x108] sm:$0xff] %v1674
                %v1676 = vld [vmem:[%s1634 + $0xa0] sm:$0xff]
                %1677 = vst [vmem:[%s1635 + $0x110] sm:$0xff] %v1676
                %v1678 = vld [vmem:[%s1634 + $0xa8] sm:$0xff]
                %1679 = vst [vmem:[%s1635 + $0x118] sm:$0xff] %v1678
                %v1680 = vld [vmem:[%s1634 + $0xb0] sm:$0xff]
                %1681 = vst [vmem:[%s1635 + $0x120] sm:$0xff] %v1680
                %v1682 = vld [vmem:[%s1634 + $0xb8] sm:$0xff]
                %1683 = vst [vmem:[%s1635 + $0x128] sm:$0xff] %v1682
                %v1684 = vld [vmem:[%s1634 + $0xc0] sm:$0xff]
                %1685 = vst [vmem:[%s1635 + $0x130] sm:$0xff] %v1684
                %v1686 = vld [vmem:[%s1634 + $0xc8] sm:$0xff]
                %1687 = vst [vmem:[%s1635 + $0x138] sm:$0xff] %v1686
                %v1688 = vld [vmem:[%s1634 + $0xd0] sm:$0xff]
                %1689 = vst [vmem:[%s1635 + $0x140] sm:$0xff] %v1688
                %v1690 = vld [vmem:[%s1634 + $0xd8] sm:$0xff]
                %1691 = vst [vmem:[%s1635 + $0x148] sm:$0xff] %v1690
                %v1692 = vld [vmem:[%s1634 + $0xe0] sm:$0xff]
                %1693 = vst [vmem:[%s1635 + $0x1c0] sm:$0xff] %v1692
                %v1694 = vld [vmem:[%s1634 + $0xe8] sm:$0xff]
                %1695 = vst [vmem:[%s1635 + $0x1c8] sm:$0xff] %v1694
                %v1696 = vld [vmem:[%s1634 + $0xf0] sm:$0xff]
                %1697 = vst [vmem:[%s1635 + $0x1d0] sm:$0xff] %v1696
                %v1698 = vld [vmem:[%s1634 + $0xf8] sm:$0xff]
                %1699 = vst [vmem:[%s1635 + $0x1d8] sm:$0xff] %v1698
                %v1700 = vld [vmem:[%s1634 + $0x100] sm:$0xff]
                %1701 = vst [vmem:[%s1635 + $0x1e0] sm:$0xff] %v1700
                %v1702 = vld [vmem:[%s1634 + $0x108] sm:$0xff]
                %1703 = vst [vmem:[%s1635 + $0x1e8] sm:$0xff] %v1702
                %v1704 = vld [vmem:[%s1634 + $0x110] sm:$0xff]
                %1705 = vst [vmem:[%s1635 + $0x1f0] sm:$0xff] %v1704
                %v1706 = vld [vmem:[%s1634 + $0x118] sm:$0xff]
                %1707 = vst [vmem:[%s1635 + $0x1f8] sm:$0xff] %v1706
                %v1708 = vld [vmem:[%s1634 + $0x120] sm:$0xff]
                %1709 = vst [vmem:[%s1635 + $0x200] sm:$0xff] %v1708
                %v1710 = vld [vmem:[%s1634 + $0x128] sm:$0xff]
                %1711 = vst [vmem:[%s1635 + $0x208] sm:$0xff] %v1710
                %v1712 = vld [vmem:[%s1634 + $0x130] sm:$0xff]
                %1713 = vst [vmem:[%s1635 + $0x210] sm:$0xff] %v1712
                %v1714 = vld [vmem:[%s1634 + $0x138] sm:$0xff]
                %1715 = vst [vmem:[%s1635 + $0x218] sm:$0xff] %v1714
                %v1716 = vld [vmem:[%s1634 + $0x140] sm:$0xff]
                %1717 = vst [vmem:[%s1635 + $0x220] sm:$0xff] %v1716
                %v1718 = vld [vmem:[%s1634 + $0x148] sm:$0xff]
                %1719 = vst [vmem:[%s1635 + $0x228] sm:$0xff] %v1718
                %v1720 = vld [vmem:[%s1634 + $0x150] sm:$0xff]
                %1721 = vst [vmem:[%s1635 + $0x2a0] sm:$0xff] %v1720
                %v1722 = vld [vmem:[%s1634 + $0x158] sm:$0xff]
                %1723 = vst [vmem:[%s1635 + $0x2a8] sm:$0xff] %v1722
                %v1724 = vld [vmem:[%s1634 + $0x160] sm:$0xff]
                %1725 = vst [vmem:[%s1635 + $0x2b0] sm:$0xff] %v1724
                %v1726 = vld [vmem:[%s1634 + $0x168] sm:$0xff]
                %1727 = vst [vmem:[%s1635 + $0x2b8] sm:$0xff] %v1726
                %v1728 = vld [vmem:[%s1634 + $0x170] sm:$0xff]
                %1729 = vst [vmem:[%s1635 + $0x2c0] sm:$0xff] %v1728
                %v1730 = vld [vmem:[%s1634 + $0x178] sm:$0xff]
                %1731 = vst [vmem:[%s1635 + $0x2c8] sm:$0xff] %v1730
                %v1732 = vld [vmem:[%s1634 + $0x180] sm:$0xff]
                %1733 = vst [vmem:[%s1635 + $0x2d0] sm:$0xff] %v1732
                %v1734 = vld [vmem:[%s1634 + $0x188] sm:$0xff]
                %1735 = vst [vmem:[%s1635 + $0x2d8] sm:$0xff] %v1734
                %v1736 = vld [vmem:[%s1634 + $0x190] sm:$0xff]
                %1737 = vst [vmem:[%s1635 + $0x2e0] sm:$0xff] %v1736
                %v1738 = vld [vmem:[%s1634 + $0x198] sm:$0xff]
                %1739 = vst [vmem:[%s1635 + $0x2e8] sm:$0xff] %v1738
                %v1740 = vld [vmem:[%s1634 + $0x1a0] sm:$0xff]
                %1741 = vst [vmem:[%s1635 + $0x2f0] sm:$0xff] %v1740
                %v1742 = vld [vmem:[%s1634 + $0x1a8] sm:$0xff]
                %1743 = vst [vmem:[%s1635 + $0x2f8] sm:$0xff] %v1742
                %v1744 = vld [vmem:[%s1634 + $0x1b0] sm:$0xff]
                %1745 = vst [vmem:[%s1635 + $0x300] sm:$0xff] %v1744
                %v1746 = vld [vmem:[%s1634 + $0x1b8] sm:$0xff]
                %1747 = vst [vmem:[%s1635 + $0x308] sm:$0xff] %v1746
              $region68: #{enc_forward.6} parent=62 // loop_footer
                %s1633 = sadd.s32 1, %s1629
              $region69: #{enc_forward.6} parent=62 // loop_footer_branch
                %1628 = sbr.rel target = $region65
              $region70: #{enc_forward.6} parent=62 // loop_exit
                _
            $region63: #{enc_forward.6} parent=58 // pred_fallthru
              _
            // Predicated region
            $region71: #{enc_forward.6} parent=58 // pred_check
              _
            $region72: #{enc_forward.6} parent=58 // pred_check_branch
              %1749 = sbr.rel target = $region74
            $region73: #{enc_forward.6} parent=58 // pred_region
              _
            $region74: #{enc_forward.6} parent=58 // pred_fallthru
              _
          $region59: #{enc_forward.6} parent=54 // pred_fallthru
            _
          %1750 = vnop
        $region55: #{enc_forward.6} parent=46 // pred_fallthru
          _
      $region47: #{enc_forward.6} parent=5 // pred_fallthru
        _
      %p1751 = scmp.le.s32.totalorder 2, %s8
      // Predicated region
      $region75: #{enc_forward.6} parent=5 // pred_check
        %p1752 = pneg %p1751
      $region76: #{enc_forward.6} parent=5 // pred_check_branch
        %1754 = sbr.rel (%p1752) target = $region78
      $region77: #{enc_forward.6} parent=5 // pred_region
        %s1755 = ssub.s32 %s8, 2
        // Predicated region
        $region79: #{enc_forward.6} parent=77 // pred_check
          %p1756 = pneg %p84
        $region80: #{enc_forward.6} parent=77 // pred_check_branch
          %1758 = sbr.rel (%p1756) target = $region82
        $region81: #{enc_forward.6} parent=77 // pred_region
          %s1759 = sand.u32 %s69, 1
          %s1760 = sand.u32 %s69, 1
          %s1761 = smul.addr %s1760, 448
          %s1762 = scalar_lea.vmem [#allocation3], %s1761
        $region82: #{enc_forward.6} parent=77 // pred_fallthru
          _
      $region78: #{enc_forward.6} parent=5 // pred_fallthru
        _
    $region6: #{enc_forward.6} parent=1 // loop_footer
      %s12 = sadd.s32 1, %s8
    $region7: #{enc_forward.6} parent=1 // loop_footer_branch
      %7 = sbr.rel target = $region3
    $region8: #{enc_forward.6} parent=1 // loop_exit
      _

// kernel: enc_forward.7
$region0: #{enc_forward.7}
  #allocation0 [shape = 'u32[]', space=smem, size = 0x4, offset = 0x4, fixed_abs, tag = 'smem constant byte address 0x4 - core index']
  #allocation1 [shape = 'u32[144,128]{1,0:T(1,128)}', space=vmem, size = 0x12000, scoped, tag = 'internal scratch']
  %s0 = inlined_call_operand.vmem [shape: f32[64,288], index: 0, kind: input, shape index: {}]
  %s1 = inlined_call_operand.vmem [shape: f32[288,1024], index: 1, kind: input, shape index: {}]
  %s2 = inlined_call_operand.vmem [shape: f32[64,1024], index: 2, kind: output, shape index: {}]
  %s3 = sld [smem:[#allocation0]]
  $region83: #{enc_forward.7} parent=0
    _
  %s5 = ssub.s32 1, %s3
  %s6 = scalar_select 0, %s5, %s3
  $region1: #{enc_forward.7} parent=0
    #allocation2 [shape = 'u8[1179648]{0}', space=vmem, size = 0x120000, scoped, tag = 'input window, operand 1']
    #allocation3 [shape = 'u8[262144]{0}', space=vmem, size = 0x40000, scoped, tag = 'output window, operand 0']
    loop: start=0, step=1, limit=4
    $region2: #{enc_forward.7} parent=1 // loop_pre_header
      _
    $region3: #{enc_forward.7} parent=1 // loop_header
      %s8 = sphi 0, %s12
      %p9 = scmp.ge.s32.totalorder %s8, 4
      %s16 = sphi 0, %s16
      %s18 = sphi 0, %s16
      %s19 = sphi 0, %s18
      %s33 = sphi 0, %s19
      %s39 = sphi 0, %s41
      %s42 = sphi 0, %s39
      %s43 = sphi 0, %s42
      %s59 = sphi 0, %s43
      %s65 = sphi 0, %s67
      %s68 = sphi 0, %s65
      %s69 = sphi 0, %s68
      %s85 = sphi 0, %s69
    $region4: #{enc_forward.7} parent=1 // loop_header_branch
      %11 = sbr.rel (%p9) target = $region8
    $region5: #{enc_forward.7} parent=1 // loop_body
      %s13 = ssub.s32 %s8, 1
      %s14 = ssub.s32 %s8, 2
      %s15 = sadd.s32 %s8, 1
      %s17 = sadd.s32 %s16, 1
      %p20 = scmp.eq.s32.totalorder %s8, 1
      %p21 = scmp.ne.s32.totalorder %s16, %s18
      %p22 = scmp.eq.s32.totalorder %s8, 0
      %p23 = por %p21, %p22
      %p24 = scmp.ne.s32.totalorder %s16, %s18
      %p25 = scmp.eq.s32.totalorder %s13, 1
      %p26 = por %p24, %p25
      %p27 = scmp.ne.s32.totalorder %s18, %s19
      %p28 = scmp.eq.s32.totalorder %s13, 0
      %p29 = por %p27, %p28
      %p30 = scmp.ne.s32.totalorder %s18, %s19
      %p31 = scmp.eq.s32.totalorder %s14, 1
      %p32 = por %p30, %p31
      %p34 = scmp.ne.s32.totalorder %s19, %s33
      %p35 = scmp.eq.s32.totalorder %s14, 0
      %p36 = por %p34, %p35
      %s37 = ssub.s32 %s8, %s15
      %p38 = scmp.eq.s32.totalorder %s37, 0
      %s40 = sadd.s32 %s39, 1
      %s41 = scalar_select %p38, %s39, %s40
      %p44 = pneg %p38
      %p45 = scmp.eq.s32.totalorder %s8, 1
      %p46 = por %p44, %p45
      %p47 = scmp.ne.s32.totalorder %s39, %s42
      %p48 = scmp.eq.s32.totalorder %s8, 0
      %p49 = por %p47, %p48
      %p50 = scmp.ne.s32.totalorder %s39, %s42
      %p51 = scmp.eq.s32.totalorder %s13, 1
      %p52 = por %p50, %p51
      %p53 = scmp.ne.s32.totalorder %s42, %s43
      %p54 = scmp.eq.s32.totalorder %s13, 0
      %p55 = por %p53, %p54
      %p56 = scmp.ne.s32.totalorder %s42, %s43
      %p57 = scmp.eq.s32.totalorder %s14, 1
      %p58 = por %p56, %p57
      %p60 = scmp.ne.s32.totalorder %s43, %s59
      %p61 = scmp.eq.s32.totalorder %s14, 0
      %p62 = por %p60, %p61
      %s63 = ssub.s32 %s8, %s15
      %p64 = scmp.eq.s32.totalorder %s63, 0
      %s66 = sadd.s32 %s65, 1
      %s67 = scalar_select %p64, %s65, %s66
      %p70 = pneg %p64
      %p71 = scmp.eq.s32.totalorder %s8, 1
      %p72 = por %p70, %p71
      %p73 = scmp.ne.s32.totalorder %s65, %s68
      %p74 = scmp.eq.s32.totalorder %s8, 0
      %p75 = por %p73, %p74
      %p76 = scmp.ne.s32.totalorder %s65, %s68
      %p77 = scmp.eq.s32.totalorder %s13, 1
      %p78 = por %p76, %p77
      %p79 = scmp.ne.s32.totalorder %s68, %s69
      %p80 = scmp.eq.s32.totalorder %s13, 0
      %p81 = por %p79, %p80
      %p82 = scmp.ne.s32.totalorder %s68, %s69
      %p83 = scmp.eq.s32.totalorder %s14, 1
      %p84 = por %p82, %p83
      %p86 = scmp.ne.s32.totalorder %s69, %s85
      %p87 = scmp.eq.s32.totalorder %s14, 0
      %p88 = por %p86, %p87
      %p89 = scmp.le.s32.totalorder 1, %s8
      %p90 = scmp.lt.s32.totalorder %s8, 3
      %p91 = pnand %p89, %p90
      %p92 = pneg %p91
      // Predicated region
      $region9: #{enc_forward.7} parent=5 // pred_check
        _
      $region10: #{enc_forward.7} parent=5 // pred_check_branch
        %94 = sbr.rel (%p91) target = $region12
      $region11: #{enc_forward.7} parent=5 // pred_region
        %s95 = ssub.s32 %s8, 1
        // Predicated region
        $region13: #{enc_forward.7} parent=11 // pred_check
          %p96 = pneg %p29
        $region14: #{enc_forward.7} parent=11 // pred_check_branch
          %98 = sbr.rel (%p96) target = $region16
        $region15: #{enc_forward.7} parent=11 // pred_region
          _
        $region16: #{enc_forward.7} parent=11 // pred_fallthru
          _
      $region12: #{enc_forward.7} parent=5 // pred_fallthru
        _
      %p99 = scmp.lt.s32.totalorder %s8, 2
      // Predicated region
      $region17: #{enc_forward.7} parent=5 // pred_check
        %p100 = pneg %p99
      $region18: #{enc_forward.7} parent=5 // pred_check_branch
        %102 = sbr.rel (%p100) target = $region20
      $region19: #{enc_forward.7} parent=5 // pred_region
        // Predicated region
        $region21: #{enc_forward.7} parent=19 // pred_check
          %p103 = pneg %p49
        $region22: #{enc_forward.7} parent=19 // pred_check_branch
          %105 = sbr.rel (%p103) target = $region24
        $region23: #{enc_forward.7} parent=19 // pred_region
          %s106 = sand.u32 %s39, 1
          %s107 = sand.u32 %s39, 1
          %s108 = smul.addr %s107, 1152
          %s109 = scalar_lea.vmem [#allocation2], %s108
          %s110 = smul.u32 4, %s8
          %s111 = smul.addr %s110, 8
          %s112 = scalar_lea.vmem %s1, %s111
          // Predicated region
          $region25: #{enc_forward.7} parent=23 // pred_check
            _
          $region26: #{enc_forward.7} parent=23 // pred_check_branch
            %114 = sbr.rel (0) target = $region28
          $region27: #{enc_forward.7} parent=23 // pred_region
            // Predicated region
            $region29: #{enc_forward.7} parent=27 // pred_check
              _
            $region30: #{enc_forward.7} parent=27 // pred_check_branch
              %116 = sbr.rel (0) target = $region32
            $region31: #{enc_forward.7} parent=27 // pred_region
              loop: start=0, step=1, limit=1
              $region33: #{enc_forward.7} parent=31 // loop_pre_header
                _
              $region34: #{enc_forward.7} parent=31 // loop_header
                %s118 = sphi 0, %s122
                %p119 = scmp.ge.s32.totalorder %s118, 1
                %s123 = sphi %s112, %s112
                %s124 = sphi %s109, %s109
              $region35: #{enc_forward.7} parent=31 // loop_header_branch
                %121 = sbr.rel (%p119) target = $region39
              $region36: #{enc_forward.7} parent=31 // loop_body
                %v125 = vld [vmem:[%s123] sm:$0xff]
                %126 = vst [vmem:[%s124] sm:$0xff] %v125
                %v127 = vld [vmem:[%s123 + $0x8] sm:$0xff]
                %128 = vst [vmem:[%s124 + $0x8] sm:$0xff] %v127
                %v129 = vld [vmem:[%s123 + $0x10] sm:$0xff]
                %130 = vst [vmem:[%s124 + $0x10] sm:$0xff] %v129
                %v131 = vld [vmem:[%s123 + $0x18] sm:$0xff]
                %132 = vst [vmem:[%s124 + $0x18] sm:$0xff] %v131
                %v133 = vld [vmem:[%s123 + $0x40] sm:$0xff]
                %134 = vst [vmem:[%s124 + $0x20] sm:$0xff] %v133
                %v135 = vld [vmem:[%s123 + $0x48] sm:$0xff]
                %136 = vst [vmem:[%s124 + $0x28] sm:$0xff] %v135
                %v137 = vld [vmem:[%s123 + $0x50] sm:$0xff]
                %138 = vst [vmem:[%s124 + $0x30] sm:$0xff] %v137
                %v139 = vld [vmem:[%s123 + $0x58] sm:$0xff]
                %140 = vst [vmem:[%s124 + $0x38] sm:$0xff] %v139
                %v141 = vld [vmem:[%s123 + $0x80] sm:$0xff]
                %142 = vst [vmem:[%s124 + $0x40] sm:$0xff] %v141
                %v143 = vld [vmem:[%s123 + $0x88] sm:$0xff]
                %144 = vst [vmem:[%s124 + $0x48] sm:$0xff] %v143
                %v145 = vld [vmem:[%s123 + $0x90] sm:$0xff]
                %146 = vst [vmem:[%s124 + $0x50] sm:$0xff] %v145
                %v147 = vld [vmem:[%s123 + $0x98] sm:$0xff]
                %148 = vst [vmem:[%s124 + $0x58] sm:$0xff] %v147
                %v149 = vld [vmem:[%s123 + $0xc0] sm:$0xff]
                %150 = vst [vmem:[%s124 + $0x60] sm:$0xff] %v149
                %v151 = vld [vmem:[%s123 + $0xc8] sm:$0xff]
                %152 = vst [vmem:[%s124 + $0x68] sm:$0xff] %v151
                %v153 = vld [vmem:[%s123 + $0xd0] sm:$0xff]
                %154 = vst [vmem:[%s124 + $0x70] sm:$0xff] %v153
                %v155 = vld [vmem:[%s123 + $0xd8] sm:$0xff]
                %156 = vst [vmem:[%s124 + $0x78] sm:$0xff] %v155
                %v157 = vld [vmem:[%s123 + $0x100] sm:$0xff]
                %158 = vst [vmem:[%s124 + $0x80] sm:$0xff] %v157
                %v159 = vld [vmem:[%s123 + $0x108] sm:$0xff]
                %160 = vst [vmem:[%s124 + $0x88] sm:$0xff] %v159
                %v161 = vld [vmem:[%s123 + $0x110] sm:$0xff]
                %162 = vst [vmem:[%s124 + $0x90] sm:$0xff] %v161
                %v163 = vld [vmem:[%s123 + $0x118] sm:$0xff]
                %164 = vst [vmem:[%s124 + $0x98] sm:$0xff] %v163
                %v165 = vld [vmem:[%s123 + $0x140] sm:$0xff]
                %166 = vst [vmem:[%s124 + $0xa0] sm:$0xff] %v165
                %v167 = vld [vmem:[%s123 + $0x148] sm:$0xff]
                %168 = vst [vmem:[%s124 + $0xa8] sm:$0xff] %v167
                %v169 = vld [vmem:[%s123 + $0x150] sm:$0xff]
                %170 = vst [vmem:[%s124 + $0xb0] sm:$0xff] %v169
                %v171 = vld [vmem:[%s123 + $0x158] sm:$0xff]
                %172 = vst [vmem:[%s124 + $0xb8] sm:$0xff] %v171
                %v173 = vld [vmem:[%s123 + $0x180] sm:$0xff]
                %174 = vst [vmem:[%s124 + $0xc0] sm:$0xff] %v173
                %v175 = vld [vmem:[%s123 + $0x188] sm:$0xff]
                %176 = vst [vmem:[%s124 + $0xc8] sm:$0xff] %v175
                %v177 = vld [vmem:[%s123 + $0x190] sm:$0xff]
                %178 = vst [vmem:[%s124 + $0xd0] sm:$0xff] %v177
                %v179 = vld [vmem:[%s123 + $0x198] sm:$0xff]
                %180 = vst [vmem:[%s124 + $0xd8] sm:$0xff] %v179
                %v181 = vld [vmem:[%s123 + $0x1c0] sm:$0xff]
                %182 = vst [vmem:[%s124 + $0xe0] sm:$0xff] %v181
                %v183 = vld [vmem:[%s123 + $0x1c8] sm:$0xff]
                %184 = vst [vmem:[%s124 + $0xe8] sm:$0xff] %v183
                %v185 = vld [vmem:[%s123 + $0x1d0] sm:$0xff]
                %186 = vst [vmem:[%s124 + $0xf0] sm:$0xff] %v185
                %v187 = vld [vmem:[%s123 + $0x1d8] sm:$0xff]
                %188 = vst [vmem:[%s124 + $0xf8] sm:$0xff] %v187
                %v189 = vld [vmem:[%s123 + $0x200] sm:$0xff]
                %190 = vst [vmem:[%s124 + $0x100] sm:$0xff] %v189
                %v191 = vld [vmem:[%s123 + $0x208] sm:$0xff]
                %192 = vst [vmem:[%s124 + $0x108] sm:$0xff] %v191
                %v193 = vld [vmem:[%s123 + $0x210] sm:$0xff]
                %194 = vst [vmem:[%s124 + $0x110] sm:$0xff] %v193
                %v195 = vld [vmem:[%s123 + $0x218] sm:$0xff]
                %196 = vst [vmem:[%s124 + $0x118] sm:$0xff] %v195
                %v197 = vld [vmem:[%s123 + $0x240] sm:$0xff]
                %198 = vst [vmem:[%s124 + $0x120] sm:$0xff] %v197
                %v199 = vld [vmem:[%s123 + $0x248] sm:$0xff]
                %200 = vst [vmem:[%s124 + $0x128] sm:$0xff] %v199
                %v201 = vld [vmem:[%s123 + $0x250] sm:$0xff]
                %202 = vst [vmem:[%s124 + $0x130] sm:$0xff] %v201
                %v203 = vld [vmem:[%s123 + $0x258] sm:$0xff]
                %204 = vst [vmem:[%s124 + $0x138] sm:$0xff] %v203
                %v205 = vld [vmem:[%s123 + $0x280] sm:$0xff]
                %206 = vst [vmem:[%s124 + $0x140] sm:$0xff] %v205
                %v207 = vld [vmem:[%s123 + $0x288] sm:$0xff]
                %208 = vst [vmem:[%s124 + $0x148] sm:$0xff] %v207
                %v209 = vld [vmem:[%s123 + $0x290] sm:$0xff]
                %210 = vst [vmem:[%s124 + $0x150] sm:$0xff] %v209
                %v211 = vld [vmem:[%s123 + $0x298] sm:$0xff]
                %212 = vst [vmem:[%s124 + $0x158] sm:$0xff] %v211
                %v213 = vld [vmem:[%s123 + $0x2c0] sm:$0xff]
                %214 = vst [vmem:[%s124 + $0x160] sm:$0xff] %v213
                %v215 = vld [vmem:[%s123 + $0x2c8] sm:$0xff]
                %216 = vst [vmem:[%s124 + $0x168] sm:$0xff] %v215
                %v217 = vld [vmem:[%s123 + $0x2d0] sm:$0xff]
                %218 = vst [vmem:[%s124 + $0x170] sm:$0xff] %v217
                %v219 = vld [vmem:[%s123 + $0x2d8] sm:$0xff]
                %220 = vst [vmem:[%s124 + $0x178] sm:$0xff] %v219
                %v221 = vld [vmem:[%s123 + $0x300] sm:$0xff]
                %222 = vst [vmem:[%s124 + $0x180] sm:$0xff] %v221
                %v223 = vld [vmem:[%s123 + $0x308] sm:$0xff]
                %224 = vst [vmem:[%s124 + $0x188] sm:$0xff] %v223
                %v225 = vld [vmem:[%s123 + $0x310] sm:$0xff]
                %226 = vst [vmem:[%s124 + $0x190] sm:$0xff] %v225
                %v227 = vld [vmem:[%s123 + $0x318] sm:$0xff]
                %228 = vst [vmem:[%s124 + $0x198] sm:$0xff] %v227
                %v229 = vld [vmem:[%s123 + $0x340] sm:$0xff]
                %230 = vst [vmem:[%s124 + $0x1a0] sm:$0xff] %v229
                %v231 = vld [vmem:[%s123 + $0x348] sm:$0xff]
                %232 = vst [vmem:[%s124 + $0x1a8] sm:$0xff] %v231
                %v233 = vld [vmem:[%s123 + $0x350] sm:$0xff]
                %234 = vst [vmem:[%s124 + $0x1b0] sm:$0xff] %v233
                %v235 = vld [vmem:[%s123 + $0x358] sm:$0xff]
                %236 = vst [vmem:[%s124 + $0x1b8] sm:$0xff] %v235
                %v237 = vld [vmem:[%s123 + $0x380] sm:$0xff]
                %238 = vst [vmem:[%s124 + $0x1c0] sm:$0xff] %v237
                %v239 = vld [vmem:[%s123 + $0x388] sm:$0xff]
                %240 = vst [vmem:[%s124 + $0x1c8] sm:$0xff] %v239
                %v241 = vld [vmem:[%s123 + $0x390] sm:$0xff]
                %242 = vst [vmem:[%s124 + $0x1d0] sm:$0xff] %v241
                %v243 = vld [vmem:[%s123 + $0x398] sm:$0xff]
                %244 = vst [vmem:[%s124 + $0x1d8] sm:$0xff] %v243
                %v245 = vld [vmem:[%s123 + $0x3c0] sm:$0xff]
                %246 = vst [vmem:[%s124 + $0x1e0] sm:$0xff] %v245
                %v247 = vld [vmem:[%s123 + $0x3c8] sm:$0xff]
                %248 = vst [vmem:[%s124 + $0x1e8] sm:$0xff] %v247
                %v249 = vld [vmem:[%s123 + $0x3d0] sm:$0xff]
                %250 = vst [vmem:[%s124 + $0x1f0] sm:$0xff] %v249
                %v251 = vld [vmem:[%s123 + $0x3d8] sm:$0xff]
                %252 = vst [vmem:[%s124 + $0x1f8] sm:$0xff] %v251
                %v253 = vld [vmem:[%s123 + $0x400] sm:$0xff]
                %254 = vst [vmem:[%s124 + $0x200] sm:$0xff] %v253
                %v255 = vld [vmem:[%s123 + $0x408] sm:$0xff]
                %256 = vst [vmem:[%s124 + $0x208] sm:$0xff] %v255
                %v257 = vld [vmem:[%s123 + $0x410] sm:$0xff]
                %258 = vst [vmem:[%s124 + $0x210] sm:$0xff] %v257
                %v259 = vld [vmem:[%s123 + $0x418] sm:$0xff]
                %260 = vst [vmem:[%s124 + $0x218] sm:$0xff] %v259
                %v261 = vld [vmem:[%s123 + $0x440] sm:$0xff]
                %262 = vst [vmem:[%s124 + $0x220] sm:$0xff] %v261
                %v263 = vld [vmem:[%s123 + $0x448] sm:$0xff]
                %264 = vst [vmem:[%s124 + $0x228] sm:$0xff] %v263
                %v265 = vld [vmem:[%s123 + $0x450] sm:$0xff]
                %266 = vst [vmem:[%s124 + $0x230] sm:$0xff] %v265
                %v267 = vld [vmem:[%s123 + $0x458] sm:$0xff]
                %268 = vst [vmem:[%s124 + $0x238] sm:$0xff] %v267
                %v269 = vld [vmem:[%s123 + $0x480] sm:$0xff]
                %270 = vst [vmem:[%s124 + $0x240] sm:$0xff] %v269
                %v271 = vld [vmem:[%s123 + $0x488] sm:$0xff]
                %272 = vst [vmem:[%s124 + $0x248] sm:$0xff] %v271
                %v273 = vld [vmem:[%s123 + $0x490] sm:$0xff]
                %274 = vst [vmem:[%s124 + $0x250] sm:$0xff] %v273
                %v275 = vld [vmem:[%s123 + $0x498] sm:$0xff]
                %276 = vst [vmem:[%s124 + $0x258] sm:$0xff] %v275
                %v277 = vld [vmem:[%s123 + $0x4c0] sm:$0xff]
                %278 = vst [vmem:[%s124 + $0x260] sm:$0xff] %v277
                %v279 = vld [vmem:[%s123 + $0x4c8] sm:$0xff]
                %280 = vst [vmem:[%s124 + $0x268] sm:$0xff] %v279
                %v281 = vld [vmem:[%s123 + $0x4d0] sm:$0xff]
                %282 = vst [vmem:[%s124 + $0x270] sm:$0xff] %v281
                %v283 = vld [vmem:[%s123 + $0x4d8] sm:$0xff]
                %284 = vst [vmem:[%s124 + $0x278] sm:$0xff] %v283
                %v285 = vld [vmem:[%s123 + $0x500] sm:$0xff]
                %286 = vst [vmem:[%s124 + $0x280] sm:$0xff] %v285
                %v287 = vld [vmem:[%s123 + $0x508] sm:$0xff]
                %288 = vst [vmem:[%s124 + $0x288] sm:$0xff] %v287
                %v289 = vld [vmem:[%s123 + $0x510] sm:$0xff]
                %290 = vst [vmem:[%s124 + $0x290] sm:$0xff] %v289
                %v291 = vld [vmem:[%s123 + $0x518] sm:$0xff]
                %292 = vst [vmem:[%s124 + $0x298] sm:$0xff] %v291
                %v293 = vld [vmem:[%s123 + $0x540] sm:$0xff]
                %294 = vst [vmem:[%s124 + $0x2a0] sm:$0xff] %v293
                %v295 = vld [vmem:[%s123 + $0x548] sm:$0xff]
                %296 = vst [vmem:[%s124 + $0x2a8] sm:$0xff] %v295
                %v297 = vld [vmem:[%s123 + $0x550] sm:$0xff]
                %298 = vst [vmem:[%s124 + $0x2b0] sm:$0xff] %v297
                %v299 = vld [vmem:[%s123 + $0x558] sm:$0xff]
                %300 = vst [vmem:[%s124 + $0x2b8] sm:$0xff] %v299
                %v301 = vld [vmem:[%s123 + $0x580] sm:$0xff]
                %302 = vst [vmem:[%s124 + $0x2c0] sm:$0xff] %v301
                %v303 = vld [vmem:[%s123 + $0x588] sm:$0xff]
                %304 = vst [vmem:[%s124 + $0x2c8] sm:$0xff] %v303
                %v305 = vld [vmem:[%s123 + $0x590] sm:$0xff]
                %306 = vst [vmem:[%s124 + $0x2d0] sm:$0xff] %v305
                %v307 = vld [vmem:[%s123 + $0x598] sm:$0xff]
                %308 = vst [vmem:[%s124 + $0x2d8] sm:$0xff] %v307
                %v309 = vld [vmem:[%s123 + $0x5c0] sm:$0xff]
                %310 = vst [vmem:[%s124 + $0x2e0] sm:$0xff] %v309
                %v311 = vld [vmem:[%s123 + $0x5c8] sm:$0xff]
                %312 = vst [vmem:[%s124 + $0x2e8] sm:$0xff] %v311
                %v313 = vld [vmem:[%s123 + $0x5d0] sm:$0xff]
                %314 = vst [vmem:[%s124 + $0x2f0] sm:$0xff] %v313
                %v315 = vld [vmem:[%s123 + $0x5d8] sm:$0xff]
                %316 = vst [vmem:[%s124 + $0x2f8] sm:$0xff] %v315
                %v317 = vld [vmem:[%s123 + $0x600] sm:$0xff]
                %318 = vst [vmem:[%s124 + $0x300] sm:$0xff] %v317
                %v319 = vld [vmem:[%s123 + $0x608] sm:$0xff]
                %320 = vst [vmem:[%s124 + $0x308] sm:$0xff] %v319
                %v321 = vld [vmem:[%s123 + $0x610] sm:$0xff]
                %322 = vst [vmem:[%s124 + $0x310] sm:$0xff] %v321
                %v323 = vld [vmem:[%s123 + $0x618] sm:$0xff]
                %324 = vst [vmem:[%s124 + $0x318] sm:$0xff] %v323
                %v325 = vld [vmem:[%s123 + $0x640] sm:$0xff]
                %326 = vst [vmem:[%s124 + $0x320] sm:$0xff] %v325
                %v327 = vld [vmem:[%s123 + $0x648] sm:$0xff]
                %328 = vst [vmem:[%s124 + $0x328] sm:$0xff] %v327
                %v329 = vld [vmem:[%s123 + $0x650] sm:$0xff]
                %330 = vst [vmem:[%s124 + $0x330] sm:$0xff] %v329
                %v331 = vld [vmem:[%s123 + $0x658] sm:$0xff]
                %332 = vst [vmem:[%s124 + $0x338] sm:$0xff] %v331
                %v333 = vld [vmem:[%s123 + $0x680] sm:$0xff]
                %334 = vst [vmem:[%s124 + $0x340] sm:$0xff] %v333
                %v335 = vld [vmem:[%s123 + $0x688] sm:$0xff]
                %336 = vst [vmem:[%s124 + $0x348] sm:$0xff] %v335
                %v337 = vld [vmem:[%s123 + $0x690] sm:$0xff]
                %338 = vst [vmem:[%s124 + $0x350] sm:$0xff] %v337
                %v339 = vld [vmem:[%s123 + $0x698] sm:$0xff]
                %340 = vst [vmem:[%s124 + $0x358] sm:$0xff] %v339
                %v341 = vld [vmem:[%s123 + $0x6c0] sm:$0xff]
                %342 = vst [vmem:[%s124 + $0x360] sm:$0xff] %v341
                %v343 = vld [vmem:[%s123 + $0x6c8] sm:$0xff]
                %344 = vst [vmem:[%s124 + $0x368] sm:$0xff] %v343
                %v345 = vld [vmem:[%s123 + $0x6d0] sm:$0xff]
                %346 = vst [vmem:[%s124 + $0x370] sm:$0xff] %v345
                %v347 = vld [vmem:[%s123 + $0x6d8] sm:$0xff]
                %348 = vst [vmem:[%s124 + $0x378] sm:$0xff] %v347
                %v349 = vld [vmem:[%s123 + $0x700] sm:$0xff]
                %350 = vst [vmem:[%s124 + $0x380] sm:$0xff] %v349
                %v351 = vld [vmem:[%s123 + $0x708] sm:$0xff]
                %352 = vst [vmem:[%s124 + $0x388] sm:$0xff] %v351
                %v353 = vld [vmem:[%s123 + $0x710] sm:$0xff]
                %354 = vst [vmem:[%s124 + $0x390] sm:$0xff] %v353
                %v355 = vld [vmem:[%s123 + $0x718] sm:$0xff]
                %356 = vst [vmem:[%s124 + $0x398] sm:$0xff] %v355
                %v357 = vld [vmem:[%s123 + $0x740] sm:$0xff]
                %358 = vst [vmem:[%s124 + $0x3a0] sm:$0xff] %v357
                %v359 = vld [vmem:[%s123 + $0x748] sm:$0xff]
                %360 = vst [vmem:[%s124 + $0x3a8] sm:$0xff] %v359
                %v361 = vld [vmem:[%s123 + $0x750] sm:$0xff]
                %362 = vst [vmem:[%s124 + $0x3b0] sm:$0xff] %v361
                %v363 = vld [vmem:[%s123 + $0x758] sm:$0xff]
                %364 = vst [vmem:[%s124 + $0x3b8] sm:$0xff] %v363
                %v365 = vld [vmem:[%s123 + $0x780] sm:$0xff]
                %366 = vst [vmem:[%s124 + $0x3c0] sm:$0xff] %v365
                %v367 = vld [vmem:[%s123 + $0x788] sm:$0xff]
                %368 = vst [vmem:[%s124 + $0x3c8] sm:$0xff] %v367
                %v369 = vld [vmem:[%s123 + $0x790] sm:$0xff]
                %370 = vst [vmem:[%s124 + $0x3d0] sm:$0xff] %v369
                %v371 = vld [vmem:[%s123 + $0x798] sm:$0xff]
                %372 = vst [vmem:[%s124 + $0x3d8] sm:$0xff] %v371
                %v373 = vld [vmem:[%s123 + $0x7c0] sm:$0xff]
                %374 = vst [vmem:[%s124 + $0x3e0] sm:$0xff] %v373
                %v375 = vld [vmem:[%s123 + $0x7c8] sm:$0xff]
                %376 = vst [vmem:[%s124 + $0x3e8] sm:$0xff] %v375
                %v377 = vld [vmem:[%s123 + $0x7d0] sm:$0xff]
                %378 = vst [vmem:[%s124 + $0x3f0] sm:$0xff] %v377
                %v379 = vld [vmem:[%s123 + $0x7d8] sm:$0xff]
                %380 = vst [vmem:[%s124 + $0x3f8] sm:$0xff] %v379
                %v381 = vld [vmem:[%s123 + $0x800] sm:$0xff]
                %382 = vst [vmem:[%s124 + $0x400] sm:$0xff] %v381
                %v383 = vld [vmem:[%s123 + $0x808] sm:$0xff]
                %384 = vst [vmem:[%s124 + $0x408] sm:$0xff] %v383
                %v385 = vld [vmem:[%s123 + $0x810] sm:$0xff]
                %386 = vst [vmem:[%s124 + $0x410] sm:$0xff] %v385
                %v387 = vld [vmem:[%s123 + $0x818] sm:$0xff]
                %388 = vst [vmem:[%s124 + $0x418] sm:$0xff] %v387
                %v389 = vld [vmem:[%s123 + $0x840] sm:$0xff]
                %390 = vst [vmem:[%s124 + $0x420] sm:$0xff] %v389
                %v391 = vld [vmem:[%s123 + $0x848] sm:$0xff]
                %392 = vst [vmem:[%s124 + $0x428] sm:$0xff] %v391
                %v393 = vld [vmem:[%s123 + $0x850] sm:$0xff]
                %394 = vst [vmem:[%s124 + $0x430] sm:$0xff] %v393
                %v395 = vld [vmem:[%s123 + $0x858] sm:$0xff]
                %396 = vst [vmem:[%s124 + $0x438] sm:$0xff] %v395
                %v397 = vld [vmem:[%s123 + $0x880] sm:$0xff]
                %398 = vst [vmem:[%s124 + $0x440] sm:$0xff] %v397
                %v399 = vld [vmem:[%s123 + $0x888] sm:$0xff]
                %400 = vst [vmem:[%s124 + $0x448] sm:$0xff] %v399
                %v401 = vld [vmem:[%s123 + $0x890] sm:$0xff]
                %402 = vst [vmem:[%s124 + $0x450] sm:$0xff] %v401
                %v403 = vld [vmem:[%s123 + $0x898] sm:$0xff]
                %404 = vst [vmem:[%s124 + $0x458] sm:$0xff] %v403
                %v405 = vld [vmem:[%s123 + $0x8c0] sm:$0xff]
                %406 = vst [vmem:[%s124 + $0x460] sm:$0xff] %v405
                %v407 = vld [vmem:[%s123 + $0x8c8] sm:$0xff]
                %408 = vst [vmem:[%s124 + $0x468] sm:$0xff] %v407
                %v409 = vld [vmem:[%s123 + $0x8d0] sm:$0xff]
                %410 = vst [vmem:[%s124 + $0x470] sm:$0xff] %v409
                %v411 = vld [vmem:[%s123 + $0x8d8] sm:$0xff]
                %412 = vst [vmem:[%s124 + $0x478] sm:$0xff] %v411
              $region37: #{enc_forward.7} parent=31 // loop_footer
                %s122 = sadd.s32 1, %s118
              $region38: #{enc_forward.7} parent=31 // loop_footer_branch
                %117 = sbr.rel target = $region34
              $region39: #{enc_forward.7} parent=31 // loop_exit
                _
            $region32: #{enc_forward.7} parent=27 // pred_fallthru
              _
            // Predicated region
            $region40: #{enc_forward.7} parent=27 // pred_check
              _
            $region41: #{enc_forward.7} parent=27 // pred_check_branch
              %414 = sbr.rel target = $region43
            $region42: #{enc_forward.7} parent=27 // pred_region
              _
            $region43: #{enc_forward.7} parent=27 // pred_fallthru
              _
          $region28: #{enc_forward.7} parent=23 // pred_fallthru
            _
          %415 = vnop
        $region24: #{enc_forward.7} parent=19 // pred_fallthru
          _
      $region20: #{enc_forward.7} parent=5 // pred_fallthru
        _
      %p416 = scmp.le.s32.totalorder 1, %s8
      %p417 = scmp.lt.s32.totalorder %s8, 3
      %p418 = pnand %p416, %p417
      %p419 = pneg %p418
      // Predicated region
      $region44: #{enc_forward.7} parent=5 // pred_check
        _
      $region45: #{enc_forward.7} parent=5 // pred_check_branch
        %421 = sbr.rel (%p418) target = $region47
      $region46: #{enc_forward.7} parent=5 // pred_region
        %s422 = ssub.s32 %s8, 1
        %s423 = sand.u32 %s42, 1
        %s424 = sand.u32 %s42, 1
        %s425 = smul.addr %s424, 1152
        %s426 = scalar_lea.vmem [#allocation2], %s425
        // Predicated region
        $region48: #{enc_forward.7} parent=46 // pred_check
          %p427 = pneg %p55
        $region49: #{enc_forward.7} parent=46 // pred_check_branch
          %429 = sbr.rel (%p427) target = $region51
        $region50: #{enc_forward.7} parent=46 // pred_region
          _
        $region51: #{enc_forward.7} parent=46 // pred_fallthru
          _
        %p430 = pneg %p29
        %p431 = pneg %p26
        %s432 = sand.u32 %s42, 1
        %s433 = sand.u32 %s42, 1
        %s434 = smul.addr %s433, 1152
        %s435 = scalar_lea.vmem [#allocation2], %s434
        %p436 = pneg %p55
        %p437 = pneg %p52
        %p438 = pneg %p81
        %p439 = pneg %p78
        %s440 = sand.u32 %s68, 1
        %s441 = sand.u32 %s68, 1
        %s442 = smul.addr %s441, 256
        %s443 = scalar_lea.vmem [#allocation3], %s442
        %s444 = smul.u32 4, %s13
        %s445 = smul.u32 4, %s13
        %v446 = vld [vmem:[%s0] sm:$0xff]
        %v447 = vld [vmem:[%s0 + $0x8] sm:$0xff]
        %v448 = vld [vmem:[%s0 + $0x10] sm:$0xff]
        %v449 = vld [vmem:[%s0 + $0x18] sm:$0xff]
        %v450 = vld [vmem:[%s0 + $0x20] sm:$0xff]
        %v451 = vld [vmem:[%s0 + $0x28] sm:$0xff]
        %v452 = vld [vmem:[%s0 + $0x30] sm:$0xff]
        %v453 = vld [vmem:[%s0 + $0x38] sm:$0xff]
        %v454 = vld [vmem:[%s0 + $0x40] sm:$0xff]
        %v455 = vld [vmem:[%s0 + $0x48] sm:$0xff]
        %v456 = vld [vmem:[%s0 + $0x50] sm:$0xff]
        %v457 = vld [vmem:[%s0 + $0x58] sm:$0xff]
        %v458 = vld [vmem:[%s0 + $0x60] sm:$0xff]
        %v459 = vld [vmem:[%s0 + $0x68] sm:$0xff]
        %v460 = vld [vmem:[%s0 + $0x70] sm:$0xff]
        %v461 = vld [vmem:[%s0 + $0x78] sm:$0xff]
        %v462 = vld [vmem:[%s0 + $0x80] sm:$0xff]
        %v463 = vld [vmem:[%s0 + $0x88] sm:$0xff]
        %v464 = vld [vmem:[%s0 + $0x90] sm:$0xff]
        %v465 = vld [vmem:[%s0 + $0x98] sm:$0xff]
        %v466 = vld [vmem:[%s0 + $0xa0] sm:$0xff]
        %v467 = vld [vmem:[%s0 + $0xa8] sm:$0xff]
        %v468 = vld [vmem:[%s0 + $0xb0] sm:$0xff]
        %v469 = vld [vmem:[%s0 + $0xb8] sm:$0xff]
        %v470 = vld [vmem:[%s426] sm:$0xff]
        %v471 = vld [vmem:[%s426 + $0x8] sm:$0xff]
        %v472 = vld [vmem:[%s426 + $0x10] sm:$0xff]
        %v473 = vld [vmem:[%s426 + $0x18] sm:$0xff]
        %v474 = vld [vmem:[%s426 + $0x20] sm:$0xff]
        %v475 = vld [vmem:[%s426 + $0x28] sm:$0xff]
        %v476 = vld [vmem:[%s426 + $0x30] sm:$0xff]
        %v477 = vld [vmem:[%s426 + $0x38] sm:$0xff]
        %v478 = vld [vmem:[%s426 + $0x40] sm:$0xff]
        %v479 = vld [vmem:[%s426 + $0x48] sm:$0xff]
        %v480 = vld [vmem:[%s426 + $0x50] sm:$0xff]
        %v481 = vld [vmem:[%s426 + $0x58] sm:$0xff]
        %v482 = vld [vmem:[%s426 + $0x60] sm:$0xff]
        %v483 = vld [vmem:[%s426 + $0x68] sm:$0xff]
        %v484 = vld [vmem:[%s426 + $0x70] sm:$0xff]
        %v485 = vld [vmem:[%s426 + $0x78] sm:$0xff]
        %v486 = vld [vmem:[%s426 + $0x80] sm:$0xff]
        %v487 = vld [vmem:[%s426 + $0x88] sm:$0xff]
        %v488 = vld [vmem:[%s426 + $0x90] sm:$0xff]
        %v489 = vld [vmem:[%s426 + $0x98] sm:$0xff]
        %v490 = vld [vmem:[%s426 + $0xa0] sm:$0xff]
        %v491 = vld [vmem:[%s426 + $0xa8] sm:$0xff]
        %v492 = vld [vmem:[%s426 + $0xb0] sm:$0xff]
        %v493 = vld [vmem:[%s426 + $0xb8] sm:$0xff]
        %v494 = vld [vmem:[%s426 + $0xc0] sm:$0xff]
        %v495 = vld [vmem:[%s426 + $0xc8] sm:$0xff]
        %v496 = vld [vmem:[%s426 + $0xd0] sm:$0xff]
        %v497 = vld [vmem:[%s426 + $0xd8] sm:$0xff]
        %v498 = vld [vmem:[%s426 + $0xe0] sm:$0xff]
        %v499 = vld [vmem:[%s426 + $0xe8] sm:$0xff]
        %v500 = vld [vmem:[%s426 + $0xf0] sm:$0xff]
        %v501 = vld [vmem:[%s426 + $0xf8] sm:$0xff]
        %v502 = vld [vmem:[%s426 + $0x100] sm:$0xff]
        %v503 = vld [vmem:[%s426 + $0x108] sm:$0xff]
        %v504 = vld [vmem:[%s426 + $0x110] sm:$0xff]
        %v505 = vld [vmem:[%s426 + $0x118] sm:$0xff]
        %v506 = vld [vmem:[%s426 + $0x120] sm:$0xff]
        %v507 = vld [vmem:[%s426 + $0x128] sm:$0xff]
        %v508 = vld [vmem:[%s426 + $0x130] sm:$0xff]
        %v509 = vld [vmem:[%s426 + $0x138] sm:$0xff]
        %v510 = vld [vmem:[%s426 + $0x140] sm:$0xff]
        %v511 = vld [vmem:[%s426 + $0x148] sm:$0xff]
        %v512 = vld [vmem:[%s426 + $0x150] sm:$0xff]
        %v513 = vld [vmem:[%s426 + $0x158] sm:$0xff]
        %v514 = vld [vmem:[%s426 + $0x160] sm:$0xff]
        %v515 = vld [vmem:[%s426 + $0x168] sm:$0xff]
        %v516 = vld [vmem:[%s426 + $0x170] sm:$0xff]
        %v517 = vld [vmem:[%s426 + $0x178] sm:$0xff]
        %v518 = vld [vmem:[%s426 + $0x180] sm:$0xff]
        %v519 = vld [vmem:[%s426 + $0x188] sm:$0xff]
        %v520 = vld [vmem:[%s426 + $0x190] sm:$0xff]
        %v521 = vld [vmem:[%s426 + $0x198] sm:$0xff]
        %v522 = vld [vmem:[%s426 + $0x1a0] sm:$0xff]
        %v523 = vld [vmem:[%s426 + $0x1a8] sm:$0xff]
        %v524 = vld [vmem:[%s426 + $0x1b0] sm:$0xff]
        %v525 = vld [vmem:[%s426 + $0x1b8] sm:$0xff]
        %v526 = vld [vmem:[%s426 + $0x1c0] sm:$0xff]
        %v527 = vld [vmem:[%s426 + $0x1c8] sm:$0xff]
        %v528 = vld [vmem:[%s426 + $0x1d0] sm:$0xff]
        %v529 = vld [vmem:[%s426 + $0x1d8] sm:$0xff]
        %v530 = vld [vmem:[%s426 + $0x1e0] sm:$0xff]
        %v531 = vld [vmem:[%s426 + $0x1e8] sm:$0xff]
        %v532 = vld [vmem:[%s426 + $0x1f0] sm:$0xff]
        %v533 = vld [vmem:[%s426 + $0x1f8] sm:$0xff]
        %v534 = vld [vmem:[%s426 + $0x200] sm:$0xff]
        %v535 = vld [vmem:[%s426 + $0x208] sm:$0xff]
        %v536 = vld [vmem:[%s426 + $0x210] sm:$0xff]
        %v537 = vld [vmem:[%s426 + $0x218] sm:$0xff]
        %v538 = vld [vmem:[%s426 + $0x220] sm:$0xff]
        %v539 = vld [vmem:[%s426 + $0x228] sm:$0xff]
        %v540 = vld [vmem:[%s426 + $0x230] sm:$0xff]
        %v541 = vld [vmem:[%s426 + $0x238] sm:$0xff]
        %v542 = vld [vmem:[%s426 + $0x240] sm:$0xff]
        %v543 = vld [vmem:[%s426 + $0x248] sm:$0xff]
        %v544 = vld [vmem:[%s426 + $0x250] sm:$0xff]
        %v545 = vld [vmem:[%s426 + $0x258] sm:$0xff]
        %v546 = vld [vmem:[%s426 + $0x260] sm:$0xff]
        %v547 = vld [vmem:[%s426 + $0x268] sm:$0xff]
        %v548 = vld [vmem:[%s426 + $0x270] sm:$0xff]
        %v549 = vld [vmem:[%s426 + $0x278] sm:$0xff]
        %v550 = vld [vmem:[%s426 + $0x280] sm:$0xff]
        %v551 = vld [vmem:[%s426 + $0x288] sm:$0xff]
        %v552 = vld [vmem:[%s426 + $0x290] sm:$0xff]
        %v553 = vld [vmem:[%s426 + $0x298] sm:$0xff]
        %v554 = vld [vmem:[%s426 + $0x2a0] sm:$0xff]
        %v555 = vld [vmem:[%s426 + $0x2a8] sm:$0xff]
        %v556 = vld [vmem:[%s426 + $0x2b0] sm:$0xff]
        %v557 = vld [vmem:[%s426 + $0x2b8] sm:$0xff]
        %v558 = vld [vmem:[%s426 + $0x2c0] sm:$0xff]
        %v559 = vld [vmem:[%s426 + $0x2c8] sm:$0xff]
        %v560 = vld [vmem:[%s426 + $0x2d0] sm:$0xff]
        %v561 = vld [vmem:[%s426 + $0x2d8] sm:$0xff]
        %v562 = vld [vmem:[%s426 + $0x2e0] sm:$0xff]
        %v563 = vld [vmem:[%s426 + $0x2e8] sm:$0xff]
        %v564 = vld [vmem:[%s426 + $0x2f0] sm:$0xff]
        %v565 = vld [vmem:[%s426 + $0x2f8] sm:$0xff]
        %v566 = vld [vmem:[%s426 + $0x300] sm:$0xff]
        %v567 = vld [vmem:[%s426 + $0x308] sm:$0xff]
        %v568 = vld [vmem:[%s426 + $0x310] sm:$0xff]
        %v569 = vld [vmem:[%s426 + $0x318] sm:$0xff]
        %v570 = vld [vmem:[%s426 + $0x320] sm:$0xff]
        %v571 = vld [vmem:[%s426 + $0x328] sm:$0xff]
        %v572 = vld [vmem:[%s426 + $0x330] sm:$0xff]
        %v573 = vld [vmem:[%s426 + $0x338] sm:$0xff]
        %v574 = vld [vmem:[%s426 + $0x340] sm:$0xff]
        %v575 = vld [vmem:[%s426 + $0x348] sm:$0xff]
        %v576 = vld [vmem:[%s426 + $0x350] sm:$0xff]
        %v577 = vld [vmem:[%s426 + $0x358] sm:$0xff]
        %v578 = vld [vmem:[%s426 + $0x360] sm:$0xff]
        %v579 = vld [vmem:[%s426 + $0x368] sm:$0xff]
        %v580 = vld [vmem:[%s426 + $0x370] sm:$0xff]
        %v581 = vld [vmem:[%s426 + $0x378] sm:$0xff]
        %v582 = vld [vmem:[%s426 + $0x380] sm:$0xff]
        %v583 = vld [vmem:[%s426 + $0x388] sm:$0xff]
        %v584 = vld [vmem:[%s426 + $0x390] sm:$0xff]
        %v585 = vld [vmem:[%s426 + $0x398] sm:$0xff]
        %v586 = vld [vmem:[%s426 + $0x3a0] sm:$0xff]
        %v587 = vld [vmem:[%s426 + $0x3a8] sm:$0xff]
        %v588 = vld [vmem:[%s426 + $0x3b0] sm:$0xff]
        %v589 = vld [vmem:[%s426 + $0x3b8] sm:$0xff]
        %v590 = vld [vmem:[%s426 + $0x3c0] sm:$0xff]
        %v591 = vld [vmem:[%s426 + $0x3c8] sm:$0xff]
        %v592 = vld [vmem:[%s426 + $0x3d0] sm:$0xff]
        %v593 = vld [vmem:[%s426 + $0x3d8] sm:$0xff]
        %v594 = vld [vmem:[%s426 + $0x3e0] sm:$0xff]
        %v595 = vld [vmem:[%s426 + $0x3e8] sm:$0xff]
        %v596 = vld [vmem:[%s426 + $0x3f0] sm:$0xff]
        %v597 = vld [vmem:[%s426 + $0x3f8] sm:$0xff]
        %v598 = vld [vmem:[%s426 + $0x400] sm:$0xff]
        %v599 = vld [vmem:[%s426 + $0x408] sm:$0xff]
        %v600 = vld [vmem:[%s426 + $0x410] sm:$0xff]
        %v601 = vld [vmem:[%s426 + $0x418] sm:$0xff]
        %v602 = vld [vmem:[%s426 + $0x420] sm:$0xff]
        %v603 = vld [vmem:[%s426 + $0x428] sm:$0xff]
        %v604 = vld [vmem:[%s426 + $0x430] sm:$0xff]
        %v605 = vld [vmem:[%s426 + $0x438] sm:$0xff]
        %v606 = vld [vmem:[%s426 + $0x440] sm:$0xff]
        %v607 = vld [vmem:[%s426 + $0x448] sm:$0xff]
        %v608 = vld [vmem:[%s426 + $0x450] sm:$0xff]
        %v609 = vld [vmem:[%s426 + $0x458] sm:$0xff]
        %v610 = vld [vmem:[%s426 + $0x460] sm:$0xff]
        %v611 = vld [vmem:[%s426 + $0x468] sm:$0xff]
        %v612 = vld [vmem:[%s426 + $0x470] sm:$0xff]
        %v613 = vld [vmem:[%s426 + $0x478] sm:$0xff]
        %vm614 = vcmask 261120
        %v616 = vsel %vm614, %v448, 0
        %v619 = vsel %vm614, %v451, 0
        %v622 = vsel %vm614, %v454, 0
        %v625 = vsel %vm614, %v457, 0
        %v628 = vsel %vm614, %v460, 0
        %v631 = vsel %vm614, %v463, 0
        %v634 = vsel %vm614, %v466, 0
        %v637 = vsel %vm614, %v469, 0
        %639 = vmatprep.subr.mxu0 %v531
        %640 = vmatpush1.msra.mxu0 %v530
        %641 = vmatprep.subr.mxu0 %v527
        %642 = vmatpush1.msra.mxu0 %v526
        %643 = vmatprep.subr.mxu0 %v523
        %644 = vmatpush1.msra.mxu0 %v522
        %645 = vmatprep.subr.mxu0 %v519
        %646 = vmatpush1.msra.mxu0 %v518
        %647 = vmatprep.subr.mxu0 %v515
        %648 = vmatpush1.msra.mxu0 %v514
        %649 = vmatprep.subr.mxu0 %v511
        %650 = vmatpush1.msra.mxu0 %v510
        %651 = vmatprep.subr.mxu0 %v507
        %652 = vmatpush1.msra.mxu0 %v506
        %653 = vmatprep.subr.mxu0 %v503
        %654 = vmatpush1.msra.mxu0 %v502
        %655 = vmatprep.subr.mxu0 %v499
        %656 = vmatpush1.msra.mxu0 %v498
        %657 = vmatprep.subr.mxu0 %v495
        %658 = vmatpush1.msra.mxu0 %v494
        %659 = vmatprep.subr.mxu0 %v491
        %660 = vmatpush1.msra.mxu0 %v490
        %661 = vmatprep.subr.mxu0 %v487
        %662 = vmatpush1.msra.mxu0 %v486
        %663 = vmatprep.subr.mxu0 %v483
        %664 = vmatpush1.msra.mxu0 %v482
        %665 = vmatprep.subr.mxu0 %v479
        %666 = vmatpush1.msra.mxu0 %v478
        %667 = vmatprep.subr.mxu0 %v475
        %668 = vmatpush1.msra.mxu0 %v474
        %669 = vmatprep.subr.mxu0 %v471
        %670 = vmatpush1.msra.mxu0 %v470
        %671 = vmatprep.subr.mxu0 %v595
        %672 = vmatpush2.msra.mxu0 %v594
        %673 = vmatprep.subr.mxu0 %v591
        %674 = vmatpush2.msra.mxu0 %v590
        %675 = vmatprep.subr.mxu0 %v587
        %676 = vmatpush2.msra.mxu0 %v586
        %677 = vmatprep.subr.mxu0 %v583
        %678 = vmatpush2.msra.mxu0 %v582
        %679 = vmatprep.subr.mxu0 %v579
        %680 = vmatpush2.msra.mxu0 %v578
        %681 = vmatprep.subr.mxu0 %v575
        %682 = vmatpush2.msra.mxu0 %v574
        %683 = vmatprep.subr.mxu0 %v571
        %684 = vmatpush2.msra.mxu0 %v570
        %685 = vmatprep.subr.mxu0 %v567
        %686 = vmatpush2.msra.mxu0 %v566
        %687 = vmatprep.subr.mxu0 %v563
        %688 = vmatpush2.msra.mxu0 %v562
        %689 = vmatprep.subr.mxu0 %v559
        %690 = vmatpush2.msra.mxu0 %v558
        %691 = vmatprep.subr.mxu0 %v555
        %692 = vmatpush2.msra.mxu0 %v554
        %693 = vmatprep.subr.mxu0 %v551
        %694 = vmatpush2.msra.mxu0 %v550
        %695 = vmatprep.subr.mxu0 %v547
        %696 = vmatpush2.msra.mxu0 %v546
        %697 = vmatprep.subr.mxu0 %v543
        %698 = vmatpush2.msra.mxu0 %v542
        %699 = vmatprep.subr.mxu0 %v539
        %700 = vmatpush2.msra.mxu0 %v538
        %701 = vmatprep.subr.mxu0 %v535
        %702 = vmatpush2.msra.mxu0 %v534
        %703 = vmatprep.mubr.f32.mxu0 %v447
        %704 = vmatmul.mubr.f32.gmra.mxu0 %v446
        %v705 = vpop.f32.mrf.mxu0
        %v706 = vadd.f32 0.0, %v705
        %v707 = vpop.f32.mrf.mxu0
        %v708 = vadd.f32 0.0, %v707
        %709 = vmatprep.mubr.f32.mxu0 %v450
        %710 = vmatmul.mubr.f32.gmra.mxu0 %v449
        %v711 = vpop.f32.mrf.mxu0
        %v712 = vadd.f32 0.0, %v711
        %v713 = vpop.f32.mrf.mxu0
        %v714 = vadd.f32 0.0, %v713
        %715 = vmatprep.mubr.f32.mxu0 %v453
        %716 = vmatmul.mubr.f32.gmra.mxu0 %v452
        %v717 = vpop.f32.mrf.mxu0
        %v718 = vadd.f32 0.0, %v717
        %v719 = vpop.f32.mrf.mxu0
        %v720 = vadd.f32 0.0, %v719
        %721 = vmatprep.mubr.f32.mxu0 %v456
        %722 = vmatmul.mubr.f32.gmra.mxu0 %v455
        %v723 = vpop.f32.mrf.mxu0
        %v724 = vadd.f32 0.0, %v723
        %v725 = vpop.f32.mrf.mxu0
        %v726 = vadd.f32 0.0, %v725
        %727 = vmatprep.mubr.f32.mxu0 %v459
        %728 = vmatmul.mubr.f32.gmra.mxu0 %v458
        %v729 = vpop.f32.mrf.mxu0
        %v730 = vadd.f32 0.0, %v729
        %v731 = vpop.f32.mrf.mxu0
        %v732 = vadd.f32 0.0, %v731
        %733 = vmatprep.mubr.f32.mxu0 %v462
        %734 = vmatmul.mubr.f32.gmra.mxu0 %v461
        %v735 = vpop.f32.mrf.mxu0
        %v736 = vadd.f32 0.0, %v735
        %v737 = vpop.f32.mrf.mxu0
        %v738 = vadd.f32 0.0, %v737
        %739 = vmatprep.mubr.f32.mxu0 %v465
        %740 = vmatmul.mubr.f32.gmra.mxu0 %v464
        %v741 = vpop.f32.mrf.mxu0
        %v742 = vadd.f32 0.0, %v741
        %v743 = vpop.f32.mrf.mxu0
        %v744 = vadd.f32 0.0, %v743
        %745 = vmatprep.mubr.f32.mxu0 %v468
        %746 = vmatmul.mubr.f32.gmra.mxu0 %v467
        %v747 = vpop.f32.mrf.mxu0
        %v748 = vadd.f32 0.0, %v747
        %v749 = vpop.f32.mrf.mxu0
        %v750 = vadd.f32 0.0, %v749
        %751 = vdwg.mxu0
        %752 = vmatprep.subr.mxu0 0.0
        %753 = vmatpush1.msra.mxu0 0.0
        %754 = vmatprep.subr.mxu0 0.0
        %755 = vmatpush1.msra.mxu0 0.0
        %756 = vmatprep.subr.mxu0 0.0
        %757 = vmatpush1.msra.mxu0 0.0
        %758 = vmatprep.subr.mxu0 0.0
        %759 = vmatpush1.msra.mxu0 0.0
        %760 = vmatprep.subr.mxu0 0.0
        %761 = vmatpush1.msra.mxu0 0.0
        %762 = vmatprep.subr.mxu0 0.0
        %763 = vmatpush1.msra.mxu0 0.0
        %764 = vmatprep.subr.mxu0 0.0
        %765 = vmatpush1.msra.mxu0 0.0
        %766 = vmatprep.subr.mxu0 0.0
        %767 = vmatpush1.msra.mxu0 0.0
        %768 = vmatprep.subr.mxu0 0.0
        %769 = vmatpush1.msra.mxu0 0.0
        %770 = vmatprep.subr.mxu0 0.0
        %771 = vmatpush1.msra.mxu0 0.0
        %772 = vmatprep.subr.mxu0 0.0
        %773 = vmatpush1.msra.mxu0 0.0
        %774 = vmatprep.subr.mxu0 0.0
        %775 = vmatpush1.msra.mxu0 0.0
        %776 = vmatprep.subr.mxu0 %v611
        %777 = vmatpush1.msra.mxu0 %v610
        %778 = vmatprep.subr.mxu0 %v607
        %779 = vmatpush1.msra.mxu0 %v606
        %780 = vmatprep.subr.mxu0 %v603
        %781 = vmatpush1.msra.mxu0 %v602
        %782 = vmatprep.subr.mxu0 %v599
        %783 = vmatpush1.msra.mxu0 %v598
        %784 = vmatprep.subr.mxu0 0.0
        %785 = vmatpush2.msra.mxu0 0.0
        %786 = vmatprep.subr.mxu0 0.0
        %787 = vmatpush2.msra.mxu0 0.0
        %788 = vmatprep.subr.mxu0 0.0
        %789 = vmatpush2.msra.mxu0 0.0
        %790 = vmatprep.subr.mxu0 0.0
        %791 = vmatpush2.msra.mxu0 0.0
        %792 = vmatprep.subr.mxu0 0.0
        %793 = vmatpush2.msra.mxu0 0.0
        %794 = vmatprep.subr.mxu0 0.0
        %795 = vmatpush2.msra.mxu0 0.0
        %796 = vmatprep.subr.mxu0 0.0
        %797 = vmatpush2.msra.mxu0 0.0
        %798 = vmatprep.subr.mxu0 0.0
        %799 = vmatpush2.msra.mxu0 0.0
        %800 = vmatprep.subr.mxu0 0.0
        %801 = vmatpush2.msra.mxu0 0.0
        %802 = vmatprep.subr.mxu0 0.0
        %803 = vmatpush2.msra.mxu0 0.0
        %804 = vmatprep.subr.mxu0 0.0
        %805 = vmatpush2.msra.mxu0 0.0
        %806 = vmatprep.subr.mxu0 0.0
        %807 = vmatpush2.msra.mxu0 0.0
        %808 = vmatprep.subr.mxu0 0.0
        %809 = vmatpush2.msra.mxu0 0.0
        %810 = vmatprep.subr.mxu0 0.0
        %811 = vmatpush2.msra.mxu0 0.0
        %812 = vmatprep.subr.mxu0 0.0
        %813 = vmatpush2.msra.mxu0 0.0
        %814 = vmatprep.subr.mxu0 0.0
        %815 = vmatpush2.msra.mxu0 0.0
        %816 = vmatprep.mubr.f32.mxu0 0.0
        %817 = vmatmul.mubr.f32.gmra.mxu0 %v616
        %v818 = vpop.f32.mrf.mxu0
        %v819 = vadd.f32 %v706, %v818
        %v820 = vpop.f32.mrf.mxu0
        %v821 = vadd.f32 %v708, %v820
        %822 = vmatprep.mubr.f32.mxu0 0.0
        %823 = vmatmul.mubr.f32.gmra.mxu0 %v619
        %v824 = vpop.f32.mrf.mxu0
        %v825 = vadd.f32 %v712, %v824
        %v826 = vpop.f32.mrf.mxu0
        %v827 = vadd.f32 %v714, %v826
        %828 = vmatprep.mubr.f32.mxu0 0.0
        %829 = vmatmul.mubr.f32.gmra.mxu0 %v622
        %v830 = vpop.f32.mrf.mxu0
        %v831 = vadd.f32 %v718, %v830
        %v832 = vpop.f32.mrf.mxu0
        %v833 = vadd.f32 %v720, %v832
        %834 = vmatprep.mubr.f32.mxu0 0.0
        %835 = vmatmul.mubr.f32.gmra.mxu0 %v625
        %v836 = vpop.f32.mrf.mxu0
        %v837 = vadd.f32 %v724, %v836
        %v838 = vpop.f32.mrf.mxu0
        %v839 = vadd.f32 %v726, %v838
        %840 = vmatprep.mubr.f32.mxu0 0.0
        %841 = vmatmul.mubr.f32.gmra.mxu0 %v628
        %v842 = vpop.f32.mrf.mxu0
        %v843 = vadd.f32 %v730, %v842
        %v844 = vpop.f32.mrf.mxu0
        %v845 = vadd.f32 %v732, %v844
        %846 = vmatprep.mubr.f32.mxu0 0.0
        %847 = vmatmul.mubr.f32.gmra.mxu0 %v631
        %v848 = vpop.f32.mrf.mxu0
        %v849 = vadd.f32 %v736, %v848
        %v850 = vpop.f32.mrf.mxu0
        %v851 = vadd.f32 %v738, %v850
        %852 = vmatprep.mubr.f32.mxu0 0.0
        %853 = vmatmul.mubr.f32.gmra.mxu0 %v634
        %v854 = vpop.f32.mrf.mxu0
        %v855 = vadd.f32 %v742, %v854
        %v856 = vpop.f32.mrf.mxu0
        %v857 = vadd.f32 %v744, %v856
        %858 = vmatprep.mubr.f32.mxu0 0.0
        %859 = vmatmul.mubr.f32.gmra.mxu0 %v637
        %v860 = vpop.f32.mrf.mxu0
        %v861 = vadd.f32 %v748, %v860
        %v862 = vpop.f32.mrf.mxu0
        %v863 = vadd.f32 %v750, %v862
        %864 = vdwg.mxu0
        %865 = vmatprep.subr.mxu0 %v533
        %866 = vmatpush1.msra.mxu0 %v532
        %867 = vmatprep.subr.mxu0 %v529
        %868 = vmatpush1.msra.mxu0 %v528
        %869 = vmatprep.subr.mxu0 %v525
        %870 = vmatpush1.msra.mxu0 %v524
        %871 = vmatprep.subr.mxu0 %v521
        %872 = vmatpush1.msra.mxu0 %v520
        %873 = vmatprep.subr.mxu0 %v517
        %874 = vmatpush1.msra.mxu0 %v516
        %875 = vmatprep.subr.mxu0 %v513
        %876 = vmatpush1.msra.mxu0 %v512
        %877 = vmatprep.subr.mxu0 %v509
        %878 = vmatpush1.msra.mxu0 %v508
        %879 = vmatprep.subr.mxu0 %v505
        %880 = vmatpush1.msra.mxu0 %v504
        %881 = vmatprep.subr.mxu0 %v501
        %882 = vmatpush1.msra.mxu0 %v500
        %883 = vmatprep.subr.mxu0 %v497
        %884 = vmatpush1.msra.mxu0 %v496
        %885 = vmatprep.subr.mxu0 %v493
        %886 = vmatpush1.msra.mxu0 %v492
        %887 = vmatprep.subr.mxu0 %v489
        %888 = vmatpush1.msra.mxu0 %v488
        %889 = vmatprep.subr.mxu0 %v485
        %890 = vmatpush1.msra.mxu0 %v484
        %891 = vmatprep.subr.mxu0 %v481
        %892 = vmatpush1.msra.mxu0 %v480
        %893 = vmatprep.subr.mxu0 %v477
        %894 = vmatpush1.msra.mxu0 %v476
        %895 = vmatprep.subr.mxu0 %v473
        %896 = vmatpush1.msra.mxu0 %v472
        %897 = vmatprep.subr.mxu0 %v597
        %898 = vmatpush2.msra.mxu0 %v596
        %899 = vmatprep.subr.mxu0 %v593
        %900 = vmatpush2.msra.mxu0 %v592
        %901 = vmatprep.subr.mxu0 %v589
        %902 = vmatpush2.msra.mxu0 %v588
        %903 = vmatprep.subr.mxu0 %v585
        %904 = vmatpush2.msra.mxu0 %v584
        %905 = vmatprep.subr.mxu0 %v581
        %906 = vmatpush2.msra.mxu0 %v580
        %907 = vmatprep.subr.mxu0 %v577
        %908 = vmatpush2.msra.mxu0 %v576
        %909 = vmatprep.subr.mxu0 %v573
        %910 = vmatpush2.msra.mxu0 %v572
        %911 = vmatprep.subr.mxu0 %v569
        %912 = vmatpush2.msra.mxu0 %v568
        %913 = vmatprep.subr.mxu0 %v565
        %914 = vmatpush2.msra.mxu0 %v564
        %915 = vmatprep.subr.mxu0 %v561
        %916 = vmatpush2.msra.mxu0 %v560
        %917 = vmatprep.subr.mxu0 %v557
        %918 = vmatpush2.msra.mxu0 %v556
        %919 = vmatprep.subr.mxu0 %v553
        %920 = vmatpush2.msra.mxu0 %v552
        %921 = vmatprep.subr.mxu0 %v549
        %922 = vmatpush2.msra.mxu0 %v548
        %923 = vmatprep.subr.mxu0 %v545
        %924 = vmatpush2.msra.mxu0 %v544
        %925 = vmatprep.subr.mxu0 %v541
        %926 = vmatpush2.msra.mxu0 %v540
        %927 = vmatprep.subr.mxu0 %v537
        %928 = vmatpush2.msra.mxu0 %v536
        %929 = vmatprep.mubr.f32.mxu0 %v447
        %930 = vmatmul.mubr.f32.gmra.mxu0 %v446
        %v931 = vpop.f32.mrf.mxu0
        %v932 = vadd.f32 0.0, %v931
        %v933 = vpop.f32.mrf.mxu0
        %v934 = vadd.f32 0.0, %v933
        %935 = vmatprep.mubr.f32.mxu0 %v450
        %936 = vmatmul.mubr.f32.gmra.mxu0 %v449
        %v937 = vpop.f32.mrf.mxu0
        %v938 = vadd.f32 0.0, %v937
        %v939 = vpop.f32.mrf.mxu0
        %v940 = vadd.f32 0.0, %v939
        %941 = vmatprep.mubr.f32.mxu0 %v453
        %942 = vmatmul.mubr.f32.gmra.mxu0 %v452
        %v943 = vpop.f32.mrf.mxu0
        %v944 = vadd.f32 0.0, %v943
        %v945 = vpop.f32.mrf.mxu0
        %v946 = vadd.f32 0.0, %v945
        %947 = vmatprep.mubr.f32.mxu0 %v456
        %948 = vmatmul.mubr.f32.gmra.mxu0 %v455
        %v949 = vpop.f32.mrf.mxu0
        %v950 = vadd.f32 0.0, %v949
        %v951 = vpop.f32.mrf.mxu0
        %v952 = vadd.f32 0.0, %v951
        %953 = vmatprep.mubr.f32.mxu0 %v459
        %954 = vmatmul.mubr.f32.gmra.mxu0 %v458
        %v955 = vpop.f32.mrf.mxu0
        %v956 = vadd.f32 0.0, %v955
        %v957 = vpop.f32.mrf.mxu0
        %v958 = vadd.f32 0.0, %v957
        %959 = vmatprep.mubr.f32.mxu0 %v462
        %960 = vmatmul.mubr.f32.gmra.mxu0 %v461
        %v961 = vpop.f32.mrf.mxu0
        %v962 = vadd.f32 0.0, %v961
        %v963 = vpop.f32.mrf.mxu0
        %v964 = vadd.f32 0.0, %v963
        %965 = vmatprep.mubr.f32.mxu0 %v465
        %966 = vmatmul.mubr.f32.gmra.mxu0 %v464
        %v967 = vpop.f32.mrf.mxu0
        %v968 = vadd.f32 0.0, %v967
        %v969 = vpop.f32.mrf.mxu0
        %v970 = vadd.f32 0.0, %v969
        %971 = vmatprep.mubr.f32.mxu0 %v468
        %972 = vmatmul.mubr.f32.gmra.mxu0 %v467
        %v973 = vpop.f32.mrf.mxu0
        %v974 = vadd.f32 0.0, %v973
        %v975 = vpop.f32.mrf.mxu0
        %v976 = vadd.f32 0.0, %v975
        %977 = vdwg.mxu0
        %978 = vmatprep.subr.mxu0 0.0
        %979 = vmatpush1.msra.mxu0 0.0
        %980 = vmatprep.subr.mxu0 0.0
        %981 = vmatpush1.msra.mxu0 0.0
        %982 = vmatprep.subr.mxu0 0.0
        %983 = vmatpush1.msra.mxu0 0.0
        %984 = vmatprep.subr.mxu0 0.0
        %985 = vmatpush1.msra.mxu0 0.0
        %986 = vmatprep.subr.mxu0 0.0
        %987 = vmatpush1.msra.mxu0 0.0
        %988 = vmatprep.subr.mxu0 0.0
        %989 = vmatpush1.msra.mxu0 0.0
        %990 = vmatprep.subr.mxu0 0.0
        %991 = vmatpush1.msra.mxu0 0.0
        %992 = vmatprep.subr.mxu0 0.0
        %993 = vmatpush1.msra.mxu0 0.0
        %994 = vmatprep.subr.mxu0 0.0
        %995 = vmatpush1.msra.mxu0 0.0
        %996 = vmatprep.subr.mxu0 0.0
        %997 = vmatpush1.msra.mxu0 0.0
        %998 = vmatprep.subr.mxu0 0.0
        %999 = vmatpush1.msra.mxu0 0.0
        %1000 = vmatprep.subr.mxu0 0.0
        %1001 = vmatpush1.msra.mxu0 0.0
        %1002 = vmatprep.subr.mxu0 %v613
        %1003 = vmatpush1.msra.mxu0 %v612
        %1004 = vmatprep.subr.mxu0 %v609
        %1005 = vmatpush1.msra.mxu0 %v608
        %1006 = vmatprep.subr.mxu0 %v605
        %1007 = vmatpush1.msra.mxu0 %v604
        %1008 = vmatprep.subr.mxu0 %v601
        %1009 = vmatpush1.msra.mxu0 %v600
        %1010 = vmatprep.subr.mxu0 0.0
        %1011 = vmatpush2.msra.mxu0 0.0
        %1012 = vmatprep.subr.mxu0 0.0
        %1013 = vmatpush2.msra.mxu0 0.0
        %1014 = vmatprep.subr.mxu0 0.0
        %1015 = vmatpush2.msra.mxu0 0.0
        %1016 = vmatprep.subr.mxu0 0.0
        %1017 = vmatpush2.msra.mxu0 0.0
        %1018 = vmatprep.subr.mxu0 0.0
        %1019 = vmatpush2.msra.mxu0 0.0
        %1020 = vmatprep.subr.mxu0 0.0
        %1021 = vmatpush2.msra.mxu0 0.0
        %1022 = vmatprep.subr.mxu0 0.0
        %1023 = vmatpush2.msra.mxu0 0.0
        %1024 = vmatprep.subr.mxu0 0.0
        %1025 = vmatpush2.msra.mxu0 0.0
        %1026 = vmatprep.subr.mxu0 0.0
        %1027 = vmatpush2.msra.mxu0 0.0
        %1028 = vmatprep.subr.mxu0 0.0
        %1029 = vmatpush2.msra.mxu0 0.0
        %1030 = vmatprep.subr.mxu0 0.0
        %1031 = vmatpush2.msra.mxu0 0.0
        %1032 = vmatprep.subr.mxu0 0.0
        %1033 = vmatpush2.msra.mxu0 0.0
        %1034 = vmatprep.subr.mxu0 0.0
        %1035 = vmatpush2.msra.mxu0 0.0
        %1036 = vmatprep.subr.mxu0 0.0
        %1037 = vmatpush2.msra.mxu0 0.0
        %1038 = vmatprep.subr.mxu0 0.0
        %1039 = vmatpush2.msra.mxu0 0.0
        %1040 = vmatprep.subr.mxu0 0.0
        %1041 = vmatpush2.msra.mxu0 0.0
        %1042 = vmatprep.mubr.f32.mxu0 0.0
        %1043 = vmatmul.mubr.f32.gmra.mxu0 %v616
        %v1044 = vpop.f32.mrf.mxu0
        %v1045 = vadd.f32 %v932, %v1044
        %v1046 = vpop.f32.mrf.mxu0
        %v1047 = vadd.f32 %v934, %v1046
        %1048 = vmatprep.mubr.f32.mxu0 0.0
        %1049 = vmatmul.mubr.f32.gmra.mxu0 %v619
        %v1050 = vpop.f32.mrf.mxu0
        %v1051 = vadd.f32 %v938, %v1050
        %v1052 = vpop.f32.mrf.mxu0
        %v1053 = vadd.f32 %v940, %v1052
        %1054 = vmatprep.mubr.f32.mxu0 0.0
        %1055 = vmatmul.mubr.f32.gmra.mxu0 %v622
        %v1056 = vpop.f32.mrf.mxu0
        %v1057 = vadd.f32 %v944, %v1056
        %v1058 = vpop.f32.mrf.mxu0
        %v1059 = vadd.f32 %v946, %v1058
        %1060 = vmatprep.mubr.f32.mxu0 0.0
        %1061 = vmatmul.mubr.f32.gmra.mxu0 %v625
        %v1062 = vpop.f32.mrf.mxu0
        %v1063 = vadd.f32 %v950, %v1062
        %v1064 = vpop.f32.mrf.mxu0
        %v1065 = vadd.f32 %v952, %v1064
        %1066 = vmatprep.mubr.f32.mxu0 0.0
        %1067 = vmatmul.mubr.f32.gmra.mxu0 %v628
        %v1068 = vpop.f32.mrf.mxu0
        %v1069 = vadd.f32 %v956, %v1068
        %v1070 = vpop.f32.mrf.mxu0
        %v1071 = vadd.f32 %v958, %v1070
        %1072 = vmatprep.mubr.f32.mxu0 0.0
        %1073 = vmatmul.mubr.f32.gmra.mxu0 %v631
        %v1074 = vpop.f32.mrf.mxu0
        %v1075 = vadd.f32 %v962, %v1074
        %v1076 = vpop.f32.mrf.mxu0
        %v1077 = vadd.f32 %v964, %v1076
        %1078 = vmatprep.mubr.f32.mxu0 0.0
        %1079 = vmatmul.mubr.f32.gmra.mxu0 %v634
        %v1080 = vpop.f32.mrf.mxu0
        %v1081 = vadd.f32 %v968, %v1080
        %v1082 = vpop.f32.mrf.mxu0
        %v1083 = vadd.f32 %v970, %v1082
        %1084 = vmatprep.mubr.f32.mxu0 0.0
        %1085 = vmatmul.mubr.f32.gmra.mxu0 %v637
        %v1086 = vpop.f32.mrf.mxu0
        %v1087 = vadd.f32 %v974, %v1086
        %v1088 = vpop.f32.mrf.mxu0
        %v1089 = vadd.f32 %v976, %v1088
        %1090 = vdwg.mxu0
        %1091 = vst [vmem:[%s443] sm:$0xff] %v819
        %1092 = vst [vmem:[%s443 + $0x8] sm:$0xff] %v821
        %1093 = vst [vmem:[%s443 + $0x10] sm:$0xff] %v1045
        %1094 = vst [vmem:[%s443 + $0x18] sm:$0xff] %v1047
        %1095 = vst [vmem:[%s443 + $0x20] sm:$0xff] %v825
        %1096 = vst [vmem:[%s443 + $0x28] sm:$0xff] %v827
        %1097 = vst [vmem:[%s443 + $0x30] sm:$0xff] %v1051
        %1098 = vst [vmem:[%s443 + $0x38] sm:$0xff] %v1053
        %1099 = vst [vmem:[%s443 + $0x40] sm:$0xff] %v831
        %1100 = vst [vmem:[%s443 + $0x48] sm:$0xff] %v833
        %1101 = vst [vmem:[%s443 + $0x50] sm:$0xff] %v1057
        %1102 = vst [vmem:[%s443 + $0x58] sm:$0xff] %v1059
        %1103 = vst [vmem:[%s443 + $0x60] sm:$0xff] %v837
        %1104 = vst [vmem:[%s443 + $0x68] sm:$0xff] %v839
        %1105 = vst [vmem:[%s443 + $0x70] sm:$0xff] %v1063
        %1106 = vst [vmem:[%s443 + $0x78] sm:$0xff] %v1065
        %1107 = vst [vmem:[%s443 + $0x80] sm:$0xff] %v843
        %1108 = vst [vmem:[%s443 + $0x88] sm:$0xff] %v845
        %1109 = vst [vmem:[%s443 + $0x90] sm:$0xff] %v1069
        %1110 = vst [vmem:[%s443 + $0x98] sm:$0xff] %v1071
        %1111 = vst [vmem:[%s443 + $0xa0] sm:$0xff] %v849
        %1112 = vst [vmem:[%s443 + $0xa8] sm:$0xff] %v851
        %1113 = vst [vmem:[%s443 + $0xb0] sm:$0xff] %v1075
        %1114 = vst [vmem:[%s443 + $0xb8] sm:$0xff] %v1077
        %1115 = vst [vmem:[%s443 + $0xc0] sm:$0xff] %v855
        %1116 = vst [vmem:[%s443 + $0xc8] sm:$0xff] %v857
        %1117 = vst [vmem:[%s443 + $0xd0] sm:$0xff] %v1081
        %1118 = vst [vmem:[%s443 + $0xd8] sm:$0xff] %v1083
        %1119 = vst [vmem:[%s443 + $0xe0] sm:$0xff] %v861
        %1120 = vst [vmem:[%s443 + $0xe8] sm:$0xff] %v863
        %1121 = vst [vmem:[%s443 + $0xf0] sm:$0xff] %v1087
        %1122 = vst [vmem:[%s443 + $0xf8] sm:$0xff] %v1089
        %s1123 = sand.u32 %s68, 1
        %s1124 = sand.u32 %s68, 1
        %s1125 = smul.addr %s1124, 256
        %s1126 = scalar_lea.vmem [#allocation3], %s1125
        // Predicated region
        $region52: #{enc_forward.7} parent=46 // pred_check
          %p1127 = pneg %p78
        $region53: #{enc_forward.7} parent=46 // pred_check_branch
          %1129 = sbr.rel (%p1127) target = $region55
        $region54: #{enc_forward.7} parent=46 // pred_region
          %s1130 = smul.u32 4, %s13
          %s1131 = smul.addr %s1130, 8
          %s1132 = scalar_lea.vmem %s2, %s1131
          // Predicated region
          $region56: #{enc_forward.7} parent=54 // pred_check
            _
          $region57: #{enc_forward.7} parent=54 // pred_check_branch
            %1134 = sbr.rel (0) target = $region59
          $region58: #{enc_forward.7} parent=54 // pred_region
            // Predicated region
            $region60: #{enc_forward.7} parent=58 // pred_check
              _
            $region61: #{enc_forward.7} parent=58 // pred_check_branch
              %1136 = sbr.rel (0) target = $region63
            $region62: #{enc_forward.7} parent=58 // pred_region
              loop: start=0, step=1, limit=1
              $region64: #{enc_forward.7} parent=62 // loop_pre_header
                _
              $region65: #{enc_forward.7} parent=62 // loop_header
                %s1138 = sphi 0, %s1142
                %p1139 = scmp.ge.s32.totalorder %s1138, 1
                %s1143 = sphi %s1126, %s1126
                %s1144 = sphi %s1132, %s1132
              $region66: #{enc_forward.7} parent=62 // loop_header_branch
                %1141 = sbr.rel (%p1139) target = $region70
              $region67: #{enc_forward.7} parent=62 // loop_body
                %v1145 = vld [vmem:[%s1143] sm:$0xff]
                %1146 = vst [vmem:[%s1144] sm:$0xff] %v1145
                %v1147 = vld [vmem:[%s1143 + $0x8] sm:$0xff]
                %1148 = vst [vmem:[%s1144 + $0x8] sm:$0xff] %v1147
                %v1149 = vld [vmem:[%s1143 + $0x10] sm:$0xff]
                %1150 = vst [vmem:[%s1144 + $0x10] sm:$0xff] %v1149
                %v1151 = vld [vmem:[%s1143 + $0x18] sm:$0xff]
                %1152 = vst [vmem:[%s1144 + $0x18] sm:$0xff] %v1151
                %v1153 = vld [vmem:[%s1143 + $0x20] sm:$0xff]
                %1154 = vst [vmem:[%s1144 + $0x40] sm:$0xff] %v1153
                %v1155 = vld [vmem:[%s1143 + $0x28] sm:$0xff]
                %1156 = vst [vmem:[%s1144 + $0x48] sm:$0xff] %v1155
                %v1157 = vld [vmem:[%s1143 + $0x30] sm:$0xff]
                %1158 = vst [vmem:[%s1144 + $0x50] sm:$0xff] %v1157
                %v1159 = vld [vmem:[%s1143 + $0x38] sm:$0xff]
                %1160 = vst [vmem:[%s1144 + $0x58] sm:$0xff] %v1159
                %v1161 = vld [vmem:[%s1143 + $0x40] sm:$0xff]
                %1162 = vst [vmem:[%s1144 + $0x80] sm:$0xff] %v1161
                %v1163 = vld [vmem:[%s1143 + $0x48] sm:$0xff]
                %1164 = vst [vmem:[%s1144 + $0x88] sm:$0xff] %v1163
                %v1165 = vld [vmem:[%s1143 + $0x50] sm:$0xff]
                %1166 = vst [vmem:[%s1144 + $0x90] sm:$0xff] %v1165
                %v1167 = vld [vmem:[%s1143 + $0x58] sm:$0xff]
                %1168 = vst [vmem:[%s1144 + $0x98] sm:$0xff] %v1167
                %v1169 = vld [vmem:[%s1143 + $0x60] sm:$0xff]
                %1170 = vst [vmem:[%s1144 + $0xc0] sm:$0xff] %v1169
                %v1171 = vld [vmem:[%s1143 + $0x68] sm:$0xff]
                %1172 = vst [vmem:[%s1144 + $0xc8] sm:$0xff] %v1171
                %v1173 = vld [vmem:[%s1143 + $0x70] sm:$0xff]
                %1174 = vst [vmem:[%s1144 + $0xd0] sm:$0xff] %v1173
                %v1175 = vld [vmem:[%s1143 + $0x78] sm:$0xff]
                %1176 = vst [vmem:[%s1144 + $0xd8] sm:$0xff] %v1175
                %v1177 = vld [vmem:[%s1143 + $0x80] sm:$0xff]
                %1178 = vst [vmem:[%s1144 + $0x100] sm:$0xff] %v1177
                %v1179 = vld [vmem:[%s1143 + $0x88] sm:$0xff]
                %1180 = vst [vmem:[%s1144 + $0x108] sm:$0xff] %v1179
                %v1181 = vld [vmem:[%s1143 + $0x90] sm:$0xff]
                %1182 = vst [vmem:[%s1144 + $0x110] sm:$0xff] %v1181
                %v1183 = vld [vmem:[%s1143 + $0x98] sm:$0xff]
                %1184 = vst [vmem:[%s1144 + $0x118] sm:$0xff] %v1183
                %v1185 = vld [vmem:[%s1143 + $0xa0] sm:$0xff]
                %1186 = vst [vmem:[%s1144 + $0x140] sm:$0xff] %v1185
                %v1187 = vld [vmem:[%s1143 + $0xa8] sm:$0xff]
                %1188 = vst [vmem:[%s1144 + $0x148] sm:$0xff] %v1187
                %v1189 = vld [vmem:[%s1143 + $0xb0] sm:$0xff]
                %1190 = vst [vmem:[%s1144 + $0x150] sm:$0xff] %v1189
                %v1191 = vld [vmem:[%s1143 + $0xb8] sm:$0xff]
                %1192 = vst [vmem:[%s1144 + $0x158] sm:$0xff] %v1191
                %v1193 = vld [vmem:[%s1143 + $0xc0] sm:$0xff]
                %1194 = vst [vmem:[%s1144 + $0x180] sm:$0xff] %v1193
                %v1195 = vld [vmem:[%s1143 + $0xc8] sm:$0xff]
                %1196 = vst [vmem:[%s1144 + $0x188] sm:$0xff] %v1195
                %v1197 = vld [vmem:[%s1143 + $0xd0] sm:$0xff]
                %1198 = vst [vmem:[%s1144 + $0x190] sm:$0xff] %v1197
                %v1199 = vld [vmem:[%s1143 + $0xd8] sm:$0xff]
                %1200 = vst [vmem:[%s1144 + $0x198] sm:$0xff] %v1199
                %v1201 = vld [vmem:[%s1143 + $0xe0] sm:$0xff]
                %1202 = vst [vmem:[%s1144 + $0x1c0] sm:$0xff] %v1201
                %v1203 = vld [vmem:[%s1143 + $0xe8] sm:$0xff]
                %1204 = vst [vmem:[%s1144 + $0x1c8] sm:$0xff] %v1203
                %v1205 = vld [vmem:[%s1143 + $0xf0] sm:$0xff]
                %1206 = vst [vmem:[%s1144 + $0x1d0] sm:$0xff] %v1205
                %v1207 = vld [vmem:[%s1143 + $0xf8] sm:$0xff]
                %1208 = vst [vmem:[%s1144 + $0x1d8] sm:$0xff] %v1207
              $region68: #{enc_forward.7} parent=62 // loop_footer
                %s1142 = sadd.s32 1, %s1138
              $region69: #{enc_forward.7} parent=62 // loop_footer_branch
                %1137 = sbr.rel target = $region65
              $region70: #{enc_forward.7} parent=62 // loop_exit
                _
            $region63: #{enc_forward.7} parent=58 // pred_fallthru
              _
            // Predicated region
            $region71: #{enc_forward.7} parent=58 // pred_check
              _
            $region72: #{enc_forward.7} parent=58 // pred_check_branch
              %1210 = sbr.rel target = $region74
            $region73: #{enc_forward.7} parent=58 // pred_region
              _
            $region74: #{enc_forward.7} parent=58 // pred_fallthru
              _
          $region59: #{enc_forward.7} parent=54 // pred_fallthru
            _
          %1211 = vnop
        $region55: #{enc_forward.7} parent=46 // pred_fallthru
          _
      $region47: #{enc_forward.7} parent=5 // pred_fallthru
        _
      %p1212 = scmp.le.s32.totalorder 2, %s8
      // Predicated region
      $region75: #{enc_forward.7} parent=5 // pred_check
        %p1213 = pneg %p1212
      $region76: #{enc_forward.7} parent=5 // pred_check_branch
        %1215 = sbr.rel (%p1213) target = $region78
      $region77: #{enc_forward.7} parent=5 // pred_region
        %s1216 = ssub.s32 %s8, 2
        // Predicated region
        $region79: #{enc_forward.7} parent=77 // pred_check
          %p1217 = pneg %p84
        $region80: #{enc_forward.7} parent=77 // pred_check_branch
          %1219 = sbr.rel (%p1217) target = $region82
        $region81: #{enc_forward.7} parent=77 // pred_region
          %s1220 = sand.u32 %s69, 1
          %s1221 = sand.u32 %s69, 1
          %s1222 = smul.addr %s1221, 256
          %s1223 = scalar_lea.vmem [#allocation3], %s1222
        $region82: #{enc_forward.7} parent=77 // pred_fallthru
          _
      $region78: #{enc_forward.7} parent=5 // pred_fallthru
        _
    $region6: #{enc_forward.7} parent=1 // loop_footer
      %s12 = sadd.s32 1, %s8
    $region7: #{enc_forward.7} parent=1 // loop_footer_branch
      %7 = sbr.rel target = $region3
    $region8: #{enc_forward.7} parent=1 // loop_exit
      _

// kernel: enc_forward.8
$region0: #{enc_forward.8}
  #allocation0 [shape = 'u32[]', space=smem, size = 0x4, offset = 0x4, fixed_abs, tag = 'smem constant byte address 0x4 - core index']
  #allocation1 [shape = 'u32[144,128]{1,0:T(1,128)}', space=vmem, size = 0x12000, scoped, tag = 'internal scratch']
  %s0 = inlined_call_operand.vmem [shape: f32[128,576], index: 0, kind: input, shape index: {}]
  %s1 = inlined_call_operand.vmem [shape: f32[576,256], index: 1, kind: input, shape index: {}]
  %s2 = inlined_call_operand.vmem [shape: f32[128,256], index: 2, kind: output, shape index: {}]
  %s3 = sld [smem:[#allocation0]]
  $region113: #{enc_forward.8} parent=0
    _
  %s5 = ssub.s32 1, %s3
  %s6 = scalar_select 0, %s5, %s3
  $region1: #{enc_forward.8} parent=0
    #allocation2 [shape = 'u8[589824]{0}', space=vmem, size = 0x90000, scoped, tag = 'input window, operand 1']
    #allocation3 [shape = 'u8[131072]{0}', space=vmem, size = 0x20000, scoped, tag = 'output window, operand 0']
    loop: start=0, step=1, limit=4
    $region2: #{enc_forward.8} parent=1 // loop_pre_header
      _
    $region3: #{enc_forward.8} parent=1 // loop_header
      %s8 = sphi 0, %s12
      %p9 = scmp.ge.s32.totalorder %s8, 4
      %s16 = sphi 0, %s16
      %s18 = sphi 0, %s16
      %s19 = sphi 0, %s18
      %s33 = sphi 0, %s19
      %s39 = sphi 0, %s41
      %s42 = sphi 0, %s39
      %s43 = sphi 0, %s42
      %s59 = sphi 0, %s43
      %s65 = sphi 0, %s67
      %s68 = sphi 0, %s65
      %s69 = sphi 0, %s68
      %s85 = sphi 0, %s69
    $region4: #{enc_forward.8} parent=1 // loop_header_branch
      %11 = sbr.rel (%p9) target = $region8
    $region5: #{enc_forward.8} parent=1 // loop_body
      %s13 = ssub.s32 %s8, 1
      %s14 = ssub.s32 %s8, 2
      %s15 = sadd.s32 %s8, 1
      %s17 = sadd.s32 %s16, 1
      %p20 = scmp.eq.s32.totalorder %s8, 1
      %p21 = scmp.ne.s32.totalorder %s16, %s18
      %p22 = scmp.eq.s32.totalorder %s8, 0
      %p23 = por %p21, %p22
      %p24 = scmp.ne.s32.totalorder %s16, %s18
      %p25 = scmp.eq.s32.totalorder %s13, 1
      %p26 = por %p24, %p25
      %p27 = scmp.ne.s32.totalorder %s18, %s19
      %p28 = scmp.eq.s32.totalorder %s13, 0
      %p29 = por %p27, %p28
      %p30 = scmp.ne.s32.totalorder %s18, %s19
      %p31 = scmp.eq.s32.totalorder %s14, 1
      %p32 = por %p30, %p31
      %p34 = scmp.ne.s32.totalorder %s19, %s33
      %p35 = scmp.eq.s32.totalorder %s14, 0
      %p36 = por %p34, %p35
      %s37 = ssub.s32 %s8, %s15
      %p38 = scmp.eq.s32.totalorder %s37, 0
      %s40 = sadd.s32 %s39, 1
      %s41 = scalar_select %p38, %s39, %s40
      %p44 = pneg %p38
      %p45 = scmp.eq.s32.totalorder %s8, 1
      %p46 = por %p44, %p45
      %p47 = scmp.ne.s32.totalorder %s39, %s42
      %p48 = scmp.eq.s32.totalorder %s8, 0
      %p49 = por %p47, %p48
      %p50 = scmp.ne.s32.totalorder %s39, %s42
      %p51 = scmp.eq.s32.totalorder %s13, 1
      %p52 = por %p50, %p51
      %p53 = scmp.ne.s32.totalorder %s42, %s43
      %p54 = scmp.eq.s32.totalorder %s13, 0
      %p55 = por %p53, %p54
      %p56 = scmp.ne.s32.totalorder %s42, %s43
      %p57 = scmp.eq.s32.totalorder %s14, 1
      %p58 = por %p56, %p57
      %p60 = scmp.ne.s32.totalorder %s43, %s59
      %p61 = scmp.eq.s32.totalorder %s14, 0
      %p62 = por %p60, %p61
      %s63 = ssub.s32 %s8, %s15
      %p64 = scmp.eq.s32.totalorder %s63, 0
      %s66 = sadd.s32 %s65, 1
      %s67 = scalar_select %p64, %s65, %s66
      %p70 = pneg %p64
      %p71 = scmp.eq.s32.totalorder %s8, 1
      %p72 = por %p70, %p71
      %p73 = scmp.ne.s32.totalorder %s65, %s68
      %p74 = scmp.eq.s32.totalorder %s8, 0
      %p75 = por %p73, %p74
      %p76 = scmp.ne.s32.totalorder %s65, %s68
      %p77 = scmp.eq.s32.totalorder %s13, 1
      %p78 = por %p76, %p77
      %p79 = scmp.ne.s32.totalorder %s68, %s69
      %p80 = scmp.eq.s32.totalorder %s13, 0
      %p81 = por %p79, %p80
      %p82 = scmp.ne.s32.totalorder %s68, %s69
      %p83 = scmp.eq.s32.totalorder %s14, 1
      %p84 = por %p82, %p83
      %p86 = scmp.ne.s32.totalorder %s69, %s85
      %p87 = scmp.eq.s32.totalorder %s14, 0
      %p88 = por %p86, %p87
      %p89 = scmp.le.s32.totalorder 1, %s8
      %p90 = scmp.lt.s32.totalorder %s8, 3
      %p91 = pnand %p89, %p90
      %p92 = pneg %p91
      // Predicated region
      $region9: #{enc_forward.8} parent=5 // pred_check
        _
      $region10: #{enc_forward.8} parent=5 // pred_check_branch
        %94 = sbr.rel (%p91) target = $region12
      $region11: #{enc_forward.8} parent=5 // pred_region
        %s95 = ssub.s32 %s8, 1
        // Predicated region
        $region13: #{enc_forward.8} parent=11 // pred_check
          %p96 = pneg %p29
        $region14: #{enc_forward.8} parent=11 // pred_check_branch
          %98 = sbr.rel (%p96) target = $region16
        $region15: #{enc_forward.8} parent=11 // pred_region
          _
        $region16: #{enc_forward.8} parent=11 // pred_fallthru
          _
      $region12: #{enc_forward.8} parent=5 // pred_fallthru
        _
      %p99 = scmp.lt.s32.totalorder %s8, 2
      // Predicated region
      $region17: #{enc_forward.8} parent=5 // pred_check
        %p100 = pneg %p99
      $region18: #{enc_forward.8} parent=5 // pred_check_branch
        %102 = sbr.rel (%p100) target = $region20
      $region19: #{enc_forward.8} parent=5 // pred_region
        // Predicated region
        $region21: #{enc_forward.8} parent=19 // pred_check
          %p103 = pneg %p49
        $region22: #{enc_forward.8} parent=19 // pred_check_branch
          %105 = sbr.rel (%p103) target = $region24
        $region23: #{enc_forward.8} parent=19 // pred_region
          %s106 = sand.u32 %s39, 1
          %s107 = sand.u32 %s39, 1
          %s108 = smul.addr %s107, 576
          %s109 = scalar_lea.vmem [#allocation2], %s108
          %s110 = smul.addr %s8, 8
          %s111 = scalar_lea.vmem %s1, %s110
          // Predicated region
          $region25: #{enc_forward.8} parent=23 // pred_check
            _
          $region26: #{enc_forward.8} parent=23 // pred_check_branch
            %113 = sbr.rel (0) target = $region28
          $region27: #{enc_forward.8} parent=23 // pred_region
            // Predicated region
            $region29: #{enc_forward.8} parent=27 // pred_check
              _
            $region30: #{enc_forward.8} parent=27 // pred_check_branch
              %115 = sbr.rel (0) target = $region32
            $region31: #{enc_forward.8} parent=27 // pred_region
              // Predicated region
              $region44: #{enc_forward.8} parent=31 // pred_check
                _
              $region45: #{enc_forward.8} parent=31 // pred_check_branch
                %273 = sbr.rel (0) target = $region47
              $region46: #{enc_forward.8} parent=31 // pred_region
                loop: start=0, step=1, limit=1
                $region48: #{enc_forward.8} parent=46 // loop_pre_header
                  _
                $region49: #{enc_forward.8} parent=46 // loop_header
                  %s275 = sphi 0, %s279
                  %p276 = scmp.ge.s32.totalorder %s275, 1
                  %s280 = sphi %s111, %s111
                  %s281 = sphi %s109, %s109
                $region50: #{enc_forward.8} parent=46 // loop_header_branch
                  %278 = sbr.rel (%p276) target = $region54
                $region51: #{enc_forward.8} parent=46 // loop_body
                  %v282 = vld [vmem:[%s280] sm:$0xff]
                  %283 = vst [vmem:[%s281] sm:$0xff] %v282
                  %v284 = vld [vmem:[%s280 + $0x10] sm:$0xff]
                  %285 = vst [vmem:[%s281 + $0x8] sm:$0xff] %v284
                  %v286 = vld [vmem:[%s280 + $0x20] sm:$0xff]
                  %287 = vst [vmem:[%s281 + $0x10] sm:$0xff] %v286
                  %v288 = vld [vmem:[%s280 + $0x30] sm:$0xff]
                  %289 = vst [vmem:[%s281 + $0x18] sm:$0xff] %v288
                  %v290 = vld [vmem:[%s280 + $0x40] sm:$0xff]
                  %291 = vst [vmem:[%s281 + $0x20] sm:$0xff] %v290
                  %v292 = vld [vmem:[%s280 + $0x50] sm:$0xff]
                  %293 = vst [vmem:[%s281 + $0x28] sm:$0xff] %v292
                  %v294 = vld [vmem:[%s280 + $0x60] sm:$0xff]
                  %295 = vst [vmem:[%s281 + $0x30] sm:$0xff] %v294
                  %v296 = vld [vmem:[%s280 + $0x70] sm:$0xff]
                  %297 = vst [vmem:[%s281 + $0x38] sm:$0xff] %v296
                  %v298 = vld [vmem:[%s280 + $0x80] sm:$0xff]
                  %299 = vst [vmem:[%s281 + $0x40] sm:$0xff] %v298
                  %v300 = vld [vmem:[%s280 + $0x90] sm:$0xff]
                  %301 = vst [vmem:[%s281 + $0x48] sm:$0xff] %v300
                  %v302 = vld [vmem:[%s280 + $0xa0] sm:$0xff]
                  %303 = vst [vmem:[%s281 + $0x50] sm:$0xff] %v302
                  %v304 = vld [vmem:[%s280 + $0xb0] sm:$0xff]
                  %305 = vst [vmem:[%s281 + $0x58] sm:$0xff] %v304
                  %v306 = vld [vmem:[%s280 + $0xc0] sm:$0xff]
                  %307 = vst [vmem:[%s281 + $0x60] sm:$0xff] %v306
                  %v308 = vld [vmem:[%s280 + $0xd0] sm:$0xff]
                  %309 = vst [vmem:[%s281 + $0x68] sm:$0xff] %v308
                  %v310 = vld [vmem:[%s280 + $0xe0] sm:$0xff]
                  %311 = vst [vmem:[%s281 + $0x70] sm:$0xff] %v310
                  %v312 = vld [vmem:[%s280 + $0xf0] sm:$0xff]
                  %313 = vst [vmem:[%s281 + $0x78] sm:$0xff] %v312
                  %v314 = vld [vmem:[%s280 + $0x100] sm:$0xff]
                  %315 = vst [vmem:[%s281 + $0x80] sm:$0xff] %v314
                  %v316 = vld [vmem:[%s280 + $0x110] sm:$0xff]
                  %317 = vst [vmem:[%s281 + $0x88] sm:$0xff] %v316
                  %v318 = vld [vmem:[%s280 + $0x120] sm:$0xff]
                  %319 = vst [vmem:[%s281 + $0x90] sm:$0xff] %v318
                  %v320 = vld [vmem:[%s280 + $0x130] sm:$0xff]
                  %321 = vst [vmem:[%s281 + $0x98] sm:$0xff] %v320
                  %v322 = vld [vmem:[%s280 + $0x140] sm:$0xff]
                  %323 = vst [vmem:[%s281 + $0xa0] sm:$0xff] %v322
                  %v324 = vld [vmem:[%s280 + $0x150] sm:$0xff]
                  %325 = vst [vmem:[%s281 + $0xa8] sm:$0xff] %v324
                  %v326 = vld [vmem:[%s280 + $0x160] sm:$0xff]
                  %327 = vst [vmem:[%s281 + $0xb0] sm:$0xff] %v326
                  %v328 = vld [vmem:[%s280 + $0x170] sm:$0xff]
                  %329 = vst [vmem:[%s281 + $0xb8] sm:$0xff] %v328
                  %v330 = vld [vmem:[%s280 + $0x180] sm:$0xff]
                  %331 = vst [vmem:[%s281 + $0xc0] sm:$0xff] %v330
                  %v332 = vld [vmem:[%s280 + $0x190] sm:$0xff]
                  %333 = vst [vmem:[%s281 + $0xc8] sm:$0xff] %v332
                  %v334 = vld [vmem:[%s280 + $0x1a0] sm:$0xff]
                  %335 = vst [vmem:[%s281 + $0xd0] sm:$0xff] %v334
                  %v336 = vld [vmem:[%s280 + $0x1b0] sm:$0xff]
                  %337 = vst [vmem:[%s281 + $0xd8] sm:$0xff] %v336
                  %v338 = vld [vmem:[%s280 + $0x1c0] sm:$0xff]
                  %339 = vst [vmem:[%s281 + $0xe0] sm:$0xff] %v338
                  %v340 = vld [vmem:[%s280 + $0x1d0] sm:$0xff]
                  %341 = vst [vmem:[%s281 + $0xe8] sm:$0xff] %v340
                  %v342 = vld [vmem:[%s280 + $0x1e0] sm:$0xff]
                  %343 = vst [vmem:[%s281 + $0xf0] sm:$0xff] %v342
                  %v344 = vld [vmem:[%s280 + $0x1f0] sm:$0xff]
                  %345 = vst [vmem:[%s281 + $0xf8] sm:$0xff] %v344
                  %v346 = vld [vmem:[%s280 + $0x200] sm:$0xff]
                  %347 = vst [vmem:[%s281 + $0x100] sm:$0xff] %v346
                  %v348 = vld [vmem:[%s280 + $0x210] sm:$0xff]
                  %349 = vst [vmem:[%s281 + $0x108] sm:$0xff] %v348
                  %v350 = vld [vmem:[%s280 + $0x220] sm:$0xff]
                  %351 = vst [vmem:[%s281 + $0x110] sm:$0xff] %v350
                  %v352 = vld [vmem:[%s280 + $0x230] sm:$0xff]
                  %353 = vst [vmem:[%s281 + $0x118] sm:$0xff] %v352
                  %v354 = vld [vmem:[%s280 + $0x240] sm:$0xff]
                  %355 = vst [vmem:[%s281 + $0x120] sm:$0xff] %v354
                  %v356 = vld [vmem:[%s280 + $0x250] sm:$0xff]
                  %357 = vst [vmem:[%s281 + $0x128] sm:$0xff] %v356
                  %v358 = vld [vmem:[%s280 + $0x260] sm:$0xff]
                  %359 = vst [vmem:[%s281 + $0x130] sm:$0xff] %v358
                  %v360 = vld [vmem:[%s280 + $0x270] sm:$0xff]
                  %361 = vst [vmem:[%s281 + $0x138] sm:$0xff] %v360
                  %v362 = vld [vmem:[%s280 + $0x280] sm:$0xff]
                  %363 = vst [vmem:[%s281 + $0x140] sm:$0xff] %v362
                  %v364 = vld [vmem:[%s280 + $0x290] sm:$0xff]
                  %365 = vst [vmem:[%s281 + $0x148] sm:$0xff] %v364
                  %v366 = vld [vmem:[%s280 + $0x2a0] sm:$0xff]
                  %367 = vst [vmem:[%s281 + $0x150] sm:$0xff] %v366
                  %v368 = vld [vmem:[%s280 + $0x2b0] sm:$0xff]
                  %369 = vst [vmem:[%s281 + $0x158] sm:$0xff] %v368
                  %v370 = vld [vmem:[%s280 + $0x2c0] sm:$0xff]
                  %371 = vst [vmem:[%s281 + $0x160] sm:$0xff] %v370
                  %v372 = vld [vmem:[%s280 + $0x2d0] sm:$0xff]
                  %373 = vst [vmem:[%s281 + $0x168] sm:$0xff] %v372
                  %v374 = vld [vmem:[%s280 + $0x2e0] sm:$0xff]
                  %375 = vst [vmem:[%s281 + $0x170] sm:$0xff] %v374
                  %v376 = vld [vmem:[%s280 + $0x2f0] sm:$0xff]
                  %377 = vst [vmem:[%s281 + $0x178] sm:$0xff] %v376
                  %v378 = vld [vmem:[%s280 + $0x300] sm:$0xff]
                  %379 = vst [vmem:[%s281 + $0x180] sm:$0xff] %v378
                  %v380 = vld [vmem:[%s280 + $0x310] sm:$0xff]
                  %381 = vst [vmem:[%s281 + $0x188] sm:$0xff] %v380
                  %v382 = vld [vmem:[%s280 + $0x320] sm:$0xff]
                  %383 = vst [vmem:[%s281 + $0x190] sm:$0xff] %v382
                  %v384 = vld [vmem:[%s280 + $0x330] sm:$0xff]
                  %385 = vst [vmem:[%s281 + $0x198] sm:$0xff] %v384
                  %v386 = vld [vmem:[%s280 + $0x340] sm:$0xff]
                  %387 = vst [vmem:[%s281 + $0x1a0] sm:$0xff] %v386
                  %v388 = vld [vmem:[%s280 + $0x350] sm:$0xff]
                  %389 = vst [vmem:[%s281 + $0x1a8] sm:$0xff] %v388
                  %v390 = vld [vmem:[%s280 + $0x360] sm:$0xff]
                  %391 = vst [vmem:[%s281 + $0x1b0] sm:$0xff] %v390
                  %v392 = vld [vmem:[%s280 + $0x370] sm:$0xff]
                  %393 = vst [vmem:[%s281 + $0x1b8] sm:$0xff] %v392
                  %v394 = vld [vmem:[%s280 + $0x380] sm:$0xff]
                  %395 = vst [vmem:[%s281 + $0x1c0] sm:$0xff] %v394
                  %v396 = vld [vmem:[%s280 + $0x390] sm:$0xff]
                  %397 = vst [vmem:[%s281 + $0x1c8] sm:$0xff] %v396
                  %v398 = vld [vmem:[%s280 + $0x3a0] sm:$0xff]
                  %399 = vst [vmem:[%s281 + $0x1d0] sm:$0xff] %v398
                  %v400 = vld [vmem:[%s280 + $0x3b0] sm:$0xff]
                  %401 = vst [vmem:[%s281 + $0x1d8] sm:$0xff] %v400
                  %v402 = vld [vmem:[%s280 + $0x3c0] sm:$0xff]
                  %403 = vst [vmem:[%s281 + $0x1e0] sm:$0xff] %v402
                  %v404 = vld [vmem:[%s280 + $0x3d0] sm:$0xff]
                  %405 = vst [vmem:[%s281 + $0x1e8] sm:$0xff] %v404
                  %v406 = vld [vmem:[%s280 + $0x3e0] sm:$0xff]
                  %407 = vst [vmem:[%s281 + $0x1f0] sm:$0xff] %v406
                  %v408 = vld [vmem:[%s280 + $0x3f0] sm:$0xff]
                  %409 = vst [vmem:[%s281 + $0x1f8] sm:$0xff] %v408
                  %v410 = vld [vmem:[%s280 + $0x400] sm:$0xff]
                  %411 = vst [vmem:[%s281 + $0x200] sm:$0xff] %v410
                  %v412 = vld [vmem:[%s280 + $0x410] sm:$0xff]
                  %413 = vst [vmem:[%s281 + $0x208] sm:$0xff] %v412
                  %v414 = vld [vmem:[%s280 + $0x420] sm:$0xff]
                  %415 = vst [vmem:[%s281 + $0x210] sm:$0xff] %v414
                  %v416 = vld [vmem:[%s280 + $0x430] sm:$0xff]
                  %417 = vst [vmem:[%s281 + $0x218] sm:$0xff] %v416
                  %v418 = vld [vmem:[%s280 + $0x440] sm:$0xff]
                  %419 = vst [vmem:[%s281 + $0x220] sm:$0xff] %v418
                  %v420 = vld [vmem:[%s280 + $0x450] sm:$0xff]
                  %421 = vst [vmem:[%s281 + $0x228] sm:$0xff] %v420
                  %v422 = vld [vmem:[%s280 + $0x460] sm:$0xff]
                  %423 = vst [vmem:[%s281 + $0x230] sm:$0xff] %v422
                  %v424 = vld [vmem:[%s280 + $0x470] sm:$0xff]
                  %425 = vst [vmem:[%s281 + $0x238] sm:$0xff] %v424
                $region52: #{enc_forward.8} parent=46 // loop_footer
                  %s279 = sadd.s32 1, %s275
                $region53: #{enc_forward.8} parent=46 // loop_footer_branch
                  %274 = sbr.rel target = $region49
                $region54: #{enc_forward.8} parent=46 // loop_exit
                  _
              $region47: #{enc_forward.8} parent=31 // pred_fallthru
                _
              // Predicated region
              $region55: #{enc_forward.8} parent=31 // pred_check
                _
              $region56: #{enc_forward.8} parent=31 // pred_check_branch
                %427 = sbr.rel target = $region58
              $region57: #{enc_forward.8} parent=31 // pred_region
                _
              $region58: #{enc_forward.8} parent=31 // pred_fallthru
                _
            $region32: #{enc_forward.8} parent=27 // pred_fallthru
              _
            // Predicated region
            $region33: #{enc_forward.8} parent=27 // pred_check
              _
            $region34: #{enc_forward.8} parent=27 // pred_check_branch
              %117 = sbr.rel target = $region36
            $region35: #{enc_forward.8} parent=27 // pred_region
              %s119 = ssub.s32 256, 1
              loop: start=0, step=1, limit=1
              $region37: #{enc_forward.8} parent=35 // loop_pre_header
                _
              $region38: #{enc_forward.8} parent=35 // loop_header
                %s121 = sphi 0, %s125
                %p122 = scmp.ge.s32.totalorder %s121, 1
                %s126 = sphi %s111, %s111
                %s127 = sphi %s109, %s109
              $region39: #{enc_forward.8} parent=35 // loop_header_branch
                %124 = sbr.rel (%p122) target = $region43
              $region40: #{enc_forward.8} parent=35 // loop_body
                %v128 = vld [vmem:[%s126] sm:%s119]
                %129 = vst [vmem:[%s127] sm:%s119] %v128
                %v130 = vld [vmem:[%s126 + $0x10] sm:%s119]
                %131 = vst [vmem:[%s127 + $0x8] sm:%s119] %v130
                %v132 = vld [vmem:[%s126 + $0x20] sm:%s119]
                %133 = vst [vmem:[%s127 + $0x10] sm:%s119] %v132
                %v134 = vld [vmem:[%s126 + $0x30] sm:%s119]
                %135 = vst [vmem:[%s127 + $0x18] sm:%s119] %v134
                %v136 = vld [vmem:[%s126 + $0x40] sm:%s119]
                %137 = vst [vmem:[%s127 + $0x20] sm:%s119] %v136
                %v138 = vld [vmem:[%s126 + $0x50] sm:%s119]
                %139 = vst [vmem:[%s127 + $0x28] sm:%s119] %v138
                %v140 = vld [vmem:[%s126 + $0x60] sm:%s119]
                %141 = vst [vmem:[%s127 + $0x30] sm:%s119] %v140
                %v142 = vld [vmem:[%s126 + $0x70] sm:%s119]
                %143 = vst [vmem:[%s127 + $0x38] sm:%s119] %v142
                %v144 = vld [vmem:[%s126 + $0x80] sm:%s119]
                %145 = vst [vmem:[%s127 + $0x40] sm:%s119] %v144
                %v146 = vld [vmem:[%s126 + $0x90] sm:%s119]
                %147 = vst [vmem:[%s127 + $0x48] sm:%s119] %v146
                %v148 = vld [vmem:[%s126 + $0xa0] sm:%s119]
                %149 = vst [vmem:[%s127 + $0x50] sm:%s119] %v148
                %v150 = vld [vmem:[%s126 + $0xb0] sm:%s119]
                %151 = vst [vmem:[%s127 + $0x58] sm:%s119] %v150
                %v152 = vld [vmem:[%s126 + $0xc0] sm:%s119]
                %153 = vst [vmem:[%s127 + $0x60] sm:%s119] %v152
                %v154 = vld [vmem:[%s126 + $0xd0] sm:%s119]
                %155 = vst [vmem:[%s127 + $0x68] sm:%s119] %v154
                %v156 = vld [vmem:[%s126 + $0xe0] sm:%s119]
                %157 = vst [vmem:[%s127 + $0x70] sm:%s119] %v156
                %v158 = vld [vmem:[%s126 + $0xf0] sm:%s119]
                %159 = vst [vmem:[%s127 + $0x78] sm:%s119] %v158
                %v160 = vld [vmem:[%s126 + $0x100] sm:%s119]
                %161 = vst [vmem:[%s127 + $0x80] sm:%s119] %v160
                %v162 = vld [vmem:[%s126 + $0x110] sm:%s119]
                %163 = vst [vmem:[%s127 + $0x88] sm:%s119] %v162
                %v164 = vld [vmem:[%s126 + $0x120] sm:%s119]
                %165 = vst [vmem:[%s127 + $0x90] sm:%s119] %v164
                %v166 = vld [vmem:[%s126 + $0x130] sm:%s119]
                %167 = vst [vmem:[%s127 + $0x98] sm:%s119] %v166
                %v168 = vld [vmem:[%s126 + $0x140] sm:%s119]
                %169 = vst [vmem:[%s127 + $0xa0] sm:%s119] %v168
                %v170 = vld [vmem:[%s126 + $0x150] sm:%s119]
                %171 = vst [vmem:[%s127 + $0xa8] sm:%s119] %v170
                %v172 = vld [vmem:[%s126 + $0x160] sm:%s119]
                %173 = vst [vmem:[%s127 + $0xb0] sm:%s119] %v172
                %v174 = vld [vmem:[%s126 + $0x170] sm:%s119]
                %175 = vst [vmem:[%s127 + $0xb8] sm:%s119] %v174
                %v176 = vld [vmem:[%s126 + $0x180] sm:%s119]
                %177 = vst [vmem:[%s127 + $0xc0] sm:%s119] %v176
                %v178 = vld [vmem:[%s126 + $0x190] sm:%s119]
                %179 = vst [vmem:[%s127 + $0xc8] sm:%s119] %v178
                %v180 = vld [vmem:[%s126 + $0x1a0] sm:%s119]
                %181 = vst [vmem:[%s127 + $0xd0] sm:%s119] %v180
                %v182 = vld [vmem:[%s126 + $0x1b0] sm:%s119]
                %183 = vst [vmem:[%s127 + $0xd8] sm:%s119] %v182
                %v184 = vld [vmem:[%s126 + $0x1c0] sm:%s119]
                %185 = vst [vmem:[%s127 + $0xe0] sm:%s119] %v184
                %v186 = vld [vmem:[%s126 + $0x1d0] sm:%s119]
                %187 = vst [vmem:[%s127 + $0xe8] sm:%s119] %v186
                %v188 = vld [vmem:[%s126 + $0x1e0] sm:%s119]
                %189 = vst [vmem:[%s127 + $0xf0] sm:%s119] %v188
                %v190 = vld [vmem:[%s126 + $0x1f0] sm:%s119]
                %191 = vst [vmem:[%s127 + $0xf8] sm:%s119] %v190
                %v192 = vld [vmem:[%s126 + $0x200] sm:%s119]
                %193 = vst [vmem:[%s127 + $0x100] sm:%s119] %v192
                %v194 = vld [vmem:[%s126 + $0x210] sm:%s119]
                %195 = vst [vmem:[%s127 + $0x108] sm:%s119] %v194
                %v196 = vld [vmem:[%s126 + $0x220] sm:%s119]
                %197 = vst [vmem:[%s127 + $0x110] sm:%s119] %v196
                %v198 = vld [vmem:[%s126 + $0x230] sm:%s119]
                %199 = vst [vmem:[%s127 + $0x118] sm:%s119] %v198
                %v200 = vld [vmem:[%s126 + $0x240] sm:%s119]
                %201 = vst [vmem:[%s127 + $0x120] sm:%s119] %v200
                %v202 = vld [vmem:[%s126 + $0x250] sm:%s119]
                %203 = vst [vmem:[%s127 + $0x128] sm:%s119] %v202
                %v204 = vld [vmem:[%s126 + $0x260] sm:%s119]
                %205 = vst [vmem:[%s127 + $0x130] sm:%s119] %v204
                %v206 = vld [vmem:[%s126 + $0x270] sm:%s119]
                %207 = vst [vmem:[%s127 + $0x138] sm:%s119] %v206
                %v208 = vld [vmem:[%s126 + $0x280] sm:%s119]
                %209 = vst [vmem:[%s127 + $0x140] sm:%s119] %v208
                %v210 = vld [vmem:[%s126 + $0x290] sm:%s119]
                %211 = vst [vmem:[%s127 + $0x148] sm:%s119] %v210
                %v212 = vld [vmem:[%s126 + $0x2a0] sm:%s119]
                %213 = vst [vmem:[%s127 + $0x150] sm:%s119] %v212
                %v214 = vld [vmem:[%s126 + $0x2b0] sm:%s119]
                %215 = vst [vmem:[%s127 + $0x158] sm:%s119] %v214
                %v216 = vld [vmem:[%s126 + $0x2c0] sm:%s119]
                %217 = vst [vmem:[%s127 + $0x160] sm:%s119] %v216
                %v218 = vld [vmem:[%s126 + $0x2d0] sm:%s119]
                %219 = vst [vmem:[%s127 + $0x168] sm:%s119] %v218
                %v220 = vld [vmem:[%s126 + $0x2e0] sm:%s119]
                %221 = vst [vmem:[%s127 + $0x170] sm:%s119] %v220
                %v222 = vld [vmem:[%s126 + $0x2f0] sm:%s119]
                %223 = vst [vmem:[%s127 + $0x178] sm:%s119] %v222
                %v224 = vld [vmem:[%s126 + $0x300] sm:%s119]
                %225 = vst [vmem:[%s127 + $0x180] sm:%s119] %v224
                %v226 = vld [vmem:[%s126 + $0x310] sm:%s119]
                %227 = vst [vmem:[%s127 + $0x188] sm:%s119] %v226
                %v228 = vld [vmem:[%s126 + $0x320] sm:%s119]
                %229 = vst [vmem:[%s127 + $0x190] sm:%s119] %v228
                %v230 = vld [vmem:[%s126 + $0x330] sm:%s119]
                %231 = vst [vmem:[%s127 + $0x198] sm:%s119] %v230
                %v232 = vld [vmem:[%s126 + $0x340] sm:%s119]
                %233 = vst [vmem:[%s127 + $0x1a0] sm:%s119] %v232
                %v234 = vld [vmem:[%s126 + $0x350] sm:%s119]
                %235 = vst [vmem:[%s127 + $0x1a8] sm:%s119] %v234
                %v236 = vld [vmem:[%s126 + $0x360] sm:%s119]
                %237 = vst [vmem:[%s127 + $0x1b0] sm:%s119] %v236
                %v238 = vld [vmem:[%s126 + $0x370] sm:%s119]
                %239 = vst [vmem:[%s127 + $0x1b8] sm:%s119] %v238
                %v240 = vld [vmem:[%s126 + $0x380] sm:%s119]
                %241 = vst [vmem:[%s127 + $0x1c0] sm:%s119] %v240
                %v242 = vld [vmem:[%s126 + $0x390] sm:%s119]
                %243 = vst [vmem:[%s127 + $0x1c8] sm:%s119] %v242
                %v244 = vld [vmem:[%s126 + $0x3a0] sm:%s119]
                %245 = vst [vmem:[%s127 + $0x1d0] sm:%s119] %v244
                %v246 = vld [vmem:[%s126 + $0x3b0] sm:%s119]
                %247 = vst [vmem:[%s127 + $0x1d8] sm:%s119] %v246
                %v248 = vld [vmem:[%s126 + $0x3c0] sm:%s119]
                %249 = vst [vmem:[%s127 + $0x1e0] sm:%s119] %v248
                %v250 = vld [vmem:[%s126 + $0x3d0] sm:%s119]
                %251 = vst [vmem:[%s127 + $0x1e8] sm:%s119] %v250
                %v252 = vld [vmem:[%s126 + $0x3e0] sm:%s119]
                %253 = vst [vmem:[%s127 + $0x1f0] sm:%s119] %v252
                %v254 = vld [vmem:[%s126 + $0x3f0] sm:%s119]
                %255 = vst [vmem:[%s127 + $0x1f8] sm:%s119] %v254
                %v256 = vld [vmem:[%s126 + $0x400] sm:%s119]
                %257 = vst [vmem:[%s127 + $0x200] sm:%s119] %v256
                %v258 = vld [vmem:[%s126 + $0x410] sm:%s119]
                %259 = vst [vmem:[%s127 + $0x208] sm:%s119] %v258
                %v260 = vld [vmem:[%s126 + $0x420] sm:%s119]
                %261 = vst [vmem:[%s127 + $0x210] sm:%s119] %v260
                %v262 = vld [vmem:[%s126 + $0x430] sm:%s119]
                %263 = vst [vmem:[%s127 + $0x218] sm:%s119] %v262
                %v264 = vld [vmem:[%s126 + $0x440] sm:%s119]
                %265 = vst [vmem:[%s127 + $0x220] sm:%s119] %v264
                %v266 = vld [vmem:[%s126 + $0x450] sm:%s119]
                %267 = vst [vmem:[%s127 + $0x228] sm:%s119] %v266
                %v268 = vld [vmem:[%s126 + $0x460] sm:%s119]
                %269 = vst [vmem:[%s127 + $0x230] sm:%s119] %v268
                %v270 = vld [vmem:[%s126 + $0x470] sm:%s119]
                %271 = vst [vmem:[%s127 + $0x238] sm:%s119] %v270
              $region41: #{enc_forward.8} parent=35 // loop_footer
                %s125 = sadd.s32 1, %s121
              $region42: #{enc_forward.8} parent=35 // loop_footer_branch
                %120 = sbr.rel target = $region38
              $region43: #{enc_forward.8} parent=35 // loop_exit
                _
            $region36: #{enc_forward.8} parent=27 // pred_fallthru
              _
          $region28: #{enc_forward.8} parent=23 // pred_fallthru
            _
          %428 = vnop
        $region24: #{enc_forward.8} parent=19 // pred_fallthru
          _
      $region20: #{enc_forward.8} parent=5 // pred_fallthru
        _
      %p429 = scmp.le.s32.totalorder 1, %s8
      %p430 = scmp.lt.s32.totalorder %s8, 3
      %p431 = pnand %p429, %p430
      %p432 = pneg %p431
      // Predicated region
      $region59: #{enc_forward.8} parent=5 // pred_check
        _
      $region60: #{enc_forward.8} parent=5 // pred_check_branch
        %434 = sbr.rel (%p431) target = $region62
      $region61: #{enc_forward.8} parent=5 // pred_region
        %s435 = ssub.s32 %s8, 1
        %s436 = sand.u32 %s42, 1
        %s437 = sand.u32 %s42, 1
        %s438 = smul.addr %s437, 576
        %s439 = scalar_lea.vmem [#allocation2], %s438
        // Predicated region
        $region63: #{enc_forward.8} parent=61 // pred_check
          %p440 = pneg %p55
        $region64: #{enc_forward.8} parent=61 // pred_check_branch
          %442 = sbr.rel (%p440) target = $region66
        $region65: #{enc_forward.8} parent=61 // pred_region
          _
        $region66: #{enc_forward.8} parent=61 // pred_fallthru
          _
        %p443 = pneg %p29
        %p444 = pneg %p26
        %s445 = sand.u32 %s42, 1
        %s446 = sand.u32 %s42, 1
        %s447 = smul.addr %s446, 576
        %s448 = scalar_lea.vmem [#allocation2], %s447
        %p449 = pneg %p55
        %p450 = pneg %p52
        %p451 = pneg %p81
        %p452 = pneg %p78
        %s453 = sand.u32 %s68, 1
        %s454 = sand.u32 %s68, 1
        %s455 = smul.addr %s454, 128
        %s456 = scalar_lea.vmem [#allocation3], %s455
        %v457 = vld [vmem:[%s0] sm:$0xff]
        %v458 = vld [vmem:[%s0 + $0x8] sm:$0xff]
        %v459 = vld [vmem:[%s0 + $0x10] sm:$0xff]
        %v460 = vld [vmem:[%s0 + $0x18] sm:$0xff]
        %v461 = vld [vmem:[%s0 + $0x20] sm:$0xff]
        %v462 = vld [vmem:[%s0 + $0x28] sm:$0xff]
        %v463 = vld [vmem:[%s0 + $0x30] sm:$0xff]
        %v464 = vld [vmem:[%s0 + $0x38] sm:$0xff]
        %v465 = vld [vmem:[%s0 + $0x40] sm:$0xff]
        %v466 = vld [vmem:[%s0 + $0x48] sm:$0xff]
        %v467 = vld [vmem:[%s0 + $0x50] sm:$0xff]
        %v468 = vld [vmem:[%s0 + $0x58] sm:$0xff]
        %v469 = vld [vmem:[%s0 + $0x60] sm:$0xff]
        %v470 = vld [vmem:[%s0 + $0x68] sm:$0xff]
        %v471 = vld [vmem:[%s0 + $0x70] sm:$0xff]
        %v472 = vld [vmem:[%s0 + $0x78] sm:$0xff]
        %v473 = vld [vmem:[%s0 + $0x80] sm:$0xff]
        %v474 = vld [vmem:[%s0 + $0x88] sm:$0xff]
        %v475 = vld [vmem:[%s0 + $0x90] sm:$0xff]
        %v476 = vld [vmem:[%s0 + $0x98] sm:$0xff]
        %v477 = vld [vmem:[%s0 + $0xa0] sm:$0xff]
        %v478 = vld [vmem:[%s0 + $0xa8] sm:$0xff]
        %v479 = vld [vmem:[%s0 + $0xb0] sm:$0xff]
        %v480 = vld [vmem:[%s0 + $0xb8] sm:$0xff]
        %v481 = vld [vmem:[%s0 + $0xc0] sm:$0xff]
        %v482 = vld [vmem:[%s0 + $0xc8] sm:$0xff]
        %v483 = vld [vmem:[%s0 + $0xd0] sm:$0xff]
        %v484 = vld [vmem:[%s0 + $0xd8] sm:$0xff]
        %v485 = vld [vmem:[%s0 + $0xe0] sm:$0xff]
        %v486 = vld [vmem:[%s0 + $0xe8] sm:$0xff]
        %v487 = vld [vmem:[%s0 + $0xf0] sm:$0xff]
        %v488 = vld [vmem:[%s0 + $0xf8] sm:$0xff]
        %v489 = vld [vmem:[%s0 + $0x100] sm:$0xff]
        %v490 = vld [vmem:[%s0 + $0x108] sm:$0xff]
        %v491 = vld [vmem:[%s0 + $0x110] sm:$0xff]
        %v492 = vld [vmem:[%s0 + $0x118] sm:$0xff]
        %v493 = vld [vmem:[%s0 + $0x120] sm:$0xff]
        %v494 = vld [vmem:[%s0 + $0x128] sm:$0xff]
        %v495 = vld [vmem:[%s0 + $0x130] sm:$0xff]
        %v496 = vld [vmem:[%s0 + $0x138] sm:$0xff]
        %v497 = vld [vmem:[%s0 + $0x140] sm:$0xff]
        %v498 = vld [vmem:[%s0 + $0x148] sm:$0xff]
        %v499 = vld [vmem:[%s0 + $0x150] sm:$0xff]
        %v500 = vld [vmem:[%s0 + $0x158] sm:$0xff]
        %v501 = vld [vmem:[%s0 + $0x160] sm:$0xff]
        %v502 = vld [vmem:[%s0 + $0x168] sm:$0xff]
        %v503 = vld [vmem:[%s0 + $0x170] sm:$0xff]
        %v504 = vld [vmem:[%s0 + $0x178] sm:$0xff]
        %v505 = vld [vmem:[%s0 + $0x180] sm:$0xff]
        %v506 = vld [vmem:[%s0 + $0x188] sm:$0xff]
        %v507 = vld [vmem:[%s0 + $0x190] sm:$0xff]
        %v508 = vld [vmem:[%s0 + $0x198] sm:$0xff]
        %v509 = vld [vmem:[%s0 + $0x1a0] sm:$0xff]
        %v510 = vld [vmem:[%s0 + $0x1a8] sm:$0xff]
        %v511 = vld [vmem:[%s0 + $0x1b0] sm:$0xff]
        %v512 = vld [vmem:[%s0 + $0x1b8] sm:$0xff]
        %v513 = vld [vmem:[%s0 + $0x1c0] sm:$0xff]
        %v514 = vld [vmem:[%s0 + $0x1c8] sm:$0xff]
        %v515 = vld [vmem:[%s0 + $0x1d0] sm:$0xff]
        %v516 = vld [vmem:[%s0 + $0x1d8] sm:$0xff]
        %v517 = vld [vmem:[%s0 + $0x1e0] sm:$0xff]
        %v518 = vld [vmem:[%s0 + $0x1e8] sm:$0xff]
        %v519 = vld [vmem:[%s0 + $0x1f0] sm:$0xff]
        %v520 = vld [vmem:[%s0 + $0x1f8] sm:$0xff]
        %v521 = vld [vmem:[%s0 + $0x200] sm:$0xff]
        %v522 = vld [vmem:[%s0 + $0x208] sm:$0xff]
        %v523 = vld [vmem:[%s0 + $0x210] sm:$0xff]
        %v524 = vld [vmem:[%s0 + $0x218] sm:$0xff]
        %v525 = vld [vmem:[%s0 + $0x220] sm:$0xff]
        %v526 = vld [vmem:[%s0 + $0x228] sm:$0xff]
        %v527 = vld [vmem:[%s0 + $0x230] sm:$0xff]
        %v528 = vld [vmem:[%s0 + $0x238] sm:$0xff]
        %v529 = vld [vmem:[%s0 + $0x240] sm:$0xff]
        %v530 = vld [vmem:[%s0 + $0x248] sm:$0xff]
        %v531 = vld [vmem:[%s0 + $0x250] sm:$0xff]
        %v532 = vld [vmem:[%s0 + $0x258] sm:$0xff]
        %v533 = vld [vmem:[%s0 + $0x260] sm:$0xff]
        %v534 = vld [vmem:[%s0 + $0x268] sm:$0xff]
        %v535 = vld [vmem:[%s0 + $0x270] sm:$0xff]
        %v536 = vld [vmem:[%s0 + $0x278] sm:$0xff]
        %v537 = vld [vmem:[%s439] sm:$0xff]
        %v538 = vld [vmem:[%s439 + $0x8] sm:$0xff]
        %v539 = vld [vmem:[%s439 + $0x10] sm:$0xff]
        %v540 = vld [vmem:[%s439 + $0x18] sm:$0xff]
        %v541 = vld [vmem:[%s439 + $0x20] sm:$0xff]
        %v542 = vld [vmem:[%s439 + $0x28] sm:$0xff]
        %v543 = vld [vmem:[%s439 + $0x30] sm:$0xff]
        %v544 = vld [vmem:[%s439 + $0x38] sm:$0xff]
        %v545 = vld [vmem:[%s439 + $0x40] sm:$0xff]
        %v546 = vld [vmem:[%s439 + $0x48] sm:$0xff]
        %v547 = vld [vmem:[%s439 + $0x50] sm:$0xff]
        %v548 = vld [vmem:[%s439 + $0x58] sm:$0xff]
        %v549 = vld [vmem:[%s439 + $0x60] sm:$0xff]
        %v550 = vld [vmem:[%s439 + $0x68] sm:$0xff]
        %v551 = vld [vmem:[%s439 + $0x70] sm:$0xff]
        %v552 = vld [vmem:[%s439 + $0x78] sm:$0xff]
        %v553 = vld [vmem:[%s439 + $0x80] sm:$0xff]
        %v554 = vld [vmem:[%s439 + $0x88] sm:$0xff]
        %v555 = vld [vmem:[%s439 + $0x90] sm:$0xff]
        %v556 = vld [vmem:[%s439 + $0x98] sm:$0xff]
        %v557 = vld [vmem:[%s439 + $0xa0] sm:$0xff]
        %v558 = vld [vmem:[%s439 + $0xa8] sm:$0xff]
        %v559 = vld [vmem:[%s439 + $0xb0] sm:$0xff]
        %v560 = vld [vmem:[%s439 + $0xb8] sm:$0xff]
        %v561 = vld [vmem:[%s439 + $0xc0] sm:$0xff]
        %v562 = vld [vmem:[%s439 + $0xc8] sm:$0xff]
        %v563 = vld [vmem:[%s439 + $0xd0] sm:$0xff]
        %v564 = vld [vmem:[%s439 + $0xd8] sm:$0xff]
        %v565 = vld [vmem:[%s439 + $0xe0] sm:$0xff]
        %v566 = vld [vmem:[%s439 + $0xe8] sm:$0xff]
        %v567 = vld [vmem:[%s439 + $0xf0] sm:$0xff]
        %v568 = vld [vmem:[%s439 + $0xf8] sm:$0xff]
        %v569 = vld [vmem:[%s439 + $0x100] sm:$0xff]
        %v570 = vld [vmem:[%s439 + $0x108] sm:$0xff]
        %v571 = vld [vmem:[%s439 + $0x110] sm:$0xff]
        %v572 = vld [vmem:[%s439 + $0x118] sm:$0xff]
        %v573 = vld [vmem:[%s439 + $0x120] sm:$0xff]
        %v574 = vld [vmem:[%s439 + $0x128] sm:$0xff]
        %v575 = vld [vmem:[%s439 + $0x130] sm:$0xff]
        %v576 = vld [vmem:[%s439 + $0x138] sm:$0xff]
        %v577 = vld [vmem:[%s439 + $0x140] sm:$0xff]
        %v578 = vld [vmem:[%s439 + $0x148] sm:$0xff]
        %v579 = vld [vmem:[%s439 + $0x150] sm:$0xff]
        %v580 = vld [vmem:[%s439 + $0x158] sm:$0xff]
        %v581 = vld [vmem:[%s439 + $0x160] sm:$0xff]
        %v582 = vld [vmem:[%s439 + $0x168] sm:$0xff]
        %v583 = vld [vmem:[%s439 + $0x170] sm:$0xff]
        %v584 = vld [vmem:[%s439 + $0x178] sm:$0xff]
        %v585 = vld [vmem:[%s439 + $0x180] sm:$0xff]
        %v586 = vld [vmem:[%s439 + $0x188] sm:$0xff]
        %v587 = vld [vmem:[%s439 + $0x190] sm:$0xff]
        %v588 = vld [vmem:[%s439 + $0x198] sm:$0xff]
        %v589 = vld [vmem:[%s439 + $0x1a0] sm:$0xff]
        %v590 = vld [vmem:[%s439 + $0x1a8] sm:$0xff]
        %v591 = vld [vmem:[%s439 + $0x1b0] sm:$0xff]
        %v592 = vld [vmem:[%s439 + $0x1b8] sm:$0xff]
        %v593 = vld [vmem:[%s439 + $0x1c0] sm:$0xff]
        %v594 = vld [vmem:[%s439 + $0x1c8] sm:$0xff]
        %v595 = vld [vmem:[%s439 + $0x1d0] sm:$0xff]
        %v596 = vld [vmem:[%s439 + $0x1d8] sm:$0xff]
        %v597 = vld [vmem:[%s439 + $0x1e0] sm:$0xff]
        %v598 = vld [vmem:[%s439 + $0x1e8] sm:$0xff]
        %v599 = vld [vmem:[%s439 + $0x1f0] sm:$0xff]
        %v600 = vld [vmem:[%s439 + $0x1f8] sm:$0xff]
        %v601 = vld [vmem:[%s439 + $0x200] sm:$0xff]
        %v602 = vld [vmem:[%s439 + $0x208] sm:$0xff]
        %v603 = vld [vmem:[%s439 + $0x210] sm:$0xff]
        %v604 = vld [vmem:[%s439 + $0x218] sm:$0xff]
        %v605 = vld [vmem:[%s439 + $0x220] sm:$0xff]
        %v606 = vld [vmem:[%s439 + $0x228] sm:$0xff]
        %v607 = vld [vmem:[%s439 + $0x230] sm:$0xff]
        %v608 = vld [vmem:[%s439 + $0x238] sm:$0xff]
        %vm609 = vcmask 523264
        %v611 = vsel %vm609, %v461, 0
        %v614 = vsel %vm609, %v466, 0
        %v617 = vsel %vm609, %v471, 0
        %v620 = vsel %vm609, %v476, 0
        %v623 = vsel %vm609, %v481, 0
        %v626 = vsel %vm609, %v486, 0
        %v629 = vsel %vm609, %v491, 0
        %v632 = vsel %vm609, %v496, 0
        %v635 = vsel %vm609, %v501, 0
        %v638 = vsel %vm609, %v506, 0
        %v641 = vsel %vm609, %v511, 0
        %v644 = vsel %vm609, %v516, 0
        %v647 = vsel %vm609, %v521, 0
        %v650 = vsel %vm609, %v526, 0
        %v653 = vsel %vm609, %v531, 0
        %v656 = vsel %vm609, %v536, 0
        %658 = vmatprep.subr.mxu0 0.0
        %659 = vmatpush1.msra.mxu0 %v552
        %660 = vmatprep.subr.mxu0 0.0
        %661 = vmatpush1.msra.mxu0 %v551
        %662 = vmatprep.subr.mxu0 0.0
        %663 = vmatpush1.msra.mxu0 %v550
        %664 = vmatprep.subr.mxu0 0.0
        %665 = vmatpush1.msra.mxu0 %v549
        %666 = vmatprep.subr.mxu0 0.0
        %667 = vmatpush1.msra.mxu0 %v548
        %668 = vmatprep.subr.mxu0 0.0
        %669 = vmatpush1.msra.mxu0 %v547
        %670 = vmatprep.subr.mxu0 0.0
        %671 = vmatpush1.msra.mxu0 %v546
        %672 = vmatprep.subr.mxu0 0.0
        %673 = vmatpush1.msra.mxu0 %v545
        %674 = vmatprep.subr.mxu0 0.0
        %675 = vmatpush1.msra.mxu0 %v544
        %676 = vmatprep.subr.mxu0 0.0
        %677 = vmatpush1.msra.mxu0 %v543
        %678 = vmatprep.subr.mxu0 0.0
        %679 = vmatpush1.msra.mxu0 %v542
        %680 = vmatprep.subr.mxu0 0.0
        %681 = vmatpush1.msra.mxu0 %v541
        %682 = vmatprep.subr.mxu0 0.0
        %683 = vmatpush1.msra.mxu0 %v540
        %684 = vmatprep.subr.mxu0 0.0
        %685 = vmatpush1.msra.mxu0 %v539
        %686 = vmatprep.subr.mxu0 0.0
        %687 = vmatpush1.msra.mxu0 %v538
        %688 = vmatprep.subr.mxu0 0.0
        %689 = vmatpush1.msra.mxu0 %v537
        %690 = vmatprep.subr.mxu0 0.0
        %691 = vmatpush2.msra.mxu0 %v568
        %692 = vmatprep.subr.mxu0 0.0
        %693 = vmatpush2.msra.mxu0 %v567
        %694 = vmatprep.subr.mxu0 0.0
        %695 = vmatpush2.msra.mxu0 %v566
        %696 = vmatprep.subr.mxu0 0.0
        %697 = vmatpush2.msra.mxu0 %v565
        %698 = vmatprep.subr.mxu0 0.0
        %699 = vmatpush2.msra.mxu0 %v564
        %700 = vmatprep.subr.mxu0 0.0
        %701 = vmatpush2.msra.mxu0 %v563
        %702 = vmatprep.subr.mxu0 0.0
        %703 = vmatpush2.msra.mxu0 %v562
        %704 = vmatprep.subr.mxu0 0.0
        %705 = vmatpush2.msra.mxu0 %v561
        %706 = vmatprep.subr.mxu0 0.0
        %707 = vmatpush2.msra.mxu0 %v560
        %708 = vmatprep.subr.mxu0 0.0
        %709 = vmatpush2.msra.mxu0 %v559
        %710 = vmatprep.subr.mxu0 0.0
        %711 = vmatpush2.msra.mxu0 %v558
        %712 = vmatprep.subr.mxu0 0.0
        %713 = vmatpush2.msra.mxu0 %v557
        %714 = vmatprep.subr.mxu0 0.0
        %715 = vmatpush2.msra.mxu0 %v556
        %716 = vmatprep.subr.mxu0 0.0
        %717 = vmatpush2.msra.mxu0 %v555
        %718 = vmatprep.subr.mxu0 0.0
        %719 = vmatpush2.msra.mxu0 %v554
        %720 = vmatprep.subr.mxu0 0.0
        %721 = vmatpush2.msra.mxu0 %v553
        %722 = vmatprep.mubr.f32.mxu0 %v458
        %723 = vmatmul.mubr.f32.gmra.mxu0 %v457
        %v724 = vpop.f32.mrf.mxu0
        %v725 = vadd.f32 0.0, %v724
        %v726 = vpop.f32.mrf.mxu0
        %727 = vmatprep.mubr.f32.mxu0 %v463
        %728 = vmatmul.mubr.f32.gmra.mxu0 %v462
        %v729 = vpop.f32.mrf.mxu0
        %v730 = vadd.f32 0.0, %v729
        %v731 = vpop.f32.mrf.mxu0
        %732 = vmatprep.mubr.f32.mxu0 %v468
        %733 = vmatmul.mubr.f32.gmra.mxu0 %v467
        %v734 = vpop.f32.mrf.mxu0
        %v735 = vadd.f32 0.0, %v734
        %v736 = vpop.f32.mrf.mxu0
        %737 = vmatprep.mubr.f32.mxu0 %v473
        %738 = vmatmul.mubr.f32.gmra.mxu0 %v472
        %v739 = vpop.f32.mrf.mxu0
        %v740 = vadd.f32 0.0, %v739
        %v741 = vpop.f32.mrf.mxu0
        %742 = vmatprep.mubr.f32.mxu0 %v478
        %743 = vmatmul.mubr.f32.gmra.mxu0 %v477
        %v744 = vpop.f32.mrf.mxu0
        %v745 = vadd.f32 0.0, %v744
        %v746 = vpop.f32.mrf.mxu0
        %747 = vmatprep.mubr.f32.mxu0 %v483
        %748 = vmatmul.mubr.f32.gmra.mxu0 %v482
        %v749 = vpop.f32.mrf.mxu0
        %v750 = vadd.f32 0.0, %v749
        %v751 = vpop.f32.mrf.mxu0
        %752 = vmatprep.mubr.f32.mxu0 %v488
        %753 = vmatmul.mubr.f32.gmra.mxu0 %v487
        %v754 = vpop.f32.mrf.mxu0
        %v755 = vadd.f32 0.0, %v754
        %v756 = vpop.f32.mrf.mxu0
        %757 = vmatprep.mubr.f32.mxu0 %v493
        %758 = vmatmul.mubr.f32.gmra.mxu0 %v492
        %v759 = vpop.f32.mrf.mxu0
        %v760 = vadd.f32 0.0, %v759
        %v761 = vpop.f32.mrf.mxu0
        %762 = vmatprep.mubr.f32.mxu0 %v498
        %763 = vmatmul.mubr.f32.gmra.mxu0 %v497
        %v764 = vpop.f32.mrf.mxu0
        %v765 = vadd.f32 0.0, %v764
        %v766 = vpop.f32.mrf.mxu0
        %767 = vmatprep.mubr.f32.mxu0 %v503
        %768 = vmatmul.mubr.f32.gmra.mxu0 %v502
        %v769 = vpop.f32.mrf.mxu0
        %v770 = vadd.f32 0.0, %v769
        %v771 = vpop.f32.mrf.mxu0
        %772 = vmatprep.mubr.f32.mxu0 %v508
        %773 = vmatmul.mubr.f32.gmra.mxu0 %v507
        %v774 = vpop.f32.mrf.mxu0
        %v775 = vadd.f32 0.0, %v774
        %v776 = vpop.f32.mrf.mxu0
        %777 = vmatprep.mubr.f32.mxu0 %v513
        %778 = vmatmul.mubr.f32.gmra.mxu0 %v512
        %v779 = vpop.f32.mrf.mxu0
        %v780 = vadd.f32 0.0, %v779
        %v781 = vpop.f32.mrf.mxu0
        %782 = vmatprep.mubr.f32.mxu0 %v518
        %783 = vmatmul.mubr.f32.gmra.mxu0 %v517
        %v784 = vpop.f32.mrf.mxu0
        %v785 = vadd.f32 0.0, %v784
        %v786 = vpop.f32.mrf.mxu0
        %787 = vmatprep.mubr.f32.mxu0 %v523
        %788 = vmatmul.mubr.f32.gmra.mxu0 %v522
        %v789 = vpop.f32.mrf.mxu0
        %v790 = vadd.f32 0.0, %v789
        %v791 = vpop.f32.mrf.mxu0
        %792 = vmatprep.mubr.f32.mxu0 %v528
        %793 = vmatmul.mubr.f32.gmra.mxu0 %v527
        %v794 = vpop.f32.mrf.mxu0
        %v795 = vadd.f32 0.0, %v794
        %v796 = vpop.f32.mrf.mxu0
        %797 = vmatprep.mubr.f32.mxu0 %v533
        %798 = vmatmul.mubr.f32.gmra.mxu0 %v532
        %v799 = vpop.f32.mrf.mxu0
        %v800 = vadd.f32 0.0, %v799
        %v801 = vpop.f32.mrf.mxu0
        %802 = vdwg.mxu0
        %803 = vmatprep.subr.mxu0 0.0
        %804 = vmatpush1.msra.mxu0 %v584
        %805 = vmatprep.subr.mxu0 0.0
        %806 = vmatpush1.msra.mxu0 %v583
        %807 = vmatprep.subr.mxu0 0.0
        %808 = vmatpush1.msra.mxu0 %v582
        %809 = vmatprep.subr.mxu0 0.0
        %810 = vmatpush1.msra.mxu0 %v581
        %811 = vmatprep.subr.mxu0 0.0
        %812 = vmatpush1.msra.mxu0 %v580
        %813 = vmatprep.subr.mxu0 0.0
        %814 = vmatpush1.msra.mxu0 %v579
        %815 = vmatprep.subr.mxu0 0.0
        %816 = vmatpush1.msra.mxu0 %v578
        %817 = vmatprep.subr.mxu0 0.0
        %818 = vmatpush1.msra.mxu0 %v577
        %819 = vmatprep.subr.mxu0 0.0
        %820 = vmatpush1.msra.mxu0 %v576
        %821 = vmatprep.subr.mxu0 0.0
        %822 = vmatpush1.msra.mxu0 %v575
        %823 = vmatprep.subr.mxu0 0.0
        %824 = vmatpush1.msra.mxu0 %v574
        %825 = vmatprep.subr.mxu0 0.0
        %826 = vmatpush1.msra.mxu0 %v573
        %827 = vmatprep.subr.mxu0 0.0
        %828 = vmatpush1.msra.mxu0 %v572
        %829 = vmatprep.subr.mxu0 0.0
        %830 = vmatpush1.msra.mxu0 %v571
        %831 = vmatprep.subr.mxu0 0.0
        %832 = vmatpush1.msra.mxu0 %v570
        %833 = vmatprep.subr.mxu0 0.0
        %834 = vmatpush1.msra.mxu0 %v569
        %835 = vmatprep.subr.mxu0 0.0
        %836 = vmatpush2.msra.mxu0 %v600
        %837 = vmatprep.subr.mxu0 0.0
        %838 = vmatpush2.msra.mxu0 %v599
        %839 = vmatprep.subr.mxu0 0.0
        %840 = vmatpush2.msra.mxu0 %v598
        %841 = vmatprep.subr.mxu0 0.0
        %842 = vmatpush2.msra.mxu0 %v597
        %843 = vmatprep.subr.mxu0 0.0
        %844 = vmatpush2.msra.mxu0 %v596
        %845 = vmatprep.subr.mxu0 0.0
        %846 = vmatpush2.msra.mxu0 %v595
        %847 = vmatprep.subr.mxu0 0.0
        %848 = vmatpush2.msra.mxu0 %v594
        %849 = vmatprep.subr.mxu0 0.0
        %850 = vmatpush2.msra.mxu0 %v593
        %851 = vmatprep.subr.mxu0 0.0
        %852 = vmatpush2.msra.mxu0 %v592
        %853 = vmatprep.subr.mxu0 0.0
        %854 = vmatpush2.msra.mxu0 %v591
        %855 = vmatprep.subr.mxu0 0.0
        %856 = vmatpush2.msra.mxu0 %v590
        %857 = vmatprep.subr.mxu0 0.0
        %858 = vmatpush2.msra.mxu0 %v589
        %859 = vmatprep.subr.mxu0 0.0
        %860 = vmatpush2.msra.mxu0 %v588
        %861 = vmatprep.subr.mxu0 0.0
        %862 = vmatpush2.msra.mxu0 %v587
        %863 = vmatprep.subr.mxu0 0.0
        %864 = vmatpush2.msra.mxu0 %v586
        %865 = vmatprep.subr.mxu0 0.0
        %866 = vmatpush2.msra.mxu0 %v585
        %867 = vmatprep.mubr.f32.mxu0 %v460
        %868 = vmatmul.mubr.f32.gmra.mxu0 %v459
        %v869 = vpop.f32.mrf.mxu0
        %v870 = vadd.f32 %v725, %v869
        %v871 = vpop.f32.mrf.mxu0
        %872 = vmatprep.mubr.f32.mxu0 %v465
        %873 = vmatmul.mubr.f32.gmra.mxu0 %v464
        %v874 = vpop.f32.mrf.mxu0
        %v875 = vadd.f32 %v730, %v874
        %v876 = vpop.f32.mrf.mxu0
        %877 = vmatprep.mubr.f32.mxu0 %v470
        %878 = vmatmul.mubr.f32.gmra.mxu0 %v469
        %v879 = vpop.f32.mrf.mxu0
        %v880 = vadd.f32 %v735, %v879
        %v881 = vpop.f32.mrf.mxu0
        %882 = vmatprep.mubr.f32.mxu0 %v475
        %883 = vmatmul.mubr.f32.gmra.mxu0 %v474
        %v884 = vpop.f32.mrf.mxu0
        %v885 = vadd.f32 %v740, %v884
        %v886 = vpop.f32.mrf.mxu0
        %887 = vmatprep.mubr.f32.mxu0 %v480
        %888 = vmatmul.mubr.f32.gmra.mxu0 %v479
        %v889 = vpop.f32.mrf.mxu0
        %v890 = vadd.f32 %v745, %v889
        %v891 = vpop.f32.mrf.mxu0
        %892 = vmatprep.mubr.f32.mxu0 %v485
        %893 = vmatmul.mubr.f32.gmra.mxu0 %v484
        %v894 = vpop.f32.mrf.mxu0
        %v895 = vadd.f32 %v750, %v894
        %v896 = vpop.f32.mrf.mxu0
        %897 = vmatprep.mubr.f32.mxu0 %v490
        %898 = vmatmul.mubr.f32.gmra.mxu0 %v489
        %v899 = vpop.f32.mrf.mxu0
        %v900 = vadd.f32 %v755, %v899
        %v901 = vpop.f32.mrf.mxu0
        %902 = vmatprep.mubr.f32.mxu0 %v495
        %903 = vmatmul.mubr.f32.gmra.mxu0 %v494
        %v904 = vpop.f32.mrf.mxu0
        %v905 = vadd.f32 %v760, %v904
        %v906 = vpop.f32.mrf.mxu0
        %907 = vmatprep.mubr.f32.mxu0 %v500
        %908 = vmatmul.mubr.f32.gmra.mxu0 %v499
        %v909 = vpop.f32.mrf.mxu0
        %v910 = vadd.f32 %v765, %v909
        %v911 = vpop.f32.mrf.mxu0
        %912 = vmatprep.mubr.f32.mxu0 %v505
        %913 = vmatmul.mubr.f32.gmra.mxu0 %v504
        %v914 = vpop.f32.mrf.mxu0
        %v915 = vadd.f32 %v770, %v914
        %v916 = vpop.f32.mrf.mxu0
        %917 = vmatprep.mubr.f32.mxu0 %v510
        %918 = vmatmul.mubr.f32.gmra.mxu0 %v509
        %v919 = vpop.f32.mrf.mxu0
        %v920 = vadd.f32 %v775, %v919
        %v921 = vpop.f32.mrf.mxu0
        %922 = vmatprep.mubr.f32.mxu0 %v515
        %923 = vmatmul.mubr.f32.gmra.mxu0 %v514
        %v924 = vpop.f32.mrf.mxu0
        %v925 = vadd.f32 %v780, %v924
        %v926 = vpop.f32.mrf.mxu0
        %927 = vmatprep.mubr.f32.mxu0 %v520
        %928 = vmatmul.mubr.f32.gmra.mxu0 %v519
        %v929 = vpop.f32.mrf.mxu0
        %v930 = vadd.f32 %v785, %v929
        %v931 = vpop.f32.mrf.mxu0
        %932 = vmatprep.mubr.f32.mxu0 %v525
        %933 = vmatmul.mubr.f32.gmra.mxu0 %v524
        %v934 = vpop.f32.mrf.mxu0
        %v935 = vadd.f32 %v790, %v934
        %v936 = vpop.f32.mrf.mxu0
        %937 = vmatprep.mubr.f32.mxu0 %v530
        %938 = vmatmul.mubr.f32.gmra.mxu0 %v529
        %v939 = vpop.f32.mrf.mxu0
        %v940 = vadd.f32 %v795, %v939
        %v941 = vpop.f32.mrf.mxu0
        %942 = vmatprep.mubr.f32.mxu0 %v535
        %943 = vmatmul.mubr.f32.gmra.mxu0 %v534
        %v944 = vpop.f32.mrf.mxu0
        %v945 = vadd.f32 %v800, %v944
        %v946 = vpop.f32.mrf.mxu0
        %947 = vdwg.mxu0
        %948 = vmatprep.subr.mxu0 0.0
        %949 = vmatpush1.msra.mxu0 0.0
        %950 = vmatprep.subr.mxu0 0.0
        %951 = vmatpush1.msra.mxu0 0.0
        %952 = vmatprep.subr.mxu0 0.0
        %953 = vmatpush1.msra.mxu0 0.0
        %954 = vmatprep.subr.mxu0 0.0
        %955 = vmatpush1.msra.mxu0 0.0
        %956 = vmatprep.subr.mxu0 0.0
        %957 = vmatpush1.msra.mxu0 0.0
        %958 = vmatprep.subr.mxu0 0.0
        %959 = vmatpush1.msra.mxu0 0.0
        %960 = vmatprep.subr.mxu0 0.0
        %961 = vmatpush1.msra.mxu0 0.0
        %962 = vmatprep.subr.mxu0 0.0
        %963 = vmatpush1.msra.mxu0 0.0
        %964 = vmatprep.subr.mxu0 0.0
        %965 = vmatpush1.msra.mxu0 %v608
        %966 = vmatprep.subr.mxu0 0.0
        %967 = vmatpush1.msra.mxu0 %v607
        %968 = vmatprep.subr.mxu0 0.0
        %969 = vmatpush1.msra.mxu0 %v606
        %970 = vmatprep.subr.mxu0 0.0
        %971 = vmatpush1.msra.mxu0 %v605
        %972 = vmatprep.subr.mxu0 0.0
        %973 = vmatpush1.msra.mxu0 %v604
        %974 = vmatprep.subr.mxu0 0.0
        %975 = vmatpush1.msra.mxu0 %v603
        %976 = vmatprep.subr.mxu0 0.0
        %977 = vmatpush1.msra.mxu0 %v602
        %978 = vmatprep.subr.mxu0 0.0
        %979 = vmatpush1.msra.mxu0 %v601
        %980 = vmatprep.subr.mxu0 0.0
        %981 = vmatpush2.msra.mxu0 0.0
        %982 = vmatprep.subr.mxu0 0.0
        %983 = vmatpush2.msra.mxu0 0.0
        %984 = vmatprep.subr.mxu0 0.0
        %985 = vmatpush2.msra.mxu0 0.0
        %986 = vmatprep.subr.mxu0 0.0
        %987 = vmatpush2.msra.mxu0 0.0
        %988 = vmatprep.subr.mxu0 0.0
        %989 = vmatpush2.msra.mxu0 0.0
        %990 = vmatprep.subr.mxu0 0.0
        %991 = vmatpush2.msra.mxu0 0.0
        %992 = vmatprep.subr.mxu0 0.0
        %993 = vmatpush2.msra.mxu0 0.0
        %994 = vmatprep.subr.mxu0 0.0
        %995 = vmatpush2.msra.mxu0 0.0
        %996 = vmatprep.subr.mxu0 0.0
        %997 = vmatpush2.msra.mxu0 0.0
        %998 = vmatprep.subr.mxu0 0.0
        %999 = vmatpush2.msra.mxu0 0.0
        %1000 = vmatprep.subr.mxu0 0.0
        %1001 = vmatpush2.msra.mxu0 0.0
        %1002 = vmatprep.subr.mxu0 0.0
        %1003 = vmatpush2.msra.mxu0 0.0
        %1004 = vmatprep.subr.mxu0 0.0
        %1005 = vmatpush2.msra.mxu0 0.0
        %1006 = vmatprep.subr.mxu0 0.0
        %1007 = vmatpush2.msra.mxu0 0.0
        %1008 = vmatprep.subr.mxu0 0.0
        %1009 = vmatpush2.msra.mxu0 0.0
        %1010 = vmatprep.subr.mxu0 0.0
        %1011 = vmatpush2.msra.mxu0 0.0
        %1012 = vmatprep.mubr.f32.mxu0 0.0
        %1013 = vmatmul.mubr.f32.gmra.mxu0 %v611
        %v1014 = vpop.f32.mrf.mxu0
        %v1015 = vadd.f32 %v870, %v1014
        %v1016 = vpop.f32.mrf.mxu0
        %1017 = vmatprep.mubr.f32.mxu0 0.0
        %1018 = vmatmul.mubr.f32.gmra.mxu0 %v614
        %v1019 = vpop.f32.mrf.mxu0
        %v1020 = vadd.f32 %v875, %v1019
        %v1021 = vpop.f32.mrf.mxu0
        %1022 = vmatprep.mubr.f32.mxu0 0.0
        %1023 = vmatmul.mubr.f32.gmra.mxu0 %v617
        %v1024 = vpop.f32.mrf.mxu0
        %v1025 = vadd.f32 %v880, %v1024
        %v1026 = vpop.f32.mrf.mxu0
        %1027 = vmatprep.mubr.f32.mxu0 0.0
        %1028 = vmatmul.mubr.f32.gmra.mxu0 %v620
        %v1029 = vpop.f32.mrf.mxu0
        %v1030 = vadd.f32 %v885, %v1029
        %v1031 = vpop.f32.mrf.mxu0
        %1032 = vmatprep.mubr.f32.mxu0 0.0
        %1033 = vmatmul.mubr.f32.gmra.mxu0 %v623
        %v1034 = vpop.f32.mrf.mxu0
        %v1035 = vadd.f32 %v890, %v1034
        %v1036 = vpop.f32.mrf.mxu0
        %1037 = vmatprep.mubr.f32.mxu0 0.0
        %1038 = vmatmul.mubr.f32.gmra.mxu0 %v626
        %v1039 = vpop.f32.mrf.mxu0
        %v1040 = vadd.f32 %v895, %v1039
        %v1041 = vpop.f32.mrf.mxu0
        %1042 = vmatprep.mubr.f32.mxu0 0.0
        %1043 = vmatmul.mubr.f32.gmra.mxu0 %v629
        %v1044 = vpop.f32.mrf.mxu0
        %v1045 = vadd.f32 %v900, %v1044
        %v1046 = vpop.f32.mrf.mxu0
        %1047 = vmatprep.mubr.f32.mxu0 0.0
        %1048 = vmatmul.mubr.f32.gmra.mxu0 %v632
        %v1049 = vpop.f32.mrf.mxu0
        %v1050 = vadd.f32 %v905, %v1049
        %v1051 = vpop.f32.mrf.mxu0
        %1052 = vmatprep.mubr.f32.mxu0 0.0
        %1053 = vmatmul.mubr.f32.gmra.mxu0 %v635
        %v1054 = vpop.f32.mrf.mxu0
        %v1055 = vadd.f32 %v910, %v1054
        %v1056 = vpop.f32.mrf.mxu0
        %1057 = vmatprep.mubr.f32.mxu0 0.0
        %1058 = vmatmul.mubr.f32.gmra.mxu0 %v638
        %v1059 = vpop.f32.mrf.mxu0
        %v1060 = vadd.f32 %v915, %v1059
        %v1061 = vpop.f32.mrf.mxu0
        %1062 = vmatprep.mubr.f32.mxu0 0.0
        %1063 = vmatmul.mubr.f32.gmra.mxu0 %v641
        %v1064 = vpop.f32.mrf.mxu0
        %v1065 = vadd.f32 %v920, %v1064
        %v1066 = vpop.f32.mrf.mxu0
        %1067 = vmatprep.mubr.f32.mxu0 0.0
        %1068 = vmatmul.mubr.f32.gmra.mxu0 %v644
        %v1069 = vpop.f32.mrf.mxu0
        %v1070 = vadd.f32 %v925, %v1069
        %v1071 = vpop.f32.mrf.mxu0
        %1072 = vmatprep.mubr.f32.mxu0 0.0
        %1073 = vmatmul.mubr.f32.gmra.mxu0 %v647
        %v1074 = vpop.f32.mrf.mxu0
        %v1075 = vadd.f32 %v930, %v1074
        %v1076 = vpop.f32.mrf.mxu0
        %1077 = vmatprep.mubr.f32.mxu0 0.0
        %1078 = vmatmul.mubr.f32.gmra.mxu0 %v650
        %v1079 = vpop.f32.mrf.mxu0
        %v1080 = vadd.f32 %v935, %v1079
        %v1081 = vpop.f32.mrf.mxu0
        %1082 = vmatprep.mubr.f32.mxu0 0.0
        %1083 = vmatmul.mubr.f32.gmra.mxu0 %v653
        %v1084 = vpop.f32.mrf.mxu0
        %v1085 = vadd.f32 %v940, %v1084
        %v1086 = vpop.f32.mrf.mxu0
        %1087 = vmatprep.mubr.f32.mxu0 0.0
        %1088 = vmatmul.mubr.f32.gmra.mxu0 %v656
        %v1089 = vpop.f32.mrf.mxu0
        %v1090 = vadd.f32 %v945, %v1089
        %v1091 = vpop.f32.mrf.mxu0
        %1092 = vdwg.mxu0
        %1093 = vst [vmem:[%s456] sm:$0xff] %v1015
        %1094 = vst [vmem:[%s456 + $0x8] sm:$0xff] %v1020
        %1095 = vst [vmem:[%s456 + $0x10] sm:$0xff] %v1025
        %1096 = vst [vmem:[%s456 + $0x18] sm:$0xff] %v1030
        %1097 = vst [vmem:[%s456 + $0x20] sm:$0xff] %v1035
        %1098 = vst [vmem:[%s456 + $0x28] sm:$0xff] %v1040
        %1099 = vst [vmem:[%s456 + $0x30] sm:$0xff] %v1045
        %1100 = vst [vmem:[%s456 + $0x38] sm:$0xff] %v1050
        %1101 = vst [vmem:[%s456 + $0x40] sm:$0xff] %v1055
        %1102 = vst [vmem:[%s456 + $0x48] sm:$0xff] %v1060
        %1103 = vst [vmem:[%s456 + $0x50] sm:$0xff] %v1065
        %1104 = vst [vmem:[%s456 + $0x58] sm:$0xff] %v1070
        %1105 = vst [vmem:[%s456 + $0x60] sm:$0xff] %v1075
        %1106 = vst [vmem:[%s456 + $0x68] sm:$0xff] %v1080
        %1107 = vst [vmem:[%s456 + $0x70] sm:$0xff] %v1085
        %1108 = vst [vmem:[%s456 + $0x78] sm:$0xff] %v1090
        %s1109 = sand.u32 %s68, 1
        %s1110 = sand.u32 %s68, 1
        %s1111 = smul.addr %s1110, 128
        %s1112 = scalar_lea.vmem [#allocation3], %s1111
        // Predicated region
        $region67: #{enc_forward.8} parent=61 // pred_check
          %p1113 = pneg %p78
        $region68: #{enc_forward.8} parent=61 // pred_check_branch
          %1115 = sbr.rel (%p1113) target = $region70
        $region69: #{enc_forward.8} parent=61 // pred_region
          %s1116 = smul.addr %s13, 8
          %s1117 = scalar_lea.vmem %s2, %s1116
          // Predicated region
          $region71: #{enc_forward.8} parent=69 // pred_check
            _
          $region72: #{enc_forward.8} parent=69 // pred_check_branch
            %1119 = sbr.rel (0) target = $region74
          $region73: #{enc_forward.8} parent=69 // pred_region
            // Predicated region
            $region75: #{enc_forward.8} parent=73 // pred_check
              _
            $region76: #{enc_forward.8} parent=73 // pred_check_branch
              %1121 = sbr.rel (0) target = $region78
            $region77: #{enc_forward.8} parent=73 // pred_region
              // Predicated region
              $region90: #{enc_forward.8} parent=77 // pred_check
                _
              $region91: #{enc_forward.8} parent=77 // pred_check_branch
                %1167 = sbr.rel (0) target = $region93
              $region92: #{enc_forward.8} parent=77 // pred_region
                loop: start=0, step=1, limit=1
                $region94: #{enc_forward.8} parent=92 // loop_pre_header
                  _
                $region95: #{enc_forward.8} parent=92 // loop_header
                  %s1169 = sphi 0, %s1173
                  %p1170 = scmp.ge.s32.totalorder %s1169, 1
                  %s1174 = sphi %s1112, %s1112
                  %s1175 = sphi %s1117, %s1117
                $region96: #{enc_forward.8} parent=92 // loop_header_branch
                  %1172 = sbr.rel (%p1170) target = $region100
                $region97: #{enc_forward.8} parent=92 // loop_body
                  %v1176 = vld [vmem:[%s1174] sm:$0xff]
                  %1177 = vst [vmem:[%s1175] sm:$0xff] %v1176
                  %v1178 = vld [vmem:[%s1174 + $0x8] sm:$0xff]
                  %1179 = vst [vmem:[%s1175 + $0x10] sm:$0xff] %v1178
                  %v1180 = vld [vmem:[%s1174 + $0x10] sm:$0xff]
                  %1181 = vst [vmem:[%s1175 + $0x20] sm:$0xff] %v1180
                  %v1182 = vld [vmem:[%s1174 + $0x18] sm:$0xff]
                  %1183 = vst [vmem:[%s1175 + $0x30] sm:$0xff] %v1182
                  %v1184 = vld [vmem:[%s1174 + $0x20] sm:$0xff]
                  %1185 = vst [vmem:[%s1175 + $0x40] sm:$0xff] %v1184
                  %v1186 = vld [vmem:[%s1174 + $0x28] sm:$0xff]
                  %1187 = vst [vmem:[%s1175 + $0x50] sm:$0xff] %v1186
                  %v1188 = vld [vmem:[%s1174 + $0x30] sm:$0xff]
                  %1189 = vst [vmem:[%s1175 + $0x60] sm:$0xff] %v1188
                  %v1190 = vld [vmem:[%s1174 + $0x38] sm:$0xff]
                  %1191 = vst [vmem:[%s1175 + $0x70] sm:$0xff] %v1190
                  %v1192 = vld [vmem:[%s1174 + $0x40] sm:$0xff]
                  %1193 = vst [vmem:[%s1175 + $0x80] sm:$0xff] %v1192
                  %v1194 = vld [vmem:[%s1174 + $0x48] sm:$0xff]
                  %1195 = vst [vmem:[%s1175 + $0x90] sm:$0xff] %v1194
                  %v1196 = vld [vmem:[%s1174 + $0x50] sm:$0xff]
                  %1197 = vst [vmem:[%s1175 + $0xa0] sm:$0xff] %v1196
                  %v1198 = vld [vmem:[%s1174 + $0x58] sm:$0xff]
                  %1199 = vst [vmem:[%s1175 + $0xb0] sm:$0xff] %v1198
                  %v1200 = vld [vmem:[%s1174 + $0x60] sm:$0xff]
                  %1201 = vst [vmem:[%s1175 + $0xc0] sm:$0xff] %v1200
                  %v1202 = vld [vmem:[%s1174 + $0x68] sm:$0xff]
                  %1203 = vst [vmem:[%s1175 + $0xd0] sm:$0xff] %v1202
                  %v1204 = vld [vmem:[%s1174 + $0x70] sm:$0xff]
                  %1205 = vst [vmem:[%s1175 + $0xe0] sm:$0xff] %v1204
                  %v1206 = vld [vmem:[%s1174 + $0x78] sm:$0xff]
                  %1207 = vst [vmem:[%s1175 + $0xf0] sm:$0xff] %v1206
                $region98: #{enc_forward.8} parent=92 // loop_footer
                  %s1173 = sadd.s32 1, %s1169
                $region99: #{enc_forward.8} parent=92 // loop_footer_branch
                  %1168 = sbr.rel target = $region95
                $region100: #{enc_forward.8} parent=92 // loop_exit
                  _
              $region93: #{enc_forward.8} parent=77 // pred_fallthru
                _
              // Predicated region
              $region101: #{enc_forward.8} parent=77 // pred_check
                _
              $region102: #{enc_forward.8} parent=77 // pred_check_branch
                %1209 = sbr.rel target = $region104
              $region103: #{enc_forward.8} parent=77 // pred_region
                _
              $region104: #{enc_forward.8} parent=77 // pred_fallthru
                _
            $region78: #{enc_forward.8} parent=73 // pred_fallthru
              _
            // Predicated region
            $region79: #{enc_forward.8} parent=73 // pred_check
              _
            $region80: #{enc_forward.8} parent=73 // pred_check_branch
              %1123 = sbr.rel target = $region82
            $region81: #{enc_forward.8} parent=73 // pred_region
              %s1125 = ssub.s32 256, 1
              loop: start=0, step=1, limit=1
              $region83: #{enc_forward.8} parent=81 // loop_pre_header
                _
              $region84: #{enc_forward.8} parent=81 // loop_header
                %s1127 = sphi 0, %s1131
                %p1128 = scmp.ge.s32.totalorder %s1127, 1
                %s1132 = sphi %s1112, %s1112
                %s1133 = sphi %s1117, %s1117
              $region85: #{enc_forward.8} parent=81 // loop_header_branch
                %1130 = sbr.rel (%p1128) target = $region89
              $region86: #{enc_forward.8} parent=81 // loop_body
                %v1134 = vld [vmem:[%s1132] sm:%s1125]
                %1135 = vst [vmem:[%s1133] sm:%s1125] %v1134
                %v1136 = vld [vmem:[%s1132 + $0x8] sm:%s1125]
                %1137 = vst [vmem:[%s1133 + $0x10] sm:%s1125] %v1136
                %v1138 = vld [vmem:[%s1132 + $0x10] sm:%s1125]
                %1139 = vst [vmem:[%s1133 + $0x20] sm:%s1125] %v1138
                %v1140 = vld [vmem:[%s1132 + $0x18] sm:%s1125]
                %1141 = vst [vmem:[%s1133 + $0x30] sm:%s1125] %v1140
                %v1142 = vld [vmem:[%s1132 + $0x20] sm:%s1125]
                %1143 = vst [vmem:[%s1133 + $0x40] sm:%s1125] %v1142
                %v1144 = vld [vmem:[%s1132 + $0x28] sm:%s1125]
                %1145 = vst [vmem:[%s1133 + $0x50] sm:%s1125] %v1144
                %v1146 = vld [vmem:[%s1132 + $0x30] sm:%s1125]
                %1147 = vst [vmem:[%s1133 + $0x60] sm:%s1125] %v1146
                %v1148 = vld [vmem:[%s1132 + $0x38] sm:%s1125]
                %1149 = vst [vmem:[%s1133 + $0x70] sm:%s1125] %v1148
                %v1150 = vld [vmem:[%s1132 + $0x40] sm:%s1125]
                %1151 = vst [vmem:[%s1133 + $0x80] sm:%s1125] %v1150
                %v1152 = vld [vmem:[%s1132 + $0x48] sm:%s1125]
                %1153 = vst [vmem:[%s1133 + $0x90] sm:%s1125] %v1152
                %v1154 = vld [vmem:[%s1132 + $0x50] sm:%s1125]
                %1155 = vst [vmem:[%s1133 + $0xa0] sm:%s1125] %v1154
                %v1156 = vld [vmem:[%s1132 + $0x58] sm:%s1125]
                %1157 = vst [vmem:[%s1133 + $0xb0] sm:%s1125] %v1156
                %v1158 = vld [vmem:[%s1132 + $0x60] sm:%s1125]
                %1159 = vst [vmem:[%s1133 + $0xc0] sm:%s1125] %v1158
                %v1160 = vld [vmem:[%s1132 + $0x68] sm:%s1125]
                %1161 = vst [vmem:[%s1133 + $0xd0] sm:%s1125] %v1160
                %v1162 = vld [vmem:[%s1132 + $0x70] sm:%s1125]
                %1163 = vst [vmem:[%s1133 + $0xe0] sm:%s1125] %v1162
                %v1164 = vld [vmem:[%s1132 + $0x78] sm:%s1125]
                %1165 = vst [vmem:[%s1133 + $0xf0] sm:%s1125] %v1164
              $region87: #{enc_forward.8} parent=81 // loop_footer
                %s1131 = sadd.s32 1, %s1127
              $region88: #{enc_forward.8} parent=81 // loop_footer_branch
                %1126 = sbr.rel target = $region84
              $region89: #{enc_forward.8} parent=81 // loop_exit
                _
            $region82: #{enc_forward.8} parent=73 // pred_fallthru
              _
          $region74: #{enc_forward.8} parent=69 // pred_fallthru
            _
          %1210 = vnop
        $region70: #{enc_forward.8} parent=61 // pred_fallthru
          _
      $region62: #{enc_forward.8} parent=5 // pred_fallthru
        _
      %p1211 = scmp.le.s32.totalorder 2, %s8
      // Predicated region
      $region105: #{enc_forward.8} parent=5 // pred_check
        %p1212 = pneg %p1211
      $region106: #{enc_forward.8} parent=5 // pred_check_branch
        %1214 = sbr.rel (%p1212) target = $region108
      $region107: #{enc_forward.8} parent=5 // pred_region
        %s1215 = ssub.s32 %s8, 2
        // Predicated region
        $region109: #{enc_forward.8} parent=107 // pred_check
          %p1216 = pneg %p84
        $region110: #{enc_forward.8} parent=107 // pred_check_branch
          %1218 = sbr.rel (%p1216) target = $region112
        $region111: #{enc_forward.8} parent=107 // pred_region
          %s1219 = sand.u32 %s69, 1
          %s1220 = sand.u32 %s69, 1
          %s1221 = smul.addr %s1220, 128
          %s1222 = scalar_lea.vmem [#allocation3], %s1221
        $region112: #{enc_forward.8} parent=107 // pred_fallthru
          _
      $region108: #{enc_forward.8} parent=5 // pred_fallthru
        _
    $region6: #{enc_forward.8} parent=1 // loop_footer
      %s12 = sadd.s32 1, %s8
    $region7: #{enc_forward.8} parent=1 // loop_footer_branch
      %7 = sbr.rel target = $region3
    $region8: #{enc_forward.8} parent=1 // loop_exit
      _

// kernel: enc_forward.9
$region0: #{enc_forward.9}
  #allocation0 [shape = 'u32[]', space=smem, size = 0x4, offset = 0x4, fixed_abs, tag = 'smem constant byte address 0x4 - core index']
  #allocation1 [shape = 'u32[144,128]{1,0:T(1,128)}', space=vmem, size = 0x12000, scoped, tag = 'internal scratch']
  %s0 = inlined_call_operand.vmem [shape: f32[2,3456], index: 0, kind: input, shape index: {}]
  %s1 = inlined_call_operand.vmem [shape: f32[2,8], index: 1, kind: input, shape index: {}]
  %s2 = inlined_call_operand.vmem [shape: f32[3456,128], index: 2, kind: input, shape index: {}]
  %s3 = inlined_call_operand.vmem [shape: f32[1,128], index: 3, kind: input, shape index: {}]
  %s4 = inlined_call_operand.vmem [shape: f32[128,16], index: 4, kind: input, shape index: {}]
  %s5 = inlined_call_operand.vmem [shape: f32[8,16], index: 5, kind: input, shape index: {}]
  %s6 = inlined_call_operand.vmem [shape: f32[1,16], index: 6, kind: input, shape index: {}]
  %s7 = inlined_call_operand.hbm [shape: f32[2,16], index: 7, kind: output, shape index: {}]
  %s8 = sld [smem:[#allocation0]]
  $region38: #{enc_forward.9} parent=0
    _
  %s10 = ssub.s32 1, %s8
  %s11 = scalar_select 0, %s10, %s8
  $region1: #{enc_forward.9} parent=0
    #allocation2 [shape = 'u8[1024]{0}', space=vmem, size = 0x400, scoped, tag = 'output window, operand 0, single buffered']
    #allocation3 [shape = 's32[1]{0}', space=sflag, size = 0x4, scoped, tag = 'scoped memory for enc_forward.9']
    %12 = vsyncpa [#allocation3], 0
    // Predicated region
    $region2: #{enc_forward.9} parent=1 // pred_check
      _
    $region3: #{enc_forward.9} parent=1 // pred_check_branch
      %14 = sbr.rel (0) target = $region5
    $region4: #{enc_forward.9} parent=1 // pred_region
      _
    $region5: #{enc_forward.9} parent=1 // pred_fallthru
      _
    // Predicated region
    $region6: #{enc_forward.9} parent=1 // pred_check
      _
    $region7: #{enc_forward.9} parent=1 // pred_check_branch
      %16 = sbr.rel (0) target = $region9
    $region8: #{enc_forward.9} parent=1 // pred_region
      _
    $region9: #{enc_forward.9} parent=1 // pred_fallthru
      _
    // Predicated region
    $region10: #{enc_forward.9} parent=1 // pred_check
      _
    $region11: #{enc_forward.9} parent=1 // pred_check_branch
      %18 = sbr.rel (0) target = $region13
    $region12: #{enc_forward.9} parent=1 // pred_region
      _
    $region13: #{enc_forward.9} parent=1 // pred_fallthru
      _
    // Predicated region
    $region14: #{enc_forward.9} parent=1 // pred_check
      _
    $region15: #{enc_forward.9} parent=1 // pred_check_branch
      %20 = sbr.rel (0) target = $region17
    $region16: #{enc_forward.9} parent=1 // pred_region
      _
    $region17: #{enc_forward.9} parent=1 // pred_fallthru
      _
    // Predicated region
    $region18: #{enc_forward.9} parent=1 // pred_check
      _
    $region19: #{enc_forward.9} parent=1 // pred_check_branch
      %22 = sbr.rel (0) target = $region21
    $region20: #{enc_forward.9} parent=1 // pred_region
      _
    $region21: #{enc_forward.9} parent=1 // pred_fallthru
      _
    // Predicated region
    $region22: #{enc_forward.9} parent=1 // pred_check
      _
    $region23: #{enc_forward.9} parent=1 // pred_check_branch
      %24 = sbr.rel (0) target = $region25
    $region24: #{enc_forward.9} parent=1 // pred_region
      _
    $region25: #{enc_forward.9} parent=1 // pred_fallthru
      _
    // Predicated region
    $region26: #{enc_forward.9} parent=1 // pred_check
      _
    $region27: #{enc_forward.9} parent=1 // pred_check_branch
      %26 = sbr.rel (0) target = $region29
    $region28: #{enc_forward.9} parent=1 // pred_region
      _
    $region29: #{enc_forward.9} parent=1 // pred_fallthru
      _
    %v27 = vld [vmem:[%s0] sm:$0xff]
    %v28 = vld [vmem:[%s0 + $0x8] sm:$0xff]
    %v29 = vld [vmem:[%s0 + $0x10] sm:$0xff]
    %v30 = vld [vmem:[%s0 + $0x18] sm:$0xff]
    %v31 = vld [vmem:[%s0 + $0x20] sm:$0xff]
    %v32 = vld [vmem:[%s0 + $0x28] sm:$0xff]
    %v33 = vld [vmem:[%s0 + $0x30] sm:$0x3f]
    %v34 = vld [vmem:[%s2] sm:$0xff]
    %v35 = vld [vmem:[%s2 + $0x8] sm:$0xff]
    %v36 = vld [vmem:[%s2 + $0x10] sm:$0xff]
    %v37 = vld [vmem:[%s2 + $0x18] sm:$0xff]
    %v38 = vld [vmem:[%s2 + $0x20] sm:$0xff]
    %v39 = vld [vmem:[%s2 + $0x28] sm:$0xff]
    %v40 = vld [vmem:[%s2 + $0x30] sm:$0xff]
    %v41 = vld [vmem:[%s2 + $0x38] sm:$0xff]
    %v42 = vld [vmem:[%s2 + $0x40] sm:$0xff]
    %v43 = vld [vmem:[%s2 + $0x48] sm:$0xff]
    %v44 = vld [vmem:[%s2 + $0x50] sm:$0xff]
    %v45 = vld [vmem:[%s2 + $0x58] sm:$0xff]
    %v46 = vld [vmem:[%s2 + $0x60] sm:$0xff]
    %v47 = vld [vmem:[%s2 + $0x68] sm:$0xff]
    %v48 = vld [vmem:[%s2 + $0x70] sm:$0xff]
    %v49 = vld [vmem:[%s2 + $0x78] sm:$0xff]
    %v50 = vld [vmem:[%s2 + $0x80] sm:$0xff]
    %v51 = vld [vmem:[%s2 + $0x88] sm:$0xff]
    %v52 = vld [vmem:[%s2 + $0x90] sm:$0xff]
    %v53 = vld [vmem:[%s2 + $0x98] sm:$0xff]
    %v54 = vld [vmem:[%s2 + $0xa0] sm:$0xff]
    %v55 = vld [vmem:[%s2 + $0xa8] sm:$0xff]
    %v56 = vld [vmem:[%s2 + $0xb0] sm:$0xff]
    %v57 = vld [vmem:[%s2 + $0xb8] sm:$0xff]
    %v58 = vld [vmem:[%s2 + $0xc0] sm:$0xff]
    %v59 = vld [vmem:[%s2 + $0xc8] sm:$0xff]
    %v60 = vld [vmem:[%s2 + $0xd0] sm:$0xff]
    %v61 = vld [vmem:[%s2 + $0xd8] sm:$0xff]
    %v62 = vld [vmem:[%s2 + $0xe0] sm:$0xff]
    %v63 = vld [vmem:[%s2 + $0xe8] sm:$0xff]
    %v64 = vld [vmem:[%s2 + $0xf0] sm:$0xff]
    %v65 = vld [vmem:[%s2 + $0xf8] sm:$0xff]
    %v66 = vld [vmem:[%s2 + $0x100] sm:$0xff]
    %v67 = vld [vmem:[%s2 + $0x108] sm:$0xff]
    %v68 = vld [vmem:[%s2 + $0x110] sm:$0xff]
    %v69 = vld [vmem:[%s2 + $0x118] sm:$0xff]
    %v70 = vld [vmem:[%s2 + $0x120] sm:$0xff]
    %v71 = vld [vmem:[%s2 + $0x128] sm:$0xff]
    %v72 = vld [vmem:[%s2 + $0x130] sm:$0xff]
    %v73 = vld [vmem:[%s2 + $0x138] sm:$0xff]
    %v74 = vld [vmem:[%s2 + $0x140] sm:$0xff]
    %v75 = vld [vmem:[%s2 + $0x148] sm:$0xff]
    %v76 = vld [vmem:[%s2 + $0x150] sm:$0xff]
    %v77 = vld [vmem:[%s2 + $0x158] sm:$0xff]
    %v78 = vld [vmem:[%s2 + $0x160] sm:$0xff]
    %v79 = vld [vmem:[%s2 + $0x168] sm:$0xff]
    %v80 = vld [vmem:[%s2 + $0x170] sm:$0xff]
    %v81 = vld [vmem:[%s2 + $0x178] sm:$0xff]
    %v82 = vld [vmem:[%s2 + $0x180] sm:$0xff]
    %v83 = vld [vmem:[%s2 + $0x188] sm:$0xff]
    %v84 = vld [vmem:[%s2 + $0x190] sm:$0xff]
    %v85 = vld [vmem:[%s2 + $0x198] sm:$0xff]
    %v86 = vld [vmem:[%s2 + $0x1a0] sm:$0xff]
    %v87 = vld [vmem:[%s2 + $0x1a8] sm:$0xff]
    %v88 = vld [vmem:[%s2 + $0x1b0] sm:$0xff]
    %v89 = vld [vmem:[%s2 + $0x1b8] sm:$0xff]
    %v90 = vld [vmem:[%s2 + $0x1c0] sm:$0xff]
    %v91 = vld [vmem:[%s2 + $0x1c8] sm:$0xff]
    %v92 = vld [vmem:[%s2 + $0x1d0] sm:$0xff]
    %v93 = vld [vmem:[%s2 + $0x1d8] sm:$0xff]
    %v94 = vld [vmem:[%s2 + $0x1e0] sm:$0xff]
    %v95 = vld [vmem:[%s2 + $0x1e8] sm:$0xff]
    %v96 = vld [vmem:[%s2 + $0x1f0] sm:$0xff]
    %v97 = vld [vmem:[%s2 + $0x1f8] sm:$0xff]
    %v98 = vld [vmem:[%s2 + $0x200] sm:$0xff]
    %v99 = vld [vmem:[%s2 + $0x208] sm:$0xff]
    %v100 = vld [vmem:[%s2 + $0x210] sm:$0xff]
    %v101 = vld [vmem:[%s2 + $0x218] sm:$0xff]
    %v102 = vld [vmem:[%s2 + $0x220] sm:$0xff]
    %v103 = vld [vmem:[%s2 + $0x228] sm:$0xff]
    %v104 = vld [vmem:[%s2 + $0x230] sm:$0xff]
    %v105 = vld [vmem:[%s2 + $0x238] sm:$0xff]
    %v106 = vld [vmem:[%s2 + $0x240] sm:$0xff]
    %v107 = vld [vmem:[%s2 + $0x248] sm:$0xff]
    %v108 = vld [vmem:[%s2 + $0x250] sm:$0xff]
    %v109 = vld [vmem:[%s2 + $0x258] sm:$0xff]
    %v110 = vld [vmem:[%s2 + $0x260] sm:$0xff]
    %v111 = vld [vmem:[%s2 + $0x268] sm:$0xff]
    %v112 = vld [vmem:[%s2 + $0x270] sm:$0xff]
    %v113 = vld [vmem:[%s2 + $0x278] sm:$0xff]
    %v114 = vld [vmem:[%s2 + $0x280] sm:$0xff]
    %v115 = vld [vmem:[%s2 + $0x288] sm:$0xff]
    %v116 = vld [vmem:[%s2 + $0x290] sm:$0xff]
    %v117 = vld [vmem:[%s2 + $0x298] sm:$0xff]
    %v118 = vld [vmem:[%s2 + $0x2a0] sm:$0xff]
    %v119 = vld [vmem:[%s2 + $0x2a8] sm:$0xff]
    %v120 = vld [vmem:[%s2 + $0x2b0] sm:$0xff]
    %v121 = vld [vmem:[%s2 + $0x2b8] sm:$0xff]
    %v122 = vld [vmem:[%s2 + $0x2c0] sm:$0xff]
    %v123 = vld [vmem:[%s2 + $0x2c8] sm:$0xff]
    %v124 = vld [vmem:[%s2 + $0x2d0] sm:$0xff]
    %v125 = vld [vmem:[%s2 + $0x2d8] sm:$0xff]
    %v126 = vld [vmem:[%s2 + $0x2e0] sm:$0xff]
    %v127 = vld [vmem:[%s2 + $0x2e8] sm:$0xff]
    %v128 = vld [vmem:[%s2 + $0x2f0] sm:$0xff]
    %v129 = vld [vmem:[%s2 + $0x2f8] sm:$0xff]
    %v130 = vld [vmem:[%s2 + $0x300] sm:$0xff]
    %v131 = vld [vmem:[%s2 + $0x308] sm:$0xff]
    %v132 = vld [vmem:[%s2 + $0x310] sm:$0xff]
    %v133 = vld [vmem:[%s2 + $0x318] sm:$0xff]
    %v134 = vld [vmem:[%s2 + $0x320] sm:$0xff]
    %v135 = vld [vmem:[%s2 + $0x328] sm:$0xff]
    %v136 = vld [vmem:[%s2 + $0x330] sm:$0xff]
    %v137 = vld [vmem:[%s2 + $0x338] sm:$0xff]
    %v138 = vld [vmem:[%s2 + $0x340] sm:$0xff]
    %v139 = vld [vmem:[%s2 + $0x348] sm:$0xff]
    %v140 = vld [vmem:[%s2 + $0x350] sm:$0xff]
    %v141 = vld [vmem:[%s2 + $0x358] sm:$0xff]
    %v142 = vld [vmem:[%s2 + $0x360] sm:$0xff]
    %v143 = vld [vmem:[%s2 + $0x368] sm:$0xff]
    %v144 = vld [vmem:[%s2 + $0x370] sm:$0xff]
    %v145 = vld [vmem:[%s2 + $0x378] sm:$0xff]
    %v146 = vld [vmem:[%s2 + $0x380] sm:$0xff]
    %v147 = vld [vmem:[%s2 + $0x388] sm:$0xff]
    %v148 = vld [vmem:[%s2 + $0x390] sm:$0xff]
    %v149 = vld [vmem:[%s2 + $0x398] sm:$0xff]
    %v150 = vld [vmem:[%s2 + $0x3a0] sm:$0xff]
    %v151 = vld [vmem:[%s2 + $0x3a8] sm:$0xff]
    %v152 = vld [vmem:[%s2 + $0x3b0] sm:$0xff]
    %v153 = vld [vmem:[%s2 + $0x3b8] sm:$0xff]
    %v154 = vld [vmem:[%s2 + $0x3c0] sm:$0xff]
    %v155 = vld [vmem:[%s2 + $0x3c8] sm:$0xff]
    %v156 = vld [vmem:[%s2 + $0x3d0] sm:$0xff]
    %v157 = vld [vmem:[%s2 + $0x3d8] sm:$0xff]
    %v158 = vld [vmem:[%s2 + $0x3e0] sm:$0xff]
    %v159 = vld [vmem:[%s2 + $0x3e8] sm:$0xff]
    %v160 = vld [vmem:[%s2 + $0x3f0] sm:$0xff]
    %v161 = vld [vmem:[%s2 + $0x3f8] sm:$0xff]
    %v162 = vld [vmem:[%s2 + $0x400] sm:$0xff]
    %v163 = vld [vmem:[%s2 + $0x408] sm:$0xff]
    %v164 = vld [vmem:[%s2 + $0x410] sm:$0xff]
    %v165 = vld [vmem:[%s2 + $0x418] sm:$0xff]
    %v166 = vld [vmem:[%s2 + $0x420] sm:$0xff]
    %v167 = vld [vmem:[%s2 + $0x428] sm:$0xff]
    %v168 = vld [vmem:[%s2 + $0x430] sm:$0xff]
    %v169 = vld [vmem:[%s2 + $0x438] sm:$0xff]
    %v170 = vld [vmem:[%s2 + $0x440] sm:$0xff]
    %v171 = vld [vmem:[%s2 + $0x448] sm:$0xff]
    %v172 = vld [vmem:[%s2 + $0x450] sm:$0xff]
    %v173 = vld [vmem:[%s2 + $0x458] sm:$0xff]
    %v174 = vld [vmem:[%s2 + $0x460] sm:$0xff]
    %v175 = vld [vmem:[%s2 + $0x468] sm:$0xff]
    %v176 = vld [vmem:[%s2 + $0x470] sm:$0xff]
    %v177 = vld [vmem:[%s2 + $0x478] sm:$0xff]
    %v178 = vld [vmem:[%s2 + $0x480] sm:$0xff]
    %v179 = vld [vmem:[%s2 + $0x488] sm:$0xff]
    %v180 = vld [vmem:[%s2 + $0x490] sm:$0xff]
    %v181 = vld [vmem:[%s2 + $0x498] sm:$0xff]
    %v182 = vld [vmem:[%s2 + $0x4a0] sm:$0xff]
    %v183 = vld [vmem:[%s2 + $0x4a8] sm:$0xff]
    %v184 = vld [vmem:[%s2 + $0x4b0] sm:$0xff]
    %v185 = vld [vmem:[%s2 + $0x4b8] sm:$0xff]
    %v186 = vld [vmem:[%s2 + $0x4c0] sm:$0xff]
    %v187 = vld [vmem:[%s2 + $0x4c8] sm:$0xff]
    %v188 = vld [vmem:[%s2 + $0x4d0] sm:$0xff]
    %v189 = vld [vmem:[%s2 + $0x4d8] sm:$0xff]
    %v190 = vld [vmem:[%s2 + $0x4e0] sm:$0xff]
    %v191 = vld [vmem:[%s2 + $0x4e8] sm:$0xff]
    %v192 = vld [vmem:[%s2 + $0x4f0] sm:$0xff]
    %v193 = vld [vmem:[%s2 + $0x4f8] sm:$0xff]
    %v194 = vld [vmem:[%s2 + $0x500] sm:$0xff]
    %v195 = vld [vmem:[%s2 + $0x508] sm:$0xff]
    %v196 = vld [vmem:[%s2 + $0x510] sm:$0xff]
    %v197 = vld [vmem:[%s2 + $0x518] sm:$0xff]
    %v198 = vld [vmem:[%s2 + $0x520] sm:$0xff]
    %v199 = vld [vmem:[%s2 + $0x528] sm:$0xff]
    %v200 = vld [vmem:[%s2 + $0x530] sm:$0xff]
    %v201 = vld [vmem:[%s2 + $0x538] sm:$0xff]
    %v202 = vld [vmem:[%s2 + $0x540] sm:$0xff]
    %v203 = vld [vmem:[%s2 + $0x548] sm:$0xff]
    %v204 = vld [vmem:[%s2 + $0x550] sm:$0xff]
    %v205 = vld [vmem:[%s2 + $0x558] sm:$0xff]
    %v206 = vld [vmem:[%s2 + $0x560] sm:$0xff]
    %v207 = vld [vmem:[%s2 + $0x568] sm:$0xff]
    %v208 = vld [vmem:[%s2 + $0x570] sm:$0xff]
    %v209 = vld [vmem:[%s2 + $0x578] sm:$0xff]
    %v210 = vld [vmem:[%s2 + $0x580] sm:$0xff]
    %v211 = vld [vmem:[%s2 + $0x588] sm:$0xff]
    %v212 = vld [vmem:[%s2 + $0x590] sm:$0xff]
    %v213 = vld [vmem:[%s2 + $0x598] sm:$0xff]
    %v214 = vld [vmem:[%s2 + $0x5a0] sm:$0xff]
    %v215 = vld [vmem:[%s2 + $0x5a8] sm:$0xff]
    %v216 = vld [vmem:[%s2 + $0x5b0] sm:$0xff]
    %v217 = vld [vmem:[%s2 + $0x5b8] sm:$0xff]
    %v218 = vld [vmem:[%s2 + $0x5c0] sm:$0xff]
    %v219 = vld [vmem:[%s2 + $0x5c8] sm:$0xff]
    %v220 = vld [vmem:[%s2 + $0x5d0] sm:$0xff]
    %v221 = vld [vmem:[%s2 + $0x5d8] sm:$0xff]
    %v222 = vld [vmem:[%s2 + $0x5e0] sm:$0xff]
    %v223 = vld [vmem:[%s2 + $0x5e8] sm:$0xff]
    %v224 = vld [vmem:[%s2 + $0x5f0] sm:$0xff]
    %v225 = vld [vmem:[%s2 + $0x5f8] sm:$0xff]
    %v226 = vld [vmem:[%s2 + $0x600] sm:$0xff]
    %v227 = vld [vmem:[%s2 + $0x608] sm:$0xff]
    %v228 = vld [vmem:[%s2 + $0x610] sm:$0xff]
    %v229 = vld [vmem:[%s2 + $0x618] sm:$0xff]
    %v230 = vld [vmem:[%s2 + $0x620] sm:$0xff]
    %v231 = vld [vmem:[%s2 + $0x628] sm:$0xff]
    %v232 = vld [vmem:[%s2 + $0x630] sm:$0xff]
    %v233 = vld [vmem:[%s2 + $0x638] sm:$0xff]
    %v234 = vld [vmem:[%s2 + $0x640] sm:$0xff]
    %v235 = vld [vmem:[%s2 + $0x648] sm:$0xff]
    %v236 = vld [vmem:[%s2 + $0x650] sm:$0xff]
    %v237 = vld [vmem:[%s2 + $0x658] sm:$0xff]
    %v238 = vld [vmem:[%s2 + $0x660] sm:$0xff]
    %v239 = vld [vmem:[%s2 + $0x668] sm:$0xff]
    %v240 = vld [vmem:[%s2 + $0x670] sm:$0xff]
    %v241 = vld [vmem:[%s2 + $0x678] sm:$0xff]
    %v242 = vld [vmem:[%s2 + $0x680] sm:$0xff]
    %v243 = vld [vmem:[%s2 + $0x688] sm:$0xff]
    %v244 = vld [vmem:[%s2 + $0x690] sm:$0xff]
    %v245 = vld [vmem:[%s2 + $0x698] sm:$0xff]
    %v246 = vld [vmem:[%s2 + $0x6a0] sm:$0xff]
    %v247 = vld [vmem:[%s2 + $0x6a8] sm:$0xff]
    %v248 = vld [vmem:[%s2 + $0x6b0] sm:$0xff]
    %v249 = vld [vmem:[%s2 + $0x6b8] sm:$0xff]
    %v250 = vld [vmem:[%s2 + $0x6c0] sm:$0xff]
    %v251 = vld [vmem:[%s2 + $0x6c8] sm:$0xff]
    %v252 = vld [vmem:[%s2 + $0x6d0] sm:$0xff]
    %v253 = vld [vmem:[%s2 + $0x6d8] sm:$0xff]
    %v254 = vld [vmem:[%s2 + $0x6e0] sm:$0xff]
    %v255 = vld [vmem:[%s2 + $0x6e8] sm:$0xff]
    %v256 = vld [vmem:[%s2 + $0x6f0] sm:$0xff]
    %v257 = vld [vmem:[%s2 + $0x6f8] sm:$0xff]
    %v258 = vld [vmem:[%s2 + $0x700] sm:$0xff]
    %v259 = vld [vmem:[%s2 + $0x708] sm:$0xff]
    %v260 = vld [vmem:[%s2 + $0x710] sm:$0xff]
    %v261 = vld [vmem:[%s2 + $0x718] sm:$0xff]
    %v262 = vld [vmem:[%s2 + $0x720] sm:$0xff]
    %v263 = vld [vmem:[%s2 + $0x728] sm:$0xff]
    %v264 = vld [vmem:[%s2 + $0x730] sm:$0xff]
    %v265 = vld [vmem:[%s2 + $0x738] sm:$0xff]
    %v266 = vld [vmem:[%s2 + $0x740] sm:$0xff]
    %v267 = vld [vmem:[%s2 + $0x748] sm:$0xff]
    %v268 = vld [vmem:[%s2 + $0x750] sm:$0xff]
    %v269 = vld [vmem:[%s2 + $0x758] sm:$0xff]
    %v270 = vld [vmem:[%s2 + $0x760] sm:$0xff]
    %v271 = vld [vmem:[%s2 + $0x768] sm:$0xff]
    %v272 = vld [vmem:[%s2 + $0x770] sm:$0xff]
    %v273 = vld [vmem:[%s2 + $0x778] sm:$0xff]
    %v274 = vld [vmem:[%s2 + $0x780] sm:$0xff]
    %v275 = vld [vmem:[%s2 + $0x788] sm:$0xff]
    %v276 = vld [vmem:[%s2 + $0x790] sm:$0xff]
    %v277 = vld [vmem:[%s2 + $0x798] sm:$0xff]
    %v278 = vld [vmem:[%s2 + $0x7a0] sm:$0xff]
    %v279 = vld [vmem:[%s2 + $0x7a8] sm:$0xff]
    %v280 = vld [vmem:[%s2 + $0x7b0] sm:$0xff]
    %v281 = vld [vmem:[%s2 + $0x7b8] sm:$0xff]
    %v282 = vld [vmem:[%s2 + $0x7c0] sm:$0xff]
    %v283 = vld [vmem:[%s2 + $0x7c8] sm:$0xff]
    %v284 = vld [vmem:[%s2 + $0x7d0] sm:$0xff]
    %v285 = vld [vmem:[%s2 + $0x7d8] sm:$0xff]
    %v286 = vld [vmem:[%s2 + $0x7e0] sm:$0xff]
    %v287 = vld [vmem:[%s2 + $0x7e8] sm:$0xff]
    %v288 = vld [vmem:[%s2 + $0x7f0] sm:$0xff]
    %v289 = vld [vmem:[%s2 + $0x7f8] sm:$0xff]
    %v290 = vld [vmem:[%s2 + $0x800] sm:$0xff]
    %v291 = vld [vmem:[%s2 + $0x808] sm:$0xff]
    %v292 = vld [vmem:[%s2 + $0x810] sm:$0xff]
    %v293 = vld [vmem:[%s2 + $0x818] sm:$0xff]
    %v294 = vld [vmem:[%s2 + $0x820] sm:$0xff]
    %v295 = vld [vmem:[%s2 + $0x828] sm:$0xff]
    %v296 = vld [vmem:[%s2 + $0x830] sm:$0xff]
    %v297 = vld [vmem:[%s2 + $0x838] sm:$0xff]
    %v298 = vld [vmem:[%s2 + $0x840] sm:$0xff]
    %v299 = vld [vmem:[%s2 + $0x848] sm:$0xff]
    %v300 = vld [vmem:[%s2 + $0x850] sm:$0xff]
    %v301 = vld [vmem:[%s2 + $0x858] sm:$0xff]
    %v302 = vld [vmem:[%s2 + $0x860] sm:$0xff]
    %v303 = vld [vmem:[%s2 + $0x868] sm:$0xff]
    %v304 = vld [vmem:[%s2 + $0x870] sm:$0xff]
    %v305 = vld [vmem:[%s2 + $0x878] sm:$0xff]
    %v306 = vld [vmem:[%s2 + $0x880] sm:$0xff]
    %v307 = vld [vmem:[%s2 + $0x888] sm:$0xff]
    %v308 = vld [vmem:[%s2 + $0x890] sm:$0xff]
    %v309 = vld [vmem:[%s2 + $0x898] sm:$0xff]
    %v310 = vld [vmem:[%s2 + $0x8a0] sm:$0xff]
    %v311 = vld [vmem:[%s2 + $0x8a8] sm:$0xff]
    %v312 = vld [vmem:[%s2 + $0x8b0] sm:$0xff]
    %v313 = vld [vmem:[%s2 + $0x8b8] sm:$0xff]
    %v314 = vld [vmem:[%s2 + $0x8c0] sm:$0xff]
    %v315 = vld [vmem:[%s2 + $0x8c8] sm:$0xff]
    %v316 = vld [vmem:[%s2 + $0x8d0] sm:$0xff]
    %v317 = vld [vmem:[%s2 + $0x8d8] sm:$0xff]
    %v318 = vld [vmem:[%s2 + $0x8e0] sm:$0xff]
    %v319 = vld [vmem:[%s2 + $0x8e8] sm:$0xff]
    %v320 = vld [vmem:[%s2 + $0x8f0] sm:$0xff]
    %v321 = vld [vmem:[%s2 + $0x8f8] sm:$0xff]
    %v322 = vld [vmem:[%s2 + $0x900] sm:$0xff]
    %v323 = vld [vmem:[%s2 + $0x908] sm:$0xff]
    %v324 = vld [vmem:[%s2 + $0x910] sm:$0xff]
    %v325 = vld [vmem:[%s2 + $0x918] sm:$0xff]
    %v326 = vld [vmem:[%s2 + $0x920] sm:$0xff]
    %v327 = vld [vmem:[%s2 + $0x928] sm:$0xff]
    %v328 = vld [vmem:[%s2 + $0x930] sm:$0xff]
    %v329 = vld [vmem:[%s2 + $0x938] sm:$0xff]
    %v330 = vld [vmem:[%s2 + $0x940] sm:$0xff]
    %v331 = vld [vmem:[%s2 + $0x948] sm:$0xff]
    %v332 = vld [vmem:[%s2 + $0x950] sm:$0xff]
    %v333 = vld [vmem:[%s2 + $0x958] sm:$0xff]
    %v334 = vld [vmem:[%s2 + $0x960] sm:$0xff]
    %v335 = vld [vmem:[%s2 + $0x968] sm:$0xff]
    %v336 = vld [vmem:[%s2 + $0x970] sm:$0xff]
    %v337 = vld [vmem:[%s2 + $0x978] sm:$0xff]
    %v338 = vld [vmem:[%s2 + $0x980] sm:$0xff]
    %v339 = vld [vmem:[%s2 + $0x988] sm:$0xff]
    %v340 = vld [vmem:[%s2 + $0x990] sm:$0xff]
    %v341 = vld [vmem:[%s2 + $0x998] sm:$0xff]
    %v342 = vld [vmem:[%s2 + $0x9a0] sm:$0xff]
    %v343 = vld [vmem:[%s2 + $0x9a8] sm:$0xff]
    %v344 = vld [vmem:[%s2 + $0x9b0] sm:$0xff]
    %v345 = vld [vmem:[%s2 + $0x9b8] sm:$0xff]
    %v346 = vld [vmem:[%s2 + $0x9c0] sm:$0xff]
    %v347 = vld [vmem:[%s2 + $0x9c8] sm:$0xff]
    %v348 = vld [vmem:[%s2 + $0x9d0] sm:$0xff]
    %v349 = vld [vmem:[%s2 + $0x9d8] sm:$0xff]
    %v350 = vld [vmem:[%s2 + $0x9e0] sm:$0xff]
    %v351 = vld [vmem:[%s2 + $0x9e8] sm:$0xff]
    %v352 = vld [vmem:[%s2 + $0x9f0] sm:$0xff]
    %v353 = vld [vmem:[%s2 + $0x9f8] sm:$0xff]
    %v354 = vld [vmem:[%s2 + $0xa00] sm:$0xff]
    %v355 = vld [vmem:[%s2 + $0xa08] sm:$0xff]
    %v356 = vld [vmem:[%s2 + $0xa10] sm:$0xff]
    %v357 = vld [vmem:[%s2 + $0xa18] sm:$0xff]
    %v358 = vld [vmem:[%s2 + $0xa20] sm:$0xff]
    %v359 = vld [vmem:[%s2 + $0xa28] sm:$0xff]
    %v360 = vld [vmem:[%s2 + $0xa30] sm:$0xff]
    %v361 = vld [vmem:[%s2 + $0xa38] sm:$0xff]
    %v362 = vld [vmem:[%s2 + $0xa40] sm:$0xff]
    %v363 = vld [vmem:[%s2 + $0xa48] sm:$0xff]
    %v364 = vld [vmem:[%s2 + $0xa50] sm:$0xff]
    %v365 = vld [vmem:[%s2 + $0xa58] sm:$0xff]
    %v366 = vld [vmem:[%s2 + $0xa60] sm:$0xff]
    %v367 = vld [vmem:[%s2 + $0xa68] sm:$0xff]
    %v368 = vld [vmem:[%s2 + $0xa70] sm:$0xff]
    %v369 = vld [vmem:[%s2 + $0xa78] sm:$0xff]
    %v370 = vld [vmem:[%s2 + $0xa80] sm:$0xff]
    %v371 = vld [vmem:[%s2 + $0xa88] sm:$0xff]
    %v372 = vld [vmem:[%s2 + $0xa90] sm:$0xff]
    %v373 = vld [vmem:[%s2 + $0xa98] sm:$0xff]
    %v374 = vld [vmem:[%s2 + $0xaa0] sm:$0xff]
    %v375 = vld [vmem:[%s2 + $0xaa8] sm:$0xff]
    %v376 = vld [vmem:[%s2 + $0xab0] sm:$0xff]
    %v377 = vld [vmem:[%s2 + $0xab8] sm:$0xff]
    %v378 = vld [vmem:[%s2 + $0xac0] sm:$0xff]
    %v379 = vld [vmem:[%s2 + $0xac8] sm:$0xff]
    %v380 = vld [vmem:[%s2 + $0xad0] sm:$0xff]
    %v381 = vld [vmem:[%s2 + $0xad8] sm:$0xff]
    %v382 = vld [vmem:[%s2 + $0xae0] sm:$0xff]
    %v383 = vld [vmem:[%s2 + $0xae8] sm:$0xff]
    %v384 = vld [vmem:[%s2 + $0xaf0] sm:$0xff]
    %v385 = vld [vmem:[%s2 + $0xaf8] sm:$0xff]
    %v386 = vld [vmem:[%s2 + $0xb00] sm:$0xff]
    %v387 = vld [vmem:[%s2 + $0xb08] sm:$0xff]
    %v388 = vld [vmem:[%s2 + $0xb10] sm:$0xff]
    %v389 = vld [vmem:[%s2 + $0xb18] sm:$0xff]
    %v390 = vld [vmem:[%s2 + $0xb20] sm:$0xff]
    %v391 = vld [vmem:[%s2 + $0xb28] sm:$0xff]
    %v392 = vld [vmem:[%s2 + $0xb30] sm:$0xff]
    %v393 = vld [vmem:[%s2 + $0xb38] sm:$0xff]
    %v394 = vld [vmem:[%s2 + $0xb40] sm:$0xff]
    %v395 = vld [vmem:[%s2 + $0xb48] sm:$0xff]
    %v396 = vld [vmem:[%s2 + $0xb50] sm:$0xff]
    %v397 = vld [vmem:[%s2 + $0xb58] sm:$0xff]
    %v398 = vld [vmem:[%s2 + $0xb60] sm:$0xff]
    %v399 = vld [vmem:[%s2 + $0xb68] sm:$0xff]
    %v400 = vld [vmem:[%s2 + $0xb70] sm:$0xff]
    %v401 = vld [vmem:[%s2 + $0xb78] sm:$0xff]
    %v402 = vld [vmem:[%s2 + $0xb80] sm:$0xff]
    %v403 = vld [vmem:[%s2 + $0xb88] sm:$0xff]
    %v404 = vld [vmem:[%s2 + $0xb90] sm:$0xff]
    %v405 = vld [vmem:[%s2 + $0xb98] sm:$0xff]
    %v406 = vld [vmem:[%s2 + $0xba0] sm:$0xff]
    %v407 = vld [vmem:[%s2 + $0xba8] sm:$0xff]
    %v408 = vld [vmem:[%s2 + $0xbb0] sm:$0xff]
    %v409 = vld [vmem:[%s2 + $0xbb8] sm:$0xff]
    %v410 = vld [vmem:[%s2 + $0xbc0] sm:$0xff]
    %v411 = vld [vmem:[%s2 + $0xbc8] sm:$0xff]
    %v412 = vld [vmem:[%s2 + $0xbd0] sm:$0xff]
    %v413 = vld [vmem:[%s2 + $0xbd8] sm:$0xff]
    %v414 = vld [vmem:[%s2 + $0xbe0] sm:$0xff]
    %v415 = vld [vmem:[%s2 + $0xbe8] sm:$0xff]
    %v416 = vld [vmem:[%s2 + $0xbf0] sm:$0xff]
    %v417 = vld [vmem:[%s2 + $0xbf8] sm:$0xff]
    %v418 = vld [vmem:[%s2 + $0xc00] sm:$0xff]
    %v419 = vld [vmem:[%s2 + $0xc08] sm:$0xff]
    %v420 = vld [vmem:[%s2 + $0xc10] sm:$0xff]
    %v421 = vld [vmem:[%s2 + $0xc18] sm:$0xff]
    %v422 = vld [vmem:[%s2 + $0xc20] sm:$0xff]
    %v423 = vld [vmem:[%s2 + $0xc28] sm:$0xff]
    %v424 = vld [vmem:[%s2 + $0xc30] sm:$0xff]
    %v425 = vld [vmem:[%s2 + $0xc38] sm:$0xff]
    %v426 = vld [vmem:[%s2 + $0xc40] sm:$0xff]
    %v427 = vld [vmem:[%s2 + $0xc48] sm:$0xff]
    %v428 = vld [vmem:[%s2 + $0xc50] sm:$0xff]
    %v429 = vld [vmem:[%s2 + $0xc58] sm:$0xff]
    %v430 = vld [vmem:[%s2 + $0xc60] sm:$0xff]
    %v431 = vld [vmem:[%s2 + $0xc68] sm:$0xff]
    %v432 = vld [vmem:[%s2 + $0xc70] sm:$0xff]
    %v433 = vld [vmem:[%s2 + $0xc78] sm:$0xff]
    %v434 = vld [vmem:[%s2 + $0xc80] sm:$0xff]
    %v435 = vld [vmem:[%s2 + $0xc88] sm:$0xff]
    %v436 = vld [vmem:[%s2 + $0xc90] sm:$0xff]
    %v437 = vld [vmem:[%s2 + $0xc98] sm:$0xff]
    %v438 = vld [vmem:[%s2 + $0xca0] sm:$0xff]
    %v439 = vld [vmem:[%s2 + $0xca8] sm:$0xff]
    %v440 = vld [vmem:[%s2 + $0xcb0] sm:$0xff]
    %v441 = vld [vmem:[%s2 + $0xcb8] sm:$0xff]
    %v442 = vld [vmem:[%s2 + $0xcc0] sm:$0xff]
    %v443 = vld [vmem:[%s2 + $0xcc8] sm:$0xff]
    %v444 = vld [vmem:[%s2 + $0xcd0] sm:$0xff]
    %v445 = vld [vmem:[%s2 + $0xcd8] sm:$0xff]
    %v446 = vld [vmem:[%s2 + $0xce0] sm:$0xff]
    %v447 = vld [vmem:[%s2 + $0xce8] sm:$0xff]
    %v448 = vld [vmem:[%s2 + $0xcf0] sm:$0xff]
    %v449 = vld [vmem:[%s2 + $0xcf8] sm:$0xff]
    %v450 = vld [vmem:[%s2 + $0xd00] sm:$0xff]
    %v451 = vld [vmem:[%s2 + $0xd08] sm:$0xff]
    %v452 = vld [vmem:[%s2 + $0xd10] sm:$0xff]
    %v453 = vld [vmem:[%s2 + $0xd18] sm:$0xff]
    %v454 = vld [vmem:[%s2 + $0xd20] sm:$0xff]
    %v455 = vld [vmem:[%s2 + $0xd28] sm:$0xff]
    %v456 = vld [vmem:[%s2 + $0xd30] sm:$0xff]
    %v457 = vld [vmem:[%s2 + $0xd38] sm:$0xff]
    %v458 = vld [vmem:[%s2 + $0xd40] sm:$0xff]
    %v459 = vld [vmem:[%s2 + $0xd48] sm:$0xff]
    %v460 = vld [vmem:[%s2 + $0xd50] sm:$0xff]
    %v461 = vld [vmem:[%s2 + $0xd58] sm:$0xff]
    %v462 = vld [vmem:[%s2 + $0xd60] sm:$0xff]
    %v463 = vld [vmem:[%s2 + $0xd68] sm:$0xff]
    %v464 = vld [vmem:[%s2 + $0xd70] sm:$0xff]
    %v465 = vld [vmem:[%s2 + $0xd78] sm:$0xff]
    %v466 = vld [vmem:[%s3] sm:$0x1]
    %v468 = vlaneseq
    %v469 = vshrl.u32 %v468, 7
    %v470 = vsub.s32 0, %v469
    %v471 = vrot.slane %v466, %v470
    %v480 = vcombine.high %v27, %v27
    %v482 = vunpack.c.l.s4 1983009808
    %v483 = vunpack.c.0.s8 %v482
    %v484 = vlaneseq
    %v485 = vshrl.u32 %v484, 7
    %v486 = vsub.s32 %v483, %v485
    %v487 = vrot.slane %v27, %v486
    %v489 = vunpack.c.l.s4 1983009808
    %v490 = vunpack.c.0.s8 %v489
    %v491 = vlaneseq
    %v492 = vshrl.u32 %v491, 7
    %v493 = vsub.s32 %v490, %v492
    %v494 = vrot.slane %v480, %v493
    %v495 = vcombine.high %v487, %v487
    %v496 = vcombine.high %v494, %v494
    %v497 = vcombine.high %v28, %v28
    %v499 = vunpack.c.l.s4 1983009808
    %v500 = vunpack.c.0.s8 %v499
    %v501 = vlaneseq
    %v502 = vshrl.u32 %v501, 7
    %v503 = vsub.s32 %v500, %v502
    %v504 = vrot.slane %v28, %v503
    %v506 = vunpack.c.l.s4 1983009808
    %v507 = vunpack.c.0.s8 %v506
    %v508 = vlaneseq
    %v509 = vshrl.u32 %v508, 7
    %v510 = vsub.s32 %v507, %v509
    %v511 = vrot.slane %v497, %v510
    %v512 = vcombine.high %v504, %v504
    %v513 = vcombine.high %v511, %v511
    %v514 = vcombine.high %v29, %v29
    %v516 = vunpack.c.l.s4 1983009808
    %v517 = vunpack.c.0.s8 %v516
    %v518 = vlaneseq
    %v519 = vshrl.u32 %v518, 7
    %v520 = vsub.s32 %v517, %v519
    %v521 = vrot.slane %v29, %v520
    %v523 = vunpack.c.l.s4 1983009808
    %v524 = vunpack.c.0.s8 %v523
    %v525 = vlaneseq
    %v526 = vshrl.u32 %v525, 7
    %v527 = vsub.s32 %v524, %v526
    %v528 = vrot.slane %v514, %v527
    %v529 = vcombine.high %v521, %v521
    %v530 = vcombine.high %v528, %v528
    %v531 = vcombine.high %v30, %v30
    %v533 = vunpack.c.l.s4 1983009808
    %v534 = vunpack.c.0.s8 %v533
    %v535 = vlaneseq
    %v536 = vshrl.u32 %v535, 7
    %v537 = vsub.s32 %v534, %v536
    %v538 = vrot.slane %v30, %v537
    %v540 = vunpack.c.l.s4 1983009808
    %v541 = vunpack.c.0.s8 %v540
    %v542 = vlaneseq
    %v543 = vshrl.u32 %v542, 7
    %v544 = vsub.s32 %v541, %v543
    %v545 = vrot.slane %v531, %v544
    %v546 = vcombine.high %v538, %v538
    %v547 = vcombine.high %v545, %v545
    %v548 = vcombine.high %v31, %v31
    %v550 = vunpack.c.l.s4 1983009808
    %v551 = vunpack.c.0.s8 %v550
    %v552 = vlaneseq
    %v553 = vshrl.u32 %v552, 7
    %v554 = vsub.s32 %v551, %v553
    %v555 = vrot.slane %v31, %v554
    %v557 = vunpack.c.l.s4 1983009808
    %v558 = vunpack.c.0.s8 %v557
    %v559 = vlaneseq
    %v560 = vshrl.u32 %v559, 7
    %v561 = vsub.s32 %v558, %v560
    %v562 = vrot.slane %v548, %v561
    %v563 = vcombine.high %v555, %v555
    %v564 = vcombine.high %v562, %v562
    %v565 = vcombine.high %v32, %v32
    %v567 = vunpack.c.l.s4 1983009808
    %v568 = vunpack.c.0.s8 %v567
    %v569 = vlaneseq
    %v570 = vshrl.u32 %v569, 7
    %v571 = vsub.s32 %v568, %v570
    %v572 = vrot.slane %v32, %v571
    %v574 = vunpack.c.l.s4 1983009808
    %v575 = vunpack.c.0.s8 %v574
    %v576 = vlaneseq
    %v577 = vshrl.u32 %v576, 7
    %v578 = vsub.s32 %v575, %v577
    %v579 = vrot.slane %v565, %v578
    %v580 = vcombine.high %v572, %v572
    %v581 = vcombine.high %v579, %v579
    %v582 = vcombine.high %v33, %v33
    %v584 = vunpack.c.l.s4 1983009808
    %v585 = vunpack.c.0.s8 %v584
    %v586 = vlaneseq
    %v587 = vshrl.u32 %v586, 7
    %v588 = vsub.s32 %v585, %v587
    %v589 = vrot.slane %v33, %v588
    %v591 = vunpack.c.l.s4 1983009808
    %v592 = vunpack.c.0.s8 %v591
    %v593 = vlaneseq
    %v594 = vshrl.u32 %v593, 7
    %v595 = vsub.s32 %v592, %v594
    %v596 = vrot.slane %v582, %v595
    %v597 = vcombine.high %v589, %v589
    %625 = vmatprep.subr.mxu0 0.0
    %626 = vmatpush1.msra.mxu0 %v49
    %627 = vmatprep.subr.mxu0 0.0
    %628 = vmatpush1.msra.mxu0 %v48
    %629 = vmatprep.subr.mxu0 0.0
    %630 = vmatpush1.msra.mxu0 %v47
    %631 = vmatprep.subr.mxu0 0.0
    %632 = vmatpush1.msra.mxu0 %v46
    %633 = vmatprep.subr.mxu0 0.0
    %634 = vmatpush1.msra.mxu0 %v45
    %635 = vmatprep.subr.mxu0 0.0
    %636 = vmatpush1.msra.mxu0 %v44
    %637 = vmatprep.subr.mxu0 0.0
    %638 = vmatpush1.msra.mxu0 %v43
    %639 = vmatprep.subr.mxu0 0.0
    %640 = vmatpush1.msra.mxu0 %v42
    %641 = vmatprep.subr.mxu0 0.0
    %642 = vmatpush1.msra.mxu0 %v41
    %643 = vmatprep.subr.mxu0 0.0
    %644 = vmatpush1.msra.mxu0 %v40
    %645 = vmatprep.subr.mxu0 0.0
    %646 = vmatpush1.msra.mxu0 %v39
    %647 = vmatprep.subr.mxu0 0.0
    %648 = vmatpush1.msra.mxu0 %v38
    %649 = vmatprep.subr.mxu0 0.0
    %650 = vmatpush1.msra.mxu0 %v37
    %651 = vmatprep.subr.mxu0 0.0
    %652 = vmatpush1.msra.mxu0 %v36
    %653 = vmatprep.subr.mxu0 0.0
    %654 = vmatpush1.msra.mxu0 %v35
    %655 = vmatprep.subr.mxu0 0.0
    %656 = vmatpush1.msra.mxu0 %v34
    %657 = vmatprep.subr.mxu0 0.0
    %658 = vmatpush2.msra.mxu0 %v65
    %659 = vmatprep.subr.mxu0 0.0
    %660 = vmatpush2.msra.mxu0 %v64
    %661 = vmatprep.subr.mxu0 0.0
    %662 = vmatpush2.msra.mxu0 %v63
    %663 = vmatprep.subr.mxu0 0.0
    %664 = vmatpush2.msra.mxu0 %v62
    %665 = vmatprep.subr.mxu0 0.0
    %666 = vmatpush2.msra.mxu0 %v61
    %667 = vmatprep.subr.mxu0 0.0
    %668 = vmatpush2.msra.mxu0 %v60
    %669 = vmatprep.subr.mxu0 0.0
    %670 = vmatpush2.msra.mxu0 %v59
    %671 = vmatprep.subr.mxu0 0.0
    %672 = vmatpush2.msra.mxu0 %v58
    %673 = vmatprep.subr.mxu0 0.0
    %674 = vmatpush2.msra.mxu0 %v57
    %675 = vmatprep.subr.mxu0 0.0
    %676 = vmatpush2.msra.mxu0 %v56
    %677 = vmatprep.subr.mxu0 0.0
    %678 = vmatpush2.msra.mxu0 %v55
    %679 = vmatprep.subr.mxu0 0.0
    %680 = vmatpush2.msra.mxu0 %v54
    %681 = vmatprep.subr.mxu0 0.0
    %682 = vmatpush2.msra.mxu0 %v53
    %683 = vmatprep.subr.mxu0 0.0
    %684 = vmatpush2.msra.mxu0 %v52
    %685 = vmatprep.subr.mxu0 0.0
    %686 = vmatpush2.msra.mxu0 %v51
    %687 = vmatprep.subr.mxu0 0.0
    %688 = vmatpush2.msra.mxu0 %v50
    %689 = vmatprep.mubr.f32.mxu0 %v495
    %690 = vmatmul.mubr.f32.gmra.mxu0 %v487
    %v691 = vpop.f32.mrf.mxu0
    %v692 = vadd.f32 %v471, %v691
    %v693 = vpop.f32.mrf.mxu0
    %694 = vdwg.mxu0
    %695 = vmatprep.subr.mxu0 0.0
    %696 = vmatpush1.msra.mxu0 %v81
    %697 = vmatprep.subr.mxu0 0.0
    %698 = vmatpush1.msra.mxu0 %v80
    %699 = vmatprep.subr.mxu0 0.0
    %700 = vmatpush1.msra.mxu0 %v79
    %701 = vmatprep.subr.mxu0 0.0
    %702 = vmatpush1.msra.mxu0 %v78
    %703 = vmatprep.subr.mxu0 0.0
    %704 = vmatpush1.msra.mxu0 %v77
    %705 = vmatprep.subr.mxu0 0.0
    %706 = vmatpush1.msra.mxu0 %v76
    %707 = vmatprep.subr.mxu0 0.0
    %708 = vmatpush1.msra.mxu0 %v75
    %709 = vmatprep.subr.mxu0 0.0
    %710 = vmatpush1.msra.mxu0 %v74
    %711 = vmatprep.subr.mxu0 0.0
    %712 = vmatpush1.msra.mxu0 %v73
    %713 = vmatprep.subr.mxu0 0.0
    %714 = vmatpush1.msra.mxu0 %v72
    %715 = vmatprep.subr.mxu0 0.0
    %716 = vmatpush1.msra.mxu0 %v71
    %717 = vmatprep.subr.mxu0 0.0
    %718 = vmatpush1.msra.mxu0 %v70
    %719 = vmatprep.subr.mxu0 0.0
    %720 = vmatpush1.msra.mxu0 %v69
    %721 = vmatprep.subr.mxu0 0.0
    %722 = vmatpush1.msra.mxu0 %v68
    %723 = vmatprep.subr.mxu0 0.0
    %724 = vmatpush1.msra.mxu0 %v67
    %725 = vmatprep.subr.mxu0 0.0
    %726 = vmatpush1.msra.mxu0 %v66
    %727 = vmatprep.subr.mxu0 0.0
    %728 = vmatpush2.msra.mxu0 %v97
    %729 = vmatprep.subr.mxu0 0.0
    %730 = vmatpush2.msra.mxu0 %v96
    %731 = vmatprep.subr.mxu0 0.0
    %732 = vmatpush2.msra.mxu0 %v95
    %733 = vmatprep.subr.mxu0 0.0
    %734 = vmatpush2.msra.mxu0 %v94
    %735 = vmatprep.subr.mxu0 0.0
    %736 = vmatpush2.msra.mxu0 %v93
    %737 = vmatprep.subr.mxu0 0.0
    %738 = vmatpush2.msra.mxu0 %v92
    %739 = vmatprep.subr.mxu0 0.0
    %740 = vmatpush2.msra.mxu0 %v91
    %741 = vmatprep.subr.mxu0 0.0
    %742 = vmatpush2.msra.mxu0 %v90
    %743 = vmatprep.subr.mxu0 0.0
    %744 = vmatpush2.msra.mxu0 %v89
    %745 = vmatprep.subr.mxu0 0.0
    %746 = vmatpush2.msra.mxu0 %v88
    %747 = vmatprep.subr.mxu0 0.0
    %748 = vmatpush2.msra.mxu0 %v87
    %749 = vmatprep.subr.mxu0 0.0
    %750 = vmatpush2.msra.mxu0 %v86
    %751 = vmatprep.subr.mxu0 0.0
    %752 = vmatpush2.msra.mxu0 %v85
    %753 = vmatprep.subr.mxu0 0.0
    %754 = vmatpush2.msra.mxu0 %v84
    %755 = vmatprep.subr.mxu0 0.0
    %756 = vmatpush2.msra.mxu0 %v83
    %757 = vmatprep.subr.mxu0 0.0
    %758 = vmatpush2.msra.mxu0 %v82
    %759 = vmatprep.mubr.f32.mxu0 %v496
    %760 = vmatmul.mubr.f32.gmra.mxu0 %v494
    %v761 = vpop.f32.mrf.mxu0
    %v762 = vadd.f32 %v692, %v761
    %v763 = vpop.f32.mrf.mxu0
    %764 = vdwg.mxu0
    %765 = vmatprep.subr.mxu0 0.0
    %766 = vmatpush1.msra.mxu0 %v113
    %767 = vmatprep.subr.mxu0 0.0
    %768 = vmatpush1.msra.mxu0 %v112
    %769 = vmatprep.subr.mxu0 0.0
    %770 = vmatpush1.msra.mxu0 %v111
    %771 = vmatprep.subr.mxu0 0.0
    %772 = vmatpush1.msra.mxu0 %v110
    %773 = vmatprep.subr.mxu0 0.0
    %774 = vmatpush1.msra.mxu0 %v109
    %775 = vmatprep.subr.mxu0 0.0
    %776 = vmatpush1.msra.mxu0 %v108
    %777 = vmatprep.subr.mxu0 0.0
    %778 = vmatpush1.msra.mxu0 %v107
    %779 = vmatprep.subr.mxu0 0.0
    %780 = vmatpush1.msra.mxu0 %v106
    %781 = vmatprep.subr.mxu0 0.0
    %782 = vmatpush1.msra.mxu0 %v105
    %783 = vmatprep.subr.mxu0 0.0
    %784 = vmatpush1.msra.mxu0 %v104
    %785 = vmatprep.subr.mxu0 0.0
    %786 = vmatpush1.msra.mxu0 %v103
    %787 = vmatprep.subr.mxu0 0.0
    %788 = vmatpush1.msra.mxu0 %v102
    %789 = vmatprep.subr.mxu0 0.0
    %790 = vmatpush1.msra.mxu0 %v101
    %791 = vmatprep.subr.mxu0 0.0
    %792 = vmatpush1.msra.mxu0 %v100
    %793 = vmatprep.subr.mxu0 0.0
    %794 = vmatpush1.msra.mxu0 %v99
    %795 = vmatprep.subr.mxu0 0.0
    %796 = vmatpush1.msra.mxu0 %v98
    %797 = vmatprep.subr.mxu0 0.0
    %798 = vmatpush2.msra.mxu0 %v129
    %799 = vmatprep.subr.mxu0 0.0
    %800 = vmatpush2.msra.mxu0 %v128
    %801 = vmatprep.subr.mxu0 0.0
    %802 = vmatpush2.msra.mxu0 %v127
    %803 = vmatprep.subr.mxu0 0.0
    %804 = vmatpush2.msra.mxu0 %v126
    %805 = vmatprep.subr.mxu0 0.0
    %806 = vmatpush2.msra.mxu0 %v125
    %807 = vmatprep.subr.mxu0 0.0
    %808 = vmatpush2.msra.mxu0 %v124
    %809 = vmatprep.subr.mxu0 0.0
    %810 = vmatpush2.msra.mxu0 %v123
    %811 = vmatprep.subr.mxu0 0.0
    %812 = vmatpush2.msra.mxu0 %v122
    %813 = vmatprep.subr.mxu0 0.0
    %814 = vmatpush2.msra.mxu0 %v121
    %815 = vmatprep.subr.mxu0 0.0
    %816 = vmatpush2.msra.mxu0 %v120
    %817 = vmatprep.subr.mxu0 0.0
    %818 = vmatpush2.msra.mxu0 %v119
    %819 = vmatprep.subr.mxu0 0.0
    %820 = vmatpush2.msra.mxu0 %v118
    %821 = vmatprep.subr.mxu0 0.0
    %822 = vmatpush2.msra.mxu0 %v117
    %823 = vmatprep.subr.mxu0 0.0
    %824 = vmatpush2.msra.mxu0 %v116
    %825 = vmatprep.subr.mxu0 0.0
    %826 = vmatpush2.msra.mxu0 %v115
    %827 = vmatprep.subr.mxu0 0.0
    %828 = vmatpush2.msra.mxu0 %v114
    %829 = vmatprep.mubr.f32.mxu0 %v512
    %830 = vmatmul.mubr.f32.gmra.mxu0 %v504
    %v831 = vpop.f32.mrf.mxu0
    %v832 = vadd.f32 %v762, %v831
    %v833 = vpop.f32.mrf.mxu0
    %834 = vdwg.mxu0
    %835 = vmatprep.subr.mxu0 0.0
    %836 = vmatpush1.msra.mxu0 %v145
    %837 = vmatprep.subr.mxu0 0.0
    %838 = vmatpush1.msra.mxu0 %v144
    %839 = vmatprep.subr.mxu0 0.0
    %840 = vmatpush1.msra.mxu0 %v143
    %841 = vmatprep.subr.mxu0 0.0
    %842 = vmatpush1.msra.mxu0 %v142
    %843 = vmatprep.subr.mxu0 0.0
    %844 = vmatpush1.msra.mxu0 %v141
    %845 = vmatprep.subr.mxu0 0.0
    %846 = vmatpush1.msra.mxu0 %v140
    %847 = vmatprep.subr.mxu0 0.0
    %848 = vmatpush1.msra.mxu0 %v139
    %849 = vmatprep.subr.mxu0 0.0
    %850 = vmatpush1.msra.mxu0 %v138
    %851 = vmatprep.subr.mxu0 0.0
    %852 = vmatpush1.msra.mxu0 %v137
    %853 = vmatprep.subr.mxu0 0.0
    %854 = vmatpush1.msra.mxu0 %v136
    %855 = vmatprep.subr.mxu0 0.0
    %856 = vmatpush1.msra.mxu0 %v135
    %857 = vmatprep.subr.mxu0 0.0
    %858 = vmatpush1.msra.mxu0 %v134
    %859 = vmatprep.subr.mxu0 0.0
    %860 = vmatpush1.msra.mxu0 %v133
    %861 = vmatprep.subr.mxu0 0.0
    %862 = vmatpush1.msra.mxu0 %v132
    %863 = vmatprep.subr.mxu0 0.0
    %864 = vmatpush1.msra.mxu0 %v131
    %865 = vmatprep.subr.mxu0 0.0
    %866 = vmatpush1.msra.mxu0 %v130
    %867 = vmatprep.subr.mxu0 0.0
    %868 = vmatpush2.msra.mxu0 %v161
    %869 = vmatprep.subr.mxu0 0.0
    %870 = vmatpush2.msra.mxu0 %v160
    %871 = vmatprep.subr.mxu0 0.0
    %872 = vmatpush2.msra.mxu0 %v159
    %873 = vmatprep.subr.mxu0 0.0
    %874 = vmatpush2.msra.mxu0 %v158
    %875 = vmatprep.subr.mxu0 0.0
    %876 = vmatpush2.msra.mxu0 %v157
    %877 = vmatprep.subr.mxu0 0.0
    %878 = vmatpush2.msra.mxu0 %v156
    %879 = vmatprep.subr.mxu0 0.0
    %880 = vmatpush2.msra.mxu0 %v155
    %881 = vmatprep.subr.mxu0 0.0
    %882 = vmatpush2.msra.mxu0 %v154
    %883 = vmatprep.subr.mxu0 0.0
    %884 = vmatpush2.msra.mxu0 %v153
    %885 = vmatprep.subr.mxu0 0.0
    %886 = vmatpush2.msra.mxu0 %v152
    %887 = vmatprep.subr.mxu0 0.0
    %888 = vmatpush2.msra.mxu0 %v151
    %889 = vmatprep.subr.mxu0 0.0
    %890 = vmatpush2.msra.mxu0 %v150
    %891 = vmatprep.subr.mxu0 0.0
    %892 = vmatpush2.msra.mxu0 %v149
    %893 = vmatprep.subr.mxu0 0.0
    %894 = vmatpush2.msra.mxu0 %v148
    %895 = vmatprep.subr.mxu0 0.0
    %896 = vmatpush2.msra.mxu0 %v147
    %897 = vmatprep.subr.mxu0 0.0
    %898 = vmatpush2.msra.mxu0 %v146
    %899 = vmatprep.mubr.f32.mxu0 %v513
    %900 = vmatmul.mubr.f32.gmra.mxu0 %v511
    %v901 = vpop.f32.mrf.mxu0
    %v902 = vadd.f32 %v832, %v901
    %v903 = vpop.f32.mrf.mxu0
    %904 = vdwg.mxu0
    %905 = vmatprep.subr.mxu0 0.0
    %906 = vmatpush1.msra.mxu0 %v177
    %907 = vmatprep.subr.mxu0 0.0
    %908 = vmatpush1.msra.mxu0 %v176
    %909 = vmatprep.subr.mxu0 0.0
    %910 = vmatpush1.msra.mxu0 %v175
    %911 = vmatprep.subr.mxu0 0.0
    %912 = vmatpush1.msra.mxu0 %v174
    %913 = vmatprep.subr.mxu0 0.0
    %914 = vmatpush1.msra.mxu0 %v173
    %915 = vmatprep.subr.mxu0 0.0
    %916 = vmatpush1.msra.mxu0 %v172
    %917 = vmatprep.subr.mxu0 0.0
    %918 = vmatpush1.msra.mxu0 %v171
    %919 = vmatprep.subr.mxu0 0.0
    %920 = vmatpush1.msra.mxu0 %v170
    %921 = vmatprep.subr.mxu0 0.0
    %922 = vmatpush1.msra.mxu0 %v169
    %923 = vmatprep.subr.mxu0 0.0
    %924 = vmatpush1.msra.mxu0 %v168
    %925 = vmatprep.subr.mxu0 0.0
    %926 = vmatpush1.msra.mxu0 %v167
    %927 = vmatprep.subr.mxu0 0.0
    %928 = vmatpush1.msra.mxu0 %v166
    %929 = vmatprep.subr.mxu0 0.0
    %930 = vmatpush1.msra.mxu0 %v165
    %931 = vmatprep.subr.mxu0 0.0
    %932 = vmatpush1.msra.mxu0 %v164
    %933 = vmatprep.subr.mxu0 0.0
    %934 = vmatpush1.msra.mxu0 %v163
    %935 = vmatprep.subr.mxu0 0.0
    %936 = vmatpush1.msra.mxu0 %v162
    %937 = vmatprep.subr.mxu0 0.0
    %938 = vmatpush2.msra.mxu0 %v193
    %939 = vmatprep.subr.mxu0 0.0
    %940 = vmatpush2.msra.mxu0 %v192
    %941 = vmatprep.subr.mxu0 0.0
    %942 = vmatpush2.msra.mxu0 %v191
    %943 = vmatprep.subr.mxu0 0.0
    %944 = vmatpush2.msra.mxu0 %v190
    %945 = vmatprep.subr.mxu0 0.0
    %946 = vmatpush2.msra.mxu0 %v189
    %947 = vmatprep.subr.mxu0 0.0
    %948 = vmatpush2.msra.mxu0 %v188
    %949 = vmatprep.subr.mxu0 0.0
    %950 = vmatpush2.msra.mxu0 %v187
    %951 = vmatprep.subr.mxu0 0.0
    %952 = vmatpush2.msra.mxu0 %v186
    %953 = vmatprep.subr.mxu0 0.0
    %954 = vmatpush2.msra.mxu0 %v185
    %955 = vmatprep.subr.mxu0 0.0
    %956 = vmatpush2.msra.mxu0 %v184
    %957 = vmatprep.subr.mxu0 0.0
    %958 = vmatpush2.msra.mxu0 %v183
    %959 = vmatprep.subr.mxu0 0.0
    %960 = vmatpush2.msra.mxu0 %v182
    %961 = vmatprep.subr.mxu0 0.0
    %962 = vmatpush2.msra.mxu0 %v181
    %963 = vmatprep.subr.mxu0 0.0
    %964 = vmatpush2.msra.mxu0 %v180
    %965 = vmatprep.subr.mxu0 0.0
    %966 = vmatpush2.msra.mxu0 %v179
    %967 = vmatprep.subr.mxu0 0.0
    %968 = vmatpush2.msra.mxu0 %v178
    %969 = vmatprep.mubr.f32.mxu0 %v529
    %970 = vmatmul.mubr.f32.gmra.mxu0 %v521
    %v971 = vpop.f32.mrf.mxu0
    %v972 = vadd.f32 %v902, %v971
    %v973 = vpop.f32.mrf.mxu0
    %974 = vdwg.mxu0
    %975 = vmatprep.subr.mxu0 0.0
    %976 = vmatpush1.msra.mxu0 %v209
    %977 = vmatprep.subr.mxu0 0.0
    %978 = vmatpush1.msra.mxu0 %v208
    %979 = vmatprep.subr.mxu0 0.0
    %980 = vmatpush1.msra.mxu0 %v207
    %981 = vmatprep.subr.mxu0 0.0
    %982 = vmatpush1.msra.mxu0 %v206
    %983 = vmatprep.subr.mxu0 0.0
    %984 = vmatpush1.msra.mxu0 %v205
    %985 = vmatprep.subr.mxu0 0.0
    %986 = vmatpush1.msra.mxu0 %v204
    %987 = vmatprep.subr.mxu0 0.0
    %988 = vmatpush1.msra.mxu0 %v203
    %989 = vmatprep.subr.mxu0 0.0
    %990 = vmatpush1.msra.mxu0 %v202
    %991 = vmatprep.subr.mxu0 0.0
    %992 = vmatpush1.msra.mxu0 %v201
    %993 = vmatprep.subr.mxu0 0.0
    %994 = vmatpush1.msra.mxu0 %v200
    %995 = vmatprep.subr.mxu0 0.0
    %996 = vmatpush1.msra.mxu0 %v199
    %997 = vmatprep.subr.mxu0 0.0
    %998 = vmatpush1.msra.mxu0 %v198
    %999 = vmatprep.subr.mxu0 0.0
    %1000 = vmatpush1.msra.mxu0 %v197
    %1001 = vmatprep.subr.mxu0 0.0
    %1002 = vmatpush1.msra.mxu0 %v196
    %1003 = vmatprep.subr.mxu0 0.0
    %1004 = vmatpush1.msra.mxu0 %v195
    %1005 = vmatprep.subr.mxu0 0.0
    %1006 = vmatpush1.msra.mxu0 %v194
    %1007 = vmatprep.subr.mxu0 0.0
    %1008 = vmatpush2.msra.mxu0 %v225
    %1009 = vmatprep.subr.mxu0 0.0
    %1010 = vmatpush2.msra.mxu0 %v224
    %1011 = vmatprep.subr.mxu0 0.0
    %1012 = vmatpush2.msra.mxu0 %v223
    %1013 = vmatprep.subr.mxu0 0.0
    %1014 = vmatpush2.msra.mxu0 %v222
    %1015 = vmatprep.subr.mxu0 0.0
    %1016 = vmatpush2.msra.mxu0 %v221
    %1017 = vmatprep.subr.mxu0 0.0
    %1018 = vmatpush2.msra.mxu0 %v220
    %1019 = vmatprep.subr.mxu0 0.0
    %1020 = vmatpush2.msra.mxu0 %v219
    %1021 = vmatprep.subr.mxu0 0.0
    %1022 = vmatpush2.msra.mxu0 %v218
    %1023 = vmatprep.subr.mxu0 0.0
    %1024 = vmatpush2.msra.mxu0 %v217
    %1025 = vmatprep.subr.mxu0 0.0
    %1026 = vmatpush2.msra.mxu0 %v216
    %1027 = vmatprep.subr.mxu0 0.0
    %1028 = vmatpush2.msra.mxu0 %v215
    %1029 = vmatprep.subr.mxu0 0.0
    %1030 = vmatpush2.msra.mxu0 %v214
    %1031 = vmatprep.subr.mxu0 0.0
    %1032 = vmatpush2.msra.mxu0 %v213
    %1033 = vmatprep.subr.mxu0 0.0
    %1034 = vmatpush2.msra.mxu0 %v212
    %1035 = vmatprep.subr.mxu0 0.0
    %1036 = vmatpush2.msra.mxu0 %v211
    %1037 = vmatprep.subr.mxu0 0.0
    %1038 = vmatpush2.msra.mxu0 %v210
    %1039 = vmatprep.mubr.f32.mxu0 %v530
    %1040 = vmatmul.mubr.f32.gmra.mxu0 %v528
    %v1041 = vpop.f32.mrf.mxu0
    %v1042 = vadd.f32 %v972, %v1041
    %v1043 = vpop.f32.mrf.mxu0
    %1044 = vdwg.mxu0
    %1045 = vmatprep.subr.mxu0 0.0
    %1046 = vmatpush1.msra.mxu0 %v241
    %1047 = vmatprep.subr.mxu0 0.0
    %1048 = vmatpush1.msra.mxu0 %v240
    %1049 = vmatprep.subr.mxu0 0.0
    %1050 = vmatpush1.msra.mxu0 %v239
    %1051 = vmatprep.subr.mxu0 0.0
    %1052 = vmatpush1.msra.mxu0 %v238
    %1053 = vmatprep.subr.mxu0 0.0
    %1054 = vmatpush1.msra.mxu0 %v237
    %1055 = vmatprep.subr.mxu0 0.0
    %1056 = vmatpush1.msra.mxu0 %v236
    %1057 = vmatprep.subr.mxu0 0.0
    %1058 = vmatpush1.msra.mxu0 %v235
    %1059 = vmatprep.subr.mxu0 0.0
    %1060 = vmatpush1.msra.mxu0 %v234
    %1061 = vmatprep.subr.mxu0 0.0
    %1062 = vmatpush1.msra.mxu0 %v233
    %1063 = vmatprep.subr.mxu0 0.0
    %1064 = vmatpush1.msra.mxu0 %v232
    %1065 = vmatprep.subr.mxu0 0.0
    %1066 = vmatpush1.msra.mxu0 %v231
    %1067 = vmatprep.subr.mxu0 0.0
    %1068 = vmatpush1.msra.mxu0 %v230
    %1069 = vmatprep.subr.mxu0 0.0
    %1070 = vmatpush1.msra.mxu0 %v229
    %1071 = vmatprep.subr.mxu0 0.0
    %1072 = vmatpush1.msra.mxu0 %v228
    %1073 = vmatprep.subr.mxu0 0.0
    %1074 = vmatpush1.msra.mxu0 %v227
    %1075 = vmatprep.subr.mxu0 0.0
    %1076 = vmatpush1.msra.mxu0 %v226
    %1077 = vmatprep.subr.mxu0 0.0
    %1078 = vmatpush2.msra.mxu0 %v257
    %1079 = vmatprep.subr.mxu0 0.0
    %1080 = vmatpush2.msra.mxu0 %v256
    %1081 = vmatprep.subr.mxu0 0.0
    %1082 = vmatpush2.msra.mxu0 %v255
    %1083 = vmatprep.subr.mxu0 0.0
    %1084 = vmatpush2.msra.mxu0 %v254
    %1085 = vmatprep.subr.mxu0 0.0
    %1086 = vmatpush2.msra.mxu0 %v253
    %1087 = vmatprep.subr.mxu0 0.0
    %1088 = vmatpush2.msra.mxu0 %v252
    %1089 = vmatprep.subr.mxu0 0.0
    %1090 = vmatpush2.msra.mxu0 %v251
    %1091 = vmatprep.subr.mxu0 0.0
    %1092 = vmatpush2.msra.mxu0 %v250
    %1093 = vmatprep.subr.mxu0 0.0
    %1094 = vmatpush2.msra.mxu0 %v249
    %1095 = vmatprep.subr.mxu0 0.0
    %1096 = vmatpush2.msra.mxu0 %v248
    %1097 = vmatprep.subr.mxu0 0.0
    %1098 = vmatpush2.msra.mxu0 %v247
    %1099 = vmatprep.subr.mxu0 0.0
    %1100 = vmatpush2.msra.mxu0 %v246
    %1101 = vmatprep.subr.mxu0 0.0
    %1102 = vmatpush2.msra.mxu0 %v245
    %1103 = vmatprep.subr.mxu0 0.0
    %1104 = vmatpush2.msra.mxu0 %v244
    %1105 = vmatprep.subr.mxu0 0.0
    %1106 = vmatpush2.msra.mxu0 %v243
    %1107 = vmatprep.subr.mxu0 0.0
    %1108 = vmatpush2.msra.mxu0 %v242
    %1109 = vmatprep.mubr.f32.mxu0 %v546
    %1110 = vmatmul.mubr.f32.gmra.mxu0 %v538
    %v1111 = vpop.f32.mrf.mxu0
    %v1112 = vadd.f32 %v1042, %v1111
    %v1113 = vpop.f32.mrf.mxu0
    %1114 = vdwg.mxu0
    %1115 = vmatprep.subr.mxu0 0.0
    %1116 = vmatpush1.msra.mxu0 %v273
    %1117 = vmatprep.subr.mxu0 0.0
    %1118 = vmatpush1.msra.mxu0 %v272
    %1119 = vmatprep.subr.mxu0 0.0
    %1120 = vmatpush1.msra.mxu0 %v271
    %1121 = vmatprep.subr.mxu0 0.0
    %1122 = vmatpush1.msra.mxu0 %v270
    %1123 = vmatprep.subr.mxu0 0.0
    %1124 = vmatpush1.msra.mxu0 %v269
    %1125 = vmatprep.subr.mxu0 0.0
    %1126 = vmatpush1.msra.mxu0 %v268
    %1127 = vmatprep.subr.mxu0 0.0
    %1128 = vmatpush1.msra.mxu0 %v267
    %1129 = vmatprep.subr.mxu0 0.0
    %1130 = vmatpush1.msra.mxu0 %v266
    %1131 = vmatprep.subr.mxu0 0.0
    %1132 = vmatpush1.msra.mxu0 %v265
    %1133 = vmatprep.subr.mxu0 0.0
    %1134 = vmatpush1.msra.mxu0 %v264
    %1135 = vmatprep.subr.mxu0 0.0
    %1136 = vmatpush1.msra.mxu0 %v263
    %1137 = vmatprep.subr.mxu0 0.0
    %1138 = vmatpush1.msra.mxu0 %v262
    %1139 = vmatprep.subr.mxu0 0.0
    %1140 = vmatpush1.msra.mxu0 %v261
    %1141 = vmatprep.subr.mxu0 0.0
    %1142 = vmatpush1.msra.mxu0 %v260
    %1143 = vmatprep.subr.mxu0 0.0
    %1144 = vmatpush1.msra.mxu0 %v259
    %1145 = vmatprep.subr.mxu0 0.0
    %1146 = vmatpush1.msra.mxu0 %v258
    %1147 = vmatprep.subr.mxu0 0.0
    %1148 = vmatpush2.msra.mxu0 %v289
    %1149 = vmatprep.subr.mxu0 0.0
    %1150 = vmatpush2.msra.mxu0 %v288
    %1151 = vmatprep.subr.mxu0 0.0
    %1152 = vmatpush2.msra.mxu0 %v287
    %1153 = vmatprep.subr.mxu0 0.0
    %1154 = vmatpush2.msra.mxu0 %v286
    %1155 = vmatprep.subr.mxu0 0.0
    %1156 = vmatpush2.msra.mxu0 %v285
    %1157 = vmatprep.subr.mxu0 0.0
    %1158 = vmatpush2.msra.mxu0 %v284
    %1159 = vmatprep.subr.mxu0 0.0
    %1160 = vmatpush2.msra.mxu0 %v283
    %1161 = vmatprep.subr.mxu0 0.0
    %1162 = vmatpush2.msra.mxu0 %v282
    %1163 = vmatprep.subr.mxu0 0.0
    %1164 = vmatpush2.msra.mxu0 %v281
    %1165 = vmatprep.subr.mxu0 0.0
    %1166 = vmatpush2.msra.mxu0 %v280
    %1167 = vmatprep.subr.mxu0 0.0
    %1168 = vmatpush2.msra.mxu0 %v279
    %1169 = vmatprep.subr.mxu0 0.0
    %1170 = vmatpush2.msra.mxu0 %v278
    %1171 = vmatprep.subr.mxu0 0.0
    %1172 = vmatpush2.msra.mxu0 %v277
    %1173 = vmatprep.subr.mxu0 0.0
    %1174 = vmatpush2.msra.mxu0 %v276
    %1175 = vmatprep.subr.mxu0 0.0
    %1176 = vmatpush2.msra.mxu0 %v275
    %1177 = vmatprep.subr.mxu0 0.0
    %1178 = vmatpush2.msra.mxu0 %v274
    %1179 = vmatprep.mubr.f32.mxu0 %v547
    %1180 = vmatmul.mubr.f32.gmra.mxu0 %v545
    %v1181 = vpop.f32.mrf.mxu0
    %v1182 = vadd.f32 %v1112, %v1181
    %v1183 = vpop.f32.mrf.mxu0
    %1184 = vdwg.mxu0
    %1185 = vmatprep.subr.mxu0 0.0
    %1186 = vmatpush1.msra.mxu0 %v305
    %1187 = vmatprep.subr.mxu0 0.0
    %1188 = vmatpush1.msra.mxu0 %v304
    %1189 = vmatprep.subr.mxu0 0.0
    %1190 = vmatpush1.msra.mxu0 %v303
    %1191 = vmatprep.subr.mxu0 0.0
    %1192 = vmatpush1.msra.mxu0 %v302
    %1193 = vmatprep.subr.mxu0 0.0
    %1194 = vmatpush1.msra.mxu0 %v301
    %1195 = vmatprep.subr.mxu0 0.0
    %1196 = vmatpush1.msra.mxu0 %v300
    %1197 = vmatprep.subr.mxu0 0.0
    %1198 = vmatpush1.msra.mxu0 %v299
    %1199 = vmatprep.subr.mxu0 0.0
    %1200 = vmatpush1.msra.mxu0 %v298
    %1201 = vmatprep.subr.mxu0 0.0
    %1202 = vmatpush1.msra.mxu0 %v297
    %1203 = vmatprep.subr.mxu0 0.0
    %1204 = vmatpush1.msra.mxu0 %v296
    %1205 = vmatprep.subr.mxu0 0.0
    %1206 = vmatpush1.msra.mxu0 %v295
    %1207 = vmatprep.subr.mxu0 0.0
    %1208 = vmatpush1.msra.mxu0 %v294
    %1209 = vmatprep.subr.mxu0 0.0
    %1210 = vmatpush1.msra.mxu0 %v293
    %1211 = vmatprep.subr.mxu0 0.0
    %1212 = vmatpush1.msra.mxu0 %v292
    %1213 = vmatprep.subr.mxu0 0.0
    %1214 = vmatpush1.msra.mxu0 %v291
    %1215 = vmatprep.subr.mxu0 0.0
    %1216 = vmatpush1.msra.mxu0 %v290
    %1217 = vmatprep.subr.mxu0 0.0
    %1218 = vmatpush2.msra.mxu0 %v321
    %1219 = vmatprep.subr.mxu0 0.0
    %1220 = vmatpush2.msra.mxu0 %v320
    %1221 = vmatprep.subr.mxu0 0.0
    %1222 = vmatpush2.msra.mxu0 %v319
    %1223 = vmatprep.subr.mxu0 0.0
    %1224 = vmatpush2.msra.mxu0 %v318
    %1225 = vmatprep.subr.mxu0 0.0
    %1226 = vmatpush2.msra.mxu0 %v317
    %1227 = vmatprep.subr.mxu0 0.0
    %1228 = vmatpush2.msra.mxu0 %v316
    %1229 = vmatprep.subr.mxu0 0.0
    %1230 = vmatpush2.msra.mxu0 %v315
    %1231 = vmatprep.subr.mxu0 0.0
    %1232 = vmatpush2.msra.mxu0 %v314
    %1233 = vmatprep.subr.mxu0 0.0
    %1234 = vmatpush2.msra.mxu0 %v313
    %1235 = vmatprep.subr.mxu0 0.0
    %1236 = vmatpush2.msra.mxu0 %v312
    %1237 = vmatprep.subr.mxu0 0.0
    %1238 = vmatpush2.msra.mxu0 %v311
    %1239 = vmatprep.subr.mxu0 0.0
    %1240 = vmatpush2.msra.mxu0 %v310
    %1241 = vmatprep.subr.mxu0 0.0
    %1242 = vmatpush2.msra.mxu0 %v309
    %1243 = vmatprep.subr.mxu0 0.0
    %1244 = vmatpush2.msra.mxu0 %v308
    %1245 = vmatprep.subr.mxu0 0.0
    %1246 = vmatpush2.msra.mxu0 %v307
    %1247 = vmatprep.subr.mxu0 0.0
    %1248 = vmatpush2.msra.mxu0 %v306
    %1249 = vmatprep.mubr.f32.mxu0 %v563
    %1250 = vmatmul.mubr.f32.gmra.mxu0 %v555
    %v1251 = vpop.f32.mrf.mxu0
    %v1252 = vadd.f32 %v1182, %v1251
    %v1253 = vpop.f32.mrf.mxu0
    %1254 = vdwg.mxu0
    %1255 = vmatprep.subr.mxu0 0.0
    %1256 = vmatpush1.msra.mxu0 %v337
    %1257 = vmatprep.subr.mxu0 0.0
    %1258 = vmatpush1.msra.mxu0 %v336
    %1259 = vmatprep.subr.mxu0 0.0
    %1260 = vmatpush1.msra.mxu0 %v335
    %1261 = vmatprep.subr.mxu0 0.0
    %1262 = vmatpush1.msra.mxu0 %v334
    %1263 = vmatprep.subr.mxu0 0.0
    %1264 = vmatpush1.msra.mxu0 %v333
    %1265 = vmatprep.subr.mxu0 0.0
    %1266 = vmatpush1.msra.mxu0 %v332
    %1267 = vmatprep.subr.mxu0 0.0
    %1268 = vmatpush1.msra.mxu0 %v331
    %1269 = vmatprep.subr.mxu0 0.0
    %1270 = vmatpush1.msra.mxu0 %v330
    %1271 = vmatprep.subr.mxu0 0.0
    %1272 = vmatpush1.msra.mxu0 %v329
    %1273 = vmatprep.subr.mxu0 0.0
    %1274 = vmatpush1.msra.mxu0 %v328
    %1275 = vmatprep.subr.mxu0 0.0
    %1276 = vmatpush1.msra.mxu0 %v327
    %1277 = vmatprep.subr.mxu0 0.0
    %1278 = vmatpush1.msra.mxu0 %v326
    %1279 = vmatprep.subr.mxu0 0.0
    %1280 = vmatpush1.msra.mxu0 %v325
    %1281 = vmatprep.subr.mxu0 0.0
    %1282 = vmatpush1.msra.mxu0 %v324
    %1283 = vmatprep.subr.mxu0 0.0
    %1284 = vmatpush1.msra.mxu0 %v323
    %1285 = vmatprep.subr.mxu0 0.0
    %1286 = vmatpush1.msra.mxu0 %v322
    %1287 = vmatprep.subr.mxu0 0.0
    %1288 = vmatpush2.msra.mxu0 %v353
    %1289 = vmatprep.subr.mxu0 0.0
    %1290 = vmatpush2.msra.mxu0 %v352
    %1291 = vmatprep.subr.mxu0 0.0
    %1292 = vmatpush2.msra.mxu0 %v351
    %1293 = vmatprep.subr.mxu0 0.0
    %1294 = vmatpush2.msra.mxu0 %v350
    %1295 = vmatprep.subr.mxu0 0.0
    %1296 = vmatpush2.msra.mxu0 %v349
    %1297 = vmatprep.subr.mxu0 0.0
    %1298 = vmatpush2.msra.mxu0 %v348
    %1299 = vmatprep.subr.mxu0 0.0
    %1300 = vmatpush2.msra.mxu0 %v347
    %1301 = vmatprep.subr.mxu0 0.0
    %1302 = vmatpush2.msra.mxu0 %v346
    %1303 = vmatprep.subr.mxu0 0.0
    %1304 = vmatpush2.msra.mxu0 %v345
    %1305 = vmatprep.subr.mxu0 0.0
    %1306 = vmatpush2.msra.mxu0 %v344
    %1307 = vmatprep.subr.mxu0 0.0
    %1308 = vmatpush2.msra.mxu0 %v343
    %1309 = vmatprep.subr.mxu0 0.0
    %1310 = vmatpush2.msra.mxu0 %v342
    %1311 = vmatprep.subr.mxu0 0.0
    %1312 = vmatpush2.msra.mxu0 %v341
    %1313 = vmatprep.subr.mxu0 0.0
    %1314 = vmatpush2.msra.mxu0 %v340
    %1315 = vmatprep.subr.mxu0 0.0
    %1316 = vmatpush2.msra.mxu0 %v339
    %1317 = vmatprep.subr.mxu0 0.0
    %1318 = vmatpush2.msra.mxu0 %v338
    %1319 = vmatprep.mubr.f32.mxu0 %v564
    %1320 = vmatmul.mubr.f32.gmra.mxu0 %v562
    %v1321 = vpop.f32.mrf.mxu0
    %v1322 = vadd.f32 %v1252, %v1321
    %v1323 = vpop.f32.mrf.mxu0
    %1324 = vdwg.mxu0
    %1325 = vmatprep.subr.mxu0 0.0
    %1326 = vmatpush1.msra.mxu0 %v369
    %1327 = vmatprep.subr.mxu0 0.0
    %1328 = vmatpush1.msra.mxu0 %v368
    %1329 = vmatprep.subr.mxu0 0.0
    %1330 = vmatpush1.msra.mxu0 %v367
    %1331 = vmatprep.subr.mxu0 0.0
    %1332 = vmatpush1.msra.mxu0 %v366
    %1333 = vmatprep.subr.mxu0 0.0
    %1334 = vmatpush1.msra.mxu0 %v365
    %1335 = vmatprep.subr.mxu0 0.0
    %1336 = vmatpush1.msra.mxu0 %v364
    %1337 = vmatprep.subr.mxu0 0.0
    %1338 = vmatpush1.msra.mxu0 %v363
    %1339 = vmatprep.subr.mxu0 0.0
    %1340 = vmatpush1.msra.mxu0 %v362
    %1341 = vmatprep.subr.mxu0 0.0
    %1342 = vmatpush1.msra.mxu0 %v361
    %1343 = vmatprep.subr.mxu0 0.0
    %1344 = vmatpush1.msra.mxu0 %v360
    %1345 = vmatprep.subr.mxu0 0.0
    %1346 = vmatpush1.msra.mxu0 %v359
    %1347 = vmatprep.subr.mxu0 0.0
    %1348 = vmatpush1.msra.mxu0 %v358
    %1349 = vmatprep.subr.mxu0 0.0
    %1350 = vmatpush1.msra.mxu0 %v357
    %1351 = vmatprep.subr.mxu0 0.0
    %1352 = vmatpush1.msra.mxu0 %v356
    %1353 = vmatprep.subr.mxu0 0.0
    %1354 = vmatpush1.msra.mxu0 %v355
    %1355 = vmatprep.subr.mxu0 0.0
    %1356 = vmatpush1.msra.mxu0 %v354
    %1357 = vmatprep.subr.mxu0 0.0
    %1358 = vmatpush2.msra.mxu0 %v385
    %1359 = vmatprep.subr.mxu0 0.0
    %1360 = vmatpush2.msra.mxu0 %v384
    %1361 = vmatprep.subr.mxu0 0.0
    %1362 = vmatpush2.msra.mxu0 %v383
    %1363 = vmatprep.subr.mxu0 0.0
    %1364 = vmatpush2.msra.mxu0 %v382
    %1365 = vmatprep.subr.mxu0 0.0
    %1366 = vmatpush2.msra.mxu0 %v381
    %1367 = vmatprep.subr.mxu0 0.0
    %1368 = vmatpush2.msra.mxu0 %v380
    %1369 = vmatprep.subr.mxu0 0.0
    %1370 = vmatpush2.msra.mxu0 %v379
    %1371 = vmatprep.subr.mxu0 0.0
    %1372 = vmatpush2.msra.mxu0 %v378
    %1373 = vmatprep.subr.mxu0 0.0
    %1374 = vmatpush2.msra.mxu0 %v377
    %1375 = vmatprep.subr.mxu0 0.0
    %1376 = vmatpush2.msra.mxu0 %v376
    %1377 = vmatprep.subr.mxu0 0.0
    %1378 = vmatpush2.msra.mxu0 %v375
    %1379 = vmatprep.subr.mxu0 0.0
    %1380 = vmatpush2.msra.mxu0 %v374
    %1381 = vmatprep.subr.mxu0 0.0
    %1382 = vmatpush2.msra.mxu0 %v373
    %1383 = vmatprep.subr.mxu0 0.0
    %1384 = vmatpush2.msra.mxu0 %v372
    %1385 = vmatprep.subr.mxu0 0.0
    %1386 = vmatpush2.msra.mxu0 %v371
    %1387 = vmatprep.subr.mxu0 0.0
    %1388 = vmatpush2.msra.mxu0 %v370
    %1389 = vmatprep.mubr.f32.mxu0 %v580
    %1390 = vmatmul.mubr.f32.gmra.mxu0 %v572
    %v1391 = vpop.f32.mrf.mxu0
    %v1392 = vadd.f32 %v1322, %v1391
    %v1393 = vpop.f32.mrf.mxu0
    %1394 = vdwg.mxu0
    %1395 = vmatprep.subr.mxu0 0.0
    %1396 = vmatpush1.msra.mxu0 %v401
    %1397 = vmatprep.subr.mxu0 0.0
    %1398 = vmatpush1.msra.mxu0 %v400
    %1399 = vmatprep.subr.mxu0 0.0
    %1400 = vmatpush1.msra.mxu0 %v399
    %1401 = vmatprep.subr.mxu0 0.0
    %1402 = vmatpush1.msra.mxu0 %v398
    %1403 = vmatprep.subr.mxu0 0.0
    %1404 = vmatpush1.msra.mxu0 %v397
    %1405 = vmatprep.subr.mxu0 0.0
    %1406 = vmatpush1.msra.mxu0 %v396
    %1407 = vmatprep.subr.mxu0 0.0
    %1408 = vmatpush1.msra.mxu0 %v395
    %1409 = vmatprep.subr.mxu0 0.0
    %1410 = vmatpush1.msra.mxu0 %v394
    %1411 = vmatprep.subr.mxu0 0.0
    %1412 = vmatpush1.msra.mxu0 %v393
    %1413 = vmatprep.subr.mxu0 0.0
    %1414 = vmatpush1.msra.mxu0 %v392
    %1415 = vmatprep.subr.mxu0 0.0
    %1416 = vmatpush1.msra.mxu0 %v391
    %1417 = vmatprep.subr.mxu0 0.0
    %1418 = vmatpush1.msra.mxu0 %v390
    %1419 = vmatprep.subr.mxu0 0.0
    %1420 = vmatpush1.msra.mxu0 %v389
    %1421 = vmatprep.subr.mxu0 0.0
    %1422 = vmatpush1.msra.mxu0 %v388
    %1423 = vmatprep.subr.mxu0 0.0
    %1424 = vmatpush1.msra.mxu0 %v387
    %1425 = vmatprep.subr.mxu0 0.0
    %1426 = vmatpush1.msra.mxu0 %v386
    %1427 = vmatprep.subr.mxu0 0.0
    %1428 = vmatpush2.msra.mxu0 %v417
    %1429 = vmatprep.subr.mxu0 0.0
    %1430 = vmatpush2.msra.mxu0 %v416
    %1431 = vmatprep.subr.mxu0 0.0
    %1432 = vmatpush2.msra.mxu0 %v415
    %1433 = vmatprep.subr.mxu0 0.0
    %1434 = vmatpush2.msra.mxu0 %v414
    %1435 = vmatprep.subr.mxu0 0.0
    %1436 = vmatpush2.msra.mxu0 %v413
    %1437 = vmatprep.subr.mxu0 0.0
    %1438 = vmatpush2.msra.mxu0 %v412
    %1439 = vmatprep.subr.mxu0 0.0
    %1440 = vmatpush2.msra.mxu0 %v411
    %1441 = vmatprep.subr.mxu0 0.0
    %1442 = vmatpush2.msra.mxu0 %v410
    %1443 = vmatprep.subr.mxu0 0.0
    %1444 = vmatpush2.msra.mxu0 %v409
    %1445 = vmatprep.subr.mxu0 0.0
    %1446 = vmatpush2.msra.mxu0 %v408
    %1447 = vmatprep.subr.mxu0 0.0
    %1448 = vmatpush2.msra.mxu0 %v407
    %1449 = vmatprep.subr.mxu0 0.0
    %1450 = vmatpush2.msra.mxu0 %v406
    %1451 = vmatprep.subr.mxu0 0.0
    %1452 = vmatpush2.msra.mxu0 %v405
    %1453 = vmatprep.subr.mxu0 0.0
    %1454 = vmatpush2.msra.mxu0 %v404
    %1455 = vmatprep.subr.mxu0 0.0
    %1456 = vmatpush2.msra.mxu0 %v403
    %1457 = vmatprep.subr.mxu0 0.0
    %1458 = vmatpush2.msra.mxu0 %v402
    %1459 = vmatprep.mubr.f32.mxu0 %v581
    %1460 = vmatmul.mubr.f32.gmra.mxu0 %v579
    %v1461 = vpop.f32.mrf.mxu0
    %v1462 = vadd.f32 %v1392, %v1461
    %v1463 = vpop.f32.mrf.mxu0
    %1464 = vdwg.mxu0
    %1465 = vmatprep.subr.mxu0 0.0
    %1466 = vmatpush1.msra.mxu0 %v433
    %1467 = vmatprep.subr.mxu0 0.0
    %1468 = vmatpush1.msra.mxu0 %v432
    %1469 = vmatprep.subr.mxu0 0.0
    %1470 = vmatpush1.msra.mxu0 %v431
    %1471 = vmatprep.subr.mxu0 0.0
    %1472 = vmatpush1.msra.mxu0 %v430
    %1473 = vmatprep.subr.mxu0 0.0
    %1474 = vmatpush1.msra.mxu0 %v429
    %1475 = vmatprep.subr.mxu0 0.0
    %1476 = vmatpush1.msra.mxu0 %v428
    %1477 = vmatprep.subr.mxu0 0.0
    %1478 = vmatpush1.msra.mxu0 %v427
    %1479 = vmatprep.subr.mxu0 0.0
    %1480 = vmatpush1.msra.mxu0 %v426
    %1481 = vmatprep.subr.mxu0 0.0
    %1482 = vmatpush1.msra.mxu0 %v425
    %1483 = vmatprep.subr.mxu0 0.0
    %1484 = vmatpush1.msra.mxu0 %v424
    %1485 = vmatprep.subr.mxu0 0.0
    %1486 = vmatpush1.msra.mxu0 %v423
    %1487 = vmatprep.subr.mxu0 0.0
    %1488 = vmatpush1.msra.mxu0 %v422
    %1489 = vmatprep.subr.mxu0 0.0
    %1490 = vmatpush1.msra.mxu0 %v421
    %1491 = vmatprep.subr.mxu0 0.0
    %1492 = vmatpush1.msra.mxu0 %v420
    %1493 = vmatprep.subr.mxu0 0.0
    %1494 = vmatpush1.msra.mxu0 %v419
    %1495 = vmatprep.subr.mxu0 0.0
    %1496 = vmatpush1.msra.mxu0 %v418
    %1497 = vmatprep.subr.mxu0 0.0
    %1498 = vmatpush2.msra.mxu0 %v449
    %1499 = vmatprep.subr.mxu0 0.0
    %1500 = vmatpush2.msra.mxu0 %v448
    %1501 = vmatprep.subr.mxu0 0.0
    %1502 = vmatpush2.msra.mxu0 %v447
    %1503 = vmatprep.subr.mxu0 0.0
    %1504 = vmatpush2.msra.mxu0 %v446
    %1505 = vmatprep.subr.mxu0 0.0
    %1506 = vmatpush2.msra.mxu0 %v445
    %1507 = vmatprep.subr.mxu0 0.0
    %1508 = vmatpush2.msra.mxu0 %v444
    %1509 = vmatprep.subr.mxu0 0.0
    %1510 = vmatpush2.msra.mxu0 %v443
    %1511 = vmatprep.subr.mxu0 0.0
    %1512 = vmatpush2.msra.mxu0 %v442
    %1513 = vmatprep.subr.mxu0 0.0
    %1514 = vmatpush2.msra.mxu0 %v441
    %1515 = vmatprep.subr.mxu0 0.0
    %1516 = vmatpush2.msra.mxu0 %v440
    %1517 = vmatprep.subr.mxu0 0.0
    %1518 = vmatpush2.msra.mxu0 %v439
    %1519 = vmatprep.subr.mxu0 0.0
    %1520 = vmatpush2.msra.mxu0 %v438
    %1521 = vmatprep.subr.mxu0 0.0
    %1522 = vmatpush2.msra.mxu0 %v437
    %1523 = vmatprep.subr.mxu0 0.0
    %1524 = vmatpush2.msra.mxu0 %v436
    %1525 = vmatprep.subr.mxu0 0.0
    %1526 = vmatpush2.msra.mxu0 %v435
    %1527 = vmatprep.subr.mxu0 0.0
    %1528 = vmatpush2.msra.mxu0 %v434
    %1529 = vmatprep.mubr.f32.mxu0 %v597
    %1530 = vmatmul.mubr.f32.gmra.mxu0 %v589
    %v1531 = vpop.f32.mrf.mxu0
    %v1532 = vadd.f32 %v1462, %v1531
    %v1533 = vpop.f32.mrf.mxu0
    %1534 = vdwg.mxu0
    %1535 = vmatprep.subr.mxu0 0.0
    %1536 = vmatpush1.msra.mxu0 %v465
    %1537 = vmatprep.subr.mxu0 0.0
    %1538 = vmatpush1.msra.mxu0 %v464
    %1539 = vmatprep.subr.mxu0 0.0
    %1540 = vmatpush1.msra.mxu0 %v463
    %1541 = vmatprep.subr.mxu0 0.0
    %1542 = vmatpush1.msra.mxu0 %v462
    %1543 = vmatprep.subr.mxu0 0.0
    %1544 = vmatpush1.msra.mxu0 %v461
    %1545 = vmatprep.subr.mxu0 0.0
    %1546 = vmatpush1.msra.mxu0 %v460
    %1547 = vmatprep.subr.mxu0 0.0
    %1548 = vmatpush1.msra.mxu0 %v459
    %1549 = vmatprep.subr.mxu0 0.0
    %1550 = vmatpush1.msra.mxu0 %v458
    %1551 = vmatprep.subr.mxu0 0.0
    %1552 = vmatpush1.msra.mxu0 %v457
    %1553 = vmatprep.subr.mxu0 0.0
    %1554 = vmatpush1.msra.mxu0 %v456
    %1555 = vmatprep.subr.mxu0 0.0
    %1556 = vmatpush1.msra.mxu0 %v455
    %1557 = vmatprep.subr.mxu0 0.0
    %1558 = vmatpush1.msra.mxu0 %v454
    %1559 = vmatprep.subr.mxu0 0.0
    %1560 = vmatpush1.msra.mxu0 %v453
    %1561 = vmatprep.subr.mxu0 0.0
    %1562 = vmatpush1.msra.mxu0 %v452
    %1563 = vmatprep.subr.mxu0 0.0
    %1564 = vmatpush1.msra.mxu0 %v451
    %1565 = vmatprep.subr.mxu0 0.0
    %1566 = vmatpush1.msra.mxu0 %v450
    %1567 = vmatprep.subr.mxu0 0.0
    %1568 = vmatpush2.msra.mxu0 0.0
    %1569 = vmatprep.subr.mxu0 0.0
    %1570 = vmatpush2.msra.mxu0 0.0
    %1571 = vmatprep.subr.mxu0 0.0
    %1572 = vmatpush2.msra.mxu0 0.0
    %1573 = vmatprep.subr.mxu0 0.0
    %1574 = vmatpush2.msra.mxu0 0.0
    %1575 = vmatprep.subr.mxu0 0.0
    %1576 = vmatpush2.msra.mxu0 0.0
    %1577 = vmatprep.subr.mxu0 0.0
    %1578 = vmatpush2.msra.mxu0 0.0
    %1579 = vmatprep.subr.mxu0 0.0
    %1580 = vmatpush2.msra.mxu0 0.0
    %1581 = vmatprep.subr.mxu0 0.0
    %1582 = vmatpush2.msra.mxu0 0.0
    %1583 = vmatprep.subr.mxu0 0.0
    %1584 = vmatpush2.msra.mxu0 0.0
    %1585 = vmatprep.subr.mxu0 0.0
    %1586 = vmatpush2.msra.mxu0 0.0
    %1587 = vmatprep.subr.mxu0 0.0
    %1588 = vmatpush2.msra.mxu0 0.0
    %1589 = vmatprep.subr.mxu0 0.0
    %1590 = vmatpush2.msra.mxu0 0.0
    %1591 = vmatprep.subr.mxu0 0.0
    %1592 = vmatpush2.msra.mxu0 0.0
    %1593 = vmatprep.subr.mxu0 0.0
    %1594 = vmatpush2.msra.mxu0 0.0
    %1595 = vmatprep.subr.mxu0 0.0
    %1596 = vmatpush2.msra.mxu0 0.0
    %1597 = vmatprep.subr.mxu0 0.0
    %1598 = vmatpush2.msra.mxu0 0.0
    %1599 = vmatprep.mubr.f32.mxu0 0.0
    %1600 = vmatmul.mubr.f32.gmra.mxu0 %v596
    %v1601 = vpop.f32.mrf.mxu0
    %v1602 = vadd.f32 %v1532, %v1601
    %v1603 = vpop.f32.mrf.mxu0
    %1604 = vdwg.mxu0
    %v1605 = vmax.f32 %v1602, 0.0
    %v1606 = vld [vmem:[%s4] sm:$0xff]
    %v1607 = vld [vmem:[%s4 + $0x8] sm:$0xff]
    %v1608 = vld [vmem:[%s4 + $0x10] sm:$0xff]
    %v1609 = vld [vmem:[%s4 + $0x18] sm:$0xff]
    %v1610 = vld [vmem:[%s4 + $0x20] sm:$0xff]
    %v1611 = vld [vmem:[%s4 + $0x28] sm:$0xff]
    %v1612 = vld [vmem:[%s4 + $0x30] sm:$0xff]
    %v1613 = vld [vmem:[%s4 + $0x38] sm:$0xff]
    %v1614 = vld [vmem:[%s4 + $0x40] sm:$0xff]
    %v1615 = vld [vmem:[%s4 + $0x48] sm:$0xff]
    %v1616 = vld [vmem:[%s4 + $0x50] sm:$0xff]
    %v1617 = vld [vmem:[%s4 + $0x58] sm:$0xff]
    %v1618 = vld [vmem:[%s4 + $0x60] sm:$0xff]
    %v1619 = vld [vmem:[%s4 + $0x68] sm:$0xff]
    %v1620 = vld [vmem:[%s4 + $0x70] sm:$0xff]
    %v1621 = vld [vmem:[%s4 + $0x78] sm:$0xff]
    %v1622 = vld [vmem:[%s1] sm:$0x3]
    %v1623 = vld [vmem:[%s5] sm:$0xff]
    %vm1624 = vcmask 64512
    %v1626 = vsel %vm1624, %v1622, 0
    %1628 = vmatprep.subr.mxu0 0.0
    %1629 = vmatpush1.msra.mxu0 0.0
    %1630 = vmatprep.subr.mxu0 0.0
    %1631 = vmatpush1.msra.mxu0 0.0
    %1632 = vmatprep.subr.mxu0 0.0
    %1633 = vmatpush1.msra.mxu0 0.0
    %1634 = vmatprep.subr.mxu0 0.0
    %1635 = vmatpush1.msra.mxu0 0.0
    %1636 = vmatprep.subr.mxu0 0.0
    %1637 = vmatpush1.msra.mxu0 0.0
    %1638 = vmatprep.subr.mxu0 0.0
    %1639 = vmatpush1.msra.mxu0 0.0
    %1640 = vmatprep.subr.mxu0 0.0
    %1641 = vmatpush1.msra.mxu0 0.0
    %1642 = vmatprep.subr.mxu0 0.0
    %1643 = vmatpush1.msra.mxu0 0.0
    %1644 = vmatprep.subr.mxu0 0.0
    %1645 = vmatpush1.msra.mxu0 0.0
    %1646 = vmatprep.subr.mxu0 0.0
    %1647 = vmatpush1.msra.mxu0 0.0
    %1648 = vmatprep.subr.mxu0 0.0
    %1649 = vmatpush1.msra.mxu0 0.0
    %1650 = vmatprep.subr.mxu0 0.0
    %1651 = vmatpush1.msra.mxu0 0.0
    %1652 = vmatprep.subr.mxu0 0.0
    %1653 = vmatpush1.msra.mxu0 0.0
    %1654 = vmatprep.subr.mxu0 0.0
    %1655 = vmatpush1.msra.mxu0 0.0
    %1656 = vmatprep.subr.mxu0 0.0
    %1657 = vmatpush1.msra.mxu0 0.0
    %1658 = vmatprep.subr.mxu0 0.0
    %1659 = vmatpush1.msra.mxu0 %v1623
    %1660 = vmatprep.subr.mxu0 0.0
    %1661 = vmatpush2.msra.mxu0 0.0
    %1662 = vmatprep.subr.mxu0 0.0
    %1663 = vmatpush2.msra.mxu0 0.0
    %1664 = vmatprep.subr.mxu0 0.0
    %1665 = vmatpush2.msra.mxu0 0.0
    %1666 = vmatprep.subr.mxu0 0.0
    %1667 = vmatpush2.msra.mxu0 0.0
    %1668 = vmatprep.subr.mxu0 0.0
    %1669 = vmatpush2.msra.mxu0 0.0
    %1670 = vmatprep.subr.mxu0 0.0
    %1671 = vmatpush2.msra.mxu0 0.0
    %1672 = vmatprep.subr.mxu0 0.0
    %1673 = vmatpush2.msra.mxu0 0.0
    %1674 = vmatprep.subr.mxu0 0.0
    %1675 = vmatpush2.msra.mxu0 0.0
    %1676 = vmatprep.subr.mxu0 0.0
    %1677 = vmatpush2.msra.mxu0 0.0
    %1678 = vmatprep.subr.mxu0 0.0
    %1679 = vmatpush2.msra.mxu0 0.0
    %1680 = vmatprep.subr.mxu0 0.0
    %1681 = vmatpush2.msra.mxu0 0.0
    %1682 = vmatprep.subr.mxu0 0.0
    %1683 = vmatpush2.msra.mxu0 0.0
    %1684 = vmatprep.subr.mxu0 0.0
    %1685 = vmatpush2.msra.mxu0 0.0
    %1686 = vmatprep.subr.mxu0 0.0
    %1687 = vmatpush2.msra.mxu0 0.0
    %1688 = vmatprep.subr.mxu0 0.0
    %1689 = vmatpush2.msra.mxu0 0.0
    %1690 = vmatprep.subr.mxu0 0.0
    %1691 = vmatpush2.msra.mxu0 0.0
    %1692 = vmatprep.mubr.f32.mxu0 0.0
    %1693 = vmatmul.mubr.f32.gmra.mxu0 %v1626
    %v1694 = vpop.f32.mrf.mxu0
    %v1695 = vadd.f32 0.0, %v1694
    %v1696 = vpop.f32.mrf.mxu0
    %1697 = vdwg.mxu0
    %1698 = vmatprep.subr.mxu0 0.0
    %1699 = vmatpush1.msra.mxu0 %v1621
    %1700 = vmatprep.subr.mxu0 0.0
    %1701 = vmatpush1.msra.mxu0 %v1620
    %1702 = vmatprep.subr.mxu0 0.0
    %1703 = vmatpush1.msra.mxu0 %v1619
    %1704 = vmatprep.subr.mxu0 0.0
    %1705 = vmatpush1.msra.mxu0 %v1618
    %1706 = vmatprep.subr.mxu0 0.0
    %1707 = vmatpush1.msra.mxu0 %v1617
    %1708 = vmatprep.subr.mxu0 0.0
    %1709 = vmatpush1.msra.mxu0 %v1616
    %1710 = vmatprep.subr.mxu0 0.0
    %1711 = vmatpush1.msra.mxu0 %v1615
    %1712 = vmatprep.subr.mxu0 0.0
    %1713 = vmatpush1.msra.mxu0 %v1614
    %1714 = vmatprep.subr.mxu0 0.0
    %1715 = vmatpush1.msra.mxu0 %v1613
    %1716 = vmatprep.subr.mxu0 0.0
    %1717 = vmatpush1.msra.mxu0 %v1612
    %1718 = vmatprep.subr.mxu0 0.0
    %1719 = vmatpush1.msra.mxu0 %v1611
    %1720 = vmatprep.subr.mxu0 0.0
    %1721 = vmatpush1.msra.mxu0 %v1610
    %1722 = vmatprep.subr.mxu0 0.0
    %1723 = vmatpush1.msra.mxu0 %v1609
    %1724 = vmatprep.subr.mxu0 0.0
    %1725 = vmatpush1.msra.mxu0 %v1608
    %1726 = vmatprep.subr.mxu0 0.0
    %1727 = vmatpush1.msra.mxu0 %v1607
    %1728 = vmatprep.subr.mxu0 0.0
    %1729 = vmatpush1.msra.mxu0 %v1606
    %1730 = vmatprep.subr.mxu0 0.0
    %1731 = vmatpush2.msra.mxu0 0.0
    %1732 = vmatprep.subr.mxu0 0.0
    %1733 = vmatpush2.msra.mxu0 0.0
    %1734 = vmatprep.subr.mxu0 0.0
    %1735 = vmatpush2.msra.mxu0 0.0
    %1736 = vmatprep.subr.mxu0 0.0
    %1737 = vmatpush2.msra.mxu0 0.0
    %1738 = vmatprep.subr.mxu0 0.0
    %1739 = vmatpush2.msra.mxu0 0.0
    %1740 = vmatprep.subr.mxu0 0.0
    %1741 = vmatpush2.msra.mxu0 0.0
    %1742 = vmatprep.subr.mxu0 0.0
    %1743 = vmatpush2.msra.mxu0 0.0
    %1744 = vmatprep.subr.mxu0 0.0
    %1745 = vmatpush2.msra.mxu0 0.0
    %1746 = vmatprep.subr.mxu0 0.0
    %1747 = vmatpush2.msra.mxu0 0.0
    %1748 = vmatprep.subr.mxu0 0.0
    %1749 = vmatpush2.msra.mxu0 0.0
    %1750 = vmatprep.subr.mxu0 0.0
    %1751 = vmatpush2.msra.mxu0 0.0
    %1752 = vmatprep.subr.mxu0 0.0
    %1753 = vmatpush2.msra.mxu0 0.0
    %1754 = vmatprep.subr.mxu0 0.0
    %1755 = vmatpush2.msra.mxu0 0.0
    %1756 = vmatprep.subr.mxu0 0.0
    %1757 = vmatpush2.msra.mxu0 0.0
    %1758 = vmatprep.subr.mxu0 0.0
    %1759 = vmatpush2.msra.mxu0 0.0
    %1760 = vmatprep.subr.mxu0 0.0
    %1761 = vmatpush2.msra.mxu0 0.0
    %1762 = vmatprep.mubr.f32.mxu0 0.0
    %1763 = vmatmul.mubr.f32.gmra.mxu0 %v1605
    %v1764 = vpop.f32.mrf.mxu0
    %v1765 = vadd.f32 %v1695, %v1764
    %v1766 = vpop.f32.mrf.mxu0
    %1767 = vdwg.mxu0
    %v1768 = vld [vmem:[%s6] sm:$0x1]
    %v1770 = vlaneseq
    %v1771 = vshrl.u32 %v1770, 7
    %v1772 = vsub.s32 0, %v1771
    %v1773 = vrot.slane %v1768, %v1772
    %v1775 = vadd.f32 %v1765, %v1773
    %vm1776 = vcmask 123904
    %1777 = vst.msk [vmem:[#allocation2] sm:$0x3] %vm1776, %v1775
    // Predicated region
    $region30: #{enc_forward.9} parent=1 // pred_check
      _
    $region31: #{enc_forward.9} parent=1 // pred_check_branch
      %1779 = sbr.rel (0) target = $region33
    $region32: #{enc_forward.9} parent=1 // pred_region
      %s1781 = ssub.s32 32, 32
      %1782 = vsyncadd [#allocation3], %s1781
      %s1784 = sshll.u32 [#allocation2], 4
      %s1785 = int_to_ptr.vmem [resolvable:$true] %s1784
      %1787 = dma.vmem_to_hbm [thread:$0]  %s1785, 32, %s7, [#allocation3]
    $region33: #{enc_forward.9} parent=1 // pred_fallthru
      _
    // Predicated region
    $region34: #{enc_forward.9} parent=1 // pred_check
      _
    $region35: #{enc_forward.9} parent=1 // pred_check_branch
      %1789 = sbr.rel (0) target = $region37
    $region36: #{enc_forward.9} parent=1 // pred_region
      %1790 = dma.done [#allocation3], 32
    $region37: #{enc_forward.9} parent=1 // pred_fallthru
      _
    %1791 = vsyncpa [#allocation3], 1

</llo_original>
